<compile_context>
chip_gen: v7x
topology: tpu7x:2x2x1
jax: 0.10.0
libtpu: 0.0.40
codegen_flags: <defaults>
</compile_context>

<pallas_src>
import math
import functools

import numpy as np
import jax
import jax.numpy as jnp
from jax import lax
from jax.experimental import pallas as pl
from jax.experimental.pallas import tpu as pltpu

NBINS = 9          # HOGModel default
POOL = 8           # pixels_per_cell default
MAX_ANGLE = math.pi

_GW = (0.2989, 0.587, 0.114)              # torchvision rgb_to_grayscale weights
_HIGHEST = jax.lax.Precision.HIGHEST      # exact f32 matmuls for the pooling step


def _hog_kernel(x_ref, top_ref, bot_ref, ah_ref, aw_ref, o_ref, *, nbins, max_angle):
    # x_ref  : (1, 3, TH, W)  rows [i*TH, (i+1)*TH) of image n
    # top_ref: (1, 3, 8,  W)  8-row slab containing global row i*TH - 1 (its row 7)
    # bot_ref: (1, 3, 8,  W)  8-row slab containing global row (i+1)*TH (its row 0)
    # ah_ref : (THc, TH)      row block-averaging matrix (entries 0 or 1/pool)
    # aw_ref : (W, Wc)        col block-averaging matrix (entries 0 or 1/pool)
    # o_ref  : (1, nbins, THc, Wc)
    TH, W = x_ref.shape[2], x_ref.shape[3]

    i = pl.program_id(1)
    n_tiles = pl.num_programs(1)

    xb = x_ref[...][0]            # (3, TH, W)
    tb = top_ref[...][0]          # (3, 8, W)
    bb = bot_ref[...][0]          # (3, 8, W)

    # torchvision rgb_to_grayscale
    g_mid = _GW[0] * xb[0] + _GW[1] * xb[1] + _GW[2] * xb[2]                    # (TH, W)
    g_top = _GW[0] * tb[0, 7:8] + _GW[1] * tb[1, 7:8] + _GW[2] * tb[2, 7:8]     # (1, W)
    g_bot = _GW[0] * bb[0, 0:1] + _GW[1] * bb[1, 0:1] + _GW[2] * bb[2, 0:1]     # (1, W)

    # halo rows that fall outside the image == conv2d zero padding
    g_top = g_top * jnp.where(i == 0, 0.0, 1.0)
    g_bot = g_bot * jnp.where(i == n_tiles - 1, 0.0, 1.0)

    g = jnp.concatenate([g_top, g_mid, g_bot], axis=0)                          # (TH+2, W)

    # zero-padded left / right neighbours (1-pixel column halo)
    zcol = jnp.zeros_like(g[:, 0:1])
    gl = jnp.concatenate([zcol, g[:, :W - 1]], axis=1)    # gl[:, j] = gpad[:, j-1]
    gr = jnp.concatenate([g[:, 1:], zcol], axis=1)        # gr[:, j] = gpad[:, j+1]

    # factored 3x3 Sobel cross-correlation (== the registered buffers in HOGLayer)
    dlr = gl - gr                        # horizontal difference per padded row
    rsum = gl + 2.0 * g + gr             # horizontal smoothing per padded row
    gx = dlr[0:TH] + 2.0 * dlr[1:TH + 1] + dlr[2:TH + 2]      # (TH, W)
    gy = rsum[0:TH] - rsum[2:TH + 2]                           # (TH, W)

    ss = gx * gx + gy * gy
    mag = jnp.where(ss > 0.0, ss * lax.rsqrt(ss), 0.0)         # gxy.norm(dim=1)
    omm = 1.0 - mag

    phase = jnp.arctan2(gx, gy)                                # atan2(gxy[:,0], gxy[:,1])
    t = phase * (float(nbins) / max_angle)                     # in (-nbins, nbins]
    fi = jnp.floor(t)
    ci = jnp.ceil(t)

    nb = float(nbins)

    def _mod_nbins(v):                   # python/torch-style '% nbins' for v in [-nb, nb]
        v = jnp.where(v < 0.0, v + nb, v)
        return jnp.where(v >= nb, v - nb, v)

    fi = _mod_nbins(fi)
    ci = _mod_nbins(ci)

    a_h = ah_ref[...]                    # (THc, TH)
    a_w = aw_ref[...]                    # (W, Wc)

    # out.scatter_(1, floor, mag); out.scatter_add_(1, ceil, 1-mag); AvgPool2d(pool)
    # streamed one bin at a time; pooling = two small MXU matmuls.
    for b in range(nbins):
        bf = float(b)
        contrib = jnp.where(fi == bf, mag, 0.0) + jnp.where(ci == bf, omm, 0.0)   # (TH, W)
        rows = jnp.dot(a_h, contrib, precision=_HIGHEST,
                       preferred_element_type=jnp.float32)                        # (THc, W)
        o_ref[0, b] = jnp.dot(rows, a_w, precision=_HIGHEST,
                              preferred_element_type=jnp.float32)                 # (THc, Wc)


def _estimate_vmem_bytes(th, W, pool, nbins):
    thc, wc = th // pool, W // pool
    inp = 2 * 3 * th * W * 4             # double-buffered main input block
    halo = 2 * 2 * 3 * 8 * W * 4         # double-buffered halo blocks
    outb = 2 * nbins * thc * wc * 4      # double-buffered output block
    mats = (thc * th + W * wc) * 4       # pooling matrices
    live = 12 * (th + 2) * W * 4         # live f32 planes inside the kernel body
    return inp + halo + outb + mats + live


def _choose_row_tile(H, W, pool, nbins, budget=20 * 1024 * 1024, max_rows=512):
    # candidates: the whole image, or any multiple of 8*pool that divides H
    cands = {H} | {t for t in range(8 * pool, H, 8 * pool) if H % t == 0}
    ok = [t for t in sorted(cands)
          if t <= max_rows and _estimate_vmem_bytes(t, W, pool, nbins) <= budget]
    return max(ok) if ok else min(cands)


def hog_model_forward(x_rgb, *, nbins=NBINS, pool=POOL, max_angle=MAX_ANGLE,
                      row_tile=None):
    """HOGModel(nbins, pixels_per_cell=pool, use_colors=False).forward.

    x_rgb: (N, 3, H, W) float32.  Returns (N, nbins * (H//pool) * (W//pool)).
    """
    N, C, H, W = x_rgb.shape
    assert C == 3, "expects RGB NCHW input"
    assert pool % 8 == 0, "kernel assumes pool is a multiple of the 8-row sublane tile"
    assert H % pool == 0 and W % pool == 0
    Hc, Wc = H // pool, W // pool

    if row_tile is None:
        TH = _choose_row_tile(H, W, pool, nbins)
    else:
        TH = int(row_tile)
        assert H % TH == 0 and (TH == H or TH % (8 * pool) == 0)
    n_tiles = H // TH
    THc = TH // pool
    hblk = TH // 8            # row tile measured in 8-row halo blocks
    n_hblk = H // 8

    x = x_rgb.astype(jnp.float32)

    # static block-averaging matrices: (A_h @ contrib) @ A_w == AvgPool2d(pool)
    a_h = jnp.asarray(
        (np.arange(THc)[:, None] == (np.arange(TH)[None, :] // pool))
        .astype(np.float32) / pool)                       # (THc, TH)
    a_w = jnp.asarray(
        ((np.arange(W)[:, None] // pool) == np.arange(Wc)[None, :])
        .astype(np.float32) / pool)                       # (W, Wc)

    kernel = functools.partial(_hog_kernel, nbins=nbins, max_angle=max_angle)

    out = pl.pallas_call(
        kernel,
        out_shape=jax.ShapeDtypeStruct((N, nbins, Hc, Wc), jnp.float32),
        grid_spec=pltpu.PrefetchScalarGridSpec(
            num_scalar_prefetch=0,
            grid=(N, n_tiles),
            in_specs=[
                # the TH rows owned by this grid step
                pl.BlockSpec((1, 3, TH, W), lambda n, i: (n, 0, i, 0)),
                # 8-row slab holding the row just above the tile (clamped at the top)
                pl.BlockSpec((1, 3, 8, W),
                             lambda n, i: (n, 0, jnp.maximum(i * hblk - 1, 0), 0)),
                # 8-row slab holding the row just below the tile (clamped at the bottom)
                pl.BlockSpec((1, 3, 8, W),
                             lambda n, i: (n, 0, jnp.minimum((i + 1) * hblk, n_hblk - 1), 0)),
                # pooling matrices: constant block index -> fetched once, kept resident
                pl.BlockSpec((THc, TH), lambda n, i: (0, 0)),
                pl.BlockSpec((W, Wc), lambda n, i: (0, 0)),
            ],
            out_specs=pl.BlockSpec((1, nbins, THc, Wc), lambda n, i: (n, 0, i, 0)),
        ),
        compiler_params=pltpu.CompilerParams(
            dimension_semantics=("parallel", "parallel"),
            vmem_limit_bytes=48 * 1024 * 1024,
        ),
    )(x, x, x, a_h, a_w)

    # res.reshape(n, nbins, -1).reshape(n, -1)
    return out.reshape(N, nbins * Hc * Wc)


def hog_model_ref(x_rgb, *, nbins=NBINS, pool=POOL, max_angle=MAX_ANGLE):
    """Pure-JAX reference matching the PyTorch module."""
    N, _, H, W = x_rgb.shape
    gray = (_GW[0] * x_rgb[:, 0] + _GW[1] * x_rgb[:, 1] + _GW[2] * x_rgb[:, 2])[:, None]
    mat = jnp.array([[1., 0., -1.], [2., 0., -2.], [1., 0., -1.]], jnp.float32)
    w = jnp.stack([mat, mat.T])[:, None]   # (2, 1, 3, 3)
    gxy = lax.conv_general_dilated(gray, w, window_strides=(1, 1),
                                   padding=((1, 1), (1, 1)),
                                   dimension_numbers=("NCHW", "OIHW", "NCHW"))
    gx, gy = gxy[:, 0], gxy[:, 1]
    mag = jnp.sqrt(gx * gx + gy * gy)
    phase = jnp.arctan2(gx, gy)
    t = phase / max_angle * nbins
    fi = jnp.mod(jnp.floor(t).astype(jnp.int32), nbins)
    ci = jnp.mod(jnp.ceil(t).astype(jnp.int32), nbins)
    bins = jnp.arange(nbins)[None, :, None, None]
    hist = ((bins == fi[:, None]).astype(jnp.float32) * mag[:, None]
            + (bins == ci[:, None]).astype(jnp.float32) * (1.0 - mag[:, None]))
    Hc, Wc = H // pool, W // pool
    pooled = hist.reshape(N, nbins, Hc, pool, Wc, pool).mean(axis=(3, 5))
    return pooled.reshape(N, -1)


if __name__ == "__main__":
    key = jax.random.PRNGKey(0)
    k1, k2 = jax.random.split(key)

    # small RGB batch in the module's NCHW layout
    x = jax.random.uniform(k1, (2, 3, 16, 16), dtype=jnp.float32)
    out = jax.block_until_ready(hog_model_forward(x))
    assert out.shape == (2, NBINS * (16 // POOL) * (16 // POOL))
    ref = hog_model_ref(x)
    np.testing.assert_allclose(np.asarray(out), np.asarray(ref), rtol=5e-4, atol=1e-5)

    # exercise the multi-row-tile / halo path and check it agrees with the
    # single-tile run of the same kernel (identical in-kernel arithmetic).
    x2 = jax.random.uniform(k2, (1, 3, 128, 16), dtype=jnp.float32)
    out_tiled = jax.block_until_ready(hog_model_forward(x2, row_tile=64))
    out_whole = jax.block_until_ready(hog_model_forward(x2, row_tile=128))
    np.testing.assert_allclose(np.asarray(out_tiled), np.asarray(out_whole),
                               rtol=1e-5, atol=1e-6)

    print("KERNEL_OK")
</pallas_src>

<mosaic_0001>
module attributes {stable_mosaic.version = 11 : i64} {
  func.func @_hog_kernel(%arg0: i32, %arg1: i32, %arg2: memref<1x3x16x16xf32, #tpu.memory_space<vmem>>, %arg3: memref<1x3x8x16xf32, #tpu.memory_space<vmem>>, %arg4: memref<1x3x8x16xf32, #tpu.memory_space<vmem>>, %arg5: memref<2x16xf32, #tpu.memory_space<vmem>>, %arg6: memref<16x2xf32, #tpu.memory_space<vmem>>, %arg7: memref<1x9x2x2xf32, #tpu.memory_space<vmem>>) attributes {dimension_semantics = [#tpu.dimension_semantics<parallel>, #tpu.dimension_semantics<parallel>], iteration_bounds = array<i64: 2, 1>, scalar_prefetch = 0 : i64, scratch_operands = 0 : i64, tpu.core_type = #tpu.core_type<tc>, window_params = [{transform_indices = @transform_0, window_bounds = array<i64: 1, 3, 16, 16>}, {transform_indices = @transform_1, window_bounds = array<i64: 1, 3, 8, 16>}, {transform_indices = @transform_2, window_bounds = array<i64: 1, 3, 8, 16>}, {pipeline_mode = #tpu.pipeline_mode<synchronous>, transform_indices = @transform_3, window_bounds = array<i64: 2, 16>}, {pipeline_mode = #tpu.pipeline_mode<synchronous>, transform_indices = @transform_4, window_bounds = array<i64: 16, 2>}, {transform_indices = @transform_5, window_bounds = array<i64: 1, 9, 2, 2>}]} {
    %c0 = arith.constant 0 : index
    %c0_0 = arith.constant 0 : index
    %c0_1 = arith.constant 0 : index
    %c0_2 = arith.constant 0 : index
    %0 = vector.load %arg2[%c0, %c0_0, %c0_1, %c0_2] : memref<1x3x16x16xf32, #tpu.memory_space<vmem>>, vector<1x3x16x16xf32>
    %1 = vector.shape_cast %0 : vector<1x3x16x16xf32> to vector<3x16x16xf32>
    %c0_3 = arith.constant 0 : index
    %c0_4 = arith.constant 0 : index
    %c0_5 = arith.constant 0 : index
    %c0_6 = arith.constant 0 : index
    %2 = vector.load %arg3[%c0_3, %c0_4, %c0_5, %c0_6] : memref<1x3x8x16xf32, #tpu.memory_space<vmem>>, vector<1x3x8x16xf32>
    %3 = vector.shape_cast %2 : vector<1x3x8x16xf32> to vector<3x8x16xf32>
    %c0_7 = arith.constant 0 : index
    %c0_8 = arith.constant 0 : index
    %c0_9 = arith.constant 0 : index
    %c0_10 = arith.constant 0 : index
    %4 = vector.load %arg4[%c0_7, %c0_8, %c0_9, %c0_10] : memref<1x3x8x16xf32, #tpu.memory_space<vmem>>, vector<1x3x8x16xf32>
    %5 = vector.shape_cast %4 : vector<1x3x8x16xf32> to vector<3x8x16xf32>
    %6 = vector.extract_strided_slice %1 {offsets = [0, 0, 0], sizes = [1, 16, 16], strides = [1, 1, 1]} : vector<3x16x16xf32> to vector<1x16x16xf32>
    %7 = vector.shape_cast %6 : vector<1x16x16xf32> to vector<16x16xf32>
    %cst = arith.constant 2.989000e-01 : f32
    %8 = vector.broadcast %cst : f32 to vector<16x16xf32>
    %9 = arith.mulf %8, %7 : vector<16x16xf32>
    %10 = vector.extract_strided_slice %1 {offsets = [1, 0, 0], sizes = [1, 16, 16], strides = [1, 1, 1]} : vector<3x16x16xf32> to vector<1x16x16xf32>
    %11 = vector.shape_cast %10 : vector<1x16x16xf32> to vector<16x16xf32>
    %cst_11 = arith.constant 5.870000e-01 : f32
    %12 = vector.broadcast %cst_11 : f32 to vector<16x16xf32>
    %13 = arith.mulf %12, %11 : vector<16x16xf32>
    %14 = arith.addf %9, %13 : vector<16x16xf32>
    %15 = vector.extract_strided_slice %1 {offsets = [2, 0, 0], sizes = [1, 16, 16], strides = [1, 1, 1]} : vector<3x16x16xf32> to vector<1x16x16xf32>
    %16 = vector.shape_cast %15 : vector<1x16x16xf32> to vector<16x16xf32>
    %cst_12 = arith.constant 1.140000e-01 : f32
    %17 = vector.broadcast %cst_12 : f32 to vector<16x16xf32>
    %18 = arith.mulf %17, %16 : vector<16x16xf32>
    %19 = arith.addf %14, %18 : vector<16x16xf32>
    %20 = vector.extract_strided_slice %3 {offsets = [0, 7, 0], sizes = [1, 1, 16], strides = [1, 1, 1]} : vector<3x8x16xf32> to vector<1x1x16xf32>
    %21 = vector.shape_cast %20 : vector<1x1x16xf32> to vector<1x16xf32>
    %cst_13 = arith.constant 2.989000e-01 : f32
    %22 = vector.broadcast %cst_13 : f32 to vector<1x16xf32>
    %23 = arith.mulf %22, %21 : vector<1x16xf32>
    %24 = vector.extract_strided_slice %3 {offsets = [1, 7, 0], sizes = [1, 1, 16], strides = [1, 1, 1]} : vector<3x8x16xf32> to vector<1x1x16xf32>
    %25 = vector.shape_cast %24 : vector<1x1x16xf32> to vector<1x16xf32>
    %cst_14 = arith.constant 5.870000e-01 : f32
    %26 = vector.broadcast %cst_14 : f32 to vector<1x16xf32>
    %27 = arith.mulf %26, %25 : vector<1x16xf32>
    %28 = arith.addf %23, %27 : vector<1x16xf32>
    %29 = vector.extract_strided_slice %3 {offsets = [2, 7, 0], sizes = [1, 1, 16], strides = [1, 1, 1]} : vector<3x8x16xf32> to vector<1x1x16xf32>
    %30 = vector.shape_cast %29 : vector<1x1x16xf32> to vector<1x16xf32>
    %cst_15 = arith.constant 1.140000e-01 : f32
    %31 = vector.broadcast %cst_15 : f32 to vector<1x16xf32>
    %32 = arith.mulf %31, %30 : vector<1x16xf32>
    %33 = arith.addf %28, %32 : vector<1x16xf32>
    %34 = vector.extract_strided_slice %5 {offsets = [0, 0, 0], sizes = [1, 1, 16], strides = [1, 1, 1]} : vector<3x8x16xf32> to vector<1x1x16xf32>
    %35 = vector.shape_cast %34 : vector<1x1x16xf32> to vector<1x16xf32>
    %cst_16 = arith.constant 2.989000e-01 : f32
    %36 = vector.broadcast %cst_16 : f32 to vector<1x16xf32>
    %37 = arith.mulf %36, %35 : vector<1x16xf32>
    %38 = vector.extract_strided_slice %5 {offsets = [1, 0, 0], sizes = [1, 1, 16], strides = [1, 1, 1]} : vector<3x8x16xf32> to vector<1x1x16xf32>
    %39 = vector.shape_cast %38 : vector<1x1x16xf32> to vector<1x16xf32>
    %cst_17 = arith.constant 5.870000e-01 : f32
    %40 = vector.broadcast %cst_17 : f32 to vector<1x16xf32>
    %41 = arith.mulf %40, %39 : vector<1x16xf32>
    %42 = arith.addf %37, %41 : vector<1x16xf32>
    %43 = vector.extract_strided_slice %5 {offsets = [2, 0, 0], sizes = [1, 1, 16], strides = [1, 1, 1]} : vector<3x8x16xf32> to vector<1x1x16xf32>
    %44 = vector.shape_cast %43 : vector<1x1x16xf32> to vector<1x16xf32>
    %cst_18 = arith.constant 1.140000e-01 : f32
    %45 = vector.broadcast %cst_18 : f32 to vector<1x16xf32>
    %46 = arith.mulf %45, %44 : vector<1x16xf32>
    %47 = arith.addf %42, %46 : vector<1x16xf32>
    %c0_i32 = arith.constant 0 : i32
    %48 = arith.cmpi eq, %arg1, %c0_i32 : i32
    %cst_19 = arith.constant 0.000000e+00 : f32
    %cst_20 = arith.constant 1.000000e+00 : f32
    %49 = arith.select %48, %cst_19, %cst_20 : f32
    %50 = vector.broadcast %49 : f32 to vector<1x16xf32>
    %51 = arith.mulf %33, %50 : vector<1x16xf32>
    %c0_i32_21 = arith.constant 0 : i32
    %52 = arith.cmpi eq, %arg1, %c0_i32_21 : i32
    %cst_22 = arith.constant 0.000000e+00 : f32
    %cst_23 = arith.constant 1.000000e+00 : f32
    %53 = arith.select %52, %cst_22, %cst_23 : f32
    %54 = vector.broadcast %53 : f32 to vector<1x16xf32>
    %55 = arith.mulf %47, %54 : vector<1x16xf32>
    %56 = tpu.concatenate %51, %19, %55 in 0 : vector<1x16xf32>, vector<16x16xf32>, vector<1x16xf32> -> vector<18x16xf32>
    %cst_24 = arith.constant 0.000000e+00 : f32
    %57 = vector.broadcast %cst_24 : f32 to vector<18x1xf32>
    %58 = vector.extract_strided_slice %56 {offsets = [0, 0], sizes = [18, 15], strides = [1, 1]} : vector<18x16xf32> to vector<18x15xf32>
    %59 = tpu.concatenate %57, %58 in 1 : vector<18x1xf32>, vector<18x15xf32> -> vector<18x16xf32>
    %60 = vector.extract_strided_slice %56 {offsets = [0, 1], sizes = [18, 15], strides = [1, 1]} : vector<18x16xf32> to vector<18x15xf32>
    %61 = tpu.concatenate %60, %57 in 1 : vector<18x15xf32>, vector<18x1xf32> -> vector<18x16xf32>
    %62 = arith.subf %59, %61 : vector<18x16xf32>
    %cst_25 = arith.constant 2.000000e+00 : f32
    %63 = vector.broadcast %cst_25 : f32 to vector<18x16xf32>
    %64 = arith.mulf %63, %56 : vector<18x16xf32>
    %65 = arith.addf %59, %64 : vector<18x16xf32>
    %66 = arith.addf %65, %61 : vector<18x16xf32>
    %67 = vector.extract_strided_slice %62 {offsets = [0, 0], sizes = [16, 16], strides = [1, 1]} : vector<18x16xf32> to vector<16x16xf32>
    %68 = vector.extract_strided_slice %62 {offsets = [1, 0], sizes = [16, 16], strides = [1, 1]} : vector<18x16xf32> to vector<16x16xf32>
    %cst_26 = arith.constant 2.000000e+00 : f32
    %69 = vector.broadcast %cst_26 : f32 to vector<16x16xf32>
    %70 = arith.mulf %69, %68 : vector<16x16xf32>
    %71 = arith.addf %67, %70 : vector<16x16xf32>
    %72 = vector.extract_strided_slice %62 {offsets = [2, 0], sizes = [16, 16], strides = [1, 1]} : vector<18x16xf32> to vector<16x16xf32>
    %73 = arith.addf %71, %72 : vector<16x16xf32>
    %74 = vector.extract_strided_slice %66 {offsets = [0, 0], sizes = [16, 16], strides = [1, 1]} : vector<18x16xf32> to vector<16x16xf32>
    %75 = vector.extract_strided_slice %66 {offsets = [2, 0], sizes = [16, 16], strides = [1, 1]} : vector<18x16xf32> to vector<16x16xf32>
    %76 = arith.subf %74, %75 : vector<16x16xf32>
    %77 = arith.mulf %73, %73 : vector<16x16xf32>
    %78 = arith.mulf %76, %76 : vector<16x16xf32>
    %79 = arith.addf %77, %78 : vector<16x16xf32>
    %cst_27 = arith.constant 0.000000e+00 : f32
    %80 = vector.broadcast %cst_27 : f32 to vector<16x16xf32>
    %81 = arith.cmpf ogt, %79, %80 : vector<16x16xf32>
    %82 = math.rsqrt %79 : vector<16x16xf32>
    %83 = arith.mulf %79, %82 : vector<16x16xf32>
    %cst_28 = arith.constant 0.000000e+00 : f32
    %84 = vector.broadcast %cst_28 : f32 to vector<16x16xf32>
    %85 = arith.select %81, %83, %84 : vector<16x16xi1>, vector<16x16xf32>
    %cst_29 = arith.constant 1.000000e+00 : f32
    %86 = vector.broadcast %cst_29 : f32 to vector<16x16xf32>
    %87 = arith.subf %86, %85 : vector<16x16xf32>
    %88 = math.atan2 %73, %76 : vector<16x16xf32>
    %cst_30 = arith.constant 2.86478901 : f32
    %89 = vector.broadcast %cst_30 : f32 to vector<16x16xf32>
    %90 = arith.mulf %88, %89 : vector<16x16xf32>
    %91 = math.floor %90 : vector<16x16xf32>
    %92 = math.ceil %90 : vector<16x16xf32>
    %cst_31 = arith.constant 0.000000e+00 : f32
    %93 = vector.broadcast %cst_31 : f32 to vector<16x16xf32>
    %94 = arith.cmpf olt, %91, %93 : vector<16x16xf32>
    %cst_32 = arith.constant 9.000000e+00 : f32
    %95 = vector.broadcast %cst_32 : f32 to vector<16x16xf32>
    %96 = arith.addf %91, %95 : vector<16x16xf32>
    %97 = arith.select %94, %96, %91 : vector<16x16xi1>, vector<16x16xf32>
    %cst_33 = arith.constant 9.000000e+00 : f32
    %98 = vector.broadcast %cst_33 : f32 to vector<16x16xf32>
    %99 = arith.cmpf oge, %97, %98 : vector<16x16xf32>
    %cst_34 = arith.constant 9.000000e+00 : f32
    %100 = vector.broadcast %cst_34 : f32 to vector<16x16xf32>
    %101 = arith.subf %97, %100 : vector<16x16xf32>
    %102 = arith.select %99, %101, %97 : vector<16x16xi1>, vector<16x16xf32>
    %cst_35 = arith.constant 0.000000e+00 : f32
    %103 = vector.broadcast %cst_35 : f32 to vector<16x16xf32>
    %104 = arith.cmpf olt, %92, %103 : vector<16x16xf32>
    %cst_36 = arith.constant 9.000000e+00 : f32
    %105 = vector.broadcast %cst_36 : f32 to vector<16x16xf32>
    %106 = arith.addf %92, %105 : vector<16x16xf32>
    %107 = arith.select %104, %106, %92 : vector<16x16xi1>, vector<16x16xf32>
    %cst_37 = arith.constant 9.000000e+00 : f32
    %108 = vector.broadcast %cst_37 : f32 to vector<16x16xf32>
    %109 = arith.cmpf oge, %107, %108 : vector<16x16xf32>
    %cst_38 = arith.constant 9.000000e+00 : f32
    %110 = vector.broadcast %cst_38 : f32 to vector<16x16xf32>
    %111 = arith.subf %107, %110 : vector<16x16xf32>
    %112 = arith.select %109, %111, %107 : vector<16x16xi1>, vector<16x16xf32>
    %c0_39 = arith.constant 0 : index
    %c0_40 = arith.constant 0 : index
    %113 = vector.load %arg5[%c0_39, %c0_40] : memref<2x16xf32, #tpu.memory_space<vmem>>, vector<2x16xf32>
    %c0_41 = arith.constant 0 : index
    %c0_42 = arith.constant 0 : index
    %114 = vector.load %arg6[%c0_41, %c0_42] : memref<16x2xf32, #tpu.memory_space<vmem>>, vector<16x2xf32>
    %cst_43 = arith.constant 0.000000e+00 : f32
    %115 = vector.broadcast %cst_43 : f32 to vector<16x16xf32>
    %116 = arith.cmpf oeq, %102, %115 : vector<16x16xf32>
    %cst_44 = arith.constant 0.000000e+00 : f32
    %117 = vector.broadcast %cst_44 : f32 to vector<16x16xf32>
    %118 = arith.select %116, %85, %117 : vector<16x16xi1>, vector<16x16xf32>
    %cst_45 = arith.constant 0.000000e+00 : f32
    %119 = vector.broadcast %cst_45 : f32 to vector<16x16xf32>
    %120 = arith.cmpf oeq, %112, %119 : vector<16x16xf32>
    %cst_46 = arith.constant 0.000000e+00 : f32
    %121 = vector.broadcast %cst_46 : f32 to vector<16x16xf32>
    %122 = arith.select %120, %87, %121 : vector<16x16xi1>, vector<16x16xf32>
    %123 = arith.addf %118, %122 : vector<16x16xf32>
    %cst_47 = arith.constant dense<0.000000e+00> : vector<2x16xf32>
    %124 = tpu.matmul %113, %123, %cst_47 {dimension_numbers = #tpu.dot_dimension_numbers<[1], [0], [0], [1], [0, 0, 1, 1], [], []>, precision = #tpu.contract_precision<fp32>} : vector<2x16xf32>, vector<16x16xf32>, vector<2x16xf32> -> vector<2x16xf32>
    %cst_48 = arith.constant dense<0.000000e+00> : vector<2x2xf32>
    %125 = tpu.matmul %124, %114, %cst_48 {dimension_numbers = #tpu.dot_dimension_numbers<[1], [0], [0], [1], [0, 0, 1, 1], [], []>, precision = #tpu.contract_precision<fp32>} : vector<2x16xf32>, vector<16x2xf32>, vector<2x2xf32> -> vector<2x2xf32>
    %c0_49 = arith.constant 0 : index
    %c0_50 = arith.constant 0 : index
    %c0_51 = arith.constant 0 : index
    %c0_52 = arith.constant 0 : index
    %126 = vector.load %arg7[%c0_49, %c0_50, %c0_51, %c0_52] : memref<1x9x2x2xf32, #tpu.memory_space<vmem>>, vector<1x1x2x2xf32>
    %127 = vector.shape_cast %126 : vector<1x1x2x2xf32> to vector<2x2xf32>
    %128 = vector.shape_cast %125 : vector<2x2xf32> to vector<1x1x2x2xf32>
    tpu.vector_store %arg7[%c0_49, %c0_50, %c0_51, %c0_52], %128 {strides = array<i32>} : memref<1x9x2x2xf32, #tpu.memory_space<vmem>>, vector<1x1x2x2xf32>,
    %cst_53 = arith.constant 1.000000e+00 : f32
    %129 = vector.broadcast %cst_53 : f32 to vector<16x16xf32>
    %130 = arith.cmpf oeq, %102, %129 : vector<16x16xf32>
    %cst_54 = arith.constant 0.000000e+00 : f32
    %131 = vector.broadcast %cst_54 : f32 to vector<16x16xf32>
    %132 = arith.select %130, %85, %131 : vector<16x16xi1>, vector<16x16xf32>
    %cst_55 = arith.constant 1.000000e+00 : f32
    %133 = vector.broadcast %cst_55 : f32 to vector<16x16xf32>
    %134 = arith.cmpf oeq, %112, %133 : vector<16x16xf32>
    %cst_56 = arith.constant 0.000000e+00 : f32
    %135 = vector.broadcast %cst_56 : f32 to vector<16x16xf32>
    %136 = arith.select %134, %87, %135 : vector<16x16xi1>, vector<16x16xf32>
    %137 = arith.addf %132, %136 : vector<16x16xf32>
    %cst_57 = arith.constant dense<0.000000e+00> : vector<2x16xf32>
    %138 = tpu.matmul %113, %137, %cst_57 {dimension_numbers = #tpu.dot_dimension_numbers<[1], [0], [0], [1], [0, 0, 1, 1], [], []>, precision = #tpu.contract_precision<fp32>} : vector<2x16xf32>, vector<16x16xf32>, vector<2x16xf32> -> vector<2x16xf32>
    %cst_58 = arith.constant dense<0.000000e+00> : vector<2x2xf32>
    %139 = tpu.matmul %138, %114, %cst_58 {dimension_numbers = #tpu.dot_dimension_numbers<[1], [0], [0], [1], [0, 0, 1, 1], [], []>, precision = #tpu.contract_precision<fp32>} : vector<2x16xf32>, vector<16x2xf32>, vector<2x2xf32> -> vector<2x2xf32>
    %c0_59 = arith.constant 0 : index
    %c1 = arith.constant 1 : index
    %c0_60 = arith.constant 0 : index
    %c0_61 = arith.constant 0 : index
    %140 = vector.load %arg7[%c0_59, %c1, %c0_60, %c0_61] : memref<1x9x2x2xf32, #tpu.memory_space<vmem>>, vector<1x1x2x2xf32>
    %141 = vector.shape_cast %140 : vector<1x1x2x2xf32> to vector<2x2xf32>
    %142 = vector.shape_cast %139 : vector<2x2xf32> to vector<1x1x2x2xf32>
    tpu.vector_store %arg7[%c0_59, %c1, %c0_60, %c0_61], %142 {strides = array<i32>} : memref<1x9x2x2xf32, #tpu.memory_space<vmem>>, vector<1x1x2x2xf32>,
    %cst_62 = arith.constant 2.000000e+00 : f32
    %143 = vector.broadcast %cst_62 : f32 to vector<16x16xf32>
    %144 = arith.cmpf oeq, %102, %143 : vector<16x16xf32>
    %cst_63 = arith.constant 0.000000e+00 : f32
    %145 = vector.broadcast %cst_63 : f32 to vector<16x16xf32>
    %146 = arith.select %144, %85, %145 : vector<16x16xi1>, vector<16x16xf32>
    %cst_64 = arith.constant 2.000000e+00 : f32
    %147 = vector.broadcast %cst_64 : f32 to vector<16x16xf32>
    %148 = arith.cmpf oeq, %112, %147 : vector<16x16xf32>
    %cst_65 = arith.constant 0.000000e+00 : f32
    %149 = vector.broadcast %cst_65 : f32 to vector<16x16xf32>
    %150 = arith.select %148, %87, %149 : vector<16x16xi1>, vector<16x16xf32>
    %151 = arith.addf %146, %150 : vector<16x16xf32>
    %cst_66 = arith.constant dense<0.000000e+00> : vector<2x16xf32>
    %152 = tpu.matmul %113, %151, %cst_66 {dimension_numbers = #tpu.dot_dimension_numbers<[1], [0], [0], [1], [0, 0, 1, 1], [], []>, precision = #tpu.contract_precision<fp32>} : vector<2x16xf32>, vector<16x16xf32>, vector<2x16xf32> -> vector<2x16xf32>
    %cst_67 = arith.constant dense<0.000000e+00> : vector<2x2xf32>
    %153 = tpu.matmul %152, %114, %cst_67 {dimension_numbers = #tpu.dot_dimension_numbers<[1], [0], [0], [1], [0, 0, 1, 1], [], []>, precision = #tpu.contract_precision<fp32>} : vector<2x16xf32>, vector<16x2xf32>, vector<2x2xf32> -> vector<2x2xf32>
    %c0_68 = arith.constant 0 : index
    %c2 = arith.constant 2 : index
    %c0_69 = arith.constant 0 : index
    %c0_70 = arith.constant 0 : index
    %154 = vector.load %arg7[%c0_68, %c2, %c0_69, %c0_70] : memref<1x9x2x2xf32, #tpu.memory_space<vmem>>, vector<1x1x2x2xf32>
    %155 = vector.shape_cast %154 : vector<1x1x2x2xf32> to vector<2x2xf32>
    %156 = vector.shape_cast %153 : vector<2x2xf32> to vector<1x1x2x2xf32>
    tpu.vector_store %arg7[%c0_68, %c2, %c0_69, %c0_70], %156 {strides = array<i32>} : memref<1x9x2x2xf32, #tpu.memory_space<vmem>>, vector<1x1x2x2xf32>,
    %cst_71 = arith.constant 3.000000e+00 : f32
    %157 = vector.broadcast %cst_71 : f32 to vector<16x16xf32>
    %158 = arith.cmpf oeq, %102, %157 : vector<16x16xf32>
    %cst_72 = arith.constant 0.000000e+00 : f32
    %159 = vector.broadcast %cst_72 : f32 to vector<16x16xf32>
    %160 = arith.select %158, %85, %159 : vector<16x16xi1>, vector<16x16xf32>
    %cst_73 = arith.constant 3.000000e+00 : f32
    %161 = vector.broadcast %cst_73 : f32 to vector<16x16xf32>
    %162 = arith.cmpf oeq, %112, %161 : vector<16x16xf32>
    %cst_74 = arith.constant 0.000000e+00 : f32
    %163 = vector.broadcast %cst_74 : f32 to vector<16x16xf32>
    %164 = arith.select %162, %87, %163 : vector<16x16xi1>, vector<16x16xf32>
    %165 = arith.addf %160, %164 : vector<16x16xf32>
    %cst_75 = arith.constant dense<0.000000e+00> : vector<2x16xf32>
    %166 = tpu.matmul %113, %165, %cst_75 {dimension_numbers = #tpu.dot_dimension_numbers<[1], [0], [0], [1], [0, 0, 1, 1], [], []>, precision = #tpu.contract_precision<fp32>} : vector<2x16xf32>, vector<16x16xf32>, vector<2x16xf32> -> vector<2x16xf32>
    %cst_76 = arith.constant dense<0.000000e+00> : vector<2x2xf32>
    %167 = tpu.matmul %166, %114, %cst_76 {dimension_numbers = #tpu.dot_dimension_numbers<[1], [0], [0], [1], [0, 0, 1, 1], [], []>, precision = #tpu.contract_precision<fp32>} : vector<2x16xf32>, vector<16x2xf32>, vector<2x2xf32> -> vector<2x2xf32>
    %c0_77 = arith.constant 0 : index
    %c3 = arith.constant 3 : index
    %c0_78 = arith.constant 0 : index
    %c0_79 = arith.constant 0 : index
    %168 = vector.load %arg7[%c0_77, %c3, %c0_78, %c0_79] : memref<1x9x2x2xf32, #tpu.memory_space<vmem>>, vector<1x1x2x2xf32>
    %169 = vector.shape_cast %168 : vector<1x1x2x2xf32> to vector<2x2xf32>
    %170 = vector.shape_cast %167 : vector<2x2xf32> to vector<1x1x2x2xf32>
    tpu.vector_store %arg7[%c0_77, %c3, %c0_78, %c0_79], %170 {strides = array<i32>} : memref<1x9x2x2xf32, #tpu.memory_space<vmem>>, vector<1x1x2x2xf32>,
    %cst_80 = arith.constant 4.000000e+00 : f32
    %171 = vector.broadcast %cst_80 : f32 to vector<16x16xf32>
    %172 = arith.cmpf oeq, %102, %171 : vector<16x16xf32>
    %cst_81 = arith.constant 0.000000e+00 : f32
    %173 = vector.broadcast %cst_81 : f32 to vector<16x16xf32>
    %174 = arith.select %172, %85, %173 : vector<16x16xi1>, vector<16x16xf32>
    %cst_82 = arith.constant 4.000000e+00 : f32
    %175 = vector.broadcast %cst_82 : f32 to vector<16x16xf32>
    %176 = arith.cmpf oeq, %112, %175 : vector<16x16xf32>
    %cst_83 = arith.constant 0.000000e+00 : f32
    %177 = vector.broadcast %cst_83 : f32 to vector<16x16xf32>
    %178 = arith.select %176, %87, %177 : vector<16x16xi1>, vector<16x16xf32>
    %179 = arith.addf %174, %178 : vector<16x16xf32>
    %cst_84 = arith.constant dense<0.000000e+00> : vector<2x16xf32>
    %180 = tpu.matmul %113, %179, %cst_84 {dimension_numbers = #tpu.dot_dimension_numbers<[1], [0], [0], [1], [0, 0, 1, 1], [], []>, precision = #tpu.contract_precision<fp32>} : vector<2x16xf32>, vector<16x16xf32>, vector<2x16xf32> -> vector<2x16xf32>
    %cst_85 = arith.constant dense<0.000000e+00> : vector<2x2xf32>
    %181 = tpu.matmul %180, %114, %cst_85 {dimension_numbers = #tpu.dot_dimension_numbers<[1], [0], [0], [1], [0, 0, 1, 1], [], []>, precision = #tpu.contract_precision<fp32>} : vector<2x16xf32>, vector<16x2xf32>, vector<2x2xf32> -> vector<2x2xf32>
    %c0_86 = arith.constant 0 : index
    %c4 = arith.constant 4 : index
    %c0_87 = arith.constant 0 : index
    %c0_88 = arith.constant 0 : index
    %182 = vector.load %arg7[%c0_86, %c4, %c0_87, %c0_88] : memref<1x9x2x2xf32, #tpu.memory_space<vmem>>, vector<1x1x2x2xf32>
    %183 = vector.shape_cast %182 : vector<1x1x2x2xf32> to vector<2x2xf32>
    %184 = vector.shape_cast %181 : vector<2x2xf32> to vector<1x1x2x2xf32>
    tpu.vector_store %arg7[%c0_86, %c4, %c0_87, %c0_88], %184 {strides = array<i32>} : memref<1x9x2x2xf32, #tpu.memory_space<vmem>>, vector<1x1x2x2xf32>,
    %cst_89 = arith.constant 5.000000e+00 : f32
    %185 = vector.broadcast %cst_89 : f32 to vector<16x16xf32>
    %186 = arith.cmpf oeq, %102, %185 : vector<16x16xf32>
    %cst_90 = arith.constant 0.000000e+00 : f32
    %187 = vector.broadcast %cst_90 : f32 to vector<16x16xf32>
    %188 = arith.select %186, %85, %187 : vector<16x16xi1>, vector<16x16xf32>
    %cst_91 = arith.constant 5.000000e+00 : f32
    %189 = vector.broadcast %cst_91 : f32 to vector<16x16xf32>
    %190 = arith.cmpf oeq, %112, %189 : vector<16x16xf32>
    %cst_92 = arith.constant 0.000000e+00 : f32
    %191 = vector.broadcast %cst_92 : f32 to vector<16x16xf32>
    %192 = arith.select %190, %87, %191 : vector<16x16xi1>, vector<16x16xf32>
    %193 = arith.addf %188, %192 : vector<16x16xf32>
    %cst_93 = arith.constant dense<0.000000e+00> : vector<2x16xf32>
    %194 = tpu.matmul %113, %193, %cst_93 {dimension_numbers = #tpu.dot_dimension_numbers<[1], [0], [0], [1], [0, 0, 1, 1], [], []>, precision = #tpu.contract_precision<fp32>} : vector<2x16xf32>, vector<16x16xf32>, vector<2x16xf32> -> vector<2x16xf32>
    %cst_94 = arith.constant dense<0.000000e+00> : vector<2x2xf32>
    %195 = tpu.matmul %194, %114, %cst_94 {dimension_numbers = #tpu.dot_dimension_numbers<[1], [0], [0], [1], [0, 0, 1, 1], [], []>, precision = #tpu.contract_precision<fp32>} : vector<2x16xf32>, vector<16x2xf32>, vector<2x2xf32> -> vector<2x2xf32>
    %c0_95 = arith.constant 0 : index
    %c5 = arith.constant 5 : index
    %c0_96 = arith.constant 0 : index
    %c0_97 = arith.constant 0 : index
    %196 = vector.load %arg7[%c0_95, %c5, %c0_96, %c0_97] : memref<1x9x2x2xf32, #tpu.memory_space<vmem>>, vector<1x1x2x2xf32>
    %197 = vector.shape_cast %196 : vector<1x1x2x2xf32> to vector<2x2xf32>
    %198 = vector.shape_cast %195 : vector<2x2xf32> to vector<1x1x2x2xf32>
    tpu.vector_store %arg7[%c0_95, %c5, %c0_96, %c0_97], %198 {strides = array<i32>} : memref<1x9x2x2xf32, #tpu.memory_space<vmem>>, vector<1x1x2x2xf32>,
    %cst_98 = arith.constant 6.000000e+00 : f32
    %199 = vector.broadcast %cst_98 : f32 to vector<16x16xf32>
    %200 = arith.cmpf oeq, %102, %199 : vector<16x16xf32>
    %cst_99 = arith.constant 0.000000e+00 : f32
    %201 = vector.broadcast %cst_99 : f32 to vector<16x16xf32>
    %202 = arith.select %200, %85, %201 : vector<16x16xi1>, vector<16x16xf32>
    %cst_100 = arith.constant 6.000000e+00 : f32
    %203 = vector.broadcast %cst_100 : f32 to vector<16x16xf32>
    %204 = arith.cmpf oeq, %112, %203 : vector<16x16xf32>
    %cst_101 = arith.constant 0.000000e+00 : f32
    %205 = vector.broadcast %cst_101 : f32 to vector<16x16xf32>
    %206 = arith.select %204, %87, %205 : vector<16x16xi1>, vector<16x16xf32>
    %207 = arith.addf %202, %206 : vector<16x16xf32>
    %cst_102 = arith.constant dense<0.000000e+00> : vector<2x16xf32>
    %208 = tpu.matmul %113, %207, %cst_102 {dimension_numbers = #tpu.dot_dimension_numbers<[1], [0], [0], [1], [0, 0, 1, 1], [], []>, precision = #tpu.contract_precision<fp32>} : vector<2x16xf32>, vector<16x16xf32>, vector<2x16xf32> -> vector<2x16xf32>
    %cst_103 = arith.constant dense<0.000000e+00> : vector<2x2xf32>
    %209 = tpu.matmul %208, %114, %cst_103 {dimension_numbers = #tpu.dot_dimension_numbers<[1], [0], [0], [1], [0, 0, 1, 1], [], []>, precision = #tpu.contract_precision<fp32>} : vector<2x16xf32>, vector<16x2xf32>, vector<2x2xf32> -> vector<2x2xf32>
    %c0_104 = arith.constant 0 : index
    %c6 = arith.constant 6 : index
    %c0_105 = arith.constant 0 : index
    %c0_106 = arith.constant 0 : index
    %210 = vector.load %arg7[%c0_104, %c6, %c0_105, %c0_106] : memref<1x9x2x2xf32, #tpu.memory_space<vmem>>, vector<1x1x2x2xf32>
    %211 = vector.shape_cast %210 : vector<1x1x2x2xf32> to vector<2x2xf32>
    %212 = vector.shape_cast %209 : vector<2x2xf32> to vector<1x1x2x2xf32>
    tpu.vector_store %arg7[%c0_104, %c6, %c0_105, %c0_106], %212 {strides = array<i32>} : memref<1x9x2x2xf32, #tpu.memory_space<vmem>>, vector<1x1x2x2xf32>,
    %cst_107 = arith.constant 7.000000e+00 : f32
    %213 = vector.broadcast %cst_107 : f32 to vector<16x16xf32>
    %214 = arith.cmpf oeq, %102, %213 : vector<16x16xf32>
    %cst_108 = arith.constant 0.000000e+00 : f32
    %215 = vector.broadcast %cst_108 : f32 to vector<16x16xf32>
    %216 = arith.select %214, %85, %215 : vector<16x16xi1>, vector<16x16xf32>
    %cst_109 = arith.constant 7.000000e+00 : f32
    %217 = vector.broadcast %cst_109 : f32 to vector<16x16xf32>
    %218 = arith.cmpf oeq, %112, %217 : vector<16x16xf32>
    %cst_110 = arith.constant 0.000000e+00 : f32
    %219 = vector.broadcast %cst_110 : f32 to vector<16x16xf32>
    %220 = arith.select %218, %87, %219 : vector<16x16xi1>, vector<16x16xf32>
    %221 = arith.addf %216, %220 : vector<16x16xf32>
    %cst_111 = arith.constant dense<0.000000e+00> : vector<2x16xf32>
    %222 = tpu.matmul %113, %221, %cst_111 {dimension_numbers = #tpu.dot_dimension_numbers<[1], [0], [0], [1], [0, 0, 1, 1], [], []>, precision = #tpu.contract_precision<fp32>} : vector<2x16xf32>, vector<16x16xf32>, vector<2x16xf32> -> vector<2x16xf32>
    %cst_112 = arith.constant dense<0.000000e+00> : vector<2x2xf32>
    %223 = tpu.matmul %222, %114, %cst_112 {dimension_numbers = #tpu.dot_dimension_numbers<[1], [0], [0], [1], [0, 0, 1, 1], [], []>, precision = #tpu.contract_precision<fp32>} : vector<2x16xf32>, vector<16x2xf32>, vector<2x2xf32> -> vector<2x2xf32>
    %c0_113 = arith.constant 0 : index
    %c7 = arith.constant 7 : index
    %c0_114 = arith.constant 0 : index
    %c0_115 = arith.constant 0 : index
    %224 = vector.load %arg7[%c0_113, %c7, %c0_114, %c0_115] : memref<1x9x2x2xf32, #tpu.memory_space<vmem>>, vector<1x1x2x2xf32>
    %225 = vector.shape_cast %224 : vector<1x1x2x2xf32> to vector<2x2xf32>
    %226 = vector.shape_cast %223 : vector<2x2xf32> to vector<1x1x2x2xf32>
    tpu.vector_store %arg7[%c0_113, %c7, %c0_114, %c0_115], %226 {strides = array<i32>} : memref<1x9x2x2xf32, #tpu.memory_space<vmem>>, vector<1x1x2x2xf32>,
    %cst_116 = arith.constant 8.000000e+00 : f32
    %227 = vector.broadcast %cst_116 : f32 to vector<16x16xf32>
    %228 = arith.cmpf oeq, %102, %227 : vector<16x16xf32>
    %cst_117 = arith.constant 0.000000e+00 : f32
    %229 = vector.broadcast %cst_117 : f32 to vector<16x16xf32>
    %230 = arith.select %228, %85, %229 : vector<16x16xi1>, vector<16x16xf32>
    %cst_118 = arith.constant 8.000000e+00 : f32
    %231 = vector.broadcast %cst_118 : f32 to vector<16x16xf32>
    %232 = arith.cmpf oeq, %112, %231 : vector<16x16xf32>
    %cst_119 = arith.constant 0.000000e+00 : f32
    %233 = vector.broadcast %cst_119 : f32 to vector<16x16xf32>
    %234 = arith.select %232, %87, %233 : vector<16x16xi1>, vector<16x16xf32>
    %235 = arith.addf %230, %234 : vector<16x16xf32>
    %cst_120 = arith.constant dense<0.000000e+00> : vector<2x16xf32>
    %236 = tpu.matmul %113, %235, %cst_120 {dimension_numbers = #tpu.dot_dimension_numbers<[1], [0], [0], [1], [0, 0, 1, 1], [], []>, precision = #tpu.contract_precision<fp32>} : vector<2x16xf32>, vector<16x16xf32>, vector<2x16xf32> -> vector<2x16xf32>
    %cst_121 = arith.constant dense<0.000000e+00> : vector<2x2xf32>
    %237 = tpu.matmul %236, %114, %cst_121 {dimension_numbers = #tpu.dot_dimension_numbers<[1], [0], [0], [1], [0, 0, 1, 1], [], []>, precision = #tpu.contract_precision<fp32>} : vector<2x16xf32>, vector<16x2xf32>, vector<2x2xf32> -> vector<2x2xf32>
    %c0_122 = arith.constant 0 : index
    %c8 = arith.constant 8 : index
    %c0_123 = arith.constant 0 : index
    %c0_124 = arith.constant 0 : index
    %238 = vector.load %arg7[%c0_122, %c8, %c0_123, %c0_124] : memref<1x9x2x2xf32, #tpu.memory_space<vmem>>, vector<1x1x2x2xf32>
    %239 = vector.shape_cast %238 : vector<1x1x2x2xf32> to vector<2x2xf32>
    %240 = vector.shape_cast %237 : vector<2x2xf32> to vector<1x1x2x2xf32>
    tpu.vector_store %arg7[%c0_122, %c8, %c0_123, %c0_124], %240 {strides = array<i32>} : memref<1x9x2x2xf32, #tpu.memory_space<vmem>>, vector<1x1x2x2xf32>,
    return
  }
  func.func @transform_0(%arg0: i32, %arg1: i32) -> (i32, i32, i32, i32) {
    %c0_i32 = arith.constant 0 : i32
    %c0_i32_0 = arith.constant 0 : i32
    %c0_i32_1 = arith.constant 0 : i32
    return %arg0, %c0_i32, %arg1, %c0_i32_0 : i32, i32, i32, i32
  }
  func.func @transform_1(%arg0: i32, %arg1: i32) -> (i32, i32, i32, i32) {
    %c2_i32 = arith.constant 2 : i32
    %0 = arith.muli %arg1, %c2_i32 : i32
    %c1_i32 = arith.constant 1 : i32
    %1 = arith.subi %0, %c1_i32 : i32
    %c0_i32 = arith.constant 0 : i32
    %2 = arith.maxsi %1, %c0_i32 : i32
    %c0_i32_0 = arith.constant 0 : i32
    %c0_i32_1 = arith.constant 0 : i32
    %c0_i32_2 = arith.constant 0 : i32
    return %arg0, %c0_i32_0, %2, %c0_i32_1 : i32, i32, i32, i32
  }
  func.func @transform_2(%arg0: i32, %arg1: i32) -> (i32, i32, i32, i32) {
    %c1_i32 = arith.constant 1 : i32
    %0 = arith.addi %arg1, %c1_i32 : i32
    %c2_i32 = arith.constant 2 : i32
    %1 = arith.muli %0, %c2_i32 : i32
    %c1_i32_0 = arith.constant 1 : i32
    %2 = arith.minsi %1, %c1_i32_0 : i32
    %c0_i32 = arith.constant 0 : i32
    %c0_i32_1 = arith.constant 0 : i32
    %c0_i32_2 = arith.constant 0 : i32
    return %arg0, %c0_i32, %2, %c0_i32_1 : i32, i32, i32, i32
  }
  func.func @transform_3(%arg0: i32, %arg1: i32) -> (i32, i32) {
    %c0_i32 = arith.constant 0 : i32
    %c0_i32_0 = arith.constant 0 : i32
    %c0_i32_1 = arith.constant 0 : i32
    return %c0_i32, %c0_i32_0 : i32, i32
  }
  func.func @transform_4(%arg0: i32, %arg1: i32) -> (i32, i32) {
    %c0_i32 = arith.constant 0 : i32
    %c0_i32_0 = arith.constant 0 : i32
    %c0_i32_1 = arith.constant 0 : i32
    return %c0_i32, %c0_i32_0 : i32, i32
  }
  func.func @transform_5(%arg0: i32, %arg1: i32) -> (i32, i32, i32, i32) {
    %c0_i32 = arith.constant 0 : i32
    %c0_i32_0 = arith.constant 0 : i32
    %c0_i32_1 = arith.constant 0 : i32
    return %arg0, %c0_i32, %arg1, %c0_i32_0 : i32, i32, i32, i32
  }
}

</mosaic_0001>

<llo_original>
// kernel: tpu_custom_call.1
$region0: #{tpu_custom_call.1}
  #allocation0 [shape = 'u32[]', space=smem, size = 0x4, offset = 0x4, fixed_abs, tag = 'smem constant byte address 0x4 - core index']
  #allocation1 [shape = 'u32[144,128]{1,0:T(1,128)}', space=vmem, size = 0x12000, scoped, tag = 'internal scratch']
  %s0 = inlined_call_operand.hbm [shape: f32[2,3,16,16], index: 0, kind: input, shape index: {}]
  %s1 = inlined_call_operand.hbm [shape: f32[2,3,16,16], index: 1, kind: input, shape index: {}]
  %s2 = inlined_call_operand.hbm [shape: f32[2,3,16,16], index: 2, kind: input, shape index: {}]
  %s3 = inlined_call_operand.vmem [shape: f32[2,16], index: 3, kind: input, shape index: {}]
  %s4 = inlined_call_operand.vmem [shape: f32[16,2], index: 4, kind: input, shape index: {}]
  %s5 = inlined_call_operand.vmem [shape: f32[2,9,2,2], index: 5, kind: output, shape index: {}]
  %s6 = sld [smem:[#allocation0]]
  $region65: #{tpu_custom_call.1} parent=0
    _
  %s8 = ssub.s32 1, %s6
  %s9 = scalar_select 0, %s8, %s6
  $region1: #{tpu_custom_call.1} parent=0
    #allocation2 [shape = 'u8[49152]{0}', space=vmem, size = 0xc000, scoped, tag = 'input window, operand 0']
    #allocation3 [shape = 's32[2]{0}', space=sflag, size = 0x8, scoped, tag = 'scoped memory for tpu_custom_call.1']
    #allocation4 [shape = 'u8[24576]{0}', space=vmem, size = 0x6000, scoped, tag = 'input window, operand 1']
    #allocation5 [shape = 's32[2]{0}', space=sflag, size = 0x8, scoped, tag = 'scoped memory for tpu_custom_call.1']
    #allocation6 [shape = 'u8[24576]{0}', space=vmem, size = 0x6000, scoped, tag = 'input window, operand 2']
    %10 = vsyncpa [#allocation3], 0
    %s11 = scalar_lea.sflag [#allocation3], 1
    %12 = vsyncpa %s11, 0
    %13 = vsyncpa [#allocation5], 0
    %s14 = scalar_lea.sflag [#allocation5], 1
    %15 = vsyncpa %s14, 0
    loop: start=0, step=1, limit=4
    $region2: #{tpu_custom_call.1} parent=1 // loop_pre_header
      _
    $region3: #{tpu_custom_call.1} parent=1 // loop_header
      %s17 = sphi 0, %s21
      %p18 = scmp.ge.s32.totalorder %s17, 4
      %s24 = sphi 0, %s36
      %s25 = sphi 0, %s32
      %s26 = sphi 0, %s24
      %s27 = sphi 0, %s25
      %s28 = sphi 0, %s26
      %s29 = sphi 0, %s27
      %s41 = sphi 0, %s43
      %s44 = sphi 0, %s41
      %s45 = sphi 0, %s44
      %s61 = sphi 0, %s45
      %s77 = sphi 0, %s79
      %s80 = sphi 0, %s77
      %s81 = sphi 0, %s80
      %s97 = sphi 0, %s81
      %s113 = sphi 0, %s115
      %s116 = sphi 0, %s113
      %s117 = sphi 0, %s116
      %s133 = sphi 0, %s117
      %s137 = sphi 0, %s137
      %s139 = sphi 0, %s137
      %s140 = sphi 0, %s139
      %s154 = sphi 0, %s140
      %s158 = sphi 0, %s158
      %s160 = sphi 0, %s158
      %s161 = sphi 0, %s160
      %s175 = sphi 0, %s161
      %s183 = sphi 0, %s185
      %s186 = sphi 0, %s183
      %s187 = sphi 0, %s186
      %s203 = sphi 0, %s187
    $region4: #{tpu_custom_call.1} parent=1 // loop_header_branch
      %20 = sbr.rel (%p18) target = $region8
    $region5: #{tpu_custom_call.1} parent=1 // loop_body
      %s22 = ssub.s32 %s17, 1
      %s23 = ssub.s32 %s17, 2
      %s30 = sadd.s32 1, %s25
      %p31 = scmp.ge.s32.totalorder %s30, 1
      %s32 = scalar_select %p31, 0, %s30
      %s33 = sadd.s32 1, %s24
      %s34 = scalar_select %p31, %s33, %s24
      %p35 = scmp.ge.s32.totalorder %s34, 2
      %s36 = scalar_select %p35, 0, %s34
      %s37 = ssub.s32 %s24, %s36
      %s38 = ssub.s32 %s25, %s32
      %s39 = sor.u32 %s37, %s38
      %p40 = scmp.eq.s32.totalorder %s39, 0
      %s42 = sadd.s32 %s41, 1
      %s43 = scalar_select %p40, %s41, %s42
      %p46 = pneg %p40
      %p47 = scmp.eq.s32.totalorder %s17, 1
      %p48 = por %p46, %p47
      %p49 = scmp.ne.s32.totalorder %s41, %s44
      %p50 = scmp.eq.s32.totalorder %s17, 0
      %p51 = por %p49, %p50
      %p52 = scmp.ne.s32.totalorder %s41, %s44
      %p53 = scmp.eq.s32.totalorder %s22, 1
      %p54 = por %p52, %p53
      %p55 = scmp.ne.s32.totalorder %s44, %s45
      %p56 = scmp.eq.s32.totalorder %s22, 0
      %p57 = por %p55, %p56
      %p58 = scmp.ne.s32.totalorder %s44, %s45
      %p59 = scmp.eq.s32.totalorder %s23, 1
      %p60 = por %p58, %p59
      %p62 = scmp.ne.s32.totalorder %s45, %s61
      %p63 = scmp.eq.s32.totalorder %s23, 0
      %p64 = por %p62, %p63
      %s65 = smul.u32 %s25, 2
      %s66 = ssub.s32 %s65, 1
      %p67 = scmp.gt.s32.totalorder %s66, 0
      %s68 = scalar_select %p67, %s66, 0
      %s69 = smul.u32 %s32, 2
      %s70 = ssub.s32 %s69, 1
      %p71 = scmp.gt.s32.totalorder %s70, 0
      %s72 = scalar_select %p71, %s70, 0
      %s73 = ssub.s32 %s24, %s36
      %s74 = ssub.s32 %s68, %s72
      %s75 = sor.u32 %s73, %s74
      %p76 = scmp.eq.s32.totalorder %s75, 0
      %s78 = sadd.s32 %s77, 1
      %s79 = scalar_select %p76, %s77, %s78
      %p82 = pneg %p76
      %p83 = scmp.eq.s32.totalorder %s17, 1
      %p84 = por %p82, %p83
      %p85 = scmp.ne.s32.totalorder %s77, %s80
      %p86 = scmp.eq.s32.totalorder %s17, 0
      %p87 = por %p85, %p86
      %p88 = scmp.ne.s32.totalorder %s77, %s80
      %p89 = scmp.eq.s32.totalorder %s22, 1
      %p90 = por %p88, %p89
      %p91 = scmp.ne.s32.totalorder %s80, %s81
      %p92 = scmp.eq.s32.totalorder %s22, 0
      %p93 = por %p91, %p92
      %p94 = scmp.ne.s32.totalorder %s80, %s81
      %p95 = scmp.eq.s32.totalorder %s23, 1
      %p96 = por %p94, %p95
      %p98 = scmp.ne.s32.totalorder %s81, %s97
      %p99 = scmp.eq.s32.totalorder %s23, 0
      %p100 = por %p98, %p99
      %s101 = sadd.s32 %s25, 1
      %s102 = smul.u32 %s101, 2
      %p103 = scmp.lt.s32.totalorder %s102, 1
      %s104 = scalar_select %p103, %s102, 1
      %s105 = sadd.s32 %s32, 1
      %s106 = smul.u32 %s105, 2
      %p107 = scmp.lt.s32.totalorder %s106, 1
      %s108 = scalar_select %p107, %s106, 1
      %s109 = ssub.s32 %s24, %s36
      %s110 = ssub.s32 %s104, %s108
      %s111 = sor.u32 %s109, %s110
      %p112 = scmp.eq.s32.totalorder %s111, 0
      %s114 = sadd.s32 %s113, 1
      %s115 = scalar_select %p112, %s113, %s114
      %p118 = pneg %p112
      %p119 = scmp.eq.s32.totalorder %s17, 1
      %p120 = por %p118, %p119
      %p121 = scmp.ne.s32.totalorder %s113, %s116
      %p122 = scmp.eq.s32.totalorder %s17, 0
      %p123 = por %p121, %p122
      %p124 = scmp.ne.s32.totalorder %s113, %s116
      %p125 = scmp.eq.s32.totalorder %s22, 1
      %p126 = por %p124, %p125
      %p127 = scmp.ne.s32.totalorder %s116, %s117
      %p128 = scmp.eq.s32.totalorder %s22, 0
      %p129 = por %p127, %p128
      %p130 = scmp.ne.s32.totalorder %s116, %s117
      %p131 = scmp.eq.s32.totalorder %s23, 1
      %p132 = por %p130, %p131
      %p134 = scmp.ne.s32.totalorder %s117, %s133
      %p135 = scmp.eq.s32.totalorder %s23, 0
      %p136 = por %p134, %p135
      %s138 = sadd.s32 %s137, 1
      %p141 = scmp.eq.s32.totalorder %s17, 1
      %p142 = scmp.ne.s32.totalorder %s137, %s139
      %p143 = scmp.eq.s32.totalorder %s17, 0
      %p144 = por %p142, %p143
      %p145 = scmp.ne.s32.totalorder %s137, %s139
      %p146 = scmp.eq.s32.totalorder %s22, 1
      %p147 = por %p145, %p146
      %p148 = scmp.ne.s32.totalorder %s139, %s140
      %p149 = scmp.eq.s32.totalorder %s22, 0
      %p150 = por %p148, %p149
      %p151 = scmp.ne.s32.totalorder %s139, %s140
      %p152 = scmp.eq.s32.totalorder %s23, 1
      %p153 = por %p151, %p152
      %p155 = scmp.ne.s32.totalorder %s140, %s154
      %p156 = scmp.eq.s32.totalorder %s23, 0
      %p157 = por %p155, %p156
      %s159 = sadd.s32 %s158, 1
      %p162 = scmp.eq.s32.totalorder %s17, 1
      %p163 = scmp.ne.s32.totalorder %s158, %s160
      %p164 = scmp.eq.s32.totalorder %s17, 0
      %p165 = por %p163, %p164
      %p166 = scmp.ne.s32.totalorder %s158, %s160
      %p167 = scmp.eq.s32.totalorder %s22, 1
      %p168 = por %p166, %p167
      %p169 = scmp.ne.s32.totalorder %s160, %s161
      %p170 = scmp.eq.s32.totalorder %s22, 0
      %p171 = por %p169, %p170
      %p172 = scmp.ne.s32.totalorder %s160, %s161
      %p173 = scmp.eq.s32.totalorder %s23, 1
      %p174 = por %p172, %p173
      %p176 = scmp.ne.s32.totalorder %s161, %s175
      %p177 = scmp.eq.s32.totalorder %s23, 0
      %p178 = por %p176, %p177
      %s179 = ssub.s32 %s24, %s36
      %s180 = ssub.s32 %s25, %s32
      %s181 = sor.u32 %s179, %s180
      %p182 = scmp.eq.s32.totalorder %s181, 0
      %s184 = sadd.s32 %s183, 1
      %s185 = scalar_select %p182, %s183, %s184
      %p188 = pneg %p182
      %p189 = scmp.eq.s32.totalorder %s17, 1
      %p190 = por %p188, %p189
      %p191 = scmp.ne.s32.totalorder %s183, %s186
      %p192 = scmp.eq.s32.totalorder %s17, 0
      %p193 = por %p191, %p192
      %p194 = scmp.ne.s32.totalorder %s183, %s186
      %p195 = scmp.eq.s32.totalorder %s22, 1
      %p196 = por %p194, %p195
      %p197 = scmp.ne.s32.totalorder %s186, %s187
      %p198 = scmp.eq.s32.totalorder %s22, 0
      %p199 = por %p197, %p198
      %p200 = scmp.ne.s32.totalorder %s186, %s187
      %p201 = scmp.eq.s32.totalorder %s23, 1
      %p202 = por %p200, %p201
      %p204 = scmp.ne.s32.totalorder %s187, %s203
      %p205 = scmp.eq.s32.totalorder %s23, 0
      %p206 = por %p204, %p205
      %p207 = scmp.le.s32.totalorder 1, %s17
      %p208 = scmp.lt.s32.totalorder %s17, 3
      %p209 = pnand %p207, %p208
      %p210 = pneg %p209
      // Predicated region
      $region9: #{tpu_custom_call.1} parent=5 // pred_check
        _
      $region10: #{tpu_custom_call.1} parent=5 // pred_check_branch
        %212 = sbr.rel (%p209) target = $region12
      $region11: #{tpu_custom_call.1} parent=5 // pred_region
        %s213 = ssub.s32 %s17, 1
        // Predicated region
        $region13: #{tpu_custom_call.1} parent=11 // pred_check
          %p214 = pneg %p150
        $region14: #{tpu_custom_call.1} parent=11 // pred_check_branch
          %216 = sbr.rel (%p214) target = $region16
        $region15: #{tpu_custom_call.1} parent=11 // pred_region
          _
        $region16: #{tpu_custom_call.1} parent=11 // pred_fallthru
          _
        // Predicated region
        $region17: #{tpu_custom_call.1} parent=11 // pred_check
          %p217 = pneg %p171
        $region18: #{tpu_custom_call.1} parent=11 // pred_check_branch
          %219 = sbr.rel (%p217) target = $region20
        $region19: #{tpu_custom_call.1} parent=11 // pred_region
          _
        $region20: #{tpu_custom_call.1} parent=11 // pred_fallthru
          _
      $region12: #{tpu_custom_call.1} parent=5 // pred_fallthru
        _
      %p220 = scmp.lt.s32.totalorder %s17, 2
      // Predicated region
      $region21: #{tpu_custom_call.1} parent=5 // pred_check
        %p221 = pneg %p220
      $region22: #{tpu_custom_call.1} parent=5 // pred_check_branch
        %223 = sbr.rel (%p221) target = $region24
      $region23: #{tpu_custom_call.1} parent=5 // pred_region
        // Predicated region
        $region25: #{tpu_custom_call.1} parent=23 // pred_check
          %p224 = pneg %p51
        $region26: #{tpu_custom_call.1} parent=23 // pred_check_branch
          %226 = sbr.rel (%p224) target = $region28
        $region27: #{tpu_custom_call.1} parent=23 // pred_region
          %s227 = sand.u32 %s41, 1
          %s228 = scalar_lea.sflag [#allocation3], %s227
          %s229 = sand.u32 %s41, 1
          %s230 = smul.addr %s229, 48
          %s231 = scalar_lea.vmem [#allocation2], %s230
          %s232 = smul.u32 2, %s25
          %s234 = ssub.s32 768, 768
          %235 = vsyncadd %s228, %s234
          %s236 = smul.addr %s24, 6
          %s237 = sadd.s32 %s232, %s236
          %s238 = smul.addr %s237, 128
          %s239 = scalar_lea.hbm %s0, %s238
          %s240 = sshll.u32 %s231, 4
          %s241 = int_to_ptr.vmem [resolvable:$true] %s240
          %246 = dma.hbm_to_vmem [thread:$0]  %s239, 768, %s241, %s228, 128, 128, 8
        $region28: #{tpu_custom_call.1} parent=23 // pred_fallthru
          _
        // Predicated region
        $region29: #{tpu_custom_call.1} parent=23 // pred_check
          %p247 = pneg %p87
        $region30: #{tpu_custom_call.1} parent=23 // pred_check_branch
          %249 = sbr.rel (%p247) target = $region32
        $region31: #{tpu_custom_call.1} parent=23 // pred_region
          %s250 = sand.u32 %s17, 1
          %s251 = scalar_lea.sflag [#allocation5], %s250
          %s252 = sand.u32 %s77, 1
          %s253 = smul.addr %s252, 24
          %s254 = scalar_lea.vmem [#allocation4], %s253
          %s255 = smul.u32 %s25, 2
          %s256 = ssub.s32 %s255, 1
          %p257 = scmp.gt.s32.totalorder %s256, 0
          %s258 = scalar_select %p257, %s256, 0
          %s260 = ssub.s32 384, 384
          %261 = vsyncadd %s251, %s260
          %s262 = smul.addr %s24, 6
          %s263 = sadd.s32 %s258, %s262
          %s264 = smul.addr %s263, 128
          %s265 = scalar_lea.hbm %s1, %s264
          %s266 = sshll.u32 %s254, 4
          %s267 = int_to_ptr.vmem [resolvable:$true] %s266
          %272 = dma.hbm_to_vmem [thread:$0]  %s265, 384, %s267, %s251, 256, 128, 8
        $region32: #{tpu_custom_call.1} parent=23 // pred_fallthru
          _
        // Predicated region
        $region33: #{tpu_custom_call.1} parent=23 // pred_check
          %p273 = pneg %p123
        $region34: #{tpu_custom_call.1} parent=23 // pred_check_branch
          %275 = sbr.rel (%p273) target = $region36
        $region35: #{tpu_custom_call.1} parent=23 // pred_region
          %s276 = sand.u32 %s17, 1
          %s277 = scalar_lea.sflag [#allocation5], %s276
          %s278 = sand.u32 %s113, 1
          %s279 = smul.addr %s278, 24
          %s280 = scalar_lea.vmem [#allocation6], %s279
          %s281 = sadd.s32 %s25, 1
          %s282 = smul.u32 %s281, 2
          %p283 = scmp.lt.s32.totalorder %s282, 1
          %s284 = scalar_select %p283, %s282, 1
          %s286 = ssub.s32 384, 384
          %287 = vsyncadd %s277, %s286
          %s288 = smul.addr %s24, 6
          %s289 = sadd.s32 %s284, %s288
          %s290 = smul.addr %s289, 128
          %s291 = scalar_lea.hbm %s2, %s290
          %s292 = sshll.u32 %s280, 4
          %s293 = int_to_ptr.vmem [resolvable:$true] %s292
          %298 = dma.hbm_to_vmem [thread:$0]  %s291, 384, %s293, %s277, 256, 128, 8
        $region36: #{tpu_custom_call.1} parent=23 // pred_fallthru
          _
      $region24: #{tpu_custom_call.1} parent=5 // pred_fallthru
        _
      %p299 = scmp.le.s32.totalorder 1, %s17
      %p300 = scmp.lt.s32.totalorder %s17, 3
      %p301 = pnand %p299, %p300
      %p302 = pneg %p301
      // Predicated region
      $region37: #{tpu_custom_call.1} parent=5 // pred_check
        _
      $region38: #{tpu_custom_call.1} parent=5 // pred_check_branch
        %304 = sbr.rel (%p301) target = $region40
      $region39: #{tpu_custom_call.1} parent=5 // pred_region
        %s305 = ssub.s32 %s17, 1
        %s306 = sand.u32 %s44, 1
        %s307 = scalar_lea.sflag [#allocation3], %s306
        %s308 = sand.u32 %s44, 1
        %s309 = smul.addr %s308, 48
        %s310 = scalar_lea.vmem [#allocation2], %s309
        // Predicated region
        $region41: #{tpu_custom_call.1} parent=39 // pred_check
          %p311 = pneg %p57
        $region42: #{tpu_custom_call.1} parent=39 // pred_check_branch
          %313 = sbr.rel (%p311) target = $region44
        $region43: #{tpu_custom_call.1} parent=39 // pred_region
          %314 = dma.done %s307, 768
        $region44: #{tpu_custom_call.1} parent=39 // pred_fallthru
          _
        %s315 = sand.u32 %s22, 1
        %s316 = scalar_lea.sflag [#allocation5], %s315
        %s317 = sand.u32 %s80, 1
        %s318 = smul.addr %s317, 24
        %s319 = scalar_lea.vmem [#allocation4], %s318
        // Predicated region
        $region45: #{tpu_custom_call.1} parent=39 // pred_check
          %p320 = pneg %p93
        $region46: #{tpu_custom_call.1} parent=39 // pred_check_branch
          %322 = sbr.rel (%p320) target = $region48
        $region47: #{tpu_custom_call.1} parent=39 // pred_region
          %323 = dma.done %s316, 384
        $region48: #{tpu_custom_call.1} parent=39 // pred_fallthru
          _
        %s324 = sand.u32 %s22, 1
        %s325 = scalar_lea.sflag [#allocation5], %s324
        %s326 = sand.u32 %s116, 1
        %s327 = smul.addr %s326, 24
        %s328 = scalar_lea.vmem [#allocation6], %s327
        // Predicated region
        $region49: #{tpu_custom_call.1} parent=39 // pred_check
          %p329 = pneg %p129
        $region50: #{tpu_custom_call.1} parent=39 // pred_check_branch
          %331 = sbr.rel (%p329) target = $region52
        $region51: #{tpu_custom_call.1} parent=39 // pred_region
          %332 = dma.done %s325, 384
        $region52: #{tpu_custom_call.1} parent=39 // pred_fallthru
          _
        %s333 = sand.u32 %s44, 1
        %s334 = scalar_lea.sflag [#allocation3], %s333
        %s335 = sand.u32 %s44, 1
        %s336 = smul.addr %s335, 48
        %s337 = scalar_lea.vmem [#allocation2], %s336
        %p338 = pneg %p57
        %p339 = pneg %p54
        %s340 = sand.u32 %s22, 1
        %s341 = scalar_lea.sflag [#allocation5], %s340
        %s342 = sand.u32 %s80, 1
        %s343 = smul.addr %s342, 24
        %s344 = scalar_lea.vmem [#allocation4], %s343
        %p345 = pneg %p93
        %p346 = pneg %p90
        %s347 = sand.u32 %s22, 1
        %s348 = scalar_lea.sflag [#allocation5], %s347
        %s349 = sand.u32 %s116, 1
        %s350 = smul.addr %s349, 24
        %s351 = scalar_lea.vmem [#allocation6], %s350
        %p352 = pneg %p129
        %p353 = pneg %p126
        %p354 = pneg %p150
        %p355 = pneg %p147
        %p356 = pneg %p171
        %p357 = pneg %p168
        %p358 = pneg %p199
        %p359 = pneg %p196
        %p360 = scmp.lt.s32.totalorder %s26, 1
        %s361 = scalar_select %p360, %s26, 1
        %p362 = scmp.lt.s32.totalorder %s27, 0
        %s363 = scalar_select %p362, %s27, 0
        %s364 = smul.addr %s361, 9
        %s365 = sadd.s32 %s363, %s364
        %s366 = smul.addr %s365, 2
        %s367 = scalar_lea.vmem %s5, %s366
        %s368 = smul.u32 2, %s27
        %s369 = smul.u32 %s27, 2
        %s370 = ssub.s32 %s369, 1
        %p371 = scmp.gt.s32.totalorder %s370, 0
        %s372 = scalar_select %p371, %s370, 0
        %s373 = sadd.s32 %s27, 1
        %s374 = smul.u32 %s373, 2
        %p375 = scmp.lt.s32.totalorder %s374, 1
        %s376 = scalar_select %p375, %s374, 1
        %p377 = scmp.lt.s32.totalorder %s26, 1
        %s378 = scalar_select %p377, %s26, 1
        %p379 = scmp.lt.s32.totalorder %s27, 0
        %s380 = scalar_select %p379, %s27, 0
        %s381 = smul.addr %s378, 9
        %s382 = sadd.s32 %s380, %s381
        %s383 = smul.addr %s382, 2
        %s384 = scalar_lea.vmem %s5, %s383
        %v385 = vld [vmem:[%s310] sm:$0xff]
        %v386 = vld [vmem:[%s310 + $0x8] sm:$0xff]
        %v387 = vld [vmem:[%s310 + $0x10] sm:$0xff]
        %v388 = vld [vmem:[%s310 + $0x18] sm:$0xff]
        %v389 = vld [vmem:[%s310 + $0x20] sm:$0xff]
        %v390 = vld [vmem:[%s310 + $0x28] sm:$0xff]
        %v391 = vld [vmem:[%s319] sm:$0xff]
        %v392 = vld [vmem:[%s319 + $0x8] sm:$0xff]
        %v393 = vld [vmem:[%s319 + $0x10] sm:$0xff]
        %v394 = vld [vmem:[%s328] sm:$0xff]
        %v395 = vld [vmem:[%s328 + $0x8] sm:$0xff]
        %v396 = vld [vmem:[%s328 + $0x10] sm:$0xff]
        %v397 = vmul.f32 %v385, 0.2989
        %v398 = vmul.f32 %v386, 0.2989
        %v399 = vmul.f32 %v387, 0.587
        %v400 = vmul.f32 %v388, 0.587
        %v401 = vadd.f32 %v397, %v399
        %v402 = vadd.f32 %v398, %v400
        %v403 = vmul.f32 %v389, 0.114
        %v404 = vmul.f32 %v390, 0.114
        %v405 = vadd.f32 %v401, %v403
        %v406 = vadd.f32 %v402, %v404
        %v407 = vmul.f32 %v391, 0.2989
        %v408 = vmul.f32 %v392, 0.587
        %v409 = vadd.f32 %v407, %v408
        %v410 = vmul.f32 %v393, 0.114
        %v411 = vadd.f32 %v409, %v410
        %v412 = vmul.f32 %v394, 0.2989
        %v413 = vmul.f32 %v395, 0.587
        %v414 = vadd.f32 %v412, %v413
        %v415 = vmul.f32 %v396, 0.114
        %v416 = vadd.f32 %v414, %v415
        %p417 = scmp.eq.s32.totalorder %s27, 0
        %s418 = scalar_select %p417, 0.0, 1.0
        %v419 = vstv %s418
        %v420 = vmul.f32 %v411, %v419
        %v421 = vmul.f32 %v416, %v419
        %v423 = vrot.slane %v420, 7
        %vm427 = vcmask 1040384
        %v428 = vrot.slane %v405, 7
        %v429 = vrot.slane %v406, 7
        %v430 = vsel %vm427, %v428, %v429
        %v435 = vrot.slane %v421, 7
        %v437 = vsel %vm427, %v423, %v428
        %v438 = vsel %vm427, %v429, %v435
        %441 = vrot.lane.b32.xlu0 %v437, 1
        %v442 = vpop.permute.xlu0 %441
        %443 = vrot.lane.b32.xlu0 %v430, 1
        %v444 = vpop.permute.xlu0 %443
        %445 = vrot.lane.b32.xlu0 %v438, 1
        %v446 = vpop.permute.xlu0 %445
        %vm450 = vcmask 7168
        %v451 = vsel %vm450, 0.0, %v442
        %v452 = vsel %vm450, 0.0, %v444
        %v453 = vsel %vm450, 0.0, %v446
        %454 = vrot.lane.b32.xlu0 %v437, 127
        %v455 = vpop.permute.xlu0 %454
        %456 = vrot.lane.b32.xlu0 %v430, 127
        %v457 = vpop.permute.xlu0 %456
        %458 = vrot.lane.b32.xlu0 %v438, 127
        %v459 = vpop.permute.xlu0 %458
        %vm463 = vcmask 121856
        %v464 = vsel %vm463, %v455, 0.0
        %v465 = vsel %vm463, %v457, 0.0
        %v466 = vsel %vm463, %v459, 0.0
        %v467 = vsub.f32 %v451, %v464
        %v468 = vsub.f32 %v452, %v465
        %v469 = vsub.f32 %v453, %v466
        %v470 = vmul.f32 %v437, 2.0
        %v471 = vmul.f32 %v430, 2.0
        %v472 = vmul.f32 %v438, 2.0
        %v473 = vadd.f32 %v451, %v470
        %v474 = vadd.f32 %v452, %v471
        %v475 = vadd.f32 %v453, %v472
        %v476 = vadd.f32 %v473, %v464
        %v477 = vadd.f32 %v474, %v465
        %v478 = vadd.f32 %v475, %v466
        %v479 = vmul.f32 %v467, 2.0
        %v480 = vmul.f32 %v468, 2.0
        %v481 = vmul.f32 %v469, 2.0
        %vm485 = vcmask 1046528
        %v486 = vrot.slane %v479, 1
        %v487 = vrot.slane %v480, 1
        %v488 = vsel %vm485, %v486, %v487
        %v489 = vrot.slane %v481, 1
        %v490 = vsel %vm485, %v487, %v489
        %v493 = vadd.f32 %v467, %v488
        %v494 = vadd.f32 %v468, %v490
        %vm498 = vcmask 1045504
        %v499 = vrot.slane %v467, 2
        %v500 = vrot.slane %v468, 2
        %v501 = vsel %vm498, %v499, %v500
        %v502 = vrot.slane %v469, 2
        %v503 = vsel %vm498, %v500, %v502
        %v506 = vadd.f32 %v493, %v501
        %v507 = vadd.f32 %v494, %v503
        %v511 = vrot.slane %v476, 2
        %v512 = vrot.slane %v477, 2
        %v513 = vsel %vm498, %v511, %v512
        %v514 = vrot.slane %v478, 2
        %v515 = vsel %vm498, %v512, %v514
        %v518 = vsub.f32 %v476, %v513
        %v519 = vsub.f32 %v477, %v515
        %v520 = vmul.f32 %v506, %v506
        %v521 = vmul.f32 %v507, %v507
        %v522 = vmul.f32 %v518, %v518
        %v523 = vmul.f32 %v519, %v519
        %v524 = vadd.f32 %v520, %v522
        %v525 = vadd.f32 %v521, %v523
        %vm526 = vcmp.gt.f32.partialorder %v524, 0.0
        %vm527 = vcmp.gt.f32.partialorder %v525, 0.0
        %v528 = vrsqrt.pop %v524
        %v529 = vrsqrt.pop %v525
        %v530 = vmul.f32 %v524, %v528
        %v531 = vmul.f32 %v525, %v529
        %v532 = vsel %vm526, %v530, 0.0
        %v533 = vsel %vm527, %v531, 0.0
        %v534 = vsub.f32 1.0, %v532
        %v535 = vsub.f32 1.0, %v533
        %v536 = vand.u32 2147483647, %v518
        %v537 = vand.u32 2147483647, %v506
        %v538 = vmin.f32 %v536, %v537
        %v539 = vmax.f32 %v536, %v537
        %v540 = vrcp.pop %v539
        %v541 = vmul.f32 %v538, %v540
        %v542 = vmul.f32 %v541, %v541
        %v543 = vmul.f32 0.002785687, %v542
        %v544 = vadd.f32 %v543, -0.015866
        %v545 = vmul.f32 %v544, %v542
        %v546 = vadd.f32 %v545, 0.04247222
        %v547 = vmul.f32 %v546, %v542
        %v548 = vadd.f32 %v547, -0.074975304
        %v549 = vmul.f32 %v548, %v542
        %v550 = vadd.f32 %v549, 0.1064488
        %v551 = vmul.f32 %v550, %v542
        %v552 = vadd.f32 %v551, -0.14207031
        %v553 = vmul.f32 %v552, %v542
        %v554 = vadd.f32 %v553, 0.19993454
        %v555 = vmul.f32 %v554, %v542
        %v556 = vadd.f32 %v555, -0.33333147
        %v557 = vmul.f32 %v556, %v542
        %v558 = vmul.f32 %v557, %v541
        %v559 = vadd.f32 %v558, %v541
        %vm560 = vcmp.gt.f32.partialorder %v537, %v536
        %v561 = vsub.f32 1.5707964, %v559
        %v562 = vsel %vm560, %v561, %v559
        %vm563 = vcmp.lt.f32.partialorder %v518, 0.0
        %v564 = vsub.f32 3.1415927, %v562
        %v565 = vsel %vm563, %v564, %v562
        %vm566 = vcmp.lt.s32.totalorder %v518, 0
        %v567 = vsel %vm566, 3.1415927, 0.0
        %vm568 = vcmp.eq.f32.partialorder %v506, 0.0
        %v569 = vsel %vm568, %v567, %v565
        %vm570 = vcmp.ne.f32.partialorder %v518, %v518
        %vm571 = vcmp.ne.f32.partialorder %v506, %v506
        %vm572 = vmor %vm570, %vm571
        %v573 = vsel %vm572, nan, %v569
        %vm574 = vcmp.lt.f32.partialorder %v518, 0.0
        %v575 = vsel %vm574, 2.3561945, 0.7853982
        %vm576 = vcmp.eq.s32.totalorder %v536, inf
        %vm577 = vcmp.eq.s32.totalorder %v537, inf
        %vm578 = vmand %vm576, %vm577
        %v579 = vsel %vm578, %v575, %v573
        %v580 = vand.u32 2147483647, %v579
        %v581 = vand.u32 %v506, 2147483648
        %v582 = vor.u32 %v580, %v581
        %v583 = vand.u32 2147483647, %v519
        %v584 = vand.u32 2147483647, %v507
        %v585 = vmin.f32 %v583, %v584
        %v586 = vmax.f32 %v583, %v584
        %v587 = vrcp.pop %v586
        %v588 = vmul.f32 %v585, %v587
        %v589 = vmul.f32 %v588, %v588
        %v590 = vmul.f32 0.002785687, %v589
        %v591 = vadd.f32 %v590, -0.015866
        %v592 = vmul.f32 %v591, %v589
        %v593 = vadd.f32 %v592, 0.04247222
        %v594 = vmul.f32 %v593, %v589
        %v595 = vadd.f32 %v594, -0.074975304
        %v596 = vmul.f32 %v595, %v589
        %v597 = vadd.f32 %v596, 0.1064488
        %v598 = vmul.f32 %v597, %v589
        %v599 = vadd.f32 %v598, -0.14207031
        %v600 = vmul.f32 %v599, %v589
        %v601 = vadd.f32 %v600, 0.19993454
        %v602 = vmul.f32 %v601, %v589
        %v603 = vadd.f32 %v602, -0.33333147
        %v604 = vmul.f32 %v603, %v589
        %v605 = vmul.f32 %v604, %v588
        %v606 = vadd.f32 %v605, %v588
        %vm607 = vcmp.gt.f32.partialorder %v584, %v583
        %v608 = vsub.f32 1.5707964, %v606
        %v609 = vsel %vm607, %v608, %v606
        %vm610 = vcmp.lt.f32.partialorder %v519, 0.0
        %v611 = vsub.f32 3.1415927, %v609
        %v612 = vsel %vm610, %v611, %v609
        %vm613 = vcmp.lt.s32.totalorder %v519, 0
        %v614 = vsel %vm613, 3.1415927, 0.0
        %vm615 = vcmp.eq.f32.partialorder %v507, 0.0
        %v616 = vsel %vm615, %v614, %v612
        %vm617 = vcmp.ne.f32.partialorder %v519, %v519
        %vm618 = vcmp.ne.f32.partialorder %v507, %v507
        %vm619 = vmor %vm617, %vm618
        %v620 = vsel %vm619, nan, %v616
        %vm621 = vcmp.lt.f32.partialorder %v519, 0.0
        %v622 = vsel %vm621, 2.3561945, 0.7853982
        %vm623 = vcmp.eq.s32.totalorder %v583, inf
        %vm624 = vcmp.eq.s32.totalorder %v584, inf
        %vm625 = vmand %vm623, %vm624
        %v626 = vsel %vm625, %v622, %v620
        %v627 = vand.u32 2147483647, %v626
        %v628 = vand.u32 %v507, 2147483648
        %v629 = vor.u32 %v627, %v628
        %v630 = vmul.f32 %v582, 2.864789
        %v631 = vmul.f32 %v629, 2.864789
        %v632 = vfloor.f32 %v630
        %v633 = vfloor.f32 %v631
        %v634 = vceil.f32 %v630
        %v635 = vceil.f32 %v631
        %vm636 = vcmp.lt.f32.partialorder %v632, 0.0
        %vm637 = vcmp.lt.f32.partialorder %v633, 0.0
        %v638 = vadd.f32 %v632, 9.0
        %v639 = vadd.f32 %v633, 9.0
        %v640 = vsel %vm636, %v638, %v632
        %v641 = vsel %vm637, %v639, %v633
        %vm642 = vcmp.ge.f32.partialorder %v640, 9.0
        %vm643 = vcmp.ge.f32.partialorder %v641, 9.0
        %v644 = vsub.f32 %v640, 9.0
        %v645 = vsub.f32 %v641, 9.0
        %v646 = vsel %vm642, %v644, %v640
        %v647 = vsel %vm643, %v645, %v641
        %vm648 = vcmp.lt.f32.partialorder %v634, 0.0
        %vm649 = vcmp.lt.f32.partialorder %v635, 0.0
        %v650 = vadd.f32 %v634, 9.0
        %v651 = vadd.f32 %v635, 9.0
        %v652 = vsel %vm648, %v650, %v634
        %v653 = vsel %vm649, %v651, %v635
        %vm654 = vcmp.ge.f32.partialorder %v652, 9.0
        %vm655 = vcmp.ge.f32.partialorder %v653, 9.0
        %v656 = vsub.f32 %v652, 9.0
        %v657 = vsub.f32 %v653, 9.0
        %v658 = vsel %vm654, %v656, %v652
        %v659 = vsel %vm655, %v657, %v653
        %v660 = vld [vmem:[%s3] sm:$0x3]
        %v661 = vld [vmem:[%s4] sm:$0xff]
        %v662 = vld [vmem:[%s4 + $0x8] sm:$0xff]
        %vm663 = vcmp.eq.f32.partialorder %v646, 0.0
        %vm664 = vcmp.eq.f32.partialorder %v647, 0.0
        %v665 = vsel %vm663, %v532, 0.0
        %v666 = vsel %vm664, %v533, 0.0
        %vm667 = vcmp.eq.f32.partialorder %v658, 0.0
        %vm668 = vcmp.eq.f32.partialorder %v659, 0.0
        %v669 = vsel %vm667, %v534, 0.0
        %v670 = vsel %vm668, %v535, 0.0
        %v671 = vadd.f32 %v665, %v669
        %v672 = vadd.f32 %v666, %v670
        %vm673 = vcmask 130048
        %v675 = vsel %vm673, %v660, 0
        %677 = vmatprep.subr.mxu0 0.0
        %v678 = vand.u32 %v671, 4294901760
        %679 = vmatpush1.msra.mxu0 %v678
        %680 = vmatprep.subr.mxu0 0.0
        %v681 = vand.u32 %v672, 4294901760
        %682 = vmatpush1.msra.mxu0 %v681
        %683 = vmatprep.subr.mxu0 0.0
        %684 = vmatpush1.msra.mxu0 0.0
        %685 = vmatprep.subr.mxu0 0.0
        %686 = vmatpush1.msra.mxu0 0.0
        %687 = vmatprep.subr.mxu0 0.0
        %688 = vmatpush1.msra.mxu0 0.0
        %689 = vmatprep.subr.mxu0 0.0
        %690 = vmatpush1.msra.mxu0 0.0
        %691 = vmatprep.subr.mxu0 0.0
        %692 = vmatpush1.msra.mxu0 0.0
        %693 = vmatprep.subr.mxu0 0.0
        %694 = vmatpush1.msra.mxu0 0.0
        %695 = vmatprep.subr.mxu0 0.0
        %696 = vmatpush1.msra.mxu0 0.0
        %697 = vmatprep.subr.mxu0 0.0
        %698 = vmatpush1.msra.mxu0 0.0
        %699 = vmatprep.subr.mxu0 0.0
        %700 = vmatpush1.msra.mxu0 0.0
        %701 = vmatprep.subr.mxu0 0.0
        %702 = vmatpush1.msra.mxu0 0.0
        %703 = vmatprep.subr.mxu0 0.0
        %704 = vmatpush1.msra.mxu0 0.0
        %705 = vmatprep.subr.mxu0 0.0
        %706 = vmatpush1.msra.mxu0 0.0
        %707 = vmatprep.subr.mxu0 0.0
        %708 = vmatpush1.msra.mxu0 0.0
        %709 = vmatprep.subr.mxu0 0.0
        %710 = vmatpush1.msra.mxu0 0.0
        %711 = vmatprep.subr.mxu0 0.0
        %712 = vmatpush1.msra.mxu0 0.0
        %713 = vmatprep.subr.mxu0 0.0
        %714 = vmatpush1.msra.mxu0 0.0
        %715 = vmatprep.subr.mxu0 0.0
        %716 = vmatpush1.msra.mxu0 0.0
        %717 = vmatprep.subr.mxu0 0.0
        %718 = vmatpush1.msra.mxu0 0.0
        %719 = vmatprep.subr.mxu0 0.0
        %720 = vmatpush1.msra.mxu0 0.0
        %721 = vmatprep.subr.mxu0 0.0
        %722 = vmatpush1.msra.mxu0 0.0
        %723 = vmatprep.subr.mxu0 0.0
        %724 = vmatpush1.msra.mxu0 0.0
        %725 = vmatprep.subr.mxu0 0.0
        %726 = vmatpush1.msra.mxu0 0.0
        %727 = vmatprep.subr.mxu0 0.0
        %728 = vmatpush1.msra.mxu0 0.0
        %729 = vmatprep.subr.mxu0 0.0
        %730 = vmatpush1.msra.mxu0 0.0
        %731 = vmatprep.subr.mxu0 0.0
        %732 = vmatpush1.msra.mxu0 0.0
        %733 = vmatprep.subr.mxu0 0.0
        %734 = vmatpush1.msra.mxu0 0.0
        %735 = vmatprep.subr.mxu0 0.0
        %736 = vmatpush1.msra.mxu0 0.0
        %737 = vmatprep.subr.mxu0 0.0
        %738 = vmatpush1.msra.mxu0 0.0
        %739 = vmatprep.subr.mxu0 0.0
        %740 = vmatpush1.msra.mxu0 0.0
        %741 = vmatprep.subr.mxu0 0.0
        %742 = vmatpush1.msra.mxu0 0.0
        %743 = vmatprep.mubr.f32.mxu0 0.0
        %v744 = vand.u32 %v675, 4294901760
        %v745 = vsub.f32 %v675, %v744
        %v746 = vand.u32 %v745, 4294901760
        %v747 = vsub.f32 %v745, %v746
        %v748 = vand.u32 %v747, 4294901760
        %749 = vmatmul.mubr.f32.gmra.mrb[0].mxu0 %v748
        %v750 = vpop.f32.mrb[0].mxu0
        %v751 = vadd.f32 0.0, %v750
        %v752 = vpop.f32.mrb[0].mxu0
        %753 = vdwg.mxu0
        %754 = vmatprep.subr.mxu0 0.0
        %v755 = vand.u32 %v671, 4294901760
        %v756 = vsub.f32 %v671, %v755
        %v757 = vand.u32 %v756, 4294901760
        %v758 = vsub.f32 %v756, %v757
        %v759 = vand.u32 %v758, 4294901760
        %760 = vmatpush1.msra.mxu0 %v759
        %761 = vmatprep.subr.mxu0 0.0
        %v762 = vand.u32 %v672, 4294901760
        %v763 = vsub.f32 %v672, %v762
        %v764 = vand.u32 %v763, 4294901760
        %v765 = vsub.f32 %v763, %v764
        %v766 = vand.u32 %v765, 4294901760
        %767 = vmatpush1.msra.mxu0 %v766
        %768 = vmatprep.subr.mxu0 0.0
        %769 = vmatpush1.msra.mxu0 0.0
        %770 = vmatprep.subr.mxu0 0.0
        %771 = vmatpush1.msra.mxu0 0.0
        %772 = vmatprep.subr.mxu0 0.0
        %773 = vmatpush1.msra.mxu0 0.0
        %774 = vmatprep.subr.mxu0 0.0
        %775 = vmatpush1.msra.mxu0 0.0
        %776 = vmatprep.subr.mxu0 0.0
        %777 = vmatpush1.msra.mxu0 0.0
        %778 = vmatprep.subr.mxu0 0.0
        %779 = vmatpush1.msra.mxu0 0.0
        %780 = vmatprep.subr.mxu0 0.0
        %781 = vmatpush1.msra.mxu0 0.0
        %782 = vmatprep.subr.mxu0 0.0
        %783 = vmatpush1.msra.mxu0 0.0
        %784 = vmatprep.subr.mxu0 0.0
        %785 = vmatpush1.msra.mxu0 0.0
        %786 = vmatprep.subr.mxu0 0.0
        %787 = vmatpush1.msra.mxu0 0.0
        %788 = vmatprep.subr.mxu0 0.0
        %789 = vmatpush1.msra.mxu0 0.0
        %790 = vmatprep.subr.mxu0 0.0
        %791 = vmatpush1.msra.mxu0 0.0
        %792 = vmatprep.subr.mxu0 0.0
        %793 = vmatpush1.msra.mxu0 0.0
        %794 = vmatprep.subr.mxu0 0.0
        %795 = vmatpush1.msra.mxu0 0.0
        %796 = vmatprep.subr.mxu0 0.0
        %797 = vmatpush1.msra.mxu0 0.0
        %798 = vmatprep.subr.mxu0 0.0
        %799 = vmatpush1.msra.mxu0 0.0
        %800 = vmatprep.subr.mxu0 0.0
        %801 = vmatpush1.msra.mxu0 0.0
        %802 = vmatprep.subr.mxu0 0.0
        %803 = vmatpush1.msra.mxu0 0.0
        %804 = vmatprep.subr.mxu0 0.0
        %805 = vmatpush1.msra.mxu0 0.0
        %806 = vmatprep.subr.mxu0 0.0
        %807 = vmatpush1.msra.mxu0 0.0
        %808 = vmatprep.subr.mxu0 0.0
        %809 = vmatpush1.msra.mxu0 0.0
        %810 = vmatprep.subr.mxu0 0.0
        %811 = vmatpush1.msra.mxu0 0.0
        %812 = vmatprep.subr.mxu0 0.0
        %813 = vmatpush1.msra.mxu0 0.0
        %814 = vmatprep.subr.mxu0 0.0
        %815 = vmatpush1.msra.mxu0 0.0
        %816 = vmatprep.subr.mxu0 0.0
        %817 = vmatpush1.msra.mxu0 0.0
        %818 = vmatprep.subr.mxu0 0.0
        %819 = vmatpush1.msra.mxu0 0.0
        %820 = vmatprep.subr.mxu0 0.0
        %821 = vmatpush1.msra.mxu0 0.0
        %822 = vmatprep.subr.mxu0 0.0
        %823 = vmatpush1.msra.mxu0 0.0
        %824 = vmatprep.subr.mxu0 0.0
        %825 = vmatpush1.msra.mxu0 0.0
        %826 = vmatprep.subr.mxu0 0.0
        %827 = vmatpush1.msra.mxu0 0.0
        %828 = vmatprep.mubr.f32.mxu0 0.0
        %v829 = vand.u32 %v675, 4294901760
        %830 = vmatmul.mubr.f32.gmra.mrb[0].mxu0 %v829
        %v831 = vpop.f32.mrb[0].mxu0
        %v832 = vadd.f32 %v751, %v831
        %v833 = vpop.f32.mrb[0].mxu0
        %834 = vdwg.mxu0
        %835 = vmatprep.subr.mxu0 0.0
        %v836 = vand.u32 %v671, 4294901760
        %v837 = vsub.f32 %v671, %v836
        %838 = vmatpush1.msra.mxu0 %v837
        %839 = vmatprep.subr.mxu0 0.0
        %v840 = vand.u32 %v672, 4294901760
        %v841 = vsub.f32 %v672, %v840
        %842 = vmatpush1.msra.mxu0 %v841
        %843 = vmatprep.subr.mxu0 0.0
        %844 = vmatpush1.msra.mxu0 0.0
        %845 = vmatprep.subr.mxu0 0.0
        %846 = vmatpush1.msra.mxu0 0.0
        %847 = vmatprep.subr.mxu0 0.0
        %848 = vmatpush1.msra.mxu0 0.0
        %849 = vmatprep.subr.mxu0 0.0
        %850 = vmatpush1.msra.mxu0 0.0
        %851 = vmatprep.subr.mxu0 0.0
        %852 = vmatpush1.msra.mxu0 0.0
        %853 = vmatprep.subr.mxu0 0.0
        %854 = vmatpush1.msra.mxu0 0.0
        %855 = vmatprep.subr.mxu0 0.0
        %856 = vmatpush1.msra.mxu0 0.0
        %857 = vmatprep.subr.mxu0 0.0
        %858 = vmatpush1.msra.mxu0 0.0
        %859 = vmatprep.subr.mxu0 0.0
        %860 = vmatpush1.msra.mxu0 0.0
        %861 = vmatprep.subr.mxu0 0.0
        %862 = vmatpush1.msra.mxu0 0.0
        %863 = vmatprep.subr.mxu0 0.0
        %864 = vmatpush1.msra.mxu0 0.0
        %865 = vmatprep.subr.mxu0 0.0
        %866 = vmatpush1.msra.mxu0 0.0
        %867 = vmatprep.subr.mxu0 0.0
        %868 = vmatpush1.msra.mxu0 0.0
        %869 = vmatprep.subr.mxu0 0.0
        %870 = vmatpush1.msra.mxu0 0.0
        %871 = vmatprep.subr.mxu0 0.0
        %872 = vmatpush1.msra.mxu0 0.0
        %873 = vmatprep.subr.mxu0 0.0
        %874 = vmatpush1.msra.mxu0 0.0
        %875 = vmatprep.subr.mxu0 0.0
        %876 = vmatpush1.msra.mxu0 0.0
        %877 = vmatprep.subr.mxu0 0.0
        %878 = vmatpush1.msra.mxu0 0.0
        %879 = vmatprep.subr.mxu0 0.0
        %880 = vmatpush1.msra.mxu0 0.0
        %881 = vmatprep.subr.mxu0 0.0
        %882 = vmatpush1.msra.mxu0 0.0
        %883 = vmatprep.subr.mxu0 0.0
        %884 = vmatpush1.msra.mxu0 0.0
        %885 = vmatprep.subr.mxu0 0.0
        %886 = vmatpush1.msra.mxu0 0.0
        %887 = vmatprep.subr.mxu0 0.0
        %888 = vmatpush1.msra.mxu0 0.0
        %889 = vmatprep.subr.mxu0 0.0
        %890 = vmatpush1.msra.mxu0 0.0
        %891 = vmatprep.subr.mxu0 0.0
        %892 = vmatpush1.msra.mxu0 0.0
        %893 = vmatprep.subr.mxu0 0.0
        %894 = vmatpush1.msra.mxu0 0.0
        %895 = vmatprep.subr.mxu0 0.0
        %896 = vmatpush1.msra.mxu0 0.0
        %897 = vmatprep.subr.mxu0 0.0
        %898 = vmatpush1.msra.mxu0 0.0
        %899 = vmatprep.subr.mxu0 0.0
        %900 = vmatpush1.msra.mxu0 0.0
        %901 = vmatprep.subr.mxu0 0.0
        %902 = vmatpush1.msra.mxu0 0.0
        %903 = vmatprep.mubr.f32.mxu0 0.0
        %v904 = vand.u32 %v675, 4294901760
        %v905 = vsub.f32 %v675, %v904
        %906 = vmatmul.mubr.f32.gmra.mrb[0].mxu0 %v905
        %v907 = vpop.f32.mrb[0].mxu0
        %v908 = vadd.f32 %v832, %v907
        %v909 = vpop.f32.mrb[0].mxu0
        %910 = vdwg.mxu0
        %911 = vmatprep.subr.mxu0 0.0
        %v912 = vand.u32 %v671, 4294901760
        %913 = vmatpush1.msra.mxu0 %v912
        %914 = vmatprep.subr.mxu0 0.0
        %v915 = vand.u32 %v672, 4294901760
        %916 = vmatpush1.msra.mxu0 %v915
        %917 = vmatprep.subr.mxu0 0.0
        %918 = vmatpush1.msra.mxu0 0.0
        %919 = vmatprep.subr.mxu0 0.0
        %920 = vmatpush1.msra.mxu0 0.0
        %921 = vmatprep.subr.mxu0 0.0
        %922 = vmatpush1.msra.mxu0 0.0
        %923 = vmatprep.subr.mxu0 0.0
        %924 = vmatpush1.msra.mxu0 0.0
        %925 = vmatprep.subr.mxu0 0.0
        %926 = vmatpush1.msra.mxu0 0.0
        %927 = vmatprep.subr.mxu0 0.0
        %928 = vmatpush1.msra.mxu0 0.0
        %929 = vmatprep.subr.mxu0 0.0
        %930 = vmatpush1.msra.mxu0 0.0
        %931 = vmatprep.subr.mxu0 0.0
        %932 = vmatpush1.msra.mxu0 0.0
        %933 = vmatprep.subr.mxu0 0.0
        %934 = vmatpush1.msra.mxu0 0.0
        %935 = vmatprep.subr.mxu0 0.0
        %936 = vmatpush1.msra.mxu0 0.0
        %937 = vmatprep.subr.mxu0 0.0
        %938 = vmatpush1.msra.mxu0 0.0
        %939 = vmatprep.subr.mxu0 0.0
        %940 = vmatpush1.msra.mxu0 0.0
        %941 = vmatprep.subr.mxu0 0.0
        %942 = vmatpush1.msra.mxu0 0.0
        %943 = vmatprep.subr.mxu0 0.0
        %944 = vmatpush1.msra.mxu0 0.0
        %945 = vmatprep.subr.mxu0 0.0
        %946 = vmatpush1.msra.mxu0 0.0
        %947 = vmatprep.subr.mxu0 0.0
        %948 = vmatpush1.msra.mxu0 0.0
        %949 = vmatprep.subr.mxu0 0.0
        %950 = vmatpush1.msra.mxu0 0.0
        %951 = vmatprep.subr.mxu0 0.0
        %952 = vmatpush1.msra.mxu0 0.0
        %953 = vmatprep.subr.mxu0 0.0
        %954 = vmatpush1.msra.mxu0 0.0
        %955 = vmatprep.subr.mxu0 0.0
        %956 = vmatpush1.msra.mxu0 0.0
        %957 = vmatprep.subr.mxu0 0.0
        %958 = vmatpush1.msra.mxu0 0.0
        %959 = vmatprep.subr.mxu0 0.0
        %960 = vmatpush1.msra.mxu0 0.0
        %961 = vmatprep.subr.mxu0 0.0
        %962 = vmatpush1.msra.mxu0 0.0
        %963 = vmatprep.subr.mxu0 0.0
        %964 = vmatpush1.msra.mxu0 0.0
        %965 = vmatprep.subr.mxu0 0.0
        %966 = vmatpush1.msra.mxu0 0.0
        %967 = vmatprep.subr.mxu0 0.0
        %968 = vmatpush1.msra.mxu0 0.0
        %969 = vmatprep.subr.mxu0 0.0
        %970 = vmatpush1.msra.mxu0 0.0
        %971 = vmatprep.subr.mxu0 0.0
        %972 = vmatpush1.msra.mxu0 0.0
        %973 = vmatprep.subr.mxu0 0.0
        %974 = vmatpush1.msra.mxu0 0.0
        %975 = vmatprep.subr.mxu0 0.0
        %976 = vmatpush1.msra.mxu0 0.0
        %977 = vmatprep.mubr.f32.mxu0 0.0
        %v978 = vand.u32 %v675, 4294901760
        %v979 = vsub.f32 %v675, %v978
        %v980 = vand.u32 %v979, 4294901760
        %981 = vmatmul.mubr.f32.gmra.mrb[0].mxu0 %v980
        %v982 = vpop.f32.mrb[0].mxu0
        %v983 = vadd.f32 %v908, %v982
        %v984 = vpop.f32.mrb[0].mxu0
        %985 = vdwg.mxu0
        %986 = vmatprep.subr.mxu0 0.0
        %v987 = vand.u32 %v671, 4294901760
        %v988 = vsub.f32 %v671, %v987
        %v989 = vand.u32 %v988, 4294901760
        %990 = vmatpush1.msra.mxu0 %v989
        %991 = vmatprep.subr.mxu0 0.0
        %v992 = vand.u32 %v672, 4294901760
        %v993 = vsub.f32 %v672, %v992
        %v994 = vand.u32 %v993, 4294901760
        %995 = vmatpush1.msra.mxu0 %v994
        %996 = vmatprep.subr.mxu0 0.0
        %997 = vmatpush1.msra.mxu0 0.0
        %998 = vmatprep.subr.mxu0 0.0
        %999 = vmatpush1.msra.mxu0 0.0
        %1000 = vmatprep.subr.mxu0 0.0
        %1001 = vmatpush1.msra.mxu0 0.0
        %1002 = vmatprep.subr.mxu0 0.0
        %1003 = vmatpush1.msra.mxu0 0.0
        %1004 = vmatprep.subr.mxu0 0.0
        %1005 = vmatpush1.msra.mxu0 0.0
        %1006 = vmatprep.subr.mxu0 0.0
        %1007 = vmatpush1.msra.mxu0 0.0
        %1008 = vmatprep.subr.mxu0 0.0
        %1009 = vmatpush1.msra.mxu0 0.0
        %1010 = vmatprep.subr.mxu0 0.0
        %1011 = vmatpush1.msra.mxu0 0.0
        %1012 = vmatprep.subr.mxu0 0.0
        %1013 = vmatpush1.msra.mxu0 0.0
        %1014 = vmatprep.subr.mxu0 0.0
        %1015 = vmatpush1.msra.mxu0 0.0
        %1016 = vmatprep.subr.mxu0 0.0
        %1017 = vmatpush1.msra.mxu0 0.0
        %1018 = vmatprep.subr.mxu0 0.0
        %1019 = vmatpush1.msra.mxu0 0.0
        %1020 = vmatprep.subr.mxu0 0.0
        %1021 = vmatpush1.msra.mxu0 0.0
        %1022 = vmatprep.subr.mxu0 0.0
        %1023 = vmatpush1.msra.mxu0 0.0
        %1024 = vmatprep.subr.mxu0 0.0
        %1025 = vmatpush1.msra.mxu0 0.0
        %1026 = vmatprep.subr.mxu0 0.0
        %1027 = vmatpush1.msra.mxu0 0.0
        %1028 = vmatprep.subr.mxu0 0.0
        %1029 = vmatpush1.msra.mxu0 0.0
        %1030 = vmatprep.subr.mxu0 0.0
        %1031 = vmatpush1.msra.mxu0 0.0
        %1032 = vmatprep.subr.mxu0 0.0
        %1033 = vmatpush1.msra.mxu0 0.0
        %1034 = vmatprep.subr.mxu0 0.0
        %1035 = vmatpush1.msra.mxu0 0.0
        %1036 = vmatprep.subr.mxu0 0.0
        %1037 = vmatpush1.msra.mxu0 0.0
        %1038 = vmatprep.subr.mxu0 0.0
        %1039 = vmatpush1.msra.mxu0 0.0
        %1040 = vmatprep.subr.mxu0 0.0
        %1041 = vmatpush1.msra.mxu0 0.0
        %1042 = vmatprep.subr.mxu0 0.0
        %1043 = vmatpush1.msra.mxu0 0.0
        %1044 = vmatprep.subr.mxu0 0.0
        %1045 = vmatpush1.msra.mxu0 0.0
        %1046 = vmatprep.subr.mxu0 0.0
        %1047 = vmatpush1.msra.mxu0 0.0
        %1048 = vmatprep.subr.mxu0 0.0
        %1049 = vmatpush1.msra.mxu0 0.0
        %1050 = vmatprep.subr.mxu0 0.0
        %1051 = vmatpush1.msra.mxu0 0.0
        %1052 = vmatprep.subr.mxu0 0.0
        %1053 = vmatpush1.msra.mxu0 0.0
        %1054 = vmatprep.subr.mxu0 0.0
        %1055 = vmatpush1.msra.mxu0 0.0
        %1056 = vmatprep.mubr.f32.mxu0 0.0
        %v1057 = vand.u32 %v675, 4294901760
        %1058 = vmatmul.mubr.f32.gmra.mrb[0].mxu0 %v1057
        %v1059 = vpop.f32.mrb[0].mxu0
        %v1060 = vadd.f32 %v983, %v1059
        %v1061 = vpop.f32.mrb[0].mxu0
        %1062 = vdwg.mxu0
        %1063 = vmatprep.subr.mxu0 0.0
        %v1064 = vand.u32 %v671, 4294901760
        %1065 = vmatpush1.msra.mxu0 %v1064
        %1066 = vmatprep.subr.mxu0 0.0
        %v1067 = vand.u32 %v672, 4294901760
        %1068 = vmatpush1.msra.mxu0 %v1067
        %1069 = vmatprep.subr.mxu0 0.0
        %1070 = vmatpush1.msra.mxu0 0.0
        %1071 = vmatprep.subr.mxu0 0.0
        %1072 = vmatpush1.msra.mxu0 0.0
        %1073 = vmatprep.subr.mxu0 0.0
        %1074 = vmatpush1.msra.mxu0 0.0
        %1075 = vmatprep.subr.mxu0 0.0
        %1076 = vmatpush1.msra.mxu0 0.0
        %1077 = vmatprep.subr.mxu0 0.0
        %1078 = vmatpush1.msra.mxu0 0.0
        %1079 = vmatprep.subr.mxu0 0.0
        %1080 = vmatpush1.msra.mxu0 0.0
        %1081 = vmatprep.subr.mxu0 0.0
        %1082 = vmatpush1.msra.mxu0 0.0
        %1083 = vmatprep.subr.mxu0 0.0
        %1084 = vmatpush1.msra.mxu0 0.0
        %1085 = vmatprep.subr.mxu0 0.0
        %1086 = vmatpush1.msra.mxu0 0.0
        %1087 = vmatprep.subr.mxu0 0.0
        %1088 = vmatpush1.msra.mxu0 0.0
        %1089 = vmatprep.subr.mxu0 0.0
        %1090 = vmatpush1.msra.mxu0 0.0
        %1091 = vmatprep.subr.mxu0 0.0
        %1092 = vmatpush1.msra.mxu0 0.0
        %1093 = vmatprep.subr.mxu0 0.0
        %1094 = vmatpush1.msra.mxu0 0.0
        %1095 = vmatprep.subr.mxu0 0.0
        %1096 = vmatpush1.msra.mxu0 0.0
        %1097 = vmatprep.subr.mxu0 0.0
        %1098 = vmatpush1.msra.mxu0 0.0
        %1099 = vmatprep.subr.mxu0 0.0
        %1100 = vmatpush1.msra.mxu0 0.0
        %1101 = vmatprep.subr.mxu0 0.0
        %1102 = vmatpush1.msra.mxu0 0.0
        %1103 = vmatprep.subr.mxu0 0.0
        %1104 = vmatpush1.msra.mxu0 0.0
        %1105 = vmatprep.subr.mxu0 0.0
        %1106 = vmatpush1.msra.mxu0 0.0
        %1107 = vmatprep.subr.mxu0 0.0
        %1108 = vmatpush1.msra.mxu0 0.0
        %1109 = vmatprep.subr.mxu0 0.0
        %1110 = vmatpush1.msra.mxu0 0.0
        %1111 = vmatprep.subr.mxu0 0.0
        %1112 = vmatpush1.msra.mxu0 0.0
        %1113 = vmatprep.subr.mxu0 0.0
        %1114 = vmatpush1.msra.mxu0 0.0
        %1115 = vmatprep.subr.mxu0 0.0
        %1116 = vmatpush1.msra.mxu0 0.0
        %1117 = vmatprep.subr.mxu0 0.0
        %1118 = vmatpush1.msra.mxu0 0.0
        %1119 = vmatprep.subr.mxu0 0.0
        %1120 = vmatpush1.msra.mxu0 0.0
        %1121 = vmatprep.subr.mxu0 0.0
        %1122 = vmatpush1.msra.mxu0 0.0
        %1123 = vmatprep.subr.mxu0 0.0
        %1124 = vmatpush1.msra.mxu0 0.0
        %1125 = vmatprep.subr.mxu0 0.0
        %1126 = vmatpush1.msra.mxu0 0.0
        %1127 = vmatprep.subr.mxu0 0.0
        %1128 = vmatpush1.msra.mxu0 0.0
        %1129 = vmatprep.mubr.f32.mxu0 0.0
        %v1130 = vand.u32 %v675, 4294901760
        %1131 = vmatmul.mubr.f32.gmra.mrb[0].mxu0 %v1130
        %v1132 = vpop.f32.mrb[0].mxu0
        %v1133 = vadd.f32 %v1060, %v1132
        %v1134 = vpop.f32.mrb[0].mxu0
        %1135 = vdwg.mxu0
        %v1137 = vsel %vm673, %v1133, 0
        %1139 = vmatprep.subr.mxu0 0.0
        %v1140 = vand.u32 %v661, 4294901760
        %1141 = vmatpush1.msra.mxu0 %v1140
        %1142 = vmatprep.subr.mxu0 0.0
        %v1143 = vand.u32 %v662, 4294901760
        %1144 = vmatpush1.msra.mxu0 %v1143
        %1145 = vmatprep.subr.mxu0 0.0
        %1146 = vmatpush1.msra.mxu0 0.0
        %1147 = vmatprep.subr.mxu0 0.0
        %1148 = vmatpush1.msra.mxu0 0.0
        %1149 = vmatprep.subr.mxu0 0.0
        %1150 = vmatpush1.msra.mxu0 0.0
        %1151 = vmatprep.subr.mxu0 0.0
        %1152 = vmatpush1.msra.mxu0 0.0
        %1153 = vmatprep.subr.mxu0 0.0
        %1154 = vmatpush1.msra.mxu0 0.0
        %1155 = vmatprep.subr.mxu0 0.0
        %1156 = vmatpush1.msra.mxu0 0.0
        %1157 = vmatprep.subr.mxu0 0.0
        %1158 = vmatpush1.msra.mxu0 0.0
        %1159 = vmatprep.subr.mxu0 0.0
        %1160 = vmatpush1.msra.mxu0 0.0
        %1161 = vmatprep.subr.mxu0 0.0
        %1162 = vmatpush1.msra.mxu0 0.0
        %1163 = vmatprep.subr.mxu0 0.0
        %1164 = vmatpush1.msra.mxu0 0.0
        %1165 = vmatprep.subr.mxu0 0.0
        %1166 = vmatpush1.msra.mxu0 0.0
        %1167 = vmatprep.subr.mxu0 0.0
        %1168 = vmatpush1.msra.mxu0 0.0
        %1169 = vmatprep.subr.mxu0 0.0
        %1170 = vmatpush1.msra.mxu0 0.0
        %1171 = vmatprep.subr.mxu0 0.0
        %1172 = vmatpush1.msra.mxu0 0.0
        %1173 = vmatprep.subr.mxu0 0.0
        %1174 = vmatpush1.msra.mxu0 0.0
        %1175 = vmatprep.subr.mxu0 0.0
        %1176 = vmatpush1.msra.mxu0 0.0
        %1177 = vmatprep.subr.mxu0 0.0
        %1178 = vmatpush1.msra.mxu0 0.0
        %1179 = vmatprep.subr.mxu0 0.0
        %1180 = vmatpush1.msra.mxu0 0.0
        %1181 = vmatprep.subr.mxu0 0.0
        %1182 = vmatpush1.msra.mxu0 0.0
        %1183 = vmatprep.subr.mxu0 0.0
        %1184 = vmatpush1.msra.mxu0 0.0
        %1185 = vmatprep.subr.mxu0 0.0
        %1186 = vmatpush1.msra.mxu0 0.0
        %1187 = vmatprep.subr.mxu0 0.0
        %1188 = vmatpush1.msra.mxu0 0.0
        %1189 = vmatprep.subr.mxu0 0.0
        %1190 = vmatpush1.msra.mxu0 0.0
        %1191 = vmatprep.subr.mxu0 0.0
        %1192 = vmatpush1.msra.mxu0 0.0
        %1193 = vmatprep.subr.mxu0 0.0
        %1194 = vmatpush1.msra.mxu0 0.0
        %1195 = vmatprep.subr.mxu0 0.0
        %1196 = vmatpush1.msra.mxu0 0.0
        %1197 = vmatprep.subr.mxu0 0.0
        %1198 = vmatpush1.msra.mxu0 0.0
        %1199 = vmatprep.subr.mxu0 0.0
        %1200 = vmatpush1.msra.mxu0 0.0
        %1201 = vmatprep.subr.mxu0 0.0
        %1202 = vmatpush1.msra.mxu0 0.0
        %1203 = vmatprep.subr.mxu0 0.0
        %1204 = vmatpush1.msra.mxu0 0.0
        %1205 = vmatprep.mubr.f32.mxu0 0.0
        %v1206 = vand.u32 %v1137, 4294901760
        %v1207 = vsub.f32 %v1137, %v1206
        %v1208 = vand.u32 %v1207, 4294901760
        %v1209 = vsub.f32 %v1207, %v1208
        %v1210 = vand.u32 %v1209, 4294901760
        %1211 = vmatmul.mubr.f32.gmra.mrb[0].mxu0 %v1210
        %v1212 = vpop.f32.mrb[0].mxu0
        %v1213 = vadd.f32 0.0, %v1212
        %v1214 = vpop.f32.mrb[0].mxu0
        %1215 = vdwg.mxu0
        %1216 = vmatprep.subr.mxu0 0.0
        %v1217 = vand.u32 %v661, 4294901760
        %v1218 = vsub.f32 %v661, %v1217
        %v1219 = vand.u32 %v1218, 4294901760
        %v1220 = vsub.f32 %v1218, %v1219
        %v1221 = vand.u32 %v1220, 4294901760
        %1222 = vmatpush1.msra.mxu0 %v1221
        %1223 = vmatprep.subr.mxu0 0.0
        %v1224 = vand.u32 %v662, 4294901760
        %v1225 = vsub.f32 %v662, %v1224
        %v1226 = vand.u32 %v1225, 4294901760
        %v1227 = vsub.f32 %v1225, %v1226
        %v1228 = vand.u32 %v1227, 4294901760
        %1229 = vmatpush1.msra.mxu0 %v1228
        %1230 = vmatprep.subr.mxu0 0.0
        %1231 = vmatpush1.msra.mxu0 0.0
        %1232 = vmatprep.subr.mxu0 0.0
        %1233 = vmatpush1.msra.mxu0 0.0
        %1234 = vmatprep.subr.mxu0 0.0
        %1235 = vmatpush1.msra.mxu0 0.0
        %1236 = vmatprep.subr.mxu0 0.0
        %1237 = vmatpush1.msra.mxu0 0.0
        %1238 = vmatprep.subr.mxu0 0.0
        %1239 = vmatpush1.msra.mxu0 0.0
        %1240 = vmatprep.subr.mxu0 0.0
        %1241 = vmatpush1.msra.mxu0 0.0
        %1242 = vmatprep.subr.mxu0 0.0
        %1243 = vmatpush1.msra.mxu0 0.0
        %1244 = vmatprep.subr.mxu0 0.0
        %1245 = vmatpush1.msra.mxu0 0.0
        %1246 = vmatprep.subr.mxu0 0.0
        %1247 = vmatpush1.msra.mxu0 0.0
        %1248 = vmatprep.subr.mxu0 0.0
        %1249 = vmatpush1.msra.mxu0 0.0
        %1250 = vmatprep.subr.mxu0 0.0
        %1251 = vmatpush1.msra.mxu0 0.0
        %1252 = vmatprep.subr.mxu0 0.0
        %1253 = vmatpush1.msra.mxu0 0.0
        %1254 = vmatprep.subr.mxu0 0.0
        %1255 = vmatpush1.msra.mxu0 0.0
        %1256 = vmatprep.subr.mxu0 0.0
        %1257 = vmatpush1.msra.mxu0 0.0
        %1258 = vmatprep.subr.mxu0 0.0
        %1259 = vmatpush1.msra.mxu0 0.0
        %1260 = vmatprep.subr.mxu0 0.0
        %1261 = vmatpush1.msra.mxu0 0.0
        %1262 = vmatprep.subr.mxu0 0.0
        %1263 = vmatpush1.msra.mxu0 0.0
        %1264 = vmatprep.subr.mxu0 0.0
        %1265 = vmatpush1.msra.mxu0 0.0
        %1266 = vmatprep.subr.mxu0 0.0
        %1267 = vmatpush1.msra.mxu0 0.0
        %1268 = vmatprep.subr.mxu0 0.0
        %1269 = vmatpush1.msra.mxu0 0.0
        %1270 = vmatprep.subr.mxu0 0.0
        %1271 = vmatpush1.msra.mxu0 0.0
        %1272 = vmatprep.subr.mxu0 0.0
        %1273 = vmatpush1.msra.mxu0 0.0
        %1274 = vmatprep.subr.mxu0 0.0
        %1275 = vmatpush1.msra.mxu0 0.0
        %1276 = vmatprep.subr.mxu0 0.0
        %1277 = vmatpush1.msra.mxu0 0.0
        %1278 = vmatprep.subr.mxu0 0.0
        %1279 = vmatpush1.msra.mxu0 0.0
        %1280 = vmatprep.subr.mxu0 0.0
        %1281 = vmatpush1.msra.mxu0 0.0
        %1282 = vmatprep.subr.mxu0 0.0
        %1283 = vmatpush1.msra.mxu0 0.0
        %1284 = vmatprep.subr.mxu0 0.0
        %1285 = vmatpush1.msra.mxu0 0.0
        %1286 = vmatprep.subr.mxu0 0.0
        %1287 = vmatpush1.msra.mxu0 0.0
        %1288 = vmatprep.subr.mxu0 0.0
        %1289 = vmatpush1.msra.mxu0 0.0
        %1290 = vmatprep.mubr.f32.mxu0 0.0
        %v1291 = vand.u32 %v1137, 4294901760
        %1292 = vmatmul.mubr.f32.gmra.mrb[0].mxu0 %v1291
        %v1293 = vpop.f32.mrb[0].mxu0
        %v1294 = vadd.f32 %v1213, %v1293
        %v1295 = vpop.f32.mrb[0].mxu0
        %1296 = vdwg.mxu0
        %1297 = vmatprep.subr.mxu0 0.0
        %v1298 = vand.u32 %v661, 4294901760
        %v1299 = vsub.f32 %v661, %v1298
        %1300 = vmatpush1.msra.mxu0 %v1299
        %1301 = vmatprep.subr.mxu0 0.0
        %v1302 = vand.u32 %v662, 4294901760
        %v1303 = vsub.f32 %v662, %v1302
        %1304 = vmatpush1.msra.mxu0 %v1303
        %1305 = vmatprep.subr.mxu0 0.0
        %1306 = vmatpush1.msra.mxu0 0.0
        %1307 = vmatprep.subr.mxu0 0.0
        %1308 = vmatpush1.msra.mxu0 0.0
        %1309 = vmatprep.subr.mxu0 0.0
        %1310 = vmatpush1.msra.mxu0 0.0
        %1311 = vmatprep.subr.mxu0 0.0
        %1312 = vmatpush1.msra.mxu0 0.0
        %1313 = vmatprep.subr.mxu0 0.0
        %1314 = vmatpush1.msra.mxu0 0.0
        %1315 = vmatprep.subr.mxu0 0.0
        %1316 = vmatpush1.msra.mxu0 0.0
        %1317 = vmatprep.subr.mxu0 0.0
        %1318 = vmatpush1.msra.mxu0 0.0
        %1319 = vmatprep.subr.mxu0 0.0
        %1320 = vmatpush1.msra.mxu0 0.0
        %1321 = vmatprep.subr.mxu0 0.0
        %1322 = vmatpush1.msra.mxu0 0.0
        %1323 = vmatprep.subr.mxu0 0.0
        %1324 = vmatpush1.msra.mxu0 0.0
        %1325 = vmatprep.subr.mxu0 0.0
        %1326 = vmatpush1.msra.mxu0 0.0
        %1327 = vmatprep.subr.mxu0 0.0
        %1328 = vmatpush1.msra.mxu0 0.0
        %1329 = vmatprep.subr.mxu0 0.0
        %1330 = vmatpush1.msra.mxu0 0.0
        %1331 = vmatprep.subr.mxu0 0.0
        %1332 = vmatpush1.msra.mxu0 0.0
        %1333 = vmatprep.subr.mxu0 0.0
        %1334 = vmatpush1.msra.mxu0 0.0
        %1335 = vmatprep.subr.mxu0 0.0
        %1336 = vmatpush1.msra.mxu0 0.0
        %1337 = vmatprep.subr.mxu0 0.0
        %1338 = vmatpush1.msra.mxu0 0.0
        %1339 = vmatprep.subr.mxu0 0.0
        %1340 = vmatpush1.msra.mxu0 0.0
        %1341 = vmatprep.subr.mxu0 0.0
        %1342 = vmatpush1.msra.mxu0 0.0
        %1343 = vmatprep.subr.mxu0 0.0
        %1344 = vmatpush1.msra.mxu0 0.0
        %1345 = vmatprep.subr.mxu0 0.0
        %1346 = vmatpush1.msra.mxu0 0.0
        %1347 = vmatprep.subr.mxu0 0.0
        %1348 = vmatpush1.msra.mxu0 0.0
        %1349 = vmatprep.subr.mxu0 0.0
        %1350 = vmatpush1.msra.mxu0 0.0
        %1351 = vmatprep.subr.mxu0 0.0
        %1352 = vmatpush1.msra.mxu0 0.0
        %1353 = vmatprep.subr.mxu0 0.0
        %1354 = vmatpush1.msra.mxu0 0.0
        %1355 = vmatprep.subr.mxu0 0.0
        %1356 = vmatpush1.msra.mxu0 0.0
        %1357 = vmatprep.subr.mxu0 0.0
        %1358 = vmatpush1.msra.mxu0 0.0
        %1359 = vmatprep.subr.mxu0 0.0
        %1360 = vmatpush1.msra.mxu0 0.0
        %1361 = vmatprep.subr.mxu0 0.0
        %1362 = vmatpush1.msra.mxu0 0.0
        %1363 = vmatprep.subr.mxu0 0.0
        %1364 = vmatpush1.msra.mxu0 0.0
        %1365 = vmatprep.mubr.f32.mxu0 0.0
        %v1366 = vand.u32 %v1137, 4294901760
        %v1367 = vsub.f32 %v1137, %v1366
        %1368 = vmatmul.mubr.f32.gmra.mrb[0].mxu0 %v1367
        %v1369 = vpop.f32.mrb[0].mxu0
        %v1370 = vadd.f32 %v1294, %v1369
        %v1371 = vpop.f32.mrb[0].mxu0
        %1372 = vdwg.mxu0
        %1373 = vmatprep.subr.mxu0 0.0
        %v1374 = vand.u32 %v661, 4294901760
        %1375 = vmatpush1.msra.mxu0 %v1374
        %1376 = vmatprep.subr.mxu0 0.0
        %v1377 = vand.u32 %v662, 4294901760
        %1378 = vmatpush1.msra.mxu0 %v1377
        %1379 = vmatprep.subr.mxu0 0.0
        %1380 = vmatpush1.msra.mxu0 0.0
        %1381 = vmatprep.subr.mxu0 0.0
        %1382 = vmatpush1.msra.mxu0 0.0
        %1383 = vmatprep.subr.mxu0 0.0
        %1384 = vmatpush1.msra.mxu0 0.0
        %1385 = vmatprep.subr.mxu0 0.0
        %1386 = vmatpush1.msra.mxu0 0.0
        %1387 = vmatprep.subr.mxu0 0.0
        %1388 = vmatpush1.msra.mxu0 0.0
        %1389 = vmatprep.subr.mxu0 0.0
        %1390 = vmatpush1.msra.mxu0 0.0
        %1391 = vmatprep.subr.mxu0 0.0
        %1392 = vmatpush1.msra.mxu0 0.0
        %1393 = vmatprep.subr.mxu0 0.0
        %1394 = vmatpush1.msra.mxu0 0.0
        %1395 = vmatprep.subr.mxu0 0.0
        %1396 = vmatpush1.msra.mxu0 0.0
        %1397 = vmatprep.subr.mxu0 0.0
        %1398 = vmatpush1.msra.mxu0 0.0
        %1399 = vmatprep.subr.mxu0 0.0
        %1400 = vmatpush1.msra.mxu0 0.0
        %1401 = vmatprep.subr.mxu0 0.0
        %1402 = vmatpush1.msra.mxu0 0.0
        %1403 = vmatprep.subr.mxu0 0.0
        %1404 = vmatpush1.msra.mxu0 0.0
        %1405 = vmatprep.subr.mxu0 0.0
        %1406 = vmatpush1.msra.mxu0 0.0
        %1407 = vmatprep.subr.mxu0 0.0
        %1408 = vmatpush1.msra.mxu0 0.0
        %1409 = vmatprep.subr.mxu0 0.0
        %1410 = vmatpush1.msra.mxu0 0.0
        %1411 = vmatprep.subr.mxu0 0.0
        %1412 = vmatpush1.msra.mxu0 0.0
        %1413 = vmatprep.subr.mxu0 0.0
        %1414 = vmatpush1.msra.mxu0 0.0
        %1415 = vmatprep.subr.mxu0 0.0
        %1416 = vmatpush1.msra.mxu0 0.0
        %1417 = vmatprep.subr.mxu0 0.0
        %1418 = vmatpush1.msra.mxu0 0.0
        %1419 = vmatprep.subr.mxu0 0.0
        %1420 = vmatpush1.msra.mxu0 0.0
        %1421 = vmatprep.subr.mxu0 0.0
        %1422 = vmatpush1.msra.mxu0 0.0
        %1423 = vmatprep.subr.mxu0 0.0
        %1424 = vmatpush1.msra.mxu0 0.0
        %1425 = vmatprep.subr.mxu0 0.0
        %1426 = vmatpush1.msra.mxu0 0.0
        %1427 = vmatprep.subr.mxu0 0.0
        %1428 = vmatpush1.msra.mxu0 0.0
        %1429 = vmatprep.subr.mxu0 0.0
        %1430 = vmatpush1.msra.mxu0 0.0
        %1431 = vmatprep.subr.mxu0 0.0
        %1432 = vmatpush1.msra.mxu0 0.0
        %1433 = vmatprep.subr.mxu0 0.0
        %1434 = vmatpush1.msra.mxu0 0.0
        %1435 = vmatprep.subr.mxu0 0.0
        %1436 = vmatpush1.msra.mxu0 0.0
        %1437 = vmatprep.subr.mxu0 0.0
        %1438 = vmatpush1.msra.mxu0 0.0
        %1439 = vmatprep.mubr.f32.mxu0 0.0
        %v1440 = vand.u32 %v1137, 4294901760
        %v1441 = vsub.f32 %v1137, %v1440
        %v1442 = vand.u32 %v1441, 4294901760
        %1443 = vmatmul.mubr.f32.gmra.mrb[0].mxu0 %v1442
        %v1444 = vpop.f32.mrb[0].mxu0
        %v1445 = vadd.f32 %v1370, %v1444
        %v1446 = vpop.f32.mrb[0].mxu0
        %1447 = vdwg.mxu0
        %1448 = vmatprep.subr.mxu0 0.0
        %v1449 = vand.u32 %v661, 4294901760
        %v1450 = vsub.f32 %v661, %v1449
        %v1451 = vand.u32 %v1450, 4294901760
        %1452 = vmatpush1.msra.mxu0 %v1451
        %1453 = vmatprep.subr.mxu0 0.0
        %v1454 = vand.u32 %v662, 4294901760
        %v1455 = vsub.f32 %v662, %v1454
        %v1456 = vand.u32 %v1455, 4294901760
        %1457 = vmatpush1.msra.mxu0 %v1456
        %1458 = vmatprep.subr.mxu0 0.0
        %1459 = vmatpush1.msra.mxu0 0.0
        %1460 = vmatprep.subr.mxu0 0.0
        %1461 = vmatpush1.msra.mxu0 0.0
        %1462 = vmatprep.subr.mxu0 0.0
        %1463 = vmatpush1.msra.mxu0 0.0
        %1464 = vmatprep.subr.mxu0 0.0
        %1465 = vmatpush1.msra.mxu0 0.0
        %1466 = vmatprep.subr.mxu0 0.0
        %1467 = vmatpush1.msra.mxu0 0.0
        %1468 = vmatprep.subr.mxu0 0.0
        %1469 = vmatpush1.msra.mxu0 0.0
        %1470 = vmatprep.subr.mxu0 0.0
        %1471 = vmatpush1.msra.mxu0 0.0
        %1472 = vmatprep.subr.mxu0 0.0
        %1473 = vmatpush1.msra.mxu0 0.0
        %1474 = vmatprep.subr.mxu0 0.0
        %1475 = vmatpush1.msra.mxu0 0.0
        %1476 = vmatprep.subr.mxu0 0.0
        %1477 = vmatpush1.msra.mxu0 0.0
        %1478 = vmatprep.subr.mxu0 0.0
        %1479 = vmatpush1.msra.mxu0 0.0
        %1480 = vmatprep.subr.mxu0 0.0
        %1481 = vmatpush1.msra.mxu0 0.0
        %1482 = vmatprep.subr.mxu0 0.0
        %1483 = vmatpush1.msra.mxu0 0.0
        %1484 = vmatprep.subr.mxu0 0.0
        %1485 = vmatpush1.msra.mxu0 0.0
        %1486 = vmatprep.subr.mxu0 0.0
        %1487 = vmatpush1.msra.mxu0 0.0
        %1488 = vmatprep.subr.mxu0 0.0
        %1489 = vmatpush1.msra.mxu0 0.0
        %1490 = vmatprep.subr.mxu0 0.0
        %1491 = vmatpush1.msra.mxu0 0.0
        %1492 = vmatprep.subr.mxu0 0.0
        %1493 = vmatpush1.msra.mxu0 0.0
        %1494 = vmatprep.subr.mxu0 0.0
        %1495 = vmatpush1.msra.mxu0 0.0
        %1496 = vmatprep.subr.mxu0 0.0
        %1497 = vmatpush1.msra.mxu0 0.0
        %1498 = vmatprep.subr.mxu0 0.0
        %1499 = vmatpush1.msra.mxu0 0.0
        %1500 = vmatprep.subr.mxu0 0.0
        %1501 = vmatpush1.msra.mxu0 0.0
        %1502 = vmatprep.subr.mxu0 0.0
        %1503 = vmatpush1.msra.mxu0 0.0
        %1504 = vmatprep.subr.mxu0 0.0
        %1505 = vmatpush1.msra.mxu0 0.0
        %1506 = vmatprep.subr.mxu0 0.0
        %1507 = vmatpush1.msra.mxu0 0.0
        %1508 = vmatprep.subr.mxu0 0.0
        %1509 = vmatpush1.msra.mxu0 0.0
        %1510 = vmatprep.subr.mxu0 0.0
        %1511 = vmatpush1.msra.mxu0 0.0
        %1512 = vmatprep.subr.mxu0 0.0
        %1513 = vmatpush1.msra.mxu0 0.0
        %1514 = vmatprep.subr.mxu0 0.0
        %1515 = vmatpush1.msra.mxu0 0.0
        %1516 = vmatprep.subr.mxu0 0.0
        %1517 = vmatpush1.msra.mxu0 0.0
        %1518 = vmatprep.mubr.f32.mxu0 0.0
        %v1519 = vand.u32 %v1137, 4294901760
        %1520 = vmatmul.mubr.f32.gmra.mrb[0].mxu0 %v1519
        %v1521 = vpop.f32.mrb[0].mxu0
        %v1522 = vadd.f32 %v1445, %v1521
        %v1523 = vpop.f32.mrb[0].mxu0
        %1524 = vdwg.mxu0
        %1525 = vmatprep.subr.mxu0 0.0
        %v1526 = vand.u32 %v661, 4294901760
        %1527 = vmatpush1.msra.mxu0 %v1526
        %1528 = vmatprep.subr.mxu0 0.0
        %v1529 = vand.u32 %v662, 4294901760
        %1530 = vmatpush1.msra.mxu0 %v1529
        %1531 = vmatprep.subr.mxu0 0.0
        %1532 = vmatpush1.msra.mxu0 0.0
        %1533 = vmatprep.subr.mxu0 0.0
        %1534 = vmatpush1.msra.mxu0 0.0
        %1535 = vmatprep.subr.mxu0 0.0
        %1536 = vmatpush1.msra.mxu0 0.0
        %1537 = vmatprep.subr.mxu0 0.0
        %1538 = vmatpush1.msra.mxu0 0.0
        %1539 = vmatprep.subr.mxu0 0.0
        %1540 = vmatpush1.msra.mxu0 0.0
        %1541 = vmatprep.subr.mxu0 0.0
        %1542 = vmatpush1.msra.mxu0 0.0
        %1543 = vmatprep.subr.mxu0 0.0
        %1544 = vmatpush1.msra.mxu0 0.0
        %1545 = vmatprep.subr.mxu0 0.0
        %1546 = vmatpush1.msra.mxu0 0.0
        %1547 = vmatprep.subr.mxu0 0.0
        %1548 = vmatpush1.msra.mxu0 0.0
        %1549 = vmatprep.subr.mxu0 0.0
        %1550 = vmatpush1.msra.mxu0 0.0
        %1551 = vmatprep.subr.mxu0 0.0
        %1552 = vmatpush1.msra.mxu0 0.0
        %1553 = vmatprep.subr.mxu0 0.0
        %1554 = vmatpush1.msra.mxu0 0.0
        %1555 = vmatprep.subr.mxu0 0.0
        %1556 = vmatpush1.msra.mxu0 0.0
        %1557 = vmatprep.subr.mxu0 0.0
        %1558 = vmatpush1.msra.mxu0 0.0
        %1559 = vmatprep.subr.mxu0 0.0
        %1560 = vmatpush1.msra.mxu0 0.0
        %1561 = vmatprep.subr.mxu0 0.0
        %1562 = vmatpush1.msra.mxu0 0.0
        %1563 = vmatprep.subr.mxu0 0.0
        %1564 = vmatpush1.msra.mxu0 0.0
        %1565 = vmatprep.subr.mxu0 0.0
        %1566 = vmatpush1.msra.mxu0 0.0
        %1567 = vmatprep.subr.mxu0 0.0
        %1568 = vmatpush1.msra.mxu0 0.0
        %1569 = vmatprep.subr.mxu0 0.0
        %1570 = vmatpush1.msra.mxu0 0.0
        %1571 = vmatprep.subr.mxu0 0.0
        %1572 = vmatpush1.msra.mxu0 0.0
        %1573 = vmatprep.subr.mxu0 0.0
        %1574 = vmatpush1.msra.mxu0 0.0
        %1575 = vmatprep.subr.mxu0 0.0
        %1576 = vmatpush1.msra.mxu0 0.0
        %1577 = vmatprep.subr.mxu0 0.0
        %1578 = vmatpush1.msra.mxu0 0.0
        %1579 = vmatprep.subr.mxu0 0.0
        %1580 = vmatpush1.msra.mxu0 0.0
        %1581 = vmatprep.subr.mxu0 0.0
        %1582 = vmatpush1.msra.mxu0 0.0
        %1583 = vmatprep.subr.mxu0 0.0
        %1584 = vmatpush1.msra.mxu0 0.0
        %1585 = vmatprep.subr.mxu0 0.0
        %1586 = vmatpush1.msra.mxu0 0.0
        %1587 = vmatprep.subr.mxu0 0.0
        %1588 = vmatpush1.msra.mxu0 0.0
        %1589 = vmatprep.subr.mxu0 0.0
        %1590 = vmatpush1.msra.mxu0 0.0
        %1591 = vmatprep.mubr.f32.mxu0 0.0
        %v1592 = vand.u32 %v1137, 4294901760
        %1593 = vmatmul.mubr.f32.gmra.mrb[0].mxu0 %v1592
        %v1594 = vpop.f32.mrb[0].mxu0
        %v1595 = vadd.f32 %v1522, %v1594
        %v1596 = vpop.f32.mrb[0].mxu0
        %1597 = vdwg.mxu0
        %vm1598 = vcmask 9216
        %1599 = vst.msk [vmem:[%s384] sm:$0x3] %vm1598, %v1595
        %vm1600 = vcmp.eq.f32.partialorder %v646, 1.0
        %vm1601 = vcmp.eq.f32.partialorder %v647, 1.0
        %v1602 = vsel %vm1600, %v532, 0.0
        %v1603 = vsel %vm1601, %v533, 0.0
        %vm1604 = vcmp.eq.f32.partialorder %v658, 1.0
        %vm1605 = vcmp.eq.f32.partialorder %v659, 1.0
        %v1606 = vsel %vm1604, %v534, 0.0
        %v1607 = vsel %vm1605, %v535, 0.0
        %v1608 = vadd.f32 %v1602, %v1606
        %v1609 = vadd.f32 %v1603, %v1607
        %1610 = vmatprep.subr.mxu0 0.0
        %v1611 = vand.u32 %v1608, 4294901760
        %1612 = vmatpush1.msra.mxu0 %v1611
        %1613 = vmatprep.subr.mxu0 0.0
        %v1614 = vand.u32 %v1609, 4294901760
        %1615 = vmatpush1.msra.mxu0 %v1614
        %1616 = vmatprep.subr.mxu0 0.0
        %1617 = vmatpush1.msra.mxu0 0.0
        %1618 = vmatprep.subr.mxu0 0.0
        %1619 = vmatpush1.msra.mxu0 0.0
        %1620 = vmatprep.subr.mxu0 0.0
        %1621 = vmatpush1.msra.mxu0 0.0
        %1622 = vmatprep.subr.mxu0 0.0
        %1623 = vmatpush1.msra.mxu0 0.0
        %1624 = vmatprep.subr.mxu0 0.0
        %1625 = vmatpush1.msra.mxu0 0.0
        %1626 = vmatprep.subr.mxu0 0.0
        %1627 = vmatpush1.msra.mxu0 0.0
        %1628 = vmatprep.subr.mxu0 0.0
        %1629 = vmatpush1.msra.mxu0 0.0
        %1630 = vmatprep.subr.mxu0 0.0
        %1631 = vmatpush1.msra.mxu0 0.0
        %1632 = vmatprep.subr.mxu0 0.0
        %1633 = vmatpush1.msra.mxu0 0.0
        %1634 = vmatprep.subr.mxu0 0.0
        %1635 = vmatpush1.msra.mxu0 0.0
        %1636 = vmatprep.subr.mxu0 0.0
        %1637 = vmatpush1.msra.mxu0 0.0
        %1638 = vmatprep.subr.mxu0 0.0
        %1639 = vmatpush1.msra.mxu0 0.0
        %1640 = vmatprep.subr.mxu0 0.0
        %1641 = vmatpush1.msra.mxu0 0.0
        %1642 = vmatprep.subr.mxu0 0.0
        %1643 = vmatpush1.msra.mxu0 0.0
        %1644 = vmatprep.subr.mxu0 0.0
        %1645 = vmatpush1.msra.mxu0 0.0
        %1646 = vmatprep.subr.mxu0 0.0
        %1647 = vmatpush1.msra.mxu0 0.0
        %1648 = vmatprep.subr.mxu0 0.0
        %1649 = vmatpush1.msra.mxu0 0.0
        %1650 = vmatprep.subr.mxu0 0.0
        %1651 = vmatpush1.msra.mxu0 0.0
        %1652 = vmatprep.subr.mxu0 0.0
        %1653 = vmatpush1.msra.mxu0 0.0
        %1654 = vmatprep.subr.mxu0 0.0
        %1655 = vmatpush1.msra.mxu0 0.0
        %1656 = vmatprep.subr.mxu0 0.0
        %1657 = vmatpush1.msra.mxu0 0.0
        %1658 = vmatprep.subr.mxu0 0.0
        %1659 = vmatpush1.msra.mxu0 0.0
        %1660 = vmatprep.subr.mxu0 0.0
        %1661 = vmatpush1.msra.mxu0 0.0
        %1662 = vmatprep.subr.mxu0 0.0
        %1663 = vmatpush1.msra.mxu0 0.0
        %1664 = vmatprep.subr.mxu0 0.0
        %1665 = vmatpush1.msra.mxu0 0.0
        %1666 = vmatprep.subr.mxu0 0.0
        %1667 = vmatpush1.msra.mxu0 0.0
        %1668 = vmatprep.subr.mxu0 0.0
        %1669 = vmatpush1.msra.mxu0 0.0
        %1670 = vmatprep.subr.mxu0 0.0
        %1671 = vmatpush1.msra.mxu0 0.0
        %1672 = vmatprep.subr.mxu0 0.0
        %1673 = vmatpush1.msra.mxu0 0.0
        %1674 = vmatprep.subr.mxu0 0.0
        %1675 = vmatpush1.msra.mxu0 0.0
        %1676 = vmatprep.mubr.f32.mxu0 0.0
        %v1677 = vand.u32 %v675, 4294901760
        %v1678 = vsub.f32 %v675, %v1677
        %v1679 = vand.u32 %v1678, 4294901760
        %v1680 = vsub.f32 %v1678, %v1679
        %v1681 = vand.u32 %v1680, 4294901760
        %1682 = vmatmul.mubr.f32.gmra.mrb[0].mxu0 %v1681
        %v1683 = vpop.f32.mrb[0].mxu0
        %v1684 = vadd.f32 0.0, %v1683
        %v1685 = vpop.f32.mrb[0].mxu0
        %1686 = vdwg.mxu0
        %1687 = vmatprep.subr.mxu0 0.0
        %v1688 = vand.u32 %v1608, 4294901760
        %v1689 = vsub.f32 %v1608, %v1688
        %v1690 = vand.u32 %v1689, 4294901760
        %v1691 = vsub.f32 %v1689, %v1690
        %v1692 = vand.u32 %v1691, 4294901760
        %1693 = vmatpush1.msra.mxu0 %v1692
        %1694 = vmatprep.subr.mxu0 0.0
        %v1695 = vand.u32 %v1609, 4294901760
        %v1696 = vsub.f32 %v1609, %v1695
        %v1697 = vand.u32 %v1696, 4294901760
        %v1698 = vsub.f32 %v1696, %v1697
        %v1699 = vand.u32 %v1698, 4294901760
        %1700 = vmatpush1.msra.mxu0 %v1699
        %1701 = vmatprep.subr.mxu0 0.0
        %1702 = vmatpush1.msra.mxu0 0.0
        %1703 = vmatprep.subr.mxu0 0.0
        %1704 = vmatpush1.msra.mxu0 0.0
        %1705 = vmatprep.subr.mxu0 0.0
        %1706 = vmatpush1.msra.mxu0 0.0
        %1707 = vmatprep.subr.mxu0 0.0
        %1708 = vmatpush1.msra.mxu0 0.0
        %1709 = vmatprep.subr.mxu0 0.0
        %1710 = vmatpush1.msra.mxu0 0.0
        %1711 = vmatprep.subr.mxu0 0.0
        %1712 = vmatpush1.msra.mxu0 0.0
        %1713 = vmatprep.subr.mxu0 0.0
        %1714 = vmatpush1.msra.mxu0 0.0
        %1715 = vmatprep.subr.mxu0 0.0
        %1716 = vmatpush1.msra.mxu0 0.0
        %1717 = vmatprep.subr.mxu0 0.0
        %1718 = vmatpush1.msra.mxu0 0.0
        %1719 = vmatprep.subr.mxu0 0.0
        %1720 = vmatpush1.msra.mxu0 0.0
        %1721 = vmatprep.subr.mxu0 0.0
        %1722 = vmatpush1.msra.mxu0 0.0
        %1723 = vmatprep.subr.mxu0 0.0
        %1724 = vmatpush1.msra.mxu0 0.0
        %1725 = vmatprep.subr.mxu0 0.0
        %1726 = vmatpush1.msra.mxu0 0.0
        %1727 = vmatprep.subr.mxu0 0.0
        %1728 = vmatpush1.msra.mxu0 0.0
        %1729 = vmatprep.subr.mxu0 0.0
        %1730 = vmatpush1.msra.mxu0 0.0
        %1731 = vmatprep.subr.mxu0 0.0
        %1732 = vmatpush1.msra.mxu0 0.0
        %1733 = vmatprep.subr.mxu0 0.0
        %1734 = vmatpush1.msra.mxu0 0.0
        %1735 = vmatprep.subr.mxu0 0.0
        %1736 = vmatpush1.msra.mxu0 0.0
        %1737 = vmatprep.subr.mxu0 0.0
        %1738 = vmatpush1.msra.mxu0 0.0
        %1739 = vmatprep.subr.mxu0 0.0
        %1740 = vmatpush1.msra.mxu0 0.0
        %1741 = vmatprep.subr.mxu0 0.0
        %1742 = vmatpush1.msra.mxu0 0.0
        %1743 = vmatprep.subr.mxu0 0.0
        %1744 = vmatpush1.msra.mxu0 0.0
        %1745 = vmatprep.subr.mxu0 0.0
        %1746 = vmatpush1.msra.mxu0 0.0
        %1747 = vmatprep.subr.mxu0 0.0
        %1748 = vmatpush1.msra.mxu0 0.0
        %1749 = vmatprep.subr.mxu0 0.0
        %1750 = vmatpush1.msra.mxu0 0.0
        %1751 = vmatprep.subr.mxu0 0.0
        %1752 = vmatpush1.msra.mxu0 0.0
        %1753 = vmatprep.subr.mxu0 0.0
        %1754 = vmatpush1.msra.mxu0 0.0
        %1755 = vmatprep.subr.mxu0 0.0
        %1756 = vmatpush1.msra.mxu0 0.0
        %1757 = vmatprep.subr.mxu0 0.0
        %1758 = vmatpush1.msra.mxu0 0.0
        %1759 = vmatprep.subr.mxu0 0.0
        %1760 = vmatpush1.msra.mxu0 0.0
        %1761 = vmatprep.mubr.f32.mxu0 0.0
        %v1762 = vand.u32 %v675, 4294901760
        %1763 = vmatmul.mubr.f32.gmra.mrb[0].mxu0 %v1762
        %v1764 = vpop.f32.mrb[0].mxu0
        %v1765 = vadd.f32 %v1684, %v1764
        %v1766 = vpop.f32.mrb[0].mxu0
        %1767 = vdwg.mxu0
        %1768 = vmatprep.subr.mxu0 0.0
        %v1769 = vand.u32 %v1608, 4294901760
        %v1770 = vsub.f32 %v1608, %v1769
        %1771 = vmatpush1.msra.mxu0 %v1770
        %1772 = vmatprep.subr.mxu0 0.0
        %v1773 = vand.u32 %v1609, 4294901760
        %v1774 = vsub.f32 %v1609, %v1773
        %1775 = vmatpush1.msra.mxu0 %v1774
        %1776 = vmatprep.subr.mxu0 0.0
        %1777 = vmatpush1.msra.mxu0 0.0
        %1778 = vmatprep.subr.mxu0 0.0
        %1779 = vmatpush1.msra.mxu0 0.0
        %1780 = vmatprep.subr.mxu0 0.0
        %1781 = vmatpush1.msra.mxu0 0.0
        %1782 = vmatprep.subr.mxu0 0.0
        %1783 = vmatpush1.msra.mxu0 0.0
        %1784 = vmatprep.subr.mxu0 0.0
        %1785 = vmatpush1.msra.mxu0 0.0
        %1786 = vmatprep.subr.mxu0 0.0
        %1787 = vmatpush1.msra.mxu0 0.0
        %1788 = vmatprep.subr.mxu0 0.0
        %1789 = vmatpush1.msra.mxu0 0.0
        %1790 = vmatprep.subr.mxu0 0.0
        %1791 = vmatpush1.msra.mxu0 0.0
        %1792 = vmatprep.subr.mxu0 0.0
        %1793 = vmatpush1.msra.mxu0 0.0
        %1794 = vmatprep.subr.mxu0 0.0
        %1795 = vmatpush1.msra.mxu0 0.0
        %1796 = vmatprep.subr.mxu0 0.0
        %1797 = vmatpush1.msra.mxu0 0.0
        %1798 = vmatprep.subr.mxu0 0.0
        %1799 = vmatpush1.msra.mxu0 0.0
        %1800 = vmatprep.subr.mxu0 0.0
        %1801 = vmatpush1.msra.mxu0 0.0
        %1802 = vmatprep.subr.mxu0 0.0
        %1803 = vmatpush1.msra.mxu0 0.0
        %1804 = vmatprep.subr.mxu0 0.0
        %1805 = vmatpush1.msra.mxu0 0.0
        %1806 = vmatprep.subr.mxu0 0.0
        %1807 = vmatpush1.msra.mxu0 0.0
        %1808 = vmatprep.subr.mxu0 0.0
        %1809 = vmatpush1.msra.mxu0 0.0
        %1810 = vmatprep.subr.mxu0 0.0
        %1811 = vmatpush1.msra.mxu0 0.0
        %1812 = vmatprep.subr.mxu0 0.0
        %1813 = vmatpush1.msra.mxu0 0.0
        %1814 = vmatprep.subr.mxu0 0.0
        %1815 = vmatpush1.msra.mxu0 0.0
        %1816 = vmatprep.subr.mxu0 0.0
        %1817 = vmatpush1.msra.mxu0 0.0
        %1818 = vmatprep.subr.mxu0 0.0
        %1819 = vmatpush1.msra.mxu0 0.0
        %1820 = vmatprep.subr.mxu0 0.0
        %1821 = vmatpush1.msra.mxu0 0.0
        %1822 = vmatprep.subr.mxu0 0.0
        %1823 = vmatpush1.msra.mxu0 0.0
        %1824 = vmatprep.subr.mxu0 0.0
        %1825 = vmatpush1.msra.mxu0 0.0
        %1826 = vmatprep.subr.mxu0 0.0
        %1827 = vmatpush1.msra.mxu0 0.0
        %1828 = vmatprep.subr.mxu0 0.0
        %1829 = vmatpush1.msra.mxu0 0.0
        %1830 = vmatprep.subr.mxu0 0.0
        %1831 = vmatpush1.msra.mxu0 0.0
        %1832 = vmatprep.subr.mxu0 0.0
        %1833 = vmatpush1.msra.mxu0 0.0
        %1834 = vmatprep.subr.mxu0 0.0
        %1835 = vmatpush1.msra.mxu0 0.0
        %1836 = vmatprep.mubr.f32.mxu0 0.0
        %v1837 = vand.u32 %v675, 4294901760
        %v1838 = vsub.f32 %v675, %v1837
        %1839 = vmatmul.mubr.f32.gmra.mrb[0].mxu0 %v1838
        %v1840 = vpop.f32.mrb[0].mxu0
        %v1841 = vadd.f32 %v1765, %v1840
        %v1842 = vpop.f32.mrb[0].mxu0
        %1843 = vdwg.mxu0
        %1844 = vmatprep.subr.mxu0 0.0
        %v1845 = vand.u32 %v1608, 4294901760
        %1846 = vmatpush1.msra.mxu0 %v1845
        %1847 = vmatprep.subr.mxu0 0.0
        %v1848 = vand.u32 %v1609, 4294901760
        %1849 = vmatpush1.msra.mxu0 %v1848
        %1850 = vmatprep.subr.mxu0 0.0
        %1851 = vmatpush1.msra.mxu0 0.0
        %1852 = vmatprep.subr.mxu0 0.0
        %1853 = vmatpush1.msra.mxu0 0.0
        %1854 = vmatprep.subr.mxu0 0.0
        %1855 = vmatpush1.msra.mxu0 0.0
        %1856 = vmatprep.subr.mxu0 0.0
        %1857 = vmatpush1.msra.mxu0 0.0
        %1858 = vmatprep.subr.mxu0 0.0
        %1859 = vmatpush1.msra.mxu0 0.0
        %1860 = vmatprep.subr.mxu0 0.0
        %1861 = vmatpush1.msra.mxu0 0.0
        %1862 = vmatprep.subr.mxu0 0.0
        %1863 = vmatpush1.msra.mxu0 0.0
        %1864 = vmatprep.subr.mxu0 0.0
        %1865 = vmatpush1.msra.mxu0 0.0
        %1866 = vmatprep.subr.mxu0 0.0
        %1867 = vmatpush1.msra.mxu0 0.0
        %1868 = vmatprep.subr.mxu0 0.0
        %1869 = vmatpush1.msra.mxu0 0.0
        %1870 = vmatprep.subr.mxu0 0.0
        %1871 = vmatpush1.msra.mxu0 0.0
        %1872 = vmatprep.subr.mxu0 0.0
        %1873 = vmatpush1.msra.mxu0 0.0
        %1874 = vmatprep.subr.mxu0 0.0
        %1875 = vmatpush1.msra.mxu0 0.0
        %1876 = vmatprep.subr.mxu0 0.0
        %1877 = vmatpush1.msra.mxu0 0.0
        %1878 = vmatprep.subr.mxu0 0.0
        %1879 = vmatpush1.msra.mxu0 0.0
        %1880 = vmatprep.subr.mxu0 0.0
        %1881 = vmatpush1.msra.mxu0 0.0
        %1882 = vmatprep.subr.mxu0 0.0
        %1883 = vmatpush1.msra.mxu0 0.0
        %1884 = vmatprep.subr.mxu0 0.0
        %1885 = vmatpush1.msra.mxu0 0.0
        %1886 = vmatprep.subr.mxu0 0.0
        %1887 = vmatpush1.msra.mxu0 0.0
        %1888 = vmatprep.subr.mxu0 0.0
        %1889 = vmatpush1.msra.mxu0 0.0
        %1890 = vmatprep.subr.mxu0 0.0
        %1891 = vmatpush1.msra.mxu0 0.0
        %1892 = vmatprep.subr.mxu0 0.0
        %1893 = vmatpush1.msra.mxu0 0.0
        %1894 = vmatprep.subr.mxu0 0.0
        %1895 = vmatpush1.msra.mxu0 0.0
        %1896 = vmatprep.subr.mxu0 0.0
        %1897 = vmatpush1.msra.mxu0 0.0
        %1898 = vmatprep.subr.mxu0 0.0
        %1899 = vmatpush1.msra.mxu0 0.0
        %1900 = vmatprep.subr.mxu0 0.0
        %1901 = vmatpush1.msra.mxu0 0.0
        %1902 = vmatprep.subr.mxu0 0.0
        %1903 = vmatpush1.msra.mxu0 0.0
        %1904 = vmatprep.subr.mxu0 0.0
        %1905 = vmatpush1.msra.mxu0 0.0
        %1906 = vmatprep.subr.mxu0 0.0
        %1907 = vmatpush1.msra.mxu0 0.0
        %1908 = vmatprep.subr.mxu0 0.0
        %1909 = vmatpush1.msra.mxu0 0.0
        %1910 = vmatprep.mubr.f32.mxu0 0.0
        %v1911 = vand.u32 %v675, 4294901760
        %v1912 = vsub.f32 %v675, %v1911
        %v1913 = vand.u32 %v1912, 4294901760
        %1914 = vmatmul.mubr.f32.gmra.mrb[0].mxu0 %v1913
        %v1915 = vpop.f32.mrb[0].mxu0
        %v1916 = vadd.f32 %v1841, %v1915
        %v1917 = vpop.f32.mrb[0].mxu0
        %1918 = vdwg.mxu0
        %1919 = vmatprep.subr.mxu0 0.0
        %v1920 = vand.u32 %v1608, 4294901760
        %v1921 = vsub.f32 %v1608, %v1920
        %v1922 = vand.u32 %v1921, 4294901760
        %1923 = vmatpush1.msra.mxu0 %v1922
        %1924 = vmatprep.subr.mxu0 0.0
        %v1925 = vand.u32 %v1609, 4294901760
        %v1926 = vsub.f32 %v1609, %v1925
        %v1927 = vand.u32 %v1926, 4294901760
        %1928 = vmatpush1.msra.mxu0 %v1927
        %1929 = vmatprep.subr.mxu0 0.0
        %1930 = vmatpush1.msra.mxu0 0.0
        %1931 = vmatprep.subr.mxu0 0.0
        %1932 = vmatpush1.msra.mxu0 0.0
        %1933 = vmatprep.subr.mxu0 0.0
        %1934 = vmatpush1.msra.mxu0 0.0
        %1935 = vmatprep.subr.mxu0 0.0
        %1936 = vmatpush1.msra.mxu0 0.0
        %1937 = vmatprep.subr.mxu0 0.0
        %1938 = vmatpush1.msra.mxu0 0.0
        %1939 = vmatprep.subr.mxu0 0.0
        %1940 = vmatpush1.msra.mxu0 0.0
        %1941 = vmatprep.subr.mxu0 0.0
        %1942 = vmatpush1.msra.mxu0 0.0
        %1943 = vmatprep.subr.mxu0 0.0
        %1944 = vmatpush1.msra.mxu0 0.0
        %1945 = vmatprep.subr.mxu0 0.0
        %1946 = vmatpush1.msra.mxu0 0.0
        %1947 = vmatprep.subr.mxu0 0.0
        %1948 = vmatpush1.msra.mxu0 0.0
        %1949 = vmatprep.subr.mxu0 0.0
        %1950 = vmatpush1.msra.mxu0 0.0
        %1951 = vmatprep.subr.mxu0 0.0
        %1952 = vmatpush1.msra.mxu0 0.0
        %1953 = vmatprep.subr.mxu0 0.0
        %1954 = vmatpush1.msra.mxu0 0.0
        %1955 = vmatprep.subr.mxu0 0.0
        %1956 = vmatpush1.msra.mxu0 0.0
        %1957 = vmatprep.subr.mxu0 0.0
        %1958 = vmatpush1.msra.mxu0 0.0
        %1959 = vmatprep.subr.mxu0 0.0
        %1960 = vmatpush1.msra.mxu0 0.0
        %1961 = vmatprep.subr.mxu0 0.0
        %1962 = vmatpush1.msra.mxu0 0.0
        %1963 = vmatprep.subr.mxu0 0.0
        %1964 = vmatpush1.msra.mxu0 0.0
        %1965 = vmatprep.subr.mxu0 0.0
        %1966 = vmatpush1.msra.mxu0 0.0
        %1967 = vmatprep.subr.mxu0 0.0
        %1968 = vmatpush1.msra.mxu0 0.0
        %1969 = vmatprep.subr.mxu0 0.0
        %1970 = vmatpush1.msra.mxu0 0.0
        %1971 = vmatprep.subr.mxu0 0.0
        %1972 = vmatpush1.msra.mxu0 0.0
        %1973 = vmatprep.subr.mxu0 0.0
        %1974 = vmatpush1.msra.mxu0 0.0
        %1975 = vmatprep.subr.mxu0 0.0
        %1976 = vmatpush1.msra.mxu0 0.0
        %1977 = vmatprep.subr.mxu0 0.0
        %1978 = vmatpush1.msra.mxu0 0.0
        %1979 = vmatprep.subr.mxu0 0.0
        %1980 = vmatpush1.msra.mxu0 0.0
        %1981 = vmatprep.subr.mxu0 0.0
        %1982 = vmatpush1.msra.mxu0 0.0
        %1983 = vmatprep.subr.mxu0 0.0
        %1984 = vmatpush1.msra.mxu0 0.0
        %1985 = vmatprep.subr.mxu0 0.0
        %1986 = vmatpush1.msra.mxu0 0.0
        %1987 = vmatprep.subr.mxu0 0.0
        %1988 = vmatpush1.msra.mxu0 0.0
        %1989 = vmatprep.mubr.f32.mxu0 0.0
        %v1990 = vand.u32 %v675, 4294901760
        %1991 = vmatmul.mubr.f32.gmra.mrb[0].mxu0 %v1990
        %v1992 = vpop.f32.mrb[0].mxu0
        %v1993 = vadd.f32 %v1916, %v1992
        %v1994 = vpop.f32.mrb[0].mxu0
        %1995 = vdwg.mxu0
        %1996 = vmatprep.subr.mxu0 0.0
        %v1997 = vand.u32 %v1608, 4294901760
        %1998 = vmatpush1.msra.mxu0 %v1997
        %1999 = vmatprep.subr.mxu0 0.0
        %v2000 = vand.u32 %v1609, 4294901760
        %2001 = vmatpush1.msra.mxu0 %v2000
        %2002 = vmatprep.subr.mxu0 0.0
        %2003 = vmatpush1.msra.mxu0 0.0
        %2004 = vmatprep.subr.mxu0 0.0
        %2005 = vmatpush1.msra.mxu0 0.0
        %2006 = vmatprep.subr.mxu0 0.0
        %2007 = vmatpush1.msra.mxu0 0.0
        %2008 = vmatprep.subr.mxu0 0.0
        %2009 = vmatpush1.msra.mxu0 0.0
        %2010 = vmatprep.subr.mxu0 0.0
        %2011 = vmatpush1.msra.mxu0 0.0
        %2012 = vmatprep.subr.mxu0 0.0
        %2013 = vmatpush1.msra.mxu0 0.0
        %2014 = vmatprep.subr.mxu0 0.0
        %2015 = vmatpush1.msra.mxu0 0.0
        %2016 = vmatprep.subr.mxu0 0.0
        %2017 = vmatpush1.msra.mxu0 0.0
        %2018 = vmatprep.subr.mxu0 0.0
        %2019 = vmatpush1.msra.mxu0 0.0
        %2020 = vmatprep.subr.mxu0 0.0
        %2021 = vmatpush1.msra.mxu0 0.0
        %2022 = vmatprep.subr.mxu0 0.0
        %2023 = vmatpush1.msra.mxu0 0.0
        %2024 = vmatprep.subr.mxu0 0.0
        %2025 = vmatpush1.msra.mxu0 0.0
        %2026 = vmatprep.subr.mxu0 0.0
        %2027 = vmatpush1.msra.mxu0 0.0
        %2028 = vmatprep.subr.mxu0 0.0
        %2029 = vmatpush1.msra.mxu0 0.0
        %2030 = vmatprep.subr.mxu0 0.0
        %2031 = vmatpush1.msra.mxu0 0.0
        %2032 = vmatprep.subr.mxu0 0.0
        %2033 = vmatpush1.msra.mxu0 0.0
        %2034 = vmatprep.subr.mxu0 0.0
        %2035 = vmatpush1.msra.mxu0 0.0
        %2036 = vmatprep.subr.mxu0 0.0
        %2037 = vmatpush1.msra.mxu0 0.0
        %2038 = vmatprep.subr.mxu0 0.0
        %2039 = vmatpush1.msra.mxu0 0.0
        %2040 = vmatprep.subr.mxu0 0.0
        %2041 = vmatpush1.msra.mxu0 0.0
        %2042 = vmatprep.subr.mxu0 0.0
        %2043 = vmatpush1.msra.mxu0 0.0
        %2044 = vmatprep.subr.mxu0 0.0
        %2045 = vmatpush1.msra.mxu0 0.0
        %2046 = vmatprep.subr.mxu0 0.0
        %2047 = vmatpush1.msra.mxu0 0.0
        %2048 = vmatprep.subr.mxu0 0.0
        %2049 = vmatpush1.msra.mxu0 0.0
        %2050 = vmatprep.subr.mxu0 0.0
        %2051 = vmatpush1.msra.mxu0 0.0
        %2052 = vmatprep.subr.mxu0 0.0
        %2053 = vmatpush1.msra.mxu0 0.0
        %2054 = vmatprep.subr.mxu0 0.0
        %2055 = vmatpush1.msra.mxu0 0.0
        %2056 = vmatprep.subr.mxu0 0.0
        %2057 = vmatpush1.msra.mxu0 0.0
        %2058 = vmatprep.subr.mxu0 0.0
        %2059 = vmatpush1.msra.mxu0 0.0
        %2060 = vmatprep.subr.mxu0 0.0
        %2061 = vmatpush1.msra.mxu0 0.0
        %2062 = vmatprep.mubr.f32.mxu0 0.0
        %v2063 = vand.u32 %v675, 4294901760
        %2064 = vmatmul.mubr.f32.gmra.mrb[0].mxu0 %v2063
        %v2065 = vpop.f32.mrb[0].mxu0
        %v2066 = vadd.f32 %v1993, %v2065
        %v2067 = vpop.f32.mrb[0].mxu0
        %2068 = vdwg.mxu0
        %v2070 = vsel %vm673, %v2066, 0
        %2072 = vmatprep.subr.mxu0 0.0
        %v2073 = vand.u32 %v661, 4294901760
        %2074 = vmatpush1.msra.mxu0 %v2073
        %2075 = vmatprep.subr.mxu0 0.0
        %v2076 = vand.u32 %v662, 4294901760
        %2077 = vmatpush1.msra.mxu0 %v2076
        %2078 = vmatprep.subr.mxu0 0.0
        %2079 = vmatpush1.msra.mxu0 0.0
        %2080 = vmatprep.subr.mxu0 0.0
        %2081 = vmatpush1.msra.mxu0 0.0
        %2082 = vmatprep.subr.mxu0 0.0
        %2083 = vmatpush1.msra.mxu0 0.0
        %2084 = vmatprep.subr.mxu0 0.0
        %2085 = vmatpush1.msra.mxu0 0.0
        %2086 = vmatprep.subr.mxu0 0.0
        %2087 = vmatpush1.msra.mxu0 0.0
        %2088 = vmatprep.subr.mxu0 0.0
        %2089 = vmatpush1.msra.mxu0 0.0
        %2090 = vmatprep.subr.mxu0 0.0
        %2091 = vmatpush1.msra.mxu0 0.0
        %2092 = vmatprep.subr.mxu0 0.0
        %2093 = vmatpush1.msra.mxu0 0.0
        %2094 = vmatprep.subr.mxu0 0.0
        %2095 = vmatpush1.msra.mxu0 0.0
        %2096 = vmatprep.subr.mxu0 0.0
        %2097 = vmatpush1.msra.mxu0 0.0
        %2098 = vmatprep.subr.mxu0 0.0
        %2099 = vmatpush1.msra.mxu0 0.0
        %2100 = vmatprep.subr.mxu0 0.0
        %2101 = vmatpush1.msra.mxu0 0.0
        %2102 = vmatprep.subr.mxu0 0.0
        %2103 = vmatpush1.msra.mxu0 0.0
        %2104 = vmatprep.subr.mxu0 0.0
        %2105 = vmatpush1.msra.mxu0 0.0
        %2106 = vmatprep.subr.mxu0 0.0
        %2107 = vmatpush1.msra.mxu0 0.0
        %2108 = vmatprep.subr.mxu0 0.0
        %2109 = vmatpush1.msra.mxu0 0.0
        %2110 = vmatprep.subr.mxu0 0.0
        %2111 = vmatpush1.msra.mxu0 0.0
        %2112 = vmatprep.subr.mxu0 0.0
        %2113 = vmatpush1.msra.mxu0 0.0
        %2114 = vmatprep.subr.mxu0 0.0
        %2115 = vmatpush1.msra.mxu0 0.0
        %2116 = vmatprep.subr.mxu0 0.0
        %2117 = vmatpush1.msra.mxu0 0.0
        %2118 = vmatprep.subr.mxu0 0.0
        %2119 = vmatpush1.msra.mxu0 0.0
        %2120 = vmatprep.subr.mxu0 0.0
        %2121 = vmatpush1.msra.mxu0 0.0
        %2122 = vmatprep.subr.mxu0 0.0
        %2123 = vmatpush1.msra.mxu0 0.0
        %2124 = vmatprep.subr.mxu0 0.0
        %2125 = vmatpush1.msra.mxu0 0.0
        %2126 = vmatprep.subr.mxu0 0.0
        %2127 = vmatpush1.msra.mxu0 0.0
        %2128 = vmatprep.subr.mxu0 0.0
        %2129 = vmatpush1.msra.mxu0 0.0
        %2130 = vmatprep.subr.mxu0 0.0
        %2131 = vmatpush1.msra.mxu0 0.0
        %2132 = vmatprep.subr.mxu0 0.0
        %2133 = vmatpush1.msra.mxu0 0.0
        %2134 = vmatprep.subr.mxu0 0.0
        %2135 = vmatpush1.msra.mxu0 0.0
        %2136 = vmatprep.subr.mxu0 0.0
        %2137 = vmatpush1.msra.mxu0 0.0
        %2138 = vmatprep.mubr.f32.mxu0 0.0
        %v2139 = vand.u32 %v2070, 4294901760
        %v2140 = vsub.f32 %v2070, %v2139
        %v2141 = vand.u32 %v2140, 4294901760
        %v2142 = vsub.f32 %v2140, %v2141
        %v2143 = vand.u32 %v2142, 4294901760
        %2144 = vmatmul.mubr.f32.gmra.mrb[0].mxu0 %v2143
        %v2145 = vpop.f32.mrb[0].mxu0
        %v2146 = vadd.f32 0.0, %v2145
        %v2147 = vpop.f32.mrb[0].mxu0
        %2148 = vdwg.mxu0
        %2149 = vmatprep.subr.mxu0 0.0
        %v2150 = vand.u32 %v661, 4294901760
        %v2151 = vsub.f32 %v661, %v2150
        %v2152 = vand.u32 %v2151, 4294901760
        %v2153 = vsub.f32 %v2151, %v2152
        %v2154 = vand.u32 %v2153, 4294901760
        %2155 = vmatpush1.msra.mxu0 %v2154
        %2156 = vmatprep.subr.mxu0 0.0
        %v2157 = vand.u32 %v662, 4294901760
        %v2158 = vsub.f32 %v662, %v2157
        %v2159 = vand.u32 %v2158, 4294901760
        %v2160 = vsub.f32 %v2158, %v2159
        %v2161 = vand.u32 %v2160, 4294901760
        %2162 = vmatpush1.msra.mxu0 %v2161
        %2163 = vmatprep.subr.mxu0 0.0
        %2164 = vmatpush1.msra.mxu0 0.0
        %2165 = vmatprep.subr.mxu0 0.0
        %2166 = vmatpush1.msra.mxu0 0.0
        %2167 = vmatprep.subr.mxu0 0.0
        %2168 = vmatpush1.msra.mxu0 0.0
        %2169 = vmatprep.subr.mxu0 0.0
        %2170 = vmatpush1.msra.mxu0 0.0
        %2171 = vmatprep.subr.mxu0 0.0
        %2172 = vmatpush1.msra.mxu0 0.0
        %2173 = vmatprep.subr.mxu0 0.0
        %2174 = vmatpush1.msra.mxu0 0.0
        %2175 = vmatprep.subr.mxu0 0.0
        %2176 = vmatpush1.msra.mxu0 0.0
        %2177 = vmatprep.subr.mxu0 0.0
        %2178 = vmatpush1.msra.mxu0 0.0
        %2179 = vmatprep.subr.mxu0 0.0
        %2180 = vmatpush1.msra.mxu0 0.0
        %2181 = vmatprep.subr.mxu0 0.0
        %2182 = vmatpush1.msra.mxu0 0.0
        %2183 = vmatprep.subr.mxu0 0.0
        %2184 = vmatpush1.msra.mxu0 0.0
        %2185 = vmatprep.subr.mxu0 0.0
        %2186 = vmatpush1.msra.mxu0 0.0
        %2187 = vmatprep.subr.mxu0 0.0
        %2188 = vmatpush1.msra.mxu0 0.0
        %2189 = vmatprep.subr.mxu0 0.0
        %2190 = vmatpush1.msra.mxu0 0.0
        %2191 = vmatprep.subr.mxu0 0.0
        %2192 = vmatpush1.msra.mxu0 0.0
        %2193 = vmatprep.subr.mxu0 0.0
        %2194 = vmatpush1.msra.mxu0 0.0
        %2195 = vmatprep.subr.mxu0 0.0
        %2196 = vmatpush1.msra.mxu0 0.0
        %2197 = vmatprep.subr.mxu0 0.0
        %2198 = vmatpush1.msra.mxu0 0.0
        %2199 = vmatprep.subr.mxu0 0.0
        %2200 = vmatpush1.msra.mxu0 0.0
        %2201 = vmatprep.subr.mxu0 0.0
        %2202 = vmatpush1.msra.mxu0 0.0
        %2203 = vmatprep.subr.mxu0 0.0
        %2204 = vmatpush1.msra.mxu0 0.0
        %2205 = vmatprep.subr.mxu0 0.0
        %2206 = vmatpush1.msra.mxu0 0.0
        %2207 = vmatprep.subr.mxu0 0.0
        %2208 = vmatpush1.msra.mxu0 0.0
        %2209 = vmatprep.subr.mxu0 0.0
        %2210 = vmatpush1.msra.mxu0 0.0
        %2211 = vmatprep.subr.mxu0 0.0
        %2212 = vmatpush1.msra.mxu0 0.0
        %2213 = vmatprep.subr.mxu0 0.0
        %2214 = vmatpush1.msra.mxu0 0.0
        %2215 = vmatprep.subr.mxu0 0.0
        %2216 = vmatpush1.msra.mxu0 0.0
        %2217 = vmatprep.subr.mxu0 0.0
        %2218 = vmatpush1.msra.mxu0 0.0
        %2219 = vmatprep.subr.mxu0 0.0
        %2220 = vmatpush1.msra.mxu0 0.0
        %2221 = vmatprep.subr.mxu0 0.0
        %2222 = vmatpush1.msra.mxu0 0.0
        %2223 = vmatprep.mubr.f32.mxu0 0.0
        %v2224 = vand.u32 %v2070, 4294901760
        %2225 = vmatmul.mubr.f32.gmra.mrb[0].mxu0 %v2224
        %v2226 = vpop.f32.mrb[0].mxu0
        %v2227 = vadd.f32 %v2146, %v2226
        %v2228 = vpop.f32.mrb[0].mxu0
        %2229 = vdwg.mxu0
        %2230 = vmatprep.subr.mxu0 0.0
        %v2231 = vand.u32 %v661, 4294901760
        %v2232 = vsub.f32 %v661, %v2231
        %2233 = vmatpush1.msra.mxu0 %v2232
        %2234 = vmatprep.subr.mxu0 0.0
        %v2235 = vand.u32 %v662, 4294901760
        %v2236 = vsub.f32 %v662, %v2235
        %2237 = vmatpush1.msra.mxu0 %v2236
        %2238 = vmatprep.subr.mxu0 0.0
        %2239 = vmatpush1.msra.mxu0 0.0
        %2240 = vmatprep.subr.mxu0 0.0
        %2241 = vmatpush1.msra.mxu0 0.0
        %2242 = vmatprep.subr.mxu0 0.0
        %2243 = vmatpush1.msra.mxu0 0.0
        %2244 = vmatprep.subr.mxu0 0.0
        %2245 = vmatpush1.msra.mxu0 0.0
        %2246 = vmatprep.subr.mxu0 0.0
        %2247 = vmatpush1.msra.mxu0 0.0
        %2248 = vmatprep.subr.mxu0 0.0
        %2249 = vmatpush1.msra.mxu0 0.0
        %2250 = vmatprep.subr.mxu0 0.0
        %2251 = vmatpush1.msra.mxu0 0.0
        %2252 = vmatprep.subr.mxu0 0.0
        %2253 = vmatpush1.msra.mxu0 0.0
        %2254 = vmatprep.subr.mxu0 0.0
        %2255 = vmatpush1.msra.mxu0 0.0
        %2256 = vmatprep.subr.mxu0 0.0
        %2257 = vmatpush1.msra.mxu0 0.0
        %2258 = vmatprep.subr.mxu0 0.0
        %2259 = vmatpush1.msra.mxu0 0.0
        %2260 = vmatprep.subr.mxu0 0.0
        %2261 = vmatpush1.msra.mxu0 0.0
        %2262 = vmatprep.subr.mxu0 0.0
        %2263 = vmatpush1.msra.mxu0 0.0
        %2264 = vmatprep.subr.mxu0 0.0
        %2265 = vmatpush1.msra.mxu0 0.0
        %2266 = vmatprep.subr.mxu0 0.0
        %2267 = vmatpush1.msra.mxu0 0.0
        %2268 = vmatprep.subr.mxu0 0.0
        %2269 = vmatpush1.msra.mxu0 0.0
        %2270 = vmatprep.subr.mxu0 0.0
        %2271 = vmatpush1.msra.mxu0 0.0
        %2272 = vmatprep.subr.mxu0 0.0
        %2273 = vmatpush1.msra.mxu0 0.0
        %2274 = vmatprep.subr.mxu0 0.0
        %2275 = vmatpush1.msra.mxu0 0.0
        %2276 = vmatprep.subr.mxu0 0.0
        %2277 = vmatpush1.msra.mxu0 0.0
        %2278 = vmatprep.subr.mxu0 0.0
        %2279 = vmatpush1.msra.mxu0 0.0
        %2280 = vmatprep.subr.mxu0 0.0
        %2281 = vmatpush1.msra.mxu0 0.0
        %2282 = vmatprep.subr.mxu0 0.0
        %2283 = vmatpush1.msra.mxu0 0.0
        %2284 = vmatprep.subr.mxu0 0.0
        %2285 = vmatpush1.msra.mxu0 0.0
        %2286 = vmatprep.subr.mxu0 0.0
        %2287 = vmatpush1.msra.mxu0 0.0
        %2288 = vmatprep.subr.mxu0 0.0
        %2289 = vmatpush1.msra.mxu0 0.0
        %2290 = vmatprep.subr.mxu0 0.0
        %2291 = vmatpush1.msra.mxu0 0.0
        %2292 = vmatprep.subr.mxu0 0.0
        %2293 = vmatpush1.msra.mxu0 0.0
        %2294 = vmatprep.subr.mxu0 0.0
        %2295 = vmatpush1.msra.mxu0 0.0
        %2296 = vmatprep.subr.mxu0 0.0
        %2297 = vmatpush1.msra.mxu0 0.0
        %2298 = vmatprep.mubr.f32.mxu0 0.0
        %v2299 = vand.u32 %v2070, 4294901760
        %v2300 = vsub.f32 %v2070, %v2299
        %2301 = vmatmul.mubr.f32.gmra.mrb[0].mxu0 %v2300
        %v2302 = vpop.f32.mrb[0].mxu0
        %v2303 = vadd.f32 %v2227, %v2302
        %v2304 = vpop.f32.mrb[0].mxu0
        %2305 = vdwg.mxu0
        %2306 = vmatprep.subr.mxu0 0.0
        %v2307 = vand.u32 %v661, 4294901760
        %2308 = vmatpush1.msra.mxu0 %v2307
        %2309 = vmatprep.subr.mxu0 0.0
        %v2310 = vand.u32 %v662, 4294901760
        %2311 = vmatpush1.msra.mxu0 %v2310
        %2312 = vmatprep.subr.mxu0 0.0
        %2313 = vmatpush1.msra.mxu0 0.0
        %2314 = vmatprep.subr.mxu0 0.0
        %2315 = vmatpush1.msra.mxu0 0.0
        %2316 = vmatprep.subr.mxu0 0.0
        %2317 = vmatpush1.msra.mxu0 0.0
        %2318 = vmatprep.subr.mxu0 0.0
        %2319 = vmatpush1.msra.mxu0 0.0
        %2320 = vmatprep.subr.mxu0 0.0
        %2321 = vmatpush1.msra.mxu0 0.0
        %2322 = vmatprep.subr.mxu0 0.0
        %2323 = vmatpush1.msra.mxu0 0.0
        %2324 = vmatprep.subr.mxu0 0.0
        %2325 = vmatpush1.msra.mxu0 0.0
        %2326 = vmatprep.subr.mxu0 0.0
        %2327 = vmatpush1.msra.mxu0 0.0
        %2328 = vmatprep.subr.mxu0 0.0
        %2329 = vmatpush1.msra.mxu0 0.0
        %2330 = vmatprep.subr.mxu0 0.0
        %2331 = vmatpush1.msra.mxu0 0.0
        %2332 = vmatprep.subr.mxu0 0.0
        %2333 = vmatpush1.msra.mxu0 0.0
        %2334 = vmatprep.subr.mxu0 0.0
        %2335 = vmatpush1.msra.mxu0 0.0
        %2336 = vmatprep.subr.mxu0 0.0
        %2337 = vmatpush1.msra.mxu0 0.0
        %2338 = vmatprep.subr.mxu0 0.0
        %2339 = vmatpush1.msra.mxu0 0.0
        %2340 = vmatprep.subr.mxu0 0.0
        %2341 = vmatpush1.msra.mxu0 0.0
        %2342 = vmatprep.subr.mxu0 0.0
        %2343 = vmatpush1.msra.mxu0 0.0
        %2344 = vmatprep.subr.mxu0 0.0
        %2345 = vmatpush1.msra.mxu0 0.0
        %2346 = vmatprep.subr.mxu0 0.0
        %2347 = vmatpush1.msra.mxu0 0.0
        %2348 = vmatprep.subr.mxu0 0.0
        %2349 = vmatpush1.msra.mxu0 0.0
        %2350 = vmatprep.subr.mxu0 0.0
        %2351 = vmatpush1.msra.mxu0 0.0
        %2352 = vmatprep.subr.mxu0 0.0
        %2353 = vmatpush1.msra.mxu0 0.0
        %2354 = vmatprep.subr.mxu0 0.0
        %2355 = vmatpush1.msra.mxu0 0.0
        %2356 = vmatprep.subr.mxu0 0.0
        %2357 = vmatpush1.msra.mxu0 0.0
        %2358 = vmatprep.subr.mxu0 0.0
        %2359 = vmatpush1.msra.mxu0 0.0
        %2360 = vmatprep.subr.mxu0 0.0
        %2361 = vmatpush1.msra.mxu0 0.0
        %2362 = vmatprep.subr.mxu0 0.0
        %2363 = vmatpush1.msra.mxu0 0.0
        %2364 = vmatprep.subr.mxu0 0.0
        %2365 = vmatpush1.msra.mxu0 0.0
        %2366 = vmatprep.subr.mxu0 0.0
        %2367 = vmatpush1.msra.mxu0 0.0
        %2368 = vmatprep.subr.mxu0 0.0
        %2369 = vmatpush1.msra.mxu0 0.0
        %2370 = vmatprep.subr.mxu0 0.0
        %2371 = vmatpush1.msra.mxu0 0.0
        %2372 = vmatprep.mubr.f32.mxu0 0.0
        %v2373 = vand.u32 %v2070, 4294901760
        %v2374 = vsub.f32 %v2070, %v2373
        %v2375 = vand.u32 %v2374, 4294901760
        %2376 = vmatmul.mubr.f32.gmra.mrb[0].mxu0 %v2375
        %v2377 = vpop.f32.mrb[0].mxu0
        %v2378 = vadd.f32 %v2303, %v2377
        %v2379 = vpop.f32.mrb[0].mxu0
        %2380 = vdwg.mxu0
        %2381 = vmatprep.subr.mxu0 0.0
        %v2382 = vand.u32 %v661, 4294901760
        %v2383 = vsub.f32 %v661, %v2382
        %v2384 = vand.u32 %v2383, 4294901760
        %2385 = vmatpush1.msra.mxu0 %v2384
        %2386 = vmatprep.subr.mxu0 0.0
        %v2387 = vand.u32 %v662, 4294901760
        %v2388 = vsub.f32 %v662, %v2387
        %v2389 = vand.u32 %v2388, 4294901760
        %2390 = vmatpush1.msra.mxu0 %v2389
        %2391 = vmatprep.subr.mxu0 0.0
        %2392 = vmatpush1.msra.mxu0 0.0
        %2393 = vmatprep.subr.mxu0 0.0
        %2394 = vmatpush1.msra.mxu0 0.0
        %2395 = vmatprep.subr.mxu0 0.0
        %2396 = vmatpush1.msra.mxu0 0.0
        %2397 = vmatprep.subr.mxu0 0.0
        %2398 = vmatpush1.msra.mxu0 0.0
        %2399 = vmatprep.subr.mxu0 0.0
        %2400 = vmatpush1.msra.mxu0 0.0
        %2401 = vmatprep.subr.mxu0 0.0
        %2402 = vmatpush1.msra.mxu0 0.0
        %2403 = vmatprep.subr.mxu0 0.0
        %2404 = vmatpush1.msra.mxu0 0.0
        %2405 = vmatprep.subr.mxu0 0.0
        %2406 = vmatpush1.msra.mxu0 0.0
        %2407 = vmatprep.subr.mxu0 0.0
        %2408 = vmatpush1.msra.mxu0 0.0
        %2409 = vmatprep.subr.mxu0 0.0
        %2410 = vmatpush1.msra.mxu0 0.0
        %2411 = vmatprep.subr.mxu0 0.0
        %2412 = vmatpush1.msra.mxu0 0.0
        %2413 = vmatprep.subr.mxu0 0.0
        %2414 = vmatpush1.msra.mxu0 0.0
        %2415 = vmatprep.subr.mxu0 0.0
        %2416 = vmatpush1.msra.mxu0 0.0
        %2417 = vmatprep.subr.mxu0 0.0
        %2418 = vmatpush1.msra.mxu0 0.0
        %2419 = vmatprep.subr.mxu0 0.0
        %2420 = vmatpush1.msra.mxu0 0.0
        %2421 = vmatprep.subr.mxu0 0.0
        %2422 = vmatpush1.msra.mxu0 0.0
        %2423 = vmatprep.subr.mxu0 0.0
        %2424 = vmatpush1.msra.mxu0 0.0
        %2425 = vmatprep.subr.mxu0 0.0
        %2426 = vmatpush1.msra.mxu0 0.0
        %2427 = vmatprep.subr.mxu0 0.0
        %2428 = vmatpush1.msra.mxu0 0.0
        %2429 = vmatprep.subr.mxu0 0.0
        %2430 = vmatpush1.msra.mxu0 0.0
        %2431 = vmatprep.subr.mxu0 0.0
        %2432 = vmatpush1.msra.mxu0 0.0
        %2433 = vmatprep.subr.mxu0 0.0
        %2434 = vmatpush1.msra.mxu0 0.0
        %2435 = vmatprep.subr.mxu0 0.0
        %2436 = vmatpush1.msra.mxu0 0.0
        %2437 = vmatprep.subr.mxu0 0.0
        %2438 = vmatpush1.msra.mxu0 0.0
        %2439 = vmatprep.subr.mxu0 0.0
        %2440 = vmatpush1.msra.mxu0 0.0
        %2441 = vmatprep.subr.mxu0 0.0
        %2442 = vmatpush1.msra.mxu0 0.0
        %2443 = vmatprep.subr.mxu0 0.0
        %2444 = vmatpush1.msra.mxu0 0.0
        %2445 = vmatprep.subr.mxu0 0.0
        %2446 = vmatpush1.msra.mxu0 0.0
        %2447 = vmatprep.subr.mxu0 0.0
        %2448 = vmatpush1.msra.mxu0 0.0
        %2449 = vmatprep.subr.mxu0 0.0
        %2450 = vmatpush1.msra.mxu0 0.0
        %2451 = vmatprep.mubr.f32.mxu0 0.0
        %v2452 = vand.u32 %v2070, 4294901760
        %2453 = vmatmul.mubr.f32.gmra.mrb[0].mxu0 %v2452
        %v2454 = vpop.f32.mrb[0].mxu0
        %v2455 = vadd.f32 %v2378, %v2454
        %v2456 = vpop.f32.mrb[0].mxu0
        %2457 = vdwg.mxu0
        %2458 = vmatprep.subr.mxu0 0.0
        %v2459 = vand.u32 %v661, 4294901760
        %2460 = vmatpush1.msra.mxu0 %v2459
        %2461 = vmatprep.subr.mxu0 0.0
        %v2462 = vand.u32 %v662, 4294901760
        %2463 = vmatpush1.msra.mxu0 %v2462
        %2464 = vmatprep.subr.mxu0 0.0
        %2465 = vmatpush1.msra.mxu0 0.0
        %2466 = vmatprep.subr.mxu0 0.0
        %2467 = vmatpush1.msra.mxu0 0.0
        %2468 = vmatprep.subr.mxu0 0.0
        %2469 = vmatpush1.msra.mxu0 0.0
        %2470 = vmatprep.subr.mxu0 0.0
        %2471 = vmatpush1.msra.mxu0 0.0
        %2472 = vmatprep.subr.mxu0 0.0
        %2473 = vmatpush1.msra.mxu0 0.0
        %2474 = vmatprep.subr.mxu0 0.0
        %2475 = vmatpush1.msra.mxu0 0.0
        %2476 = vmatprep.subr.mxu0 0.0
        %2477 = vmatpush1.msra.mxu0 0.0
        %2478 = vmatprep.subr.mxu0 0.0
        %2479 = vmatpush1.msra.mxu0 0.0
        %2480 = vmatprep.subr.mxu0 0.0
        %2481 = vmatpush1.msra.mxu0 0.0
        %2482 = vmatprep.subr.mxu0 0.0
        %2483 = vmatpush1.msra.mxu0 0.0
        %2484 = vmatprep.subr.mxu0 0.0
        %2485 = vmatpush1.msra.mxu0 0.0
        %2486 = vmatprep.subr.mxu0 0.0
        %2487 = vmatpush1.msra.mxu0 0.0
        %2488 = vmatprep.subr.mxu0 0.0
        %2489 = vmatpush1.msra.mxu0 0.0
        %2490 = vmatprep.subr.mxu0 0.0
        %2491 = vmatpush1.msra.mxu0 0.0
        %2492 = vmatprep.subr.mxu0 0.0
        %2493 = vmatpush1.msra.mxu0 0.0
        %2494 = vmatprep.subr.mxu0 0.0
        %2495 = vmatpush1.msra.mxu0 0.0
        %2496 = vmatprep.subr.mxu0 0.0
        %2497 = vmatpush1.msra.mxu0 0.0
        %2498 = vmatprep.subr.mxu0 0.0
        %2499 = vmatpush1.msra.mxu0 0.0
        %2500 = vmatprep.subr.mxu0 0.0
        %2501 = vmatpush1.msra.mxu0 0.0
        %2502 = vmatprep.subr.mxu0 0.0
        %2503 = vmatpush1.msra.mxu0 0.0
        %2504 = vmatprep.subr.mxu0 0.0
        %2505 = vmatpush1.msra.mxu0 0.0
        %2506 = vmatprep.subr.mxu0 0.0
        %2507 = vmatpush1.msra.mxu0 0.0
        %2508 = vmatprep.subr.mxu0 0.0
        %2509 = vmatpush1.msra.mxu0 0.0
        %2510 = vmatprep.subr.mxu0 0.0
        %2511 = vmatpush1.msra.mxu0 0.0
        %2512 = vmatprep.subr.mxu0 0.0
        %2513 = vmatpush1.msra.mxu0 0.0
        %2514 = vmatprep.subr.mxu0 0.0
        %2515 = vmatpush1.msra.mxu0 0.0
        %2516 = vmatprep.subr.mxu0 0.0
        %2517 = vmatpush1.msra.mxu0 0.0
        %2518 = vmatprep.subr.mxu0 0.0
        %2519 = vmatpush1.msra.mxu0 0.0
        %2520 = vmatprep.subr.mxu0 0.0
        %2521 = vmatpush1.msra.mxu0 0.0
        %2522 = vmatprep.subr.mxu0 0.0
        %2523 = vmatpush1.msra.mxu0 0.0
        %2524 = vmatprep.mubr.f32.mxu0 0.0
        %v2525 = vand.u32 %v2070, 4294901760
        %2526 = vmatmul.mubr.f32.gmra.mrb[0].mxu0 %v2525
        %v2527 = vpop.f32.mrb[0].mxu0
        %v2528 = vadd.f32 %v2455, %v2527
        %v2529 = vpop.f32.mrb[0].mxu0
        %2530 = vdwg.mxu0
        %s2531 = scalar_lea.vmem %s384, 2
        %2532 = vst.msk [vmem:[%s2531] sm:$0x3] %vm1598, %v2528
        %vm2533 = vcmp.eq.f32.partialorder %v646, 2.0
        %vm2534 = vcmp.eq.f32.partialorder %v647, 2.0
        %v2535 = vsel %vm2533, %v532, 0.0
        %v2536 = vsel %vm2534, %v533, 0.0
        %vm2537 = vcmp.eq.f32.partialorder %v658, 2.0
        %vm2538 = vcmp.eq.f32.partialorder %v659, 2.0
        %v2539 = vsel %vm2537, %v534, 0.0
        %v2540 = vsel %vm2538, %v535, 0.0
        %v2541 = vadd.f32 %v2535, %v2539
        %v2542 = vadd.f32 %v2536, %v2540
        %2543 = vmatprep.subr.mxu0 0.0
        %v2544 = vand.u32 %v2541, 4294901760
        %2545 = vmatpush1.msra.mxu0 %v2544
        %2546 = vmatprep.subr.mxu0 0.0
        %v2547 = vand.u32 %v2542, 4294901760
        %2548 = vmatpush1.msra.mxu0 %v2547
        %2549 = vmatprep.subr.mxu0 0.0
        %2550 = vmatpush1.msra.mxu0 0.0
        %2551 = vmatprep.subr.mxu0 0.0
        %2552 = vmatpush1.msra.mxu0 0.0
        %2553 = vmatprep.subr.mxu0 0.0
        %2554 = vmatpush1.msra.mxu0 0.0
        %2555 = vmatprep.subr.mxu0 0.0
        %2556 = vmatpush1.msra.mxu0 0.0
        %2557 = vmatprep.subr.mxu0 0.0
        %2558 = vmatpush1.msra.mxu0 0.0
        %2559 = vmatprep.subr.mxu0 0.0
        %2560 = vmatpush1.msra.mxu0 0.0
        %2561 = vmatprep.subr.mxu0 0.0
        %2562 = vmatpush1.msra.mxu0 0.0
        %2563 = vmatprep.subr.mxu0 0.0
        %2564 = vmatpush1.msra.mxu0 0.0
        %2565 = vmatprep.subr.mxu0 0.0
        %2566 = vmatpush1.msra.mxu0 0.0
        %2567 = vmatprep.subr.mxu0 0.0
        %2568 = vmatpush1.msra.mxu0 0.0
        %2569 = vmatprep.subr.mxu0 0.0
        %2570 = vmatpush1.msra.mxu0 0.0
        %2571 = vmatprep.subr.mxu0 0.0
        %2572 = vmatpush1.msra.mxu0 0.0
        %2573 = vmatprep.subr.mxu0 0.0
        %2574 = vmatpush1.msra.mxu0 0.0
        %2575 = vmatprep.subr.mxu0 0.0
        %2576 = vmatpush1.msra.mxu0 0.0
        %2577 = vmatprep.subr.mxu0 0.0
        %2578 = vmatpush1.msra.mxu0 0.0
        %2579 = vmatprep.subr.mxu0 0.0
        %2580 = vmatpush1.msra.mxu0 0.0
        %2581 = vmatprep.subr.mxu0 0.0
        %2582 = vmatpush1.msra.mxu0 0.0
        %2583 = vmatprep.subr.mxu0 0.0
        %2584 = vmatpush1.msra.mxu0 0.0
        %2585 = vmatprep.subr.mxu0 0.0
        %2586 = vmatpush1.msra.mxu0 0.0
        %2587 = vmatprep.subr.mxu0 0.0
        %2588 = vmatpush1.msra.mxu0 0.0
        %2589 = vmatprep.subr.mxu0 0.0
        %2590 = vmatpush1.msra.mxu0 0.0
        %2591 = vmatprep.subr.mxu0 0.0
        %2592 = vmatpush1.msra.mxu0 0.0
        %2593 = vmatprep.subr.mxu0 0.0
        %2594 = vmatpush1.msra.mxu0 0.0
        %2595 = vmatprep.subr.mxu0 0.0
        %2596 = vmatpush1.msra.mxu0 0.0
        %2597 = vmatprep.subr.mxu0 0.0
        %2598 = vmatpush1.msra.mxu0 0.0
        %2599 = vmatprep.subr.mxu0 0.0
        %2600 = vmatpush1.msra.mxu0 0.0
        %2601 = vmatprep.subr.mxu0 0.0
        %2602 = vmatpush1.msra.mxu0 0.0
        %2603 = vmatprep.subr.mxu0 0.0
        %2604 = vmatpush1.msra.mxu0 0.0
        %2605 = vmatprep.subr.mxu0 0.0
        %2606 = vmatpush1.msra.mxu0 0.0
        %2607 = vmatprep.subr.mxu0 0.0
        %2608 = vmatpush1.msra.mxu0 0.0
        %2609 = vmatprep.mubr.f32.mxu0 0.0
        %v2610 = vand.u32 %v675, 4294901760
        %v2611 = vsub.f32 %v675, %v2610
        %v2612 = vand.u32 %v2611, 4294901760
        %v2613 = vsub.f32 %v2611, %v2612
        %v2614 = vand.u32 %v2613, 4294901760
        %2615 = vmatmul.mubr.f32.gmra.mrb[0].mxu0 %v2614
        %v2616 = vpop.f32.mrb[0].mxu0
        %v2617 = vadd.f32 0.0, %v2616
        %v2618 = vpop.f32.mrb[0].mxu0
        %2619 = vdwg.mxu0
        %2620 = vmatprep.subr.mxu0 0.0
        %v2621 = vand.u32 %v2541, 4294901760
        %v2622 = vsub.f32 %v2541, %v2621
        %v2623 = vand.u32 %v2622, 4294901760
        %v2624 = vsub.f32 %v2622, %v2623
        %v2625 = vand.u32 %v2624, 4294901760
        %2626 = vmatpush1.msra.mxu0 %v2625
        %2627 = vmatprep.subr.mxu0 0.0
        %v2628 = vand.u32 %v2542, 4294901760
        %v2629 = vsub.f32 %v2542, %v2628
        %v2630 = vand.u32 %v2629, 4294901760
        %v2631 = vsub.f32 %v2629, %v2630
        %v2632 = vand.u32 %v2631, 4294901760
        %2633 = vmatpush1.msra.mxu0 %v2632
        %2634 = vmatprep.subr.mxu0 0.0
        %2635 = vmatpush1.msra.mxu0 0.0
        %2636 = vmatprep.subr.mxu0 0.0
        %2637 = vmatpush1.msra.mxu0 0.0
        %2638 = vmatprep.subr.mxu0 0.0
        %2639 = vmatpush1.msra.mxu0 0.0
        %2640 = vmatprep.subr.mxu0 0.0
        %2641 = vmatpush1.msra.mxu0 0.0
        %2642 = vmatprep.subr.mxu0 0.0
        %2643 = vmatpush1.msra.mxu0 0.0
        %2644 = vmatprep.subr.mxu0 0.0
        %2645 = vmatpush1.msra.mxu0 0.0
        %2646 = vmatprep.subr.mxu0 0.0
        %2647 = vmatpush1.msra.mxu0 0.0
        %2648 = vmatprep.subr.mxu0 0.0
        %2649 = vmatpush1.msra.mxu0 0.0
        %2650 = vmatprep.subr.mxu0 0.0
        %2651 = vmatpush1.msra.mxu0 0.0
        %2652 = vmatprep.subr.mxu0 0.0
        %2653 = vmatpush1.msra.mxu0 0.0
        %2654 = vmatprep.subr.mxu0 0.0
        %2655 = vmatpush1.msra.mxu0 0.0
        %2656 = vmatprep.subr.mxu0 0.0
        %2657 = vmatpush1.msra.mxu0 0.0
        %2658 = vmatprep.subr.mxu0 0.0
        %2659 = vmatpush1.msra.mxu0 0.0
        %2660 = vmatprep.subr.mxu0 0.0
        %2661 = vmatpush1.msra.mxu0 0.0
        %2662 = vmatprep.subr.mxu0 0.0
        %2663 = vmatpush1.msra.mxu0 0.0
        %2664 = vmatprep.subr.mxu0 0.0
        %2665 = vmatpush1.msra.mxu0 0.0
        %2666 = vmatprep.subr.mxu0 0.0
        %2667 = vmatpush1.msra.mxu0 0.0
        %2668 = vmatprep.subr.mxu0 0.0
        %2669 = vmatpush1.msra.mxu0 0.0
        %2670 = vmatprep.subr.mxu0 0.0
        %2671 = vmatpush1.msra.mxu0 0.0
        %2672 = vmatprep.subr.mxu0 0.0
        %2673 = vmatpush1.msra.mxu0 0.0
        %2674 = vmatprep.subr.mxu0 0.0
        %2675 = vmatpush1.msra.mxu0 0.0
        %2676 = vmatprep.subr.mxu0 0.0
        %2677 = vmatpush1.msra.mxu0 0.0
        %2678 = vmatprep.subr.mxu0 0.0
        %2679 = vmatpush1.msra.mxu0 0.0
        %2680 = vmatprep.subr.mxu0 0.0
        %2681 = vmatpush1.msra.mxu0 0.0
        %2682 = vmatprep.subr.mxu0 0.0
        %2683 = vmatpush1.msra.mxu0 0.0
        %2684 = vmatprep.subr.mxu0 0.0
        %2685 = vmatpush1.msra.mxu0 0.0
        %2686 = vmatprep.subr.mxu0 0.0
        %2687 = vmatpush1.msra.mxu0 0.0
        %2688 = vmatprep.subr.mxu0 0.0
        %2689 = vmatpush1.msra.mxu0 0.0
        %2690 = vmatprep.subr.mxu0 0.0
        %2691 = vmatpush1.msra.mxu0 0.0
        %2692 = vmatprep.subr.mxu0 0.0
        %2693 = vmatpush1.msra.mxu0 0.0
        %2694 = vmatprep.mubr.f32.mxu0 0.0
        %v2695 = vand.u32 %v675, 4294901760
        %2696 = vmatmul.mubr.f32.gmra.mrb[0].mxu0 %v2695
        %v2697 = vpop.f32.mrb[0].mxu0
        %v2698 = vadd.f32 %v2617, %v2697
        %v2699 = vpop.f32.mrb[0].mxu0
        %2700 = vdwg.mxu0
        %2701 = vmatprep.subr.mxu0 0.0
        %v2702 = vand.u32 %v2541, 4294901760
        %v2703 = vsub.f32 %v2541, %v2702
        %2704 = vmatpush1.msra.mxu0 %v2703
        %2705 = vmatprep.subr.mxu0 0.0
        %v2706 = vand.u32 %v2542, 4294901760
        %v2707 = vsub.f32 %v2542, %v2706
        %2708 = vmatpush1.msra.mxu0 %v2707
        %2709 = vmatprep.subr.mxu0 0.0
        %2710 = vmatpush1.msra.mxu0 0.0
        %2711 = vmatprep.subr.mxu0 0.0
        %2712 = vmatpush1.msra.mxu0 0.0
        %2713 = vmatprep.subr.mxu0 0.0
        %2714 = vmatpush1.msra.mxu0 0.0
        %2715 = vmatprep.subr.mxu0 0.0
        %2716 = vmatpush1.msra.mxu0 0.0
        %2717 = vmatprep.subr.mxu0 0.0
        %2718 = vmatpush1.msra.mxu0 0.0
        %2719 = vmatprep.subr.mxu0 0.0
        %2720 = vmatpush1.msra.mxu0 0.0
        %2721 = vmatprep.subr.mxu0 0.0
        %2722 = vmatpush1.msra.mxu0 0.0
        %2723 = vmatprep.subr.mxu0 0.0
        %2724 = vmatpush1.msra.mxu0 0.0
        %2725 = vmatprep.subr.mxu0 0.0
        %2726 = vmatpush1.msra.mxu0 0.0
        %2727 = vmatprep.subr.mxu0 0.0
        %2728 = vmatpush1.msra.mxu0 0.0
        %2729 = vmatprep.subr.mxu0 0.0
        %2730 = vmatpush1.msra.mxu0 0.0
        %2731 = vmatprep.subr.mxu0 0.0
        %2732 = vmatpush1.msra.mxu0 0.0
        %2733 = vmatprep.subr.mxu0 0.0
        %2734 = vmatpush1.msra.mxu0 0.0
        %2735 = vmatprep.subr.mxu0 0.0
        %2736 = vmatpush1.msra.mxu0 0.0
        %2737 = vmatprep.subr.mxu0 0.0
        %2738 = vmatpush1.msra.mxu0 0.0
        %2739 = vmatprep.subr.mxu0 0.0
        %2740 = vmatpush1.msra.mxu0 0.0
        %2741 = vmatprep.subr.mxu0 0.0
        %2742 = vmatpush1.msra.mxu0 0.0
        %2743 = vmatprep.subr.mxu0 0.0
        %2744 = vmatpush1.msra.mxu0 0.0
        %2745 = vmatprep.subr.mxu0 0.0
        %2746 = vmatpush1.msra.mxu0 0.0
        %2747 = vmatprep.subr.mxu0 0.0
        %2748 = vmatpush1.msra.mxu0 0.0
        %2749 = vmatprep.subr.mxu0 0.0
        %2750 = vmatpush1.msra.mxu0 0.0
        %2751 = vmatprep.subr.mxu0 0.0
        %2752 = vmatpush1.msra.mxu0 0.0
        %2753 = vmatprep.subr.mxu0 0.0
        %2754 = vmatpush1.msra.mxu0 0.0
        %2755 = vmatprep.subr.mxu0 0.0
        %2756 = vmatpush1.msra.mxu0 0.0
        %2757 = vmatprep.subr.mxu0 0.0
        %2758 = vmatpush1.msra.mxu0 0.0
        %2759 = vmatprep.subr.mxu0 0.0
        %2760 = vmatpush1.msra.mxu0 0.0
        %2761 = vmatprep.subr.mxu0 0.0
        %2762 = vmatpush1.msra.mxu0 0.0
        %2763 = vmatprep.subr.mxu0 0.0
        %2764 = vmatpush1.msra.mxu0 0.0
        %2765 = vmatprep.subr.mxu0 0.0
        %2766 = vmatpush1.msra.mxu0 0.0
        %2767 = vmatprep.subr.mxu0 0.0
        %2768 = vmatpush1.msra.mxu0 0.0
        %2769 = vmatprep.mubr.f32.mxu0 0.0
        %v2770 = vand.u32 %v675, 4294901760
        %v2771 = vsub.f32 %v675, %v2770
        %2772 = vmatmul.mubr.f32.gmra.mrb[0].mxu0 %v2771
        %v2773 = vpop.f32.mrb[0].mxu0
        %v2774 = vadd.f32 %v2698, %v2773
        %v2775 = vpop.f32.mrb[0].mxu0
        %2776 = vdwg.mxu0
        %2777 = vmatprep.subr.mxu0 0.0
        %v2778 = vand.u32 %v2541, 4294901760
        %2779 = vmatpush1.msra.mxu0 %v2778
        %2780 = vmatprep.subr.mxu0 0.0
        %v2781 = vand.u32 %v2542, 4294901760
        %2782 = vmatpush1.msra.mxu0 %v2781
        %2783 = vmatprep.subr.mxu0 0.0
        %2784 = vmatpush1.msra.mxu0 0.0
        %2785 = vmatprep.subr.mxu0 0.0
        %2786 = vmatpush1.msra.mxu0 0.0
        %2787 = vmatprep.subr.mxu0 0.0
        %2788 = vmatpush1.msra.mxu0 0.0
        %2789 = vmatprep.subr.mxu0 0.0
        %2790 = vmatpush1.msra.mxu0 0.0
        %2791 = vmatprep.subr.mxu0 0.0
        %2792 = vmatpush1.msra.mxu0 0.0
        %2793 = vmatprep.subr.mxu0 0.0
        %2794 = vmatpush1.msra.mxu0 0.0
        %2795 = vmatprep.subr.mxu0 0.0
        %2796 = vmatpush1.msra.mxu0 0.0
        %2797 = vmatprep.subr.mxu0 0.0
        %2798 = vmatpush1.msra.mxu0 0.0
        %2799 = vmatprep.subr.mxu0 0.0
        %2800 = vmatpush1.msra.mxu0 0.0
        %2801 = vmatprep.subr.mxu0 0.0
        %2802 = vmatpush1.msra.mxu0 0.0
        %2803 = vmatprep.subr.mxu0 0.0
        %2804 = vmatpush1.msra.mxu0 0.0
        %2805 = vmatprep.subr.mxu0 0.0
        %2806 = vmatpush1.msra.mxu0 0.0
        %2807 = vmatprep.subr.mxu0 0.0
        %2808 = vmatpush1.msra.mxu0 0.0
        %2809 = vmatprep.subr.mxu0 0.0
        %2810 = vmatpush1.msra.mxu0 0.0
        %2811 = vmatprep.subr.mxu0 0.0
        %2812 = vmatpush1.msra.mxu0 0.0
        %2813 = vmatprep.subr.mxu0 0.0
        %2814 = vmatpush1.msra.mxu0 0.0
        %2815 = vmatprep.subr.mxu0 0.0
        %2816 = vmatpush1.msra.mxu0 0.0
        %2817 = vmatprep.subr.mxu0 0.0
        %2818 = vmatpush1.msra.mxu0 0.0
        %2819 = vmatprep.subr.mxu0 0.0
        %2820 = vmatpush1.msra.mxu0 0.0
        %2821 = vmatprep.subr.mxu0 0.0
        %2822 = vmatpush1.msra.mxu0 0.0
        %2823 = vmatprep.subr.mxu0 0.0
        %2824 = vmatpush1.msra.mxu0 0.0
        %2825 = vmatprep.subr.mxu0 0.0
        %2826 = vmatpush1.msra.mxu0 0.0
        %2827 = vmatprep.subr.mxu0 0.0
        %2828 = vmatpush1.msra.mxu0 0.0
        %2829 = vmatprep.subr.mxu0 0.0
        %2830 = vmatpush1.msra.mxu0 0.0
        %2831 = vmatprep.subr.mxu0 0.0
        %2832 = vmatpush1.msra.mxu0 0.0
        %2833 = vmatprep.subr.mxu0 0.0
        %2834 = vmatpush1.msra.mxu0 0.0
        %2835 = vmatprep.subr.mxu0 0.0
        %2836 = vmatpush1.msra.mxu0 0.0
        %2837 = vmatprep.subr.mxu0 0.0
        %2838 = vmatpush1.msra.mxu0 0.0
        %2839 = vmatprep.subr.mxu0 0.0
        %2840 = vmatpush1.msra.mxu0 0.0
        %2841 = vmatprep.subr.mxu0 0.0
        %2842 = vmatpush1.msra.mxu0 0.0
        %2843 = vmatprep.mubr.f32.mxu0 0.0
        %v2844 = vand.u32 %v675, 4294901760
        %v2845 = vsub.f32 %v675, %v2844
        %v2846 = vand.u32 %v2845, 4294901760
        %2847 = vmatmul.mubr.f32.gmra.mrb[0].mxu0 %v2846
        %v2848 = vpop.f32.mrb[0].mxu0
        %v2849 = vadd.f32 %v2774, %v2848
        %v2850 = vpop.f32.mrb[0].mxu0
        %2851 = vdwg.mxu0
        %2852 = vmatprep.subr.mxu0 0.0
        %v2853 = vand.u32 %v2541, 4294901760
        %v2854 = vsub.f32 %v2541, %v2853
        %v2855 = vand.u32 %v2854, 4294901760
        %2856 = vmatpush1.msra.mxu0 %v2855
        %2857 = vmatprep.subr.mxu0 0.0
        %v2858 = vand.u32 %v2542, 4294901760
        %v2859 = vsub.f32 %v2542, %v2858
        %v2860 = vand.u32 %v2859, 4294901760
        %2861 = vmatpush1.msra.mxu0 %v2860
        %2862 = vmatprep.subr.mxu0 0.0
        %2863 = vmatpush1.msra.mxu0 0.0
        %2864 = vmatprep.subr.mxu0 0.0
        %2865 = vmatpush1.msra.mxu0 0.0
        %2866 = vmatprep.subr.mxu0 0.0
        %2867 = vmatpush1.msra.mxu0 0.0
        %2868 = vmatprep.subr.mxu0 0.0
        %2869 = vmatpush1.msra.mxu0 0.0
        %2870 = vmatprep.subr.mxu0 0.0
        %2871 = vmatpush1.msra.mxu0 0.0
        %2872 = vmatprep.subr.mxu0 0.0
        %2873 = vmatpush1.msra.mxu0 0.0
        %2874 = vmatprep.subr.mxu0 0.0
        %2875 = vmatpush1.msra.mxu0 0.0
        %2876 = vmatprep.subr.mxu0 0.0
        %2877 = vmatpush1.msra.mxu0 0.0
        %2878 = vmatprep.subr.mxu0 0.0
        %2879 = vmatpush1.msra.mxu0 0.0
        %2880 = vmatprep.subr.mxu0 0.0
        %2881 = vmatpush1.msra.mxu0 0.0
        %2882 = vmatprep.subr.mxu0 0.0
        %2883 = vmatpush1.msra.mxu0 0.0
        %2884 = vmatprep.subr.mxu0 0.0
        %2885 = vmatpush1.msra.mxu0 0.0
        %2886 = vmatprep.subr.mxu0 0.0
        %2887 = vmatpush1.msra.mxu0 0.0
        %2888 = vmatprep.subr.mxu0 0.0
        %2889 = vmatpush1.msra.mxu0 0.0
        %2890 = vmatprep.subr.mxu0 0.0
        %2891 = vmatpush1.msra.mxu0 0.0
        %2892 = vmatprep.subr.mxu0 0.0
        %2893 = vmatpush1.msra.mxu0 0.0
        %2894 = vmatprep.subr.mxu0 0.0
        %2895 = vmatpush1.msra.mxu0 0.0
        %2896 = vmatprep.subr.mxu0 0.0
        %2897 = vmatpush1.msra.mxu0 0.0
        %2898 = vmatprep.subr.mxu0 0.0
        %2899 = vmatpush1.msra.mxu0 0.0
        %2900 = vmatprep.subr.mxu0 0.0
        %2901 = vmatpush1.msra.mxu0 0.0
        %2902 = vmatprep.subr.mxu0 0.0
        %2903 = vmatpush1.msra.mxu0 0.0
        %2904 = vmatprep.subr.mxu0 0.0
        %2905 = vmatpush1.msra.mxu0 0.0
        %2906 = vmatprep.subr.mxu0 0.0
        %2907 = vmatpush1.msra.mxu0 0.0
        %2908 = vmatprep.subr.mxu0 0.0
        %2909 = vmatpush1.msra.mxu0 0.0
        %2910 = vmatprep.subr.mxu0 0.0
        %2911 = vmatpush1.msra.mxu0 0.0
        %2912 = vmatprep.subr.mxu0 0.0
        %2913 = vmatpush1.msra.mxu0 0.0
        %2914 = vmatprep.subr.mxu0 0.0
        %2915 = vmatpush1.msra.mxu0 0.0
        %2916 = vmatprep.subr.mxu0 0.0
        %2917 = vmatpush1.msra.mxu0 0.0
        %2918 = vmatprep.subr.mxu0 0.0
        %2919 = vmatpush1.msra.mxu0 0.0
        %2920 = vmatprep.subr.mxu0 0.0
        %2921 = vmatpush1.msra.mxu0 0.0
        %2922 = vmatprep.mubr.f32.mxu0 0.0
        %v2923 = vand.u32 %v675, 4294901760
        %2924 = vmatmul.mubr.f32.gmra.mrb[0].mxu0 %v2923
        %v2925 = vpop.f32.mrb[0].mxu0
        %v2926 = vadd.f32 %v2849, %v2925
        %v2927 = vpop.f32.mrb[0].mxu0
        %2928 = vdwg.mxu0
        %2929 = vmatprep.subr.mxu0 0.0
        %v2930 = vand.u32 %v2541, 4294901760
        %2931 = vmatpush1.msra.mxu0 %v2930
        %2932 = vmatprep.subr.mxu0 0.0
        %v2933 = vand.u32 %v2542, 4294901760
        %2934 = vmatpush1.msra.mxu0 %v2933
        %2935 = vmatprep.subr.mxu0 0.0
        %2936 = vmatpush1.msra.mxu0 0.0
        %2937 = vmatprep.subr.mxu0 0.0
        %2938 = vmatpush1.msra.mxu0 0.0
        %2939 = vmatprep.subr.mxu0 0.0
        %2940 = vmatpush1.msra.mxu0 0.0
        %2941 = vmatprep.subr.mxu0 0.0
        %2942 = vmatpush1.msra.mxu0 0.0
        %2943 = vmatprep.subr.mxu0 0.0
        %2944 = vmatpush1.msra.mxu0 0.0
        %2945 = vmatprep.subr.mxu0 0.0
        %2946 = vmatpush1.msra.mxu0 0.0
        %2947 = vmatprep.subr.mxu0 0.0
        %2948 = vmatpush1.msra.mxu0 0.0
        %2949 = vmatprep.subr.mxu0 0.0
        %2950 = vmatpush1.msra.mxu0 0.0
        %2951 = vmatprep.subr.mxu0 0.0
        %2952 = vmatpush1.msra.mxu0 0.0
        %2953 = vmatprep.subr.mxu0 0.0
        %2954 = vmatpush1.msra.mxu0 0.0
        %2955 = vmatprep.subr.mxu0 0.0
        %2956 = vmatpush1.msra.mxu0 0.0
        %2957 = vmatprep.subr.mxu0 0.0
        %2958 = vmatpush1.msra.mxu0 0.0
        %2959 = vmatprep.subr.mxu0 0.0
        %2960 = vmatpush1.msra.mxu0 0.0
        %2961 = vmatprep.subr.mxu0 0.0
        %2962 = vmatpush1.msra.mxu0 0.0
        %2963 = vmatprep.subr.mxu0 0.0
        %2964 = vmatpush1.msra.mxu0 0.0
        %2965 = vmatprep.subr.mxu0 0.0
        %2966 = vmatpush1.msra.mxu0 0.0
        %2967 = vmatprep.subr.mxu0 0.0
        %2968 = vmatpush1.msra.mxu0 0.0
        %2969 = vmatprep.subr.mxu0 0.0
        %2970 = vmatpush1.msra.mxu0 0.0
        %2971 = vmatprep.subr.mxu0 0.0
        %2972 = vmatpush1.msra.mxu0 0.0
        %2973 = vmatprep.subr.mxu0 0.0
        %2974 = vmatpush1.msra.mxu0 0.0
        %2975 = vmatprep.subr.mxu0 0.0
        %2976 = vmatpush1.msra.mxu0 0.0
        %2977 = vmatprep.subr.mxu0 0.0
        %2978 = vmatpush1.msra.mxu0 0.0
        %2979 = vmatprep.subr.mxu0 0.0
        %2980 = vmatpush1.msra.mxu0 0.0
        %2981 = vmatprep.subr.mxu0 0.0
        %2982 = vmatpush1.msra.mxu0 0.0
        %2983 = vmatprep.subr.mxu0 0.0
        %2984 = vmatpush1.msra.mxu0 0.0
        %2985 = vmatprep.subr.mxu0 0.0
        %2986 = vmatpush1.msra.mxu0 0.0
        %2987 = vmatprep.subr.mxu0 0.0
        %2988 = vmatpush1.msra.mxu0 0.0
        %2989 = vmatprep.subr.mxu0 0.0
        %2990 = vmatpush1.msra.mxu0 0.0
        %2991 = vmatprep.subr.mxu0 0.0
        %2992 = vmatpush1.msra.mxu0 0.0
        %2993 = vmatprep.subr.mxu0 0.0
        %2994 = vmatpush1.msra.mxu0 0.0
        %2995 = vmatprep.mubr.f32.mxu0 0.0
        %v2996 = vand.u32 %v675, 4294901760
        %2997 = vmatmul.mubr.f32.gmra.mrb[0].mxu0 %v2996
        %v2998 = vpop.f32.mrb[0].mxu0
        %v2999 = vadd.f32 %v2926, %v2998
        %v3000 = vpop.f32.mrb[0].mxu0
        %3001 = vdwg.mxu0
        %v3003 = vsel %vm673, %v2999, 0
        %3005 = vmatprep.subr.mxu0 0.0
        %v3006 = vand.u32 %v661, 4294901760
        %3007 = vmatpush1.msra.mxu0 %v3006
        %3008 = vmatprep.subr.mxu0 0.0
        %v3009 = vand.u32 %v662, 4294901760
        %3010 = vmatpush1.msra.mxu0 %v3009
        %3011 = vmatprep.subr.mxu0 0.0
        %3012 = vmatpush1.msra.mxu0 0.0
        %3013 = vmatprep.subr.mxu0 0.0
        %3014 = vmatpush1.msra.mxu0 0.0
        %3015 = vmatprep.subr.mxu0 0.0
        %3016 = vmatpush1.msra.mxu0 0.0
        %3017 = vmatprep.subr.mxu0 0.0
        %3018 = vmatpush1.msra.mxu0 0.0
        %3019 = vmatprep.subr.mxu0 0.0
        %3020 = vmatpush1.msra.mxu0 0.0
        %3021 = vmatprep.subr.mxu0 0.0
        %3022 = vmatpush1.msra.mxu0 0.0
        %3023 = vmatprep.subr.mxu0 0.0
        %3024 = vmatpush1.msra.mxu0 0.0
        %3025 = vmatprep.subr.mxu0 0.0
        %3026 = vmatpush1.msra.mxu0 0.0
        %3027 = vmatprep.subr.mxu0 0.0
        %3028 = vmatpush1.msra.mxu0 0.0
        %3029 = vmatprep.subr.mxu0 0.0
        %3030 = vmatpush1.msra.mxu0 0.0
        %3031 = vmatprep.subr.mxu0 0.0
        %3032 = vmatpush1.msra.mxu0 0.0
        %3033 = vmatprep.subr.mxu0 0.0
        %3034 = vmatpush1.msra.mxu0 0.0
        %3035 = vmatprep.subr.mxu0 0.0
        %3036 = vmatpush1.msra.mxu0 0.0
        %3037 = vmatprep.subr.mxu0 0.0
        %3038 = vmatpush1.msra.mxu0 0.0
        %3039 = vmatprep.subr.mxu0 0.0
        %3040 = vmatpush1.msra.mxu0 0.0
        %3041 = vmatprep.subr.mxu0 0.0
        %3042 = vmatpush1.msra.mxu0 0.0
        %3043 = vmatprep.subr.mxu0 0.0
        %3044 = vmatpush1.msra.mxu0 0.0
        %3045 = vmatprep.subr.mxu0 0.0
        %3046 = vmatpush1.msra.mxu0 0.0
        %3047 = vmatprep.subr.mxu0 0.0
        %3048 = vmatpush1.msra.mxu0 0.0
        %3049 = vmatprep.subr.mxu0 0.0
        %3050 = vmatpush1.msra.mxu0 0.0
        %3051 = vmatprep.subr.mxu0 0.0
        %3052 = vmatpush1.msra.mxu0 0.0
        %3053 = vmatprep.subr.mxu0 0.0
        %3054 = vmatpush1.msra.mxu0 0.0
        %3055 = vmatprep.subr.mxu0 0.0
        %3056 = vmatpush1.msra.mxu0 0.0
        %3057 = vmatprep.subr.mxu0 0.0
        %3058 = vmatpush1.msra.mxu0 0.0
        %3059 = vmatprep.subr.mxu0 0.0
        %3060 = vmatpush1.msra.mxu0 0.0
        %3061 = vmatprep.subr.mxu0 0.0
        %3062 = vmatpush1.msra.mxu0 0.0
        %3063 = vmatprep.subr.mxu0 0.0
        %3064 = vmatpush1.msra.mxu0 0.0
        %3065 = vmatprep.subr.mxu0 0.0
        %3066 = vmatpush1.msra.mxu0 0.0
        %3067 = vmatprep.subr.mxu0 0.0
        %3068 = vmatpush1.msra.mxu0 0.0
        %3069 = vmatprep.subr.mxu0 0.0
        %3070 = vmatpush1.msra.mxu0 0.0
        %3071 = vmatprep.mubr.f32.mxu0 0.0
        %v3072 = vand.u32 %v3003, 4294901760
        %v3073 = vsub.f32 %v3003, %v3072
        %v3074 = vand.u32 %v3073, 4294901760
        %v3075 = vsub.f32 %v3073, %v3074
        %v3076 = vand.u32 %v3075, 4294901760
        %3077 = vmatmul.mubr.f32.gmra.mrb[0].mxu0 %v3076
        %v3078 = vpop.f32.mrb[0].mxu0
        %v3079 = vadd.f32 0.0, %v3078
        %v3080 = vpop.f32.mrb[0].mxu0
        %3081 = vdwg.mxu0
        %3082 = vmatprep.subr.mxu0 0.0
        %v3083 = vand.u32 %v661, 4294901760
        %v3084 = vsub.f32 %v661, %v3083
        %v3085 = vand.u32 %v3084, 4294901760
        %v3086 = vsub.f32 %v3084, %v3085
        %v3087 = vand.u32 %v3086, 4294901760
        %3088 = vmatpush1.msra.mxu0 %v3087
        %3089 = vmatprep.subr.mxu0 0.0
        %v3090 = vand.u32 %v662, 4294901760
        %v3091 = vsub.f32 %v662, %v3090
        %v3092 = vand.u32 %v3091, 4294901760
        %v3093 = vsub.f32 %v3091, %v3092
        %v3094 = vand.u32 %v3093, 4294901760
        %3095 = vmatpush1.msra.mxu0 %v3094
        %3096 = vmatprep.subr.mxu0 0.0
        %3097 = vmatpush1.msra.mxu0 0.0
        %3098 = vmatprep.subr.mxu0 0.0
        %3099 = vmatpush1.msra.mxu0 0.0
        %3100 = vmatprep.subr.mxu0 0.0
        %3101 = vmatpush1.msra.mxu0 0.0
        %3102 = vmatprep.subr.mxu0 0.0
        %3103 = vmatpush1.msra.mxu0 0.0
        %3104 = vmatprep.subr.mxu0 0.0
        %3105 = vmatpush1.msra.mxu0 0.0
        %3106 = vmatprep.subr.mxu0 0.0
        %3107 = vmatpush1.msra.mxu0 0.0
        %3108 = vmatprep.subr.mxu0 0.0
        %3109 = vmatpush1.msra.mxu0 0.0
        %3110 = vmatprep.subr.mxu0 0.0
        %3111 = vmatpush1.msra.mxu0 0.0
        %3112 = vmatprep.subr.mxu0 0.0
        %3113 = vmatpush1.msra.mxu0 0.0
        %3114 = vmatprep.subr.mxu0 0.0
        %3115 = vmatpush1.msra.mxu0 0.0
        %3116 = vmatprep.subr.mxu0 0.0
        %3117 = vmatpush1.msra.mxu0 0.0
        %3118 = vmatprep.subr.mxu0 0.0
        %3119 = vmatpush1.msra.mxu0 0.0
        %3120 = vmatprep.subr.mxu0 0.0
        %3121 = vmatpush1.msra.mxu0 0.0
        %3122 = vmatprep.subr.mxu0 0.0
        %3123 = vmatpush1.msra.mxu0 0.0
        %3124 = vmatprep.subr.mxu0 0.0
        %3125 = vmatpush1.msra.mxu0 0.0
        %3126 = vmatprep.subr.mxu0 0.0
        %3127 = vmatpush1.msra.mxu0 0.0
        %3128 = vmatprep.subr.mxu0 0.0
        %3129 = vmatpush1.msra.mxu0 0.0
        %3130 = vmatprep.subr.mxu0 0.0
        %3131 = vmatpush1.msra.mxu0 0.0
        %3132 = vmatprep.subr.mxu0 0.0
        %3133 = vmatpush1.msra.mxu0 0.0
        %3134 = vmatprep.subr.mxu0 0.0
        %3135 = vmatpush1.msra.mxu0 0.0
        %3136 = vmatprep.subr.mxu0 0.0
        %3137 = vmatpush1.msra.mxu0 0.0
        %3138 = vmatprep.subr.mxu0 0.0
        %3139 = vmatpush1.msra.mxu0 0.0
        %3140 = vmatprep.subr.mxu0 0.0
        %3141 = vmatpush1.msra.mxu0 0.0
        %3142 = vmatprep.subr.mxu0 0.0
        %3143 = vmatpush1.msra.mxu0 0.0
        %3144 = vmatprep.subr.mxu0 0.0
        %3145 = vmatpush1.msra.mxu0 0.0
        %3146 = vmatprep.subr.mxu0 0.0
        %3147 = vmatpush1.msra.mxu0 0.0
        %3148 = vmatprep.subr.mxu0 0.0
        %3149 = vmatpush1.msra.mxu0 0.0
        %3150 = vmatprep.subr.mxu0 0.0
        %3151 = vmatpush1.msra.mxu0 0.0
        %3152 = vmatprep.subr.mxu0 0.0
        %3153 = vmatpush1.msra.mxu0 0.0
        %3154 = vmatprep.subr.mxu0 0.0
        %3155 = vmatpush1.msra.mxu0 0.0
        %3156 = vmatprep.mubr.f32.mxu0 0.0
        %v3157 = vand.u32 %v3003, 4294901760
        %3158 = vmatmul.mubr.f32.gmra.mrb[0].mxu0 %v3157
        %v3159 = vpop.f32.mrb[0].mxu0
        %v3160 = vadd.f32 %v3079, %v3159
        %v3161 = vpop.f32.mrb[0].mxu0
        %3162 = vdwg.mxu0
        %3163 = vmatprep.subr.mxu0 0.0
        %v3164 = vand.u32 %v661, 4294901760
        %v3165 = vsub.f32 %v661, %v3164
        %3166 = vmatpush1.msra.mxu0 %v3165
        %3167 = vmatprep.subr.mxu0 0.0
        %v3168 = vand.u32 %v662, 4294901760
        %v3169 = vsub.f32 %v662, %v3168
        %3170 = vmatpush1.msra.mxu0 %v3169
        %3171 = vmatprep.subr.mxu0 0.0
        %3172 = vmatpush1.msra.mxu0 0.0
        %3173 = vmatprep.subr.mxu0 0.0
        %3174 = vmatpush1.msra.mxu0 0.0
        %3175 = vmatprep.subr.mxu0 0.0
        %3176 = vmatpush1.msra.mxu0 0.0
        %3177 = vmatprep.subr.mxu0 0.0
        %3178 = vmatpush1.msra.mxu0 0.0
        %3179 = vmatprep.subr.mxu0 0.0
        %3180 = vmatpush1.msra.mxu0 0.0
        %3181 = vmatprep.subr.mxu0 0.0
        %3182 = vmatpush1.msra.mxu0 0.0
        %3183 = vmatprep.subr.mxu0 0.0
        %3184 = vmatpush1.msra.mxu0 0.0
        %3185 = vmatprep.subr.mxu0 0.0
        %3186 = vmatpush1.msra.mxu0 0.0
        %3187 = vmatprep.subr.mxu0 0.0
        %3188 = vmatpush1.msra.mxu0 0.0
        %3189 = vmatprep.subr.mxu0 0.0
        %3190 = vmatpush1.msra.mxu0 0.0
        %3191 = vmatprep.subr.mxu0 0.0
        %3192 = vmatpush1.msra.mxu0 0.0
        %3193 = vmatprep.subr.mxu0 0.0
        %3194 = vmatpush1.msra.mxu0 0.0
        %3195 = vmatprep.subr.mxu0 0.0
        %3196 = vmatpush1.msra.mxu0 0.0
        %3197 = vmatprep.subr.mxu0 0.0
        %3198 = vmatpush1.msra.mxu0 0.0
        %3199 = vmatprep.subr.mxu0 0.0
        %3200 = vmatpush1.msra.mxu0 0.0
        %3201 = vmatprep.subr.mxu0 0.0
        %3202 = vmatpush1.msra.mxu0 0.0
        %3203 = vmatprep.subr.mxu0 0.0
        %3204 = vmatpush1.msra.mxu0 0.0
        %3205 = vmatprep.subr.mxu0 0.0
        %3206 = vmatpush1.msra.mxu0 0.0
        %3207 = vmatprep.subr.mxu0 0.0
        %3208 = vmatpush1.msra.mxu0 0.0
        %3209 = vmatprep.subr.mxu0 0.0
        %3210 = vmatpush1.msra.mxu0 0.0
        %3211 = vmatprep.subr.mxu0 0.0
        %3212 = vmatpush1.msra.mxu0 0.0
        %3213 = vmatprep.subr.mxu0 0.0
        %3214 = vmatpush1.msra.mxu0 0.0
        %3215 = vmatprep.subr.mxu0 0.0
        %3216 = vmatpush1.msra.mxu0 0.0
        %3217 = vmatprep.subr.mxu0 0.0
        %3218 = vmatpush1.msra.mxu0 0.0
        %3219 = vmatprep.subr.mxu0 0.0
        %3220 = vmatpush1.msra.mxu0 0.0
        %3221 = vmatprep.subr.mxu0 0.0
        %3222 = vmatpush1.msra.mxu0 0.0
        %3223 = vmatprep.subr.mxu0 0.0
        %3224 = vmatpush1.msra.mxu0 0.0
        %3225 = vmatprep.subr.mxu0 0.0
        %3226 = vmatpush1.msra.mxu0 0.0
        %3227 = vmatprep.subr.mxu0 0.0
        %3228 = vmatpush1.msra.mxu0 0.0
        %3229 = vmatprep.subr.mxu0 0.0
        %3230 = vmatpush1.msra.mxu0 0.0
        %3231 = vmatprep.mubr.f32.mxu0 0.0
        %v3232 = vand.u32 %v3003, 4294901760
        %v3233 = vsub.f32 %v3003, %v3232
        %3234 = vmatmul.mubr.f32.gmra.mrb[0].mxu0 %v3233
        %v3235 = vpop.f32.mrb[0].mxu0
        %v3236 = vadd.f32 %v3160, %v3235
        %v3237 = vpop.f32.mrb[0].mxu0
        %3238 = vdwg.mxu0
        %3239 = vmatprep.subr.mxu0 0.0
        %v3240 = vand.u32 %v661, 4294901760
        %3241 = vmatpush1.msra.mxu0 %v3240
        %3242 = vmatprep.subr.mxu0 0.0
        %v3243 = vand.u32 %v662, 4294901760
        %3244 = vmatpush1.msra.mxu0 %v3243
        %3245 = vmatprep.subr.mxu0 0.0
        %3246 = vmatpush1.msra.mxu0 0.0
        %3247 = vmatprep.subr.mxu0 0.0
        %3248 = vmatpush1.msra.mxu0 0.0
        %3249 = vmatprep.subr.mxu0 0.0
        %3250 = vmatpush1.msra.mxu0 0.0
        %3251 = vmatprep.subr.mxu0 0.0
        %3252 = vmatpush1.msra.mxu0 0.0
        %3253 = vmatprep.subr.mxu0 0.0
        %3254 = vmatpush1.msra.mxu0 0.0
        %3255 = vmatprep.subr.mxu0 0.0
        %3256 = vmatpush1.msra.mxu0 0.0
        %3257 = vmatprep.subr.mxu0 0.0
        %3258 = vmatpush1.msra.mxu0 0.0
        %3259 = vmatprep.subr.mxu0 0.0
        %3260 = vmatpush1.msra.mxu0 0.0
        %3261 = vmatprep.subr.mxu0 0.0
        %3262 = vmatpush1.msra.mxu0 0.0
        %3263 = vmatprep.subr.mxu0 0.0
        %3264 = vmatpush1.msra.mxu0 0.0
        %3265 = vmatprep.subr.mxu0 0.0
        %3266 = vmatpush1.msra.mxu0 0.0
        %3267 = vmatprep.subr.mxu0 0.0
        %3268 = vmatpush1.msra.mxu0 0.0
        %3269 = vmatprep.subr.mxu0 0.0
        %3270 = vmatpush1.msra.mxu0 0.0
        %3271 = vmatprep.subr.mxu0 0.0
        %3272 = vmatpush1.msra.mxu0 0.0
        %3273 = vmatprep.subr.mxu0 0.0
        %3274 = vmatpush1.msra.mxu0 0.0
        %3275 = vmatprep.subr.mxu0 0.0
        %3276 = vmatpush1.msra.mxu0 0.0
        %3277 = vmatprep.subr.mxu0 0.0
        %3278 = vmatpush1.msra.mxu0 0.0
        %3279 = vmatprep.subr.mxu0 0.0
        %3280 = vmatpush1.msra.mxu0 0.0
        %3281 = vmatprep.subr.mxu0 0.0
        %3282 = vmatpush1.msra.mxu0 0.0
        %3283 = vmatprep.subr.mxu0 0.0
        %3284 = vmatpush1.msra.mxu0 0.0
        %3285 = vmatprep.subr.mxu0 0.0
        %3286 = vmatpush1.msra.mxu0 0.0
        %3287 = vmatprep.subr.mxu0 0.0
        %3288 = vmatpush1.msra.mxu0 0.0
        %3289 = vmatprep.subr.mxu0 0.0
        %3290 = vmatpush1.msra.mxu0 0.0
        %3291 = vmatprep.subr.mxu0 0.0
        %3292 = vmatpush1.msra.mxu0 0.0
        %3293 = vmatprep.subr.mxu0 0.0
        %3294 = vmatpush1.msra.mxu0 0.0
        %3295 = vmatprep.subr.mxu0 0.0
        %3296 = vmatpush1.msra.mxu0 0.0
        %3297 = vmatprep.subr.mxu0 0.0
        %3298 = vmatpush1.msra.mxu0 0.0
        %3299 = vmatprep.subr.mxu0 0.0
        %3300 = vmatpush1.msra.mxu0 0.0
        %3301 = vmatprep.subr.mxu0 0.0
        %3302 = vmatpush1.msra.mxu0 0.0
        %3303 = vmatprep.subr.mxu0 0.0
        %3304 = vmatpush1.msra.mxu0 0.0
        %3305 = vmatprep.mubr.f32.mxu0 0.0
        %v3306 = vand.u32 %v3003, 4294901760
        %v3307 = vsub.f32 %v3003, %v3306
        %v3308 = vand.u32 %v3307, 4294901760
        %3309 = vmatmul.mubr.f32.gmra.mrb[0].mxu0 %v3308
        %v3310 = vpop.f32.mrb[0].mxu0
        %v3311 = vadd.f32 %v3236, %v3310
        %v3312 = vpop.f32.mrb[0].mxu0
        %3313 = vdwg.mxu0
        %3314 = vmatprep.subr.mxu0 0.0
        %v3315 = vand.u32 %v661, 4294901760
        %v3316 = vsub.f32 %v661, %v3315
        %v3317 = vand.u32 %v3316, 4294901760
        %3318 = vmatpush1.msra.mxu0 %v3317
        %3319 = vmatprep.subr.mxu0 0.0
        %v3320 = vand.u32 %v662, 4294901760
        %v3321 = vsub.f32 %v662, %v3320
        %v3322 = vand.u32 %v3321, 4294901760
        %3323 = vmatpush1.msra.mxu0 %v3322
        %3324 = vmatprep.subr.mxu0 0.0
        %3325 = vmatpush1.msra.mxu0 0.0
        %3326 = vmatprep.subr.mxu0 0.0
        %3327 = vmatpush1.msra.mxu0 0.0
        %3328 = vmatprep.subr.mxu0 0.0
        %3329 = vmatpush1.msra.mxu0 0.0
        %3330 = vmatprep.subr.mxu0 0.0
        %3331 = vmatpush1.msra.mxu0 0.0
        %3332 = vmatprep.subr.mxu0 0.0
        %3333 = vmatpush1.msra.mxu0 0.0
        %3334 = vmatprep.subr.mxu0 0.0
        %3335 = vmatpush1.msra.mxu0 0.0
        %3336 = vmatprep.subr.mxu0 0.0
        %3337 = vmatpush1.msra.mxu0 0.0
        %3338 = vmatprep.subr.mxu0 0.0
        %3339 = vmatpush1.msra.mxu0 0.0
        %3340 = vmatprep.subr.mxu0 0.0
        %3341 = vmatpush1.msra.mxu0 0.0
        %3342 = vmatprep.subr.mxu0 0.0
        %3343 = vmatpush1.msra.mxu0 0.0
        %3344 = vmatprep.subr.mxu0 0.0
        %3345 = vmatpush1.msra.mxu0 0.0
        %3346 = vmatprep.subr.mxu0 0.0
        %3347 = vmatpush1.msra.mxu0 0.0
        %3348 = vmatprep.subr.mxu0 0.0
        %3349 = vmatpush1.msra.mxu0 0.0
        %3350 = vmatprep.subr.mxu0 0.0
        %3351 = vmatpush1.msra.mxu0 0.0
        %3352 = vmatprep.subr.mxu0 0.0
        %3353 = vmatpush1.msra.mxu0 0.0
        %3354 = vmatprep.subr.mxu0 0.0
        %3355 = vmatpush1.msra.mxu0 0.0
        %3356 = vmatprep.subr.mxu0 0.0
        %3357 = vmatpush1.msra.mxu0 0.0
        %3358 = vmatprep.subr.mxu0 0.0
        %3359 = vmatpush1.msra.mxu0 0.0
        %3360 = vmatprep.subr.mxu0 0.0
        %3361 = vmatpush1.msra.mxu0 0.0
        %3362 = vmatprep.subr.mxu0 0.0
        %3363 = vmatpush1.msra.mxu0 0.0
        %3364 = vmatprep.subr.mxu0 0.0
        %3365 = vmatpush1.msra.mxu0 0.0
        %3366 = vmatprep.subr.mxu0 0.0
        %3367 = vmatpush1.msra.mxu0 0.0
        %3368 = vmatprep.subr.mxu0 0.0
        %3369 = vmatpush1.msra.mxu0 0.0
        %3370 = vmatprep.subr.mxu0 0.0
        %3371 = vmatpush1.msra.mxu0 0.0
        %3372 = vmatprep.subr.mxu0 0.0
        %3373 = vmatpush1.msra.mxu0 0.0
        %3374 = vmatprep.subr.mxu0 0.0
        %3375 = vmatpush1.msra.mxu0 0.0
        %3376 = vmatprep.subr.mxu0 0.0
        %3377 = vmatpush1.msra.mxu0 0.0
        %3378 = vmatprep.subr.mxu0 0.0
        %3379 = vmatpush1.msra.mxu0 0.0
        %3380 = vmatprep.subr.mxu0 0.0
        %3381 = vmatpush1.msra.mxu0 0.0
        %3382 = vmatprep.subr.mxu0 0.0
        %3383 = vmatpush1.msra.mxu0 0.0
        %3384 = vmatprep.mubr.f32.mxu0 0.0
        %v3385 = vand.u32 %v3003, 4294901760
        %3386 = vmatmul.mubr.f32.gmra.mrb[0].mxu0 %v3385
        %v3387 = vpop.f32.mrb[0].mxu0
        %v3388 = vadd.f32 %v3311, %v3387
        %v3389 = vpop.f32.mrb[0].mxu0
        %3390 = vdwg.mxu0
        %3391 = vmatprep.subr.mxu0 0.0
        %v3392 = vand.u32 %v661, 4294901760
        %3393 = vmatpush1.msra.mxu0 %v3392
        %3394 = vmatprep.subr.mxu0 0.0
        %v3395 = vand.u32 %v662, 4294901760
        %3396 = vmatpush1.msra.mxu0 %v3395
        %3397 = vmatprep.subr.mxu0 0.0
        %3398 = vmatpush1.msra.mxu0 0.0
        %3399 = vmatprep.subr.mxu0 0.0
        %3400 = vmatpush1.msra.mxu0 0.0
        %3401 = vmatprep.subr.mxu0 0.0
        %3402 = vmatpush1.msra.mxu0 0.0
        %3403 = vmatprep.subr.mxu0 0.0
        %3404 = vmatpush1.msra.mxu0 0.0
        %3405 = vmatprep.subr.mxu0 0.0
        %3406 = vmatpush1.msra.mxu0 0.0
        %3407 = vmatprep.subr.mxu0 0.0
        %3408 = vmatpush1.msra.mxu0 0.0
        %3409 = vmatprep.subr.mxu0 0.0
        %3410 = vmatpush1.msra.mxu0 0.0
        %3411 = vmatprep.subr.mxu0 0.0
        %3412 = vmatpush1.msra.mxu0 0.0
        %3413 = vmatprep.subr.mxu0 0.0
        %3414 = vmatpush1.msra.mxu0 0.0
        %3415 = vmatprep.subr.mxu0 0.0
        %3416 = vmatpush1.msra.mxu0 0.0
        %3417 = vmatprep.subr.mxu0 0.0
        %3418 = vmatpush1.msra.mxu0 0.0
        %3419 = vmatprep.subr.mxu0 0.0
        %3420 = vmatpush1.msra.mxu0 0.0
        %3421 = vmatprep.subr.mxu0 0.0
        %3422 = vmatpush1.msra.mxu0 0.0
        %3423 = vmatprep.subr.mxu0 0.0
        %3424 = vmatpush1.msra.mxu0 0.0
        %3425 = vmatprep.subr.mxu0 0.0
        %3426 = vmatpush1.msra.mxu0 0.0
        %3427 = vmatprep.subr.mxu0 0.0
        %3428 = vmatpush1.msra.mxu0 0.0
        %3429 = vmatprep.subr.mxu0 0.0
        %3430 = vmatpush1.msra.mxu0 0.0
        %3431 = vmatprep.subr.mxu0 0.0
        %3432 = vmatpush1.msra.mxu0 0.0
        %3433 = vmatprep.subr.mxu0 0.0
        %3434 = vmatpush1.msra.mxu0 0.0
        %3435 = vmatprep.subr.mxu0 0.0
        %3436 = vmatpush1.msra.mxu0 0.0
        %3437 = vmatprep.subr.mxu0 0.0
        %3438 = vmatpush1.msra.mxu0 0.0
        %3439 = vmatprep.subr.mxu0 0.0
        %3440 = vmatpush1.msra.mxu0 0.0
        %3441 = vmatprep.subr.mxu0 0.0
        %3442 = vmatpush1.msra.mxu0 0.0
        %3443 = vmatprep.subr.mxu0 0.0
        %3444 = vmatpush1.msra.mxu0 0.0
        %3445 = vmatprep.subr.mxu0 0.0
        %3446 = vmatpush1.msra.mxu0 0.0
        %3447 = vmatprep.subr.mxu0 0.0
        %3448 = vmatpush1.msra.mxu0 0.0
        %3449 = vmatprep.subr.mxu0 0.0
        %3450 = vmatpush1.msra.mxu0 0.0
        %3451 = vmatprep.subr.mxu0 0.0
        %3452 = vmatpush1.msra.mxu0 0.0
        %3453 = vmatprep.subr.mxu0 0.0
        %3454 = vmatpush1.msra.mxu0 0.0
        %3455 = vmatprep.subr.mxu0 0.0
        %3456 = vmatpush1.msra.mxu0 0.0
        %3457 = vmatprep.mubr.f32.mxu0 0.0
        %v3458 = vand.u32 %v3003, 4294901760
        %3459 = vmatmul.mubr.f32.gmra.mrb[0].mxu0 %v3458
        %v3460 = vpop.f32.mrb[0].mxu0
        %v3461 = vadd.f32 %v3388, %v3460
        %v3462 = vpop.f32.mrb[0].mxu0
        %3463 = vdwg.mxu0
        %s3464 = scalar_lea.vmem %s384, 4
        %3465 = vst.msk [vmem:[%s3464] sm:$0x3] %vm1598, %v3461
        %vm3466 = vcmp.eq.f32.partialorder %v646, 3.0
        %vm3467 = vcmp.eq.f32.partialorder %v647, 3.0
        %v3468 = vsel %vm3466, %v532, 0.0
        %v3469 = vsel %vm3467, %v533, 0.0
        %vm3470 = vcmp.eq.f32.partialorder %v658, 3.0
        %vm3471 = vcmp.eq.f32.partialorder %v659, 3.0
        %v3472 = vsel %vm3470, %v534, 0.0
        %v3473 = vsel %vm3471, %v535, 0.0
        %v3474 = vadd.f32 %v3468, %v3472
        %v3475 = vadd.f32 %v3469, %v3473
        %3476 = vmatprep.subr.mxu0 0.0
        %v3477 = vand.u32 %v3474, 4294901760
        %3478 = vmatpush1.msra.mxu0 %v3477
        %3479 = vmatprep.subr.mxu0 0.0
        %v3480 = vand.u32 %v3475, 4294901760
        %3481 = vmatpush1.msra.mxu0 %v3480
        %3482 = vmatprep.subr.mxu0 0.0
        %3483 = vmatpush1.msra.mxu0 0.0
        %3484 = vmatprep.subr.mxu0 0.0
        %3485 = vmatpush1.msra.mxu0 0.0
        %3486 = vmatprep.subr.mxu0 0.0
        %3487 = vmatpush1.msra.mxu0 0.0
        %3488 = vmatprep.subr.mxu0 0.0
        %3489 = vmatpush1.msra.mxu0 0.0
        %3490 = vmatprep.subr.mxu0 0.0
        %3491 = vmatpush1.msra.mxu0 0.0
        %3492 = vmatprep.subr.mxu0 0.0
        %3493 = vmatpush1.msra.mxu0 0.0
        %3494 = vmatprep.subr.mxu0 0.0
        %3495 = vmatpush1.msra.mxu0 0.0
        %3496 = vmatprep.subr.mxu0 0.0
        %3497 = vmatpush1.msra.mxu0 0.0
        %3498 = vmatprep.subr.mxu0 0.0
        %3499 = vmatpush1.msra.mxu0 0.0
        %3500 = vmatprep.subr.mxu0 0.0
        %3501 = vmatpush1.msra.mxu0 0.0
        %3502 = vmatprep.subr.mxu0 0.0
        %3503 = vmatpush1.msra.mxu0 0.0
        %3504 = vmatprep.subr.mxu0 0.0
        %3505 = vmatpush1.msra.mxu0 0.0
        %3506 = vmatprep.subr.mxu0 0.0
        %3507 = vmatpush1.msra.mxu0 0.0
        %3508 = vmatprep.subr.mxu0 0.0
        %3509 = vmatpush1.msra.mxu0 0.0
        %3510 = vmatprep.subr.mxu0 0.0
        %3511 = vmatpush1.msra.mxu0 0.0
        %3512 = vmatprep.subr.mxu0 0.0
        %3513 = vmatpush1.msra.mxu0 0.0
        %3514 = vmatprep.subr.mxu0 0.0
        %3515 = vmatpush1.msra.mxu0 0.0
        %3516 = vmatprep.subr.mxu0 0.0
        %3517 = vmatpush1.msra.mxu0 0.0
        %3518 = vmatprep.subr.mxu0 0.0
        %3519 = vmatpush1.msra.mxu0 0.0
        %3520 = vmatprep.subr.mxu0 0.0
        %3521 = vmatpush1.msra.mxu0 0.0
        %3522 = vmatprep.subr.mxu0 0.0
        %3523 = vmatpush1.msra.mxu0 0.0
        %3524 = vmatprep.subr.mxu0 0.0
        %3525 = vmatpush1.msra.mxu0 0.0
        %3526 = vmatprep.subr.mxu0 0.0
        %3527 = vmatpush1.msra.mxu0 0.0
        %3528 = vmatprep.subr.mxu0 0.0
        %3529 = vmatpush1.msra.mxu0 0.0
        %3530 = vmatprep.subr.mxu0 0.0
        %3531 = vmatpush1.msra.mxu0 0.0
        %3532 = vmatprep.subr.mxu0 0.0
        %3533 = vmatpush1.msra.mxu0 0.0
        %3534 = vmatprep.subr.mxu0 0.0
        %3535 = vmatpush1.msra.mxu0 0.0
        %3536 = vmatprep.subr.mxu0 0.0
        %3537 = vmatpush1.msra.mxu0 0.0
        %3538 = vmatprep.subr.mxu0 0.0
        %3539 = vmatpush1.msra.mxu0 0.0
        %3540 = vmatprep.subr.mxu0 0.0
        %3541 = vmatpush1.msra.mxu0 0.0
        %3542 = vmatprep.mubr.f32.mxu0 0.0
        %v3543 = vand.u32 %v675, 4294901760
        %v3544 = vsub.f32 %v675, %v3543
        %v3545 = vand.u32 %v3544, 4294901760
        %v3546 = vsub.f32 %v3544, %v3545
        %v3547 = vand.u32 %v3546, 4294901760
        %3548 = vmatmul.mubr.f32.gmra.mrb[0].mxu0 %v3547
        %v3549 = vpop.f32.mrb[0].mxu0
        %v3550 = vadd.f32 0.0, %v3549
        %v3551 = vpop.f32.mrb[0].mxu0
        %3552 = vdwg.mxu0
        %3553 = vmatprep.subr.mxu0 0.0
        %v3554 = vand.u32 %v3474, 4294901760
        %v3555 = vsub.f32 %v3474, %v3554
        %v3556 = vand.u32 %v3555, 4294901760
        %v3557 = vsub.f32 %v3555, %v3556
        %v3558 = vand.u32 %v3557, 4294901760
        %3559 = vmatpush1.msra.mxu0 %v3558
        %3560 = vmatprep.subr.mxu0 0.0
        %v3561 = vand.u32 %v3475, 4294901760
        %v3562 = vsub.f32 %v3475, %v3561
        %v3563 = vand.u32 %v3562, 4294901760
        %v3564 = vsub.f32 %v3562, %v3563
        %v3565 = vand.u32 %v3564, 4294901760
        %3566 = vmatpush1.msra.mxu0 %v3565
        %3567 = vmatprep.subr.mxu0 0.0
        %3568 = vmatpush1.msra.mxu0 0.0
        %3569 = vmatprep.subr.mxu0 0.0
        %3570 = vmatpush1.msra.mxu0 0.0
        %3571 = vmatprep.subr.mxu0 0.0
        %3572 = vmatpush1.msra.mxu0 0.0
        %3573 = vmatprep.subr.mxu0 0.0
        %3574 = vmatpush1.msra.mxu0 0.0
        %3575 = vmatprep.subr.mxu0 0.0
        %3576 = vmatpush1.msra.mxu0 0.0
        %3577 = vmatprep.subr.mxu0 0.0
        %3578 = vmatpush1.msra.mxu0 0.0
        %3579 = vmatprep.subr.mxu0 0.0
        %3580 = vmatpush1.msra.mxu0 0.0
        %3581 = vmatprep.subr.mxu0 0.0
        %3582 = vmatpush1.msra.mxu0 0.0
        %3583 = vmatprep.subr.mxu0 0.0
        %3584 = vmatpush1.msra.mxu0 0.0
        %3585 = vmatprep.subr.mxu0 0.0
        %3586 = vmatpush1.msra.mxu0 0.0
        %3587 = vmatprep.subr.mxu0 0.0
        %3588 = vmatpush1.msra.mxu0 0.0
        %3589 = vmatprep.subr.mxu0 0.0
        %3590 = vmatpush1.msra.mxu0 0.0
        %3591 = vmatprep.subr.mxu0 0.0
        %3592 = vmatpush1.msra.mxu0 0.0
        %3593 = vmatprep.subr.mxu0 0.0
        %3594 = vmatpush1.msra.mxu0 0.0
        %3595 = vmatprep.subr.mxu0 0.0
        %3596 = vmatpush1.msra.mxu0 0.0
        %3597 = vmatprep.subr.mxu0 0.0
        %3598 = vmatpush1.msra.mxu0 0.0
        %3599 = vmatprep.subr.mxu0 0.0
        %3600 = vmatpush1.msra.mxu0 0.0
        %3601 = vmatprep.subr.mxu0 0.0
        %3602 = vmatpush1.msra.mxu0 0.0
        %3603 = vmatprep.subr.mxu0 0.0
        %3604 = vmatpush1.msra.mxu0 0.0
        %3605 = vmatprep.subr.mxu0 0.0
        %3606 = vmatpush1.msra.mxu0 0.0
        %3607 = vmatprep.subr.mxu0 0.0
        %3608 = vmatpush1.msra.mxu0 0.0
        %3609 = vmatprep.subr.mxu0 0.0
        %3610 = vmatpush1.msra.mxu0 0.0
        %3611 = vmatprep.subr.mxu0 0.0
        %3612 = vmatpush1.msra.mxu0 0.0
        %3613 = vmatprep.subr.mxu0 0.0
        %3614 = vmatpush1.msra.mxu0 0.0
        %3615 = vmatprep.subr.mxu0 0.0
        %3616 = vmatpush1.msra.mxu0 0.0
        %3617 = vmatprep.subr.mxu0 0.0
        %3618 = vmatpush1.msra.mxu0 0.0
        %3619 = vmatprep.subr.mxu0 0.0
        %3620 = vmatpush1.msra.mxu0 0.0
        %3621 = vmatprep.subr.mxu0 0.0
        %3622 = vmatpush1.msra.mxu0 0.0
        %3623 = vmatprep.subr.mxu0 0.0
        %3624 = vmatpush1.msra.mxu0 0.0
        %3625 = vmatprep.subr.mxu0 0.0
        %3626 = vmatpush1.msra.mxu0 0.0
        %3627 = vmatprep.mubr.f32.mxu0 0.0
        %v3628 = vand.u32 %v675, 4294901760
        %3629 = vmatmul.mubr.f32.gmra.mrb[0].mxu0 %v3628
        %v3630 = vpop.f32.mrb[0].mxu0
        %v3631 = vadd.f32 %v3550, %v3630
        %v3632 = vpop.f32.mrb[0].mxu0
        %3633 = vdwg.mxu0
        %3634 = vmatprep.subr.mxu0 0.0
        %v3635 = vand.u32 %v3474, 4294901760
        %v3636 = vsub.f32 %v3474, %v3635
        %3637 = vmatpush1.msra.mxu0 %v3636
        %3638 = vmatprep.subr.mxu0 0.0
        %v3639 = vand.u32 %v3475, 4294901760
        %v3640 = vsub.f32 %v3475, %v3639
        %3641 = vmatpush1.msra.mxu0 %v3640
        %3642 = vmatprep.subr.mxu0 0.0
        %3643 = vmatpush1.msra.mxu0 0.0
        %3644 = vmatprep.subr.mxu0 0.0
        %3645 = vmatpush1.msra.mxu0 0.0
        %3646 = vmatprep.subr.mxu0 0.0
        %3647 = vmatpush1.msra.mxu0 0.0
        %3648 = vmatprep.subr.mxu0 0.0
        %3649 = vmatpush1.msra.mxu0 0.0
        %3650 = vmatprep.subr.mxu0 0.0
        %3651 = vmatpush1.msra.mxu0 0.0
        %3652 = vmatprep.subr.mxu0 0.0
        %3653 = vmatpush1.msra.mxu0 0.0
        %3654 = vmatprep.subr.mxu0 0.0
        %3655 = vmatpush1.msra.mxu0 0.0
        %3656 = vmatprep.subr.mxu0 0.0
        %3657 = vmatpush1.msra.mxu0 0.0
        %3658 = vmatprep.subr.mxu0 0.0
        %3659 = vmatpush1.msra.mxu0 0.0
        %3660 = vmatprep.subr.mxu0 0.0
        %3661 = vmatpush1.msra.mxu0 0.0
        %3662 = vmatprep.subr.mxu0 0.0
        %3663 = vmatpush1.msra.mxu0 0.0
        %3664 = vmatprep.subr.mxu0 0.0
        %3665 = vmatpush1.msra.mxu0 0.0
        %3666 = vmatprep.subr.mxu0 0.0
        %3667 = vmatpush1.msra.mxu0 0.0
        %3668 = vmatprep.subr.mxu0 0.0
        %3669 = vmatpush1.msra.mxu0 0.0
        %3670 = vmatprep.subr.mxu0 0.0
        %3671 = vmatpush1.msra.mxu0 0.0
        %3672 = vmatprep.subr.mxu0 0.0
        %3673 = vmatpush1.msra.mxu0 0.0
        %3674 = vmatprep.subr.mxu0 0.0
        %3675 = vmatpush1.msra.mxu0 0.0
        %3676 = vmatprep.subr.mxu0 0.0
        %3677 = vmatpush1.msra.mxu0 0.0
        %3678 = vmatprep.subr.mxu0 0.0
        %3679 = vmatpush1.msra.mxu0 0.0
        %3680 = vmatprep.subr.mxu0 0.0
        %3681 = vmatpush1.msra.mxu0 0.0
        %3682 = vmatprep.subr.mxu0 0.0
        %3683 = vmatpush1.msra.mxu0 0.0
        %3684 = vmatprep.subr.mxu0 0.0
        %3685 = vmatpush1.msra.mxu0 0.0
        %3686 = vmatprep.subr.mxu0 0.0
        %3687 = vmatpush1.msra.mxu0 0.0
        %3688 = vmatprep.subr.mxu0 0.0
        %3689 = vmatpush1.msra.mxu0 0.0
        %3690 = vmatprep.subr.mxu0 0.0
        %3691 = vmatpush1.msra.mxu0 0.0
        %3692 = vmatprep.subr.mxu0 0.0
        %3693 = vmatpush1.msra.mxu0 0.0
        %3694 = vmatprep.subr.mxu0 0.0
        %3695 = vmatpush1.msra.mxu0 0.0
        %3696 = vmatprep.subr.mxu0 0.0
        %3697 = vmatpush1.msra.mxu0 0.0
        %3698 = vmatprep.subr.mxu0 0.0
        %3699 = vmatpush1.msra.mxu0 0.0
        %3700 = vmatprep.subr.mxu0 0.0
        %3701 = vmatpush1.msra.mxu0 0.0
        %3702 = vmatprep.mubr.f32.mxu0 0.0
        %v3703 = vand.u32 %v675, 4294901760
        %v3704 = vsub.f32 %v675, %v3703
        %3705 = vmatmul.mubr.f32.gmra.mrb[0].mxu0 %v3704
        %v3706 = vpop.f32.mrb[0].mxu0
        %v3707 = vadd.f32 %v3631, %v3706
        %v3708 = vpop.f32.mrb[0].mxu0
        %3709 = vdwg.mxu0
        %3710 = vmatprep.subr.mxu0 0.0
        %v3711 = vand.u32 %v3474, 4294901760
        %3712 = vmatpush1.msra.mxu0 %v3711
        %3713 = vmatprep.subr.mxu0 0.0
        %v3714 = vand.u32 %v3475, 4294901760
        %3715 = vmatpush1.msra.mxu0 %v3714
        %3716 = vmatprep.subr.mxu0 0.0
        %3717 = vmatpush1.msra.mxu0 0.0
        %3718 = vmatprep.subr.mxu0 0.0
        %3719 = vmatpush1.msra.mxu0 0.0
        %3720 = vmatprep.subr.mxu0 0.0
        %3721 = vmatpush1.msra.mxu0 0.0
        %3722 = vmatprep.subr.mxu0 0.0
        %3723 = vmatpush1.msra.mxu0 0.0
        %3724 = vmatprep.subr.mxu0 0.0
        %3725 = vmatpush1.msra.mxu0 0.0
        %3726 = vmatprep.subr.mxu0 0.0
        %3727 = vmatpush1.msra.mxu0 0.0
        %3728 = vmatprep.subr.mxu0 0.0
        %3729 = vmatpush1.msra.mxu0 0.0
        %3730 = vmatprep.subr.mxu0 0.0
        %3731 = vmatpush1.msra.mxu0 0.0
        %3732 = vmatprep.subr.mxu0 0.0
        %3733 = vmatpush1.msra.mxu0 0.0
        %3734 = vmatprep.subr.mxu0 0.0
        %3735 = vmatpush1.msra.mxu0 0.0
        %3736 = vmatprep.subr.mxu0 0.0
        %3737 = vmatpush1.msra.mxu0 0.0
        %3738 = vmatprep.subr.mxu0 0.0
        %3739 = vmatpush1.msra.mxu0 0.0
        %3740 = vmatprep.subr.mxu0 0.0
        %3741 = vmatpush1.msra.mxu0 0.0
        %3742 = vmatprep.subr.mxu0 0.0
        %3743 = vmatpush1.msra.mxu0 0.0
        %3744 = vmatprep.subr.mxu0 0.0
        %3745 = vmatpush1.msra.mxu0 0.0
        %3746 = vmatprep.subr.mxu0 0.0
        %3747 = vmatpush1.msra.mxu0 0.0
        %3748 = vmatprep.subr.mxu0 0.0
        %3749 = vmatpush1.msra.mxu0 0.0
        %3750 = vmatprep.subr.mxu0 0.0
        %3751 = vmatpush1.msra.mxu0 0.0
        %3752 = vmatprep.subr.mxu0 0.0
        %3753 = vmatpush1.msra.mxu0 0.0
        %3754 = vmatprep.subr.mxu0 0.0
        %3755 = vmatpush1.msra.mxu0 0.0
        %3756 = vmatprep.subr.mxu0 0.0
        %3757 = vmatpush1.msra.mxu0 0.0
        %3758 = vmatprep.subr.mxu0 0.0
        %3759 = vmatpush1.msra.mxu0 0.0
        %3760 = vmatprep.subr.mxu0 0.0
        %3761 = vmatpush1.msra.mxu0 0.0
        %3762 = vmatprep.subr.mxu0 0.0
        %3763 = vmatpush1.msra.mxu0 0.0
        %3764 = vmatprep.subr.mxu0 0.0
        %3765 = vmatpush1.msra.mxu0 0.0
        %3766 = vmatprep.subr.mxu0 0.0
        %3767 = vmatpush1.msra.mxu0 0.0
        %3768 = vmatprep.subr.mxu0 0.0
        %3769 = vmatpush1.msra.mxu0 0.0
        %3770 = vmatprep.subr.mxu0 0.0
        %3771 = vmatpush1.msra.mxu0 0.0
        %3772 = vmatprep.subr.mxu0 0.0
        %3773 = vmatpush1.msra.mxu0 0.0
        %3774 = vmatprep.subr.mxu0 0.0
        %3775 = vmatpush1.msra.mxu0 0.0
        %3776 = vmatprep.mubr.f32.mxu0 0.0
        %v3777 = vand.u32 %v675, 4294901760
        %v3778 = vsub.f32 %v675, %v3777
        %v3779 = vand.u32 %v3778, 4294901760
        %3780 = vmatmul.mubr.f32.gmra.mrb[0].mxu0 %v3779
        %v3781 = vpop.f32.mrb[0].mxu0
        %v3782 = vadd.f32 %v3707, %v3781
        %v3783 = vpop.f32.mrb[0].mxu0
        %3784 = vdwg.mxu0
        %3785 = vmatprep.subr.mxu0 0.0
        %v3786 = vand.u32 %v3474, 4294901760
        %v3787 = vsub.f32 %v3474, %v3786
        %v3788 = vand.u32 %v3787, 4294901760
        %3789 = vmatpush1.msra.mxu0 %v3788
        %3790 = vmatprep.subr.mxu0 0.0
        %v3791 = vand.u32 %v3475, 4294901760
        %v3792 = vsub.f32 %v3475, %v3791
        %v3793 = vand.u32 %v3792, 4294901760
        %3794 = vmatpush1.msra.mxu0 %v3793
        %3795 = vmatprep.subr.mxu0 0.0
        %3796 = vmatpush1.msra.mxu0 0.0
        %3797 = vmatprep.subr.mxu0 0.0
        %3798 = vmatpush1.msra.mxu0 0.0
        %3799 = vmatprep.subr.mxu0 0.0
        %3800 = vmatpush1.msra.mxu0 0.0
        %3801 = vmatprep.subr.mxu0 0.0
        %3802 = vmatpush1.msra.mxu0 0.0
        %3803 = vmatprep.subr.mxu0 0.0
        %3804 = vmatpush1.msra.mxu0 0.0
        %3805 = vmatprep.subr.mxu0 0.0
        %3806 = vmatpush1.msra.mxu0 0.0
        %3807 = vmatprep.subr.mxu0 0.0
        %3808 = vmatpush1.msra.mxu0 0.0
        %3809 = vmatprep.subr.mxu0 0.0
        %3810 = vmatpush1.msra.mxu0 0.0
        %3811 = vmatprep.subr.mxu0 0.0
        %3812 = vmatpush1.msra.mxu0 0.0
        %3813 = vmatprep.subr.mxu0 0.0
        %3814 = vmatpush1.msra.mxu0 0.0
        %3815 = vmatprep.subr.mxu0 0.0
        %3816 = vmatpush1.msra.mxu0 0.0
        %3817 = vmatprep.subr.mxu0 0.0
        %3818 = vmatpush1.msra.mxu0 0.0
        %3819 = vmatprep.subr.mxu0 0.0
        %3820 = vmatpush1.msra.mxu0 0.0
        %3821 = vmatprep.subr.mxu0 0.0
        %3822 = vmatpush1.msra.mxu0 0.0
        %3823 = vmatprep.subr.mxu0 0.0
        %3824 = vmatpush1.msra.mxu0 0.0
        %3825 = vmatprep.subr.mxu0 0.0
        %3826 = vmatpush1.msra.mxu0 0.0
        %3827 = vmatprep.subr.mxu0 0.0
        %3828 = vmatpush1.msra.mxu0 0.0
        %3829 = vmatprep.subr.mxu0 0.0
        %3830 = vmatpush1.msra.mxu0 0.0
        %3831 = vmatprep.subr.mxu0 0.0
        %3832 = vmatpush1.msra.mxu0 0.0
        %3833 = vmatprep.subr.mxu0 0.0
        %3834 = vmatpush1.msra.mxu0 0.0
        %3835 = vmatprep.subr.mxu0 0.0
        %3836 = vmatpush1.msra.mxu0 0.0
        %3837 = vmatprep.subr.mxu0 0.0
        %3838 = vmatpush1.msra.mxu0 0.0
        %3839 = vmatprep.subr.mxu0 0.0
        %3840 = vmatpush1.msra.mxu0 0.0
        %3841 = vmatprep.subr.mxu0 0.0
        %3842 = vmatpush1.msra.mxu0 0.0
        %3843 = vmatprep.subr.mxu0 0.0
        %3844 = vmatpush1.msra.mxu0 0.0
        %3845 = vmatprep.subr.mxu0 0.0
        %3846 = vmatpush1.msra.mxu0 0.0
        %3847 = vmatprep.subr.mxu0 0.0
        %3848 = vmatpush1.msra.mxu0 0.0
        %3849 = vmatprep.subr.mxu0 0.0
        %3850 = vmatpush1.msra.mxu0 0.0
        %3851 = vmatprep.subr.mxu0 0.0
        %3852 = vmatpush1.msra.mxu0 0.0
        %3853 = vmatprep.subr.mxu0 0.0
        %3854 = vmatpush1.msra.mxu0 0.0
        %3855 = vmatprep.mubr.f32.mxu0 0.0
        %v3856 = vand.u32 %v675, 4294901760
        %3857 = vmatmul.mubr.f32.gmra.mrb[0].mxu0 %v3856
        %v3858 = vpop.f32.mrb[0].mxu0
        %v3859 = vadd.f32 %v3782, %v3858
        %v3860 = vpop.f32.mrb[0].mxu0
        %3861 = vdwg.mxu0
        %3862 = vmatprep.subr.mxu0 0.0
        %v3863 = vand.u32 %v3474, 4294901760
        %3864 = vmatpush1.msra.mxu0 %v3863
        %3865 = vmatprep.subr.mxu0 0.0
        %v3866 = vand.u32 %v3475, 4294901760
        %3867 = vmatpush1.msra.mxu0 %v3866
        %3868 = vmatprep.subr.mxu0 0.0
        %3869 = vmatpush1.msra.mxu0 0.0
        %3870 = vmatprep.subr.mxu0 0.0
        %3871 = vmatpush1.msra.mxu0 0.0
        %3872 = vmatprep.subr.mxu0 0.0
        %3873 = vmatpush1.msra.mxu0 0.0
        %3874 = vmatprep.subr.mxu0 0.0
        %3875 = vmatpush1.msra.mxu0 0.0
        %3876 = vmatprep.subr.mxu0 0.0
        %3877 = vmatpush1.msra.mxu0 0.0
        %3878 = vmatprep.subr.mxu0 0.0
        %3879 = vmatpush1.msra.mxu0 0.0
        %3880 = vmatprep.subr.mxu0 0.0
        %3881 = vmatpush1.msra.mxu0 0.0
        %3882 = vmatprep.subr.mxu0 0.0
        %3883 = vmatpush1.msra.mxu0 0.0
        %3884 = vmatprep.subr.mxu0 0.0
        %3885 = vmatpush1.msra.mxu0 0.0
        %3886 = vmatprep.subr.mxu0 0.0
        %3887 = vmatpush1.msra.mxu0 0.0
        %3888 = vmatprep.subr.mxu0 0.0
        %3889 = vmatpush1.msra.mxu0 0.0
        %3890 = vmatprep.subr.mxu0 0.0
        %3891 = vmatpush1.msra.mxu0 0.0
        %3892 = vmatprep.subr.mxu0 0.0
        %3893 = vmatpush1.msra.mxu0 0.0
        %3894 = vmatprep.subr.mxu0 0.0
        %3895 = vmatpush1.msra.mxu0 0.0
        %3896 = vmatprep.subr.mxu0 0.0
        %3897 = vmatpush1.msra.mxu0 0.0
        %3898 = vmatprep.subr.mxu0 0.0
        %3899 = vmatpush1.msra.mxu0 0.0
        %3900 = vmatprep.subr.mxu0 0.0
        %3901 = vmatpush1.msra.mxu0 0.0
        %3902 = vmatprep.subr.mxu0 0.0
        %3903 = vmatpush1.msra.mxu0 0.0
        %3904 = vmatprep.subr.mxu0 0.0
        %3905 = vmatpush1.msra.mxu0 0.0
        %3906 = vmatprep.subr.mxu0 0.0
        %3907 = vmatpush1.msra.mxu0 0.0
        %3908 = vmatprep.subr.mxu0 0.0
        %3909 = vmatpush1.msra.mxu0 0.0
        %3910 = vmatprep.subr.mxu0 0.0
        %3911 = vmatpush1.msra.mxu0 0.0
        %3912 = vmatprep.subr.mxu0 0.0
        %3913 = vmatpush1.msra.mxu0 0.0
        %3914 = vmatprep.subr.mxu0 0.0
        %3915 = vmatpush1.msra.mxu0 0.0
        %3916 = vmatprep.subr.mxu0 0.0
        %3917 = vmatpush1.msra.mxu0 0.0
        %3918 = vmatprep.subr.mxu0 0.0
        %3919 = vmatpush1.msra.mxu0 0.0
        %3920 = vmatprep.subr.mxu0 0.0
        %3921 = vmatpush1.msra.mxu0 0.0
        %3922 = vmatprep.subr.mxu0 0.0
        %3923 = vmatpush1.msra.mxu0 0.0
        %3924 = vmatprep.subr.mxu0 0.0
        %3925 = vmatpush1.msra.mxu0 0.0
        %3926 = vmatprep.subr.mxu0 0.0
        %3927 = vmatpush1.msra.mxu0 0.0
        %3928 = vmatprep.mubr.f32.mxu0 0.0
        %v3929 = vand.u32 %v675, 4294901760
        %3930 = vmatmul.mubr.f32.gmra.mrb[0].mxu0 %v3929
        %v3931 = vpop.f32.mrb[0].mxu0
        %v3932 = vadd.f32 %v3859, %v3931
        %v3933 = vpop.f32.mrb[0].mxu0
        %3934 = vdwg.mxu0
        %v3936 = vsel %vm673, %v3932, 0
        %3938 = vmatprep.subr.mxu0 0.0
        %v3939 = vand.u32 %v661, 4294901760
        %3940 = vmatpush1.msra.mxu0 %v3939
        %3941 = vmatprep.subr.mxu0 0.0
        %v3942 = vand.u32 %v662, 4294901760
        %3943 = vmatpush1.msra.mxu0 %v3942
        %3944 = vmatprep.subr.mxu0 0.0
        %3945 = vmatpush1.msra.mxu0 0.0
        %3946 = vmatprep.subr.mxu0 0.0
        %3947 = vmatpush1.msra.mxu0 0.0
        %3948 = vmatprep.subr.mxu0 0.0
        %3949 = vmatpush1.msra.mxu0 0.0
        %3950 = vmatprep.subr.mxu0 0.0
        %3951 = vmatpush1.msra.mxu0 0.0
        %3952 = vmatprep.subr.mxu0 0.0
        %3953 = vmatpush1.msra.mxu0 0.0
        %3954 = vmatprep.subr.mxu0 0.0
        %3955 = vmatpush1.msra.mxu0 0.0
        %3956 = vmatprep.subr.mxu0 0.0
        %3957 = vmatpush1.msra.mxu0 0.0
        %3958 = vmatprep.subr.mxu0 0.0
        %3959 = vmatpush1.msra.mxu0 0.0
        %3960 = vmatprep.subr.mxu0 0.0
        %3961 = vmatpush1.msra.mxu0 0.0
        %3962 = vmatprep.subr.mxu0 0.0
        %3963 = vmatpush1.msra.mxu0 0.0
        %3964 = vmatprep.subr.mxu0 0.0
        %3965 = vmatpush1.msra.mxu0 0.0
        %3966 = vmatprep.subr.mxu0 0.0
        %3967 = vmatpush1.msra.mxu0 0.0
        %3968 = vmatprep.subr.mxu0 0.0
        %3969 = vmatpush1.msra.mxu0 0.0
        %3970 = vmatprep.subr.mxu0 0.0
        %3971 = vmatpush1.msra.mxu0 0.0
        %3972 = vmatprep.subr.mxu0 0.0
        %3973 = vmatpush1.msra.mxu0 0.0
        %3974 = vmatprep.subr.mxu0 0.0
        %3975 = vmatpush1.msra.mxu0 0.0
        %3976 = vmatprep.subr.mxu0 0.0
        %3977 = vmatpush1.msra.mxu0 0.0
        %3978 = vmatprep.subr.mxu0 0.0
        %3979 = vmatpush1.msra.mxu0 0.0
        %3980 = vmatprep.subr.mxu0 0.0
        %3981 = vmatpush1.msra.mxu0 0.0
        %3982 = vmatprep.subr.mxu0 0.0
        %3983 = vmatpush1.msra.mxu0 0.0
        %3984 = vmatprep.subr.mxu0 0.0
        %3985 = vmatpush1.msra.mxu0 0.0
        %3986 = vmatprep.subr.mxu0 0.0
        %3987 = vmatpush1.msra.mxu0 0.0
        %3988 = vmatprep.subr.mxu0 0.0
        %3989 = vmatpush1.msra.mxu0 0.0
        %3990 = vmatprep.subr.mxu0 0.0
        %3991 = vmatpush1.msra.mxu0 0.0
        %3992 = vmatprep.subr.mxu0 0.0
        %3993 = vmatpush1.msra.mxu0 0.0
        %3994 = vmatprep.subr.mxu0 0.0
        %3995 = vmatpush1.msra.mxu0 0.0
        %3996 = vmatprep.subr.mxu0 0.0
        %3997 = vmatpush1.msra.mxu0 0.0
        %3998 = vmatprep.subr.mxu0 0.0
        %3999 = vmatpush1.msra.mxu0 0.0
        %4000 = vmatprep.subr.mxu0 0.0
        %4001 = vmatpush1.msra.mxu0 0.0
        %4002 = vmatprep.subr.mxu0 0.0
        %4003 = vmatpush1.msra.mxu0 0.0
        %4004 = vmatprep.mubr.f32.mxu0 0.0
        %v4005 = vand.u32 %v3936, 4294901760
        %v4006 = vsub.f32 %v3936, %v4005
        %v4007 = vand.u32 %v4006, 4294901760
        %v4008 = vsub.f32 %v4006, %v4007
        %v4009 = vand.u32 %v4008, 4294901760
        %4010 = vmatmul.mubr.f32.gmra.mrb[0].mxu0 %v4009
        %v4011 = vpop.f32.mrb[0].mxu0
        %v4012 = vadd.f32 0.0, %v4011
        %v4013 = vpop.f32.mrb[0].mxu0
        %4014 = vdwg.mxu0
        %4015 = vmatprep.subr.mxu0 0.0
        %v4016 = vand.u32 %v661, 4294901760
        %v4017 = vsub.f32 %v661, %v4016
        %v4018 = vand.u32 %v4017, 4294901760
        %v4019 = vsub.f32 %v4017, %v4018
        %v4020 = vand.u32 %v4019, 4294901760
        %4021 = vmatpush1.msra.mxu0 %v4020
        %4022 = vmatprep.subr.mxu0 0.0
        %v4023 = vand.u32 %v662, 4294901760
        %v4024 = vsub.f32 %v662, %v4023
        %v4025 = vand.u32 %v4024, 4294901760
        %v4026 = vsub.f32 %v4024, %v4025
        %v4027 = vand.u32 %v4026, 4294901760
        %4028 = vmatpush1.msra.mxu0 %v4027
        %4029 = vmatprep.subr.mxu0 0.0
        %4030 = vmatpush1.msra.mxu0 0.0
        %4031 = vmatprep.subr.mxu0 0.0
        %4032 = vmatpush1.msra.mxu0 0.0
        %4033 = vmatprep.subr.mxu0 0.0
        %4034 = vmatpush1.msra.mxu0 0.0
        %4035 = vmatprep.subr.mxu0 0.0
        %4036 = vmatpush1.msra.mxu0 0.0
        %4037 = vmatprep.subr.mxu0 0.0
        %4038 = vmatpush1.msra.mxu0 0.0
        %4039 = vmatprep.subr.mxu0 0.0
        %4040 = vmatpush1.msra.mxu0 0.0
        %4041 = vmatprep.subr.mxu0 0.0
        %4042 = vmatpush1.msra.mxu0 0.0
        %4043 = vmatprep.subr.mxu0 0.0
        %4044 = vmatpush1.msra.mxu0 0.0
        %4045 = vmatprep.subr.mxu0 0.0
        %4046 = vmatpush1.msra.mxu0 0.0
        %4047 = vmatprep.subr.mxu0 0.0
        %4048 = vmatpush1.msra.mxu0 0.0
        %4049 = vmatprep.subr.mxu0 0.0
        %4050 = vmatpush1.msra.mxu0 0.0
        %4051 = vmatprep.subr.mxu0 0.0
        %4052 = vmatpush1.msra.mxu0 0.0
        %4053 = vmatprep.subr.mxu0 0.0
        %4054 = vmatpush1.msra.mxu0 0.0
        %4055 = vmatprep.subr.mxu0 0.0
        %4056 = vmatpush1.msra.mxu0 0.0
        %4057 = vmatprep.subr.mxu0 0.0
        %4058 = vmatpush1.msra.mxu0 0.0
        %4059 = vmatprep.subr.mxu0 0.0
        %4060 = vmatpush1.msra.mxu0 0.0
        %4061 = vmatprep.subr.mxu0 0.0
        %4062 = vmatpush1.msra.mxu0 0.0
        %4063 = vmatprep.subr.mxu0 0.0
        %4064 = vmatpush1.msra.mxu0 0.0
        %4065 = vmatprep.subr.mxu0 0.0
        %4066 = vmatpush1.msra.mxu0 0.0
        %4067 = vmatprep.subr.mxu0 0.0
        %4068 = vmatpush1.msra.mxu0 0.0
        %4069 = vmatprep.subr.mxu0 0.0
        %4070 = vmatpush1.msra.mxu0 0.0
        %4071 = vmatprep.subr.mxu0 0.0
        %4072 = vmatpush1.msra.mxu0 0.0
        %4073 = vmatprep.subr.mxu0 0.0
        %4074 = vmatpush1.msra.mxu0 0.0
        %4075 = vmatprep.subr.mxu0 0.0
        %4076 = vmatpush1.msra.mxu0 0.0
        %4077 = vmatprep.subr.mxu0 0.0
        %4078 = vmatpush1.msra.mxu0 0.0
        %4079 = vmatprep.subr.mxu0 0.0
        %4080 = vmatpush1.msra.mxu0 0.0
        %4081 = vmatprep.subr.mxu0 0.0
        %4082 = vmatpush1.msra.mxu0 0.0
        %4083 = vmatprep.subr.mxu0 0.0
        %4084 = vmatpush1.msra.mxu0 0.0
        %4085 = vmatprep.subr.mxu0 0.0
        %4086 = vmatpush1.msra.mxu0 0.0
        %4087 = vmatprep.subr.mxu0 0.0
        %4088 = vmatpush1.msra.mxu0 0.0
        %4089 = vmatprep.mubr.f32.mxu0 0.0
        %v4090 = vand.u32 %v3936, 4294901760
        %4091 = vmatmul.mubr.f32.gmra.mrb[0].mxu0 %v4090
        %v4092 = vpop.f32.mrb[0].mxu0
        %v4093 = vadd.f32 %v4012, %v4092
        %v4094 = vpop.f32.mrb[0].mxu0
        %4095 = vdwg.mxu0
        %4096 = vmatprep.subr.mxu0 0.0
        %v4097 = vand.u32 %v661, 4294901760
        %v4098 = vsub.f32 %v661, %v4097
        %4099 = vmatpush1.msra.mxu0 %v4098
        %4100 = vmatprep.subr.mxu0 0.0
        %v4101 = vand.u32 %v662, 4294901760
        %v4102 = vsub.f32 %v662, %v4101
        %4103 = vmatpush1.msra.mxu0 %v4102
        %4104 = vmatprep.subr.mxu0 0.0
        %4105 = vmatpush1.msra.mxu0 0.0
        %4106 = vmatprep.subr.mxu0 0.0
        %4107 = vmatpush1.msra.mxu0 0.0
        %4108 = vmatprep.subr.mxu0 0.0
        %4109 = vmatpush1.msra.mxu0 0.0
        %4110 = vmatprep.subr.mxu0 0.0
        %4111 = vmatpush1.msra.mxu0 0.0
        %4112 = vmatprep.subr.mxu0 0.0
        %4113 = vmatpush1.msra.mxu0 0.0
        %4114 = vmatprep.subr.mxu0 0.0
        %4115 = vmatpush1.msra.mxu0 0.0
        %4116 = vmatprep.subr.mxu0 0.0
        %4117 = vmatpush1.msra.mxu0 0.0
        %4118 = vmatprep.subr.mxu0 0.0
        %4119 = vmatpush1.msra.mxu0 0.0
        %4120 = vmatprep.subr.mxu0 0.0
        %4121 = vmatpush1.msra.mxu0 0.0
        %4122 = vmatprep.subr.mxu0 0.0
        %4123 = vmatpush1.msra.mxu0 0.0
        %4124 = vmatprep.subr.mxu0 0.0
        %4125 = vmatpush1.msra.mxu0 0.0
        %4126 = vmatprep.subr.mxu0 0.0
        %4127 = vmatpush1.msra.mxu0 0.0
        %4128 = vmatprep.subr.mxu0 0.0
        %4129 = vmatpush1.msra.mxu0 0.0
        %4130 = vmatprep.subr.mxu0 0.0
        %4131 = vmatpush1.msra.mxu0 0.0
        %4132 = vmatprep.subr.mxu0 0.0
        %4133 = vmatpush1.msra.mxu0 0.0
        %4134 = vmatprep.subr.mxu0 0.0
        %4135 = vmatpush1.msra.mxu0 0.0
        %4136 = vmatprep.subr.mxu0 0.0
        %4137 = vmatpush1.msra.mxu0 0.0
        %4138 = vmatprep.subr.mxu0 0.0
        %4139 = vmatpush1.msra.mxu0 0.0
        %4140 = vmatprep.subr.mxu0 0.0
        %4141 = vmatpush1.msra.mxu0 0.0
        %4142 = vmatprep.subr.mxu0 0.0
        %4143 = vmatpush1.msra.mxu0 0.0
        %4144 = vmatprep.subr.mxu0 0.0
        %4145 = vmatpush1.msra.mxu0 0.0
        %4146 = vmatprep.subr.mxu0 0.0
        %4147 = vmatpush1.msra.mxu0 0.0
        %4148 = vmatprep.subr.mxu0 0.0
        %4149 = vmatpush1.msra.mxu0 0.0
        %4150 = vmatprep.subr.mxu0 0.0
        %4151 = vmatpush1.msra.mxu0 0.0
        %4152 = vmatprep.subr.mxu0 0.0
        %4153 = vmatpush1.msra.mxu0 0.0
        %4154 = vmatprep.subr.mxu0 0.0
        %4155 = vmatpush1.msra.mxu0 0.0
        %4156 = vmatprep.subr.mxu0 0.0
        %4157 = vmatpush1.msra.mxu0 0.0
        %4158 = vmatprep.subr.mxu0 0.0
        %4159 = vmatpush1.msra.mxu0 0.0
        %4160 = vmatprep.subr.mxu0 0.0
        %4161 = vmatpush1.msra.mxu0 0.0
        %4162 = vmatprep.subr.mxu0 0.0
        %4163 = vmatpush1.msra.mxu0 0.0
        %4164 = vmatprep.mubr.f32.mxu0 0.0
        %v4165 = vand.u32 %v3936, 4294901760
        %v4166 = vsub.f32 %v3936, %v4165
        %4167 = vmatmul.mubr.f32.gmra.mrb[0].mxu0 %v4166
        %v4168 = vpop.f32.mrb[0].mxu0
        %v4169 = vadd.f32 %v4093, %v4168
        %v4170 = vpop.f32.mrb[0].mxu0
        %4171 = vdwg.mxu0
        %4172 = vmatprep.subr.mxu0 0.0
        %v4173 = vand.u32 %v661, 4294901760
        %4174 = vmatpush1.msra.mxu0 %v4173
        %4175 = vmatprep.subr.mxu0 0.0
        %v4176 = vand.u32 %v662, 4294901760
        %4177 = vmatpush1.msra.mxu0 %v4176
        %4178 = vmatprep.subr.mxu0 0.0
        %4179 = vmatpush1.msra.mxu0 0.0
        %4180 = vmatprep.subr.mxu0 0.0
        %4181 = vmatpush1.msra.mxu0 0.0
        %4182 = vmatprep.subr.mxu0 0.0
        %4183 = vmatpush1.msra.mxu0 0.0
        %4184 = vmatprep.subr.mxu0 0.0
        %4185 = vmatpush1.msra.mxu0 0.0
        %4186 = vmatprep.subr.mxu0 0.0
        %4187 = vmatpush1.msra.mxu0 0.0
        %4188 = vmatprep.subr.mxu0 0.0
        %4189 = vmatpush1.msra.mxu0 0.0
        %4190 = vmatprep.subr.mxu0 0.0
        %4191 = vmatpush1.msra.mxu0 0.0
        %4192 = vmatprep.subr.mxu0 0.0
        %4193 = vmatpush1.msra.mxu0 0.0
        %4194 = vmatprep.subr.mxu0 0.0
        %4195 = vmatpush1.msra.mxu0 0.0
        %4196 = vmatprep.subr.mxu0 0.0
        %4197 = vmatpush1.msra.mxu0 0.0
        %4198 = vmatprep.subr.mxu0 0.0
        %4199 = vmatpush1.msra.mxu0 0.0
        %4200 = vmatprep.subr.mxu0 0.0
        %4201 = vmatpush1.msra.mxu0 0.0
        %4202 = vmatprep.subr.mxu0 0.0
        %4203 = vmatpush1.msra.mxu0 0.0
        %4204 = vmatprep.subr.mxu0 0.0
        %4205 = vmatpush1.msra.mxu0 0.0
        %4206 = vmatprep.subr.mxu0 0.0
        %4207 = vmatpush1.msra.mxu0 0.0
        %4208 = vmatprep.subr.mxu0 0.0
        %4209 = vmatpush1.msra.mxu0 0.0
        %4210 = vmatprep.subr.mxu0 0.0
        %4211 = vmatpush1.msra.mxu0 0.0
        %4212 = vmatprep.subr.mxu0 0.0
        %4213 = vmatpush1.msra.mxu0 0.0
        %4214 = vmatprep.subr.mxu0 0.0
        %4215 = vmatpush1.msra.mxu0 0.0
        %4216 = vmatprep.subr.mxu0 0.0
        %4217 = vmatpush1.msra.mxu0 0.0
        %4218 = vmatprep.subr.mxu0 0.0
        %4219 = vmatpush1.msra.mxu0 0.0
        %4220 = vmatprep.subr.mxu0 0.0
        %4221 = vmatpush1.msra.mxu0 0.0
        %4222 = vmatprep.subr.mxu0 0.0
        %4223 = vmatpush1.msra.mxu0 0.0
        %4224 = vmatprep.subr.mxu0 0.0
        %4225 = vmatpush1.msra.mxu0 0.0
        %4226 = vmatprep.subr.mxu0 0.0
        %4227 = vmatpush1.msra.mxu0 0.0
        %4228 = vmatprep.subr.mxu0 0.0
        %4229 = vmatpush1.msra.mxu0 0.0
        %4230 = vmatprep.subr.mxu0 0.0
        %4231 = vmatpush1.msra.mxu0 0.0
        %4232 = vmatprep.subr.mxu0 0.0
        %4233 = vmatpush1.msra.mxu0 0.0
        %4234 = vmatprep.subr.mxu0 0.0
        %4235 = vmatpush1.msra.mxu0 0.0
        %4236 = vmatprep.subr.mxu0 0.0
        %4237 = vmatpush1.msra.mxu0 0.0
        %4238 = vmatprep.mubr.f32.mxu0 0.0
        %v4239 = vand.u32 %v3936, 4294901760
        %v4240 = vsub.f32 %v3936, %v4239
        %v4241 = vand.u32 %v4240, 4294901760
        %4242 = vmatmul.mubr.f32.gmra.mrb[0].mxu0 %v4241
        %v4243 = vpop.f32.mrb[0].mxu0
        %v4244 = vadd.f32 %v4169, %v4243
        %v4245 = vpop.f32.mrb[0].mxu0
        %4246 = vdwg.mxu0
        %4247 = vmatprep.subr.mxu0 0.0
        %v4248 = vand.u32 %v661, 4294901760
        %v4249 = vsub.f32 %v661, %v4248
        %v4250 = vand.u32 %v4249, 4294901760
        %4251 = vmatpush1.msra.mxu0 %v4250
        %4252 = vmatprep.subr.mxu0 0.0
        %v4253 = vand.u32 %v662, 4294901760
        %v4254 = vsub.f32 %v662, %v4253
        %v4255 = vand.u32 %v4254, 4294901760
        %4256 = vmatpush1.msra.mxu0 %v4255
        %4257 = vmatprep.subr.mxu0 0.0
        %4258 = vmatpush1.msra.mxu0 0.0
        %4259 = vmatprep.subr.mxu0 0.0
        %4260 = vmatpush1.msra.mxu0 0.0
        %4261 = vmatprep.subr.mxu0 0.0
        %4262 = vmatpush1.msra.mxu0 0.0
        %4263 = vmatprep.subr.mxu0 0.0
        %4264 = vmatpush1.msra.mxu0 0.0
        %4265 = vmatprep.subr.mxu0 0.0
        %4266 = vmatpush1.msra.mxu0 0.0
        %4267 = vmatprep.subr.mxu0 0.0
        %4268 = vmatpush1.msra.mxu0 0.0
        %4269 = vmatprep.subr.mxu0 0.0
        %4270 = vmatpush1.msra.mxu0 0.0
        %4271 = vmatprep.subr.mxu0 0.0
        %4272 = vmatpush1.msra.mxu0 0.0
        %4273 = vmatprep.subr.mxu0 0.0
        %4274 = vmatpush1.msra.mxu0 0.0
        %4275 = vmatprep.subr.mxu0 0.0
        %4276 = vmatpush1.msra.mxu0 0.0
        %4277 = vmatprep.subr.mxu0 0.0
        %4278 = vmatpush1.msra.mxu0 0.0
        %4279 = vmatprep.subr.mxu0 0.0
        %4280 = vmatpush1.msra.mxu0 0.0
        %4281 = vmatprep.subr.mxu0 0.0
        %4282 = vmatpush1.msra.mxu0 0.0
        %4283 = vmatprep.subr.mxu0 0.0
        %4284 = vmatpush1.msra.mxu0 0.0
        %4285 = vmatprep.subr.mxu0 0.0
        %4286 = vmatpush1.msra.mxu0 0.0
        %4287 = vmatprep.subr.mxu0 0.0
        %4288 = vmatpush1.msra.mxu0 0.0
        %4289 = vmatprep.subr.mxu0 0.0
        %4290 = vmatpush1.msra.mxu0 0.0
        %4291 = vmatprep.subr.mxu0 0.0
        %4292 = vmatpush1.msra.mxu0 0.0
        %4293 = vmatprep.subr.mxu0 0.0
        %4294 = vmatpush1.msra.mxu0 0.0
        %4295 = vmatprep.subr.mxu0 0.0
        %4296 = vmatpush1.msra.mxu0 0.0
        %4297 = vmatprep.subr.mxu0 0.0
        %4298 = vmatpush1.msra.mxu0 0.0
        %4299 = vmatprep.subr.mxu0 0.0
        %4300 = vmatpush1.msra.mxu0 0.0
        %4301 = vmatprep.subr.mxu0 0.0
        %4302 = vmatpush1.msra.mxu0 0.0
        %4303 = vmatprep.subr.mxu0 0.0
        %4304 = vmatpush1.msra.mxu0 0.0
        %4305 = vmatprep.subr.mxu0 0.0
        %4306 = vmatpush1.msra.mxu0 0.0
        %4307 = vmatprep.subr.mxu0 0.0
        %4308 = vmatpush1.msra.mxu0 0.0
        %4309 = vmatprep.subr.mxu0 0.0
        %4310 = vmatpush1.msra.mxu0 0.0
        %4311 = vmatprep.subr.mxu0 0.0
        %4312 = vmatpush1.msra.mxu0 0.0
        %4313 = vmatprep.subr.mxu0 0.0
        %4314 = vmatpush1.msra.mxu0 0.0
        %4315 = vmatprep.subr.mxu0 0.0
        %4316 = vmatpush1.msra.mxu0 0.0
        %4317 = vmatprep.mubr.f32.mxu0 0.0
        %v4318 = vand.u32 %v3936, 4294901760
        %4319 = vmatmul.mubr.f32.gmra.mrb[0].mxu0 %v4318
        %v4320 = vpop.f32.mrb[0].mxu0
        %v4321 = vadd.f32 %v4244, %v4320
        %v4322 = vpop.f32.mrb[0].mxu0
        %4323 = vdwg.mxu0
        %4324 = vmatprep.subr.mxu0 0.0
        %v4325 = vand.u32 %v661, 4294901760
        %4326 = vmatpush1.msra.mxu0 %v4325
        %4327 = vmatprep.subr.mxu0 0.0
        %v4328 = vand.u32 %v662, 4294901760
        %4329 = vmatpush1.msra.mxu0 %v4328
        %4330 = vmatprep.subr.mxu0 0.0
        %4331 = vmatpush1.msra.mxu0 0.0
        %4332 = vmatprep.subr.mxu0 0.0
        %4333 = vmatpush1.msra.mxu0 0.0
        %4334 = vmatprep.subr.mxu0 0.0
        %4335 = vmatpush1.msra.mxu0 0.0
        %4336 = vmatprep.subr.mxu0 0.0
        %4337 = vmatpush1.msra.mxu0 0.0
        %4338 = vmatprep.subr.mxu0 0.0
        %4339 = vmatpush1.msra.mxu0 0.0
        %4340 = vmatprep.subr.mxu0 0.0
        %4341 = vmatpush1.msra.mxu0 0.0
        %4342 = vmatprep.subr.mxu0 0.0
        %4343 = vmatpush1.msra.mxu0 0.0
        %4344 = vmatprep.subr.mxu0 0.0
        %4345 = vmatpush1.msra.mxu0 0.0
        %4346 = vmatprep.subr.mxu0 0.0
        %4347 = vmatpush1.msra.mxu0 0.0
        %4348 = vmatprep.subr.mxu0 0.0
        %4349 = vmatpush1.msra.mxu0 0.0
        %4350 = vmatprep.subr.mxu0 0.0
        %4351 = vmatpush1.msra.mxu0 0.0
        %4352 = vmatprep.subr.mxu0 0.0
        %4353 = vmatpush1.msra.mxu0 0.0
        %4354 = vmatprep.subr.mxu0 0.0
        %4355 = vmatpush1.msra.mxu0 0.0
        %4356 = vmatprep.subr.mxu0 0.0
        %4357 = vmatpush1.msra.mxu0 0.0
        %4358 = vmatprep.subr.mxu0 0.0
        %4359 = vmatpush1.msra.mxu0 0.0
        %4360 = vmatprep.subr.mxu0 0.0
        %4361 = vmatpush1.msra.mxu0 0.0
        %4362 = vmatprep.subr.mxu0 0.0
        %4363 = vmatpush1.msra.mxu0 0.0
        %4364 = vmatprep.subr.mxu0 0.0
        %4365 = vmatpush1.msra.mxu0 0.0
        %4366 = vmatprep.subr.mxu0 0.0
        %4367 = vmatpush1.msra.mxu0 0.0
        %4368 = vmatprep.subr.mxu0 0.0
        %4369 = vmatpush1.msra.mxu0 0.0
        %4370 = vmatprep.subr.mxu0 0.0
        %4371 = vmatpush1.msra.mxu0 0.0
        %4372 = vmatprep.subr.mxu0 0.0
        %4373 = vmatpush1.msra.mxu0 0.0
        %4374 = vmatprep.subr.mxu0 0.0
        %4375 = vmatpush1.msra.mxu0 0.0
        %4376 = vmatprep.subr.mxu0 0.0
        %4377 = vmatpush1.msra.mxu0 0.0
        %4378 = vmatprep.subr.mxu0 0.0
        %4379 = vmatpush1.msra.mxu0 0.0
        %4380 = vmatprep.subr.mxu0 0.0
        %4381 = vmatpush1.msra.mxu0 0.0
        %4382 = vmatprep.subr.mxu0 0.0
        %4383 = vmatpush1.msra.mxu0 0.0
        %4384 = vmatprep.subr.mxu0 0.0
        %4385 = vmatpush1.msra.mxu0 0.0
        %4386 = vmatprep.subr.mxu0 0.0
        %4387 = vmatpush1.msra.mxu0 0.0
        %4388 = vmatprep.subr.mxu0 0.0
        %4389 = vmatpush1.msra.mxu0 0.0
        %4390 = vmatprep.mubr.f32.mxu0 0.0
        %v4391 = vand.u32 %v3936, 4294901760
        %4392 = vmatmul.mubr.f32.gmra.mrb[0].mxu0 %v4391
        %v4393 = vpop.f32.mrb[0].mxu0
        %v4394 = vadd.f32 %v4321, %v4393
        %v4395 = vpop.f32.mrb[0].mxu0
        %4396 = vdwg.mxu0
        %s4397 = scalar_lea.vmem %s384, 6
        %4398 = vst.msk [vmem:[%s4397] sm:$0x3] %vm1598, %v4394
        %vm4399 = vcmp.eq.f32.partialorder %v646, 4.0
        %vm4400 = vcmp.eq.f32.partialorder %v647, 4.0
        %v4401 = vsel %vm4399, %v532, 0.0
        %v4402 = vsel %vm4400, %v533, 0.0
        %vm4403 = vcmp.eq.f32.partialorder %v658, 4.0
        %vm4404 = vcmp.eq.f32.partialorder %v659, 4.0
        %v4405 = vsel %vm4403, %v534, 0.0
        %v4406 = vsel %vm4404, %v535, 0.0
        %v4407 = vadd.f32 %v4401, %v4405
        %v4408 = vadd.f32 %v4402, %v4406
        %4409 = vmatprep.subr.mxu0 0.0
        %v4410 = vand.u32 %v4407, 4294901760
        %4411 = vmatpush1.msra.mxu0 %v4410
        %4412 = vmatprep.subr.mxu0 0.0
        %v4413 = vand.u32 %v4408, 4294901760
        %4414 = vmatpush1.msra.mxu0 %v4413
        %4415 = vmatprep.subr.mxu0 0.0
        %4416 = vmatpush1.msra.mxu0 0.0
        %4417 = vmatprep.subr.mxu0 0.0
        %4418 = vmatpush1.msra.mxu0 0.0
        %4419 = vmatprep.subr.mxu0 0.0
        %4420 = vmatpush1.msra.mxu0 0.0
        %4421 = vmatprep.subr.mxu0 0.0
        %4422 = vmatpush1.msra.mxu0 0.0
        %4423 = vmatprep.subr.mxu0 0.0
        %4424 = vmatpush1.msra.mxu0 0.0
        %4425 = vmatprep.subr.mxu0 0.0
        %4426 = vmatpush1.msra.mxu0 0.0
        %4427 = vmatprep.subr.mxu0 0.0
        %4428 = vmatpush1.msra.mxu0 0.0
        %4429 = vmatprep.subr.mxu0 0.0
        %4430 = vmatpush1.msra.mxu0 0.0
        %4431 = vmatprep.subr.mxu0 0.0
        %4432 = vmatpush1.msra.mxu0 0.0
        %4433 = vmatprep.subr.mxu0 0.0
        %4434 = vmatpush1.msra.mxu0 0.0
        %4435 = vmatprep.subr.mxu0 0.0
        %4436 = vmatpush1.msra.mxu0 0.0
        %4437 = vmatprep.subr.mxu0 0.0
        %4438 = vmatpush1.msra.mxu0 0.0
        %4439 = vmatprep.subr.mxu0 0.0
        %4440 = vmatpush1.msra.mxu0 0.0
        %4441 = vmatprep.subr.mxu0 0.0
        %4442 = vmatpush1.msra.mxu0 0.0
        %4443 = vmatprep.subr.mxu0 0.0
        %4444 = vmatpush1.msra.mxu0 0.0
        %4445 = vmatprep.subr.mxu0 0.0
        %4446 = vmatpush1.msra.mxu0 0.0
        %4447 = vmatprep.subr.mxu0 0.0
        %4448 = vmatpush1.msra.mxu0 0.0
        %4449 = vmatprep.subr.mxu0 0.0
        %4450 = vmatpush1.msra.mxu0 0.0
        %4451 = vmatprep.subr.mxu0 0.0
        %4452 = vmatpush1.msra.mxu0 0.0
        %4453 = vmatprep.subr.mxu0 0.0
        %4454 = vmatpush1.msra.mxu0 0.0
        %4455 = vmatprep.subr.mxu0 0.0
        %4456 = vmatpush1.msra.mxu0 0.0
        %4457 = vmatprep.subr.mxu0 0.0
        %4458 = vmatpush1.msra.mxu0 0.0
        %4459 = vmatprep.subr.mxu0 0.0
        %4460 = vmatpush1.msra.mxu0 0.0
        %4461 = vmatprep.subr.mxu0 0.0
        %4462 = vmatpush1.msra.mxu0 0.0
        %4463 = vmatprep.subr.mxu0 0.0
        %4464 = vmatpush1.msra.mxu0 0.0
        %4465 = vmatprep.subr.mxu0 0.0
        %4466 = vmatpush1.msra.mxu0 0.0
        %4467 = vmatprep.subr.mxu0 0.0
        %4468 = vmatpush1.msra.mxu0 0.0
        %4469 = vmatprep.subr.mxu0 0.0
        %4470 = vmatpush1.msra.mxu0 0.0
        %4471 = vmatprep.subr.mxu0 0.0
        %4472 = vmatpush1.msra.mxu0 0.0
        %4473 = vmatprep.subr.mxu0 0.0
        %4474 = vmatpush1.msra.mxu0 0.0
        %4475 = vmatprep.mubr.f32.mxu0 0.0
        %v4476 = vand.u32 %v675, 4294901760
        %v4477 = vsub.f32 %v675, %v4476
        %v4478 = vand.u32 %v4477, 4294901760
        %v4479 = vsub.f32 %v4477, %v4478
        %v4480 = vand.u32 %v4479, 4294901760
        %4481 = vmatmul.mubr.f32.gmra.mrb[0].mxu0 %v4480
        %v4482 = vpop.f32.mrb[0].mxu0
        %v4483 = vadd.f32 0.0, %v4482
        %v4484 = vpop.f32.mrb[0].mxu0
        %4485 = vdwg.mxu0
        %4486 = vmatprep.subr.mxu0 0.0
        %v4487 = vand.u32 %v4407, 4294901760
        %v4488 = vsub.f32 %v4407, %v4487
        %v4489 = vand.u32 %v4488, 4294901760
        %v4490 = vsub.f32 %v4488, %v4489
        %v4491 = vand.u32 %v4490, 4294901760
        %4492 = vmatpush1.msra.mxu0 %v4491
        %4493 = vmatprep.subr.mxu0 0.0
        %v4494 = vand.u32 %v4408, 4294901760
        %v4495 = vsub.f32 %v4408, %v4494
        %v4496 = vand.u32 %v4495, 4294901760
        %v4497 = vsub.f32 %v4495, %v4496
        %v4498 = vand.u32 %v4497, 4294901760
        %4499 = vmatpush1.msra.mxu0 %v4498
        %4500 = vmatprep.subr.mxu0 0.0
        %4501 = vmatpush1.msra.mxu0 0.0
        %4502 = vmatprep.subr.mxu0 0.0
        %4503 = vmatpush1.msra.mxu0 0.0
        %4504 = vmatprep.subr.mxu0 0.0
        %4505 = vmatpush1.msra.mxu0 0.0
        %4506 = vmatprep.subr.mxu0 0.0
        %4507 = vmatpush1.msra.mxu0 0.0
        %4508 = vmatprep.subr.mxu0 0.0
        %4509 = vmatpush1.msra.mxu0 0.0
        %4510 = vmatprep.subr.mxu0 0.0
        %4511 = vmatpush1.msra.mxu0 0.0
        %4512 = vmatprep.subr.mxu0 0.0
        %4513 = vmatpush1.msra.mxu0 0.0
        %4514 = vmatprep.subr.mxu0 0.0
        %4515 = vmatpush1.msra.mxu0 0.0
        %4516 = vmatprep.subr.mxu0 0.0
        %4517 = vmatpush1.msra.mxu0 0.0
        %4518 = vmatprep.subr.mxu0 0.0
        %4519 = vmatpush1.msra.mxu0 0.0
        %4520 = vmatprep.subr.mxu0 0.0
        %4521 = vmatpush1.msra.mxu0 0.0
        %4522 = vmatprep.subr.mxu0 0.0
        %4523 = vmatpush1.msra.mxu0 0.0
        %4524 = vmatprep.subr.mxu0 0.0
        %4525 = vmatpush1.msra.mxu0 0.0
        %4526 = vmatprep.subr.mxu0 0.0
        %4527 = vmatpush1.msra.mxu0 0.0
        %4528 = vmatprep.subr.mxu0 0.0
        %4529 = vmatpush1.msra.mxu0 0.0
        %4530 = vmatprep.subr.mxu0 0.0
        %4531 = vmatpush1.msra.mxu0 0.0
        %4532 = vmatprep.subr.mxu0 0.0
        %4533 = vmatpush1.msra.mxu0 0.0
        %4534 = vmatprep.subr.mxu0 0.0
        %4535 = vmatpush1.msra.mxu0 0.0
        %4536 = vmatprep.subr.mxu0 0.0
        %4537 = vmatpush1.msra.mxu0 0.0
        %4538 = vmatprep.subr.mxu0 0.0
        %4539 = vmatpush1.msra.mxu0 0.0
        %4540 = vmatprep.subr.mxu0 0.0
        %4541 = vmatpush1.msra.mxu0 0.0
        %4542 = vmatprep.subr.mxu0 0.0
        %4543 = vmatpush1.msra.mxu0 0.0
        %4544 = vmatprep.subr.mxu0 0.0
        %4545 = vmatpush1.msra.mxu0 0.0
        %4546 = vmatprep.subr.mxu0 0.0
        %4547 = vmatpush1.msra.mxu0 0.0
        %4548 = vmatprep.subr.mxu0 0.0
        %4549 = vmatpush1.msra.mxu0 0.0
        %4550 = vmatprep.subr.mxu0 0.0
        %4551 = vmatpush1.msra.mxu0 0.0
        %4552 = vmatprep.subr.mxu0 0.0
        %4553 = vmatpush1.msra.mxu0 0.0
        %4554 = vmatprep.subr.mxu0 0.0
        %4555 = vmatpush1.msra.mxu0 0.0
        %4556 = vmatprep.subr.mxu0 0.0
        %4557 = vmatpush1.msra.mxu0 0.0
        %4558 = vmatprep.subr.mxu0 0.0
        %4559 = vmatpush1.msra.mxu0 0.0
        %4560 = vmatprep.mubr.f32.mxu0 0.0
        %v4561 = vand.u32 %v675, 4294901760
        %4562 = vmatmul.mubr.f32.gmra.mrb[0].mxu0 %v4561
        %v4563 = vpop.f32.mrb[0].mxu0
        %v4564 = vadd.f32 %v4483, %v4563
        %v4565 = vpop.f32.mrb[0].mxu0
        %4566 = vdwg.mxu0
        %4567 = vmatprep.subr.mxu0 0.0
        %v4568 = vand.u32 %v4407, 4294901760
        %v4569 = vsub.f32 %v4407, %v4568
        %4570 = vmatpush1.msra.mxu0 %v4569
        %4571 = vmatprep.subr.mxu0 0.0
        %v4572 = vand.u32 %v4408, 4294901760
        %v4573 = vsub.f32 %v4408, %v4572
        %4574 = vmatpush1.msra.mxu0 %v4573
        %4575 = vmatprep.subr.mxu0 0.0
        %4576 = vmatpush1.msra.mxu0 0.0
        %4577 = vmatprep.subr.mxu0 0.0
        %4578 = vmatpush1.msra.mxu0 0.0
        %4579 = vmatprep.subr.mxu0 0.0
        %4580 = vmatpush1.msra.mxu0 0.0
        %4581 = vmatprep.subr.mxu0 0.0
        %4582 = vmatpush1.msra.mxu0 0.0
        %4583 = vmatprep.subr.mxu0 0.0
        %4584 = vmatpush1.msra.mxu0 0.0
        %4585 = vmatprep.subr.mxu0 0.0
        %4586 = vmatpush1.msra.mxu0 0.0
        %4587 = vmatprep.subr.mxu0 0.0
        %4588 = vmatpush1.msra.mxu0 0.0
        %4589 = vmatprep.subr.mxu0 0.0
        %4590 = vmatpush1.msra.mxu0 0.0
        %4591 = vmatprep.subr.mxu0 0.0
        %4592 = vmatpush1.msra.mxu0 0.0
        %4593 = vmatprep.subr.mxu0 0.0
        %4594 = vmatpush1.msra.mxu0 0.0
        %4595 = vmatprep.subr.mxu0 0.0
        %4596 = vmatpush1.msra.mxu0 0.0
        %4597 = vmatprep.subr.mxu0 0.0
        %4598 = vmatpush1.msra.mxu0 0.0
        %4599 = vmatprep.subr.mxu0 0.0
        %4600 = vmatpush1.msra.mxu0 0.0
        %4601 = vmatprep.subr.mxu0 0.0
        %4602 = vmatpush1.msra.mxu0 0.0
        %4603 = vmatprep.subr.mxu0 0.0
        %4604 = vmatpush1.msra.mxu0 0.0
        %4605 = vmatprep.subr.mxu0 0.0
        %4606 = vmatpush1.msra.mxu0 0.0
        %4607 = vmatprep.subr.mxu0 0.0
        %4608 = vmatpush1.msra.mxu0 0.0
        %4609 = vmatprep.subr.mxu0 0.0
        %4610 = vmatpush1.msra.mxu0 0.0
        %4611 = vmatprep.subr.mxu0 0.0
        %4612 = vmatpush1.msra.mxu0 0.0
        %4613 = vmatprep.subr.mxu0 0.0
        %4614 = vmatpush1.msra.mxu0 0.0
        %4615 = vmatprep.subr.mxu0 0.0
        %4616 = vmatpush1.msra.mxu0 0.0
        %4617 = vmatprep.subr.mxu0 0.0
        %4618 = vmatpush1.msra.mxu0 0.0
        %4619 = vmatprep.subr.mxu0 0.0
        %4620 = vmatpush1.msra.mxu0 0.0
        %4621 = vmatprep.subr.mxu0 0.0
        %4622 = vmatpush1.msra.mxu0 0.0
        %4623 = vmatprep.subr.mxu0 0.0
        %4624 = vmatpush1.msra.mxu0 0.0
        %4625 = vmatprep.subr.mxu0 0.0
        %4626 = vmatpush1.msra.mxu0 0.0
        %4627 = vmatprep.subr.mxu0 0.0
        %4628 = vmatpush1.msra.mxu0 0.0
        %4629 = vmatprep.subr.mxu0 0.0
        %4630 = vmatpush1.msra.mxu0 0.0
        %4631 = vmatprep.subr.mxu0 0.0
        %4632 = vmatpush1.msra.mxu0 0.0
        %4633 = vmatprep.subr.mxu0 0.0
        %4634 = vmatpush1.msra.mxu0 0.0
        %4635 = vmatprep.mubr.f32.mxu0 0.0
        %v4636 = vand.u32 %v675, 4294901760
        %v4637 = vsub.f32 %v675, %v4636
        %4638 = vmatmul.mubr.f32.gmra.mrb[0].mxu0 %v4637
        %v4639 = vpop.f32.mrb[0].mxu0
        %v4640 = vadd.f32 %v4564, %v4639
        %v4641 = vpop.f32.mrb[0].mxu0
        %4642 = vdwg.mxu0
        %4643 = vmatprep.subr.mxu0 0.0
        %v4644 = vand.u32 %v4407, 4294901760
        %4645 = vmatpush1.msra.mxu0 %v4644
        %4646 = vmatprep.subr.mxu0 0.0
        %v4647 = vand.u32 %v4408, 4294901760
        %4648 = vmatpush1.msra.mxu0 %v4647
        %4649 = vmatprep.subr.mxu0 0.0
        %4650 = vmatpush1.msra.mxu0 0.0
        %4651 = vmatprep.subr.mxu0 0.0
        %4652 = vmatpush1.msra.mxu0 0.0
        %4653 = vmatprep.subr.mxu0 0.0
        %4654 = vmatpush1.msra.mxu0 0.0
        %4655 = vmatprep.subr.mxu0 0.0
        %4656 = vmatpush1.msra.mxu0 0.0
        %4657 = vmatprep.subr.mxu0 0.0
        %4658 = vmatpush1.msra.mxu0 0.0
        %4659 = vmatprep.subr.mxu0 0.0
        %4660 = vmatpush1.msra.mxu0 0.0
        %4661 = vmatprep.subr.mxu0 0.0
        %4662 = vmatpush1.msra.mxu0 0.0
        %4663 = vmatprep.subr.mxu0 0.0
        %4664 = vmatpush1.msra.mxu0 0.0
        %4665 = vmatprep.subr.mxu0 0.0
        %4666 = vmatpush1.msra.mxu0 0.0
        %4667 = vmatprep.subr.mxu0 0.0
        %4668 = vmatpush1.msra.mxu0 0.0
        %4669 = vmatprep.subr.mxu0 0.0
        %4670 = vmatpush1.msra.mxu0 0.0
        %4671 = vmatprep.subr.mxu0 0.0
        %4672 = vmatpush1.msra.mxu0 0.0
        %4673 = vmatprep.subr.mxu0 0.0
        %4674 = vmatpush1.msra.mxu0 0.0
        %4675 = vmatprep.subr.mxu0 0.0
        %4676 = vmatpush1.msra.mxu0 0.0
        %4677 = vmatprep.subr.mxu0 0.0
        %4678 = vmatpush1.msra.mxu0 0.0
        %4679 = vmatprep.subr.mxu0 0.0
        %4680 = vmatpush1.msra.mxu0 0.0
        %4681 = vmatprep.subr.mxu0 0.0
        %4682 = vmatpush1.msra.mxu0 0.0
        %4683 = vmatprep.subr.mxu0 0.0
        %4684 = vmatpush1.msra.mxu0 0.0
        %4685 = vmatprep.subr.mxu0 0.0
        %4686 = vmatpush1.msra.mxu0 0.0
        %4687 = vmatprep.subr.mxu0 0.0
        %4688 = vmatpush1.msra.mxu0 0.0
        %4689 = vmatprep.subr.mxu0 0.0
        %4690 = vmatpush1.msra.mxu0 0.0
        %4691 = vmatprep.subr.mxu0 0.0
        %4692 = vmatpush1.msra.mxu0 0.0
        %4693 = vmatprep.subr.mxu0 0.0
        %4694 = vmatpush1.msra.mxu0 0.0
        %4695 = vmatprep.subr.mxu0 0.0
        %4696 = vmatpush1.msra.mxu0 0.0
        %4697 = vmatprep.subr.mxu0 0.0
        %4698 = vmatpush1.msra.mxu0 0.0
        %4699 = vmatprep.subr.mxu0 0.0
        %4700 = vmatpush1.msra.mxu0 0.0
        %4701 = vmatprep.subr.mxu0 0.0
        %4702 = vmatpush1.msra.mxu0 0.0
        %4703 = vmatprep.subr.mxu0 0.0
        %4704 = vmatpush1.msra.mxu0 0.0
        %4705 = vmatprep.subr.mxu0 0.0
        %4706 = vmatpush1.msra.mxu0 0.0
        %4707 = vmatprep.subr.mxu0 0.0
        %4708 = vmatpush1.msra.mxu0 0.0
        %4709 = vmatprep.mubr.f32.mxu0 0.0
        %v4710 = vand.u32 %v675, 4294901760
        %v4711 = vsub.f32 %v675, %v4710
        %v4712 = vand.u32 %v4711, 4294901760
        %4713 = vmatmul.mubr.f32.gmra.mrb[0].mxu0 %v4712
        %v4714 = vpop.f32.mrb[0].mxu0
        %v4715 = vadd.f32 %v4640, %v4714
        %v4716 = vpop.f32.mrb[0].mxu0
        %4717 = vdwg.mxu0
        %4718 = vmatprep.subr.mxu0 0.0
        %v4719 = vand.u32 %v4407, 4294901760
        %v4720 = vsub.f32 %v4407, %v4719
        %v4721 = vand.u32 %v4720, 4294901760
        %4722 = vmatpush1.msra.mxu0 %v4721
        %4723 = vmatprep.subr.mxu0 0.0
        %v4724 = vand.u32 %v4408, 4294901760
        %v4725 = vsub.f32 %v4408, %v4724
        %v4726 = vand.u32 %v4725, 4294901760
        %4727 = vmatpush1.msra.mxu0 %v4726
        %4728 = vmatprep.subr.mxu0 0.0
        %4729 = vmatpush1.msra.mxu0 0.0
        %4730 = vmatprep.subr.mxu0 0.0
        %4731 = vmatpush1.msra.mxu0 0.0
        %4732 = vmatprep.subr.mxu0 0.0
        %4733 = vmatpush1.msra.mxu0 0.0
        %4734 = vmatprep.subr.mxu0 0.0
        %4735 = vmatpush1.msra.mxu0 0.0
        %4736 = vmatprep.subr.mxu0 0.0
        %4737 = vmatpush1.msra.mxu0 0.0
        %4738 = vmatprep.subr.mxu0 0.0
        %4739 = vmatpush1.msra.mxu0 0.0
        %4740 = vmatprep.subr.mxu0 0.0
        %4741 = vmatpush1.msra.mxu0 0.0
        %4742 = vmatprep.subr.mxu0 0.0
        %4743 = vmatpush1.msra.mxu0 0.0
        %4744 = vmatprep.subr.mxu0 0.0
        %4745 = vmatpush1.msra.mxu0 0.0
        %4746 = vmatprep.subr.mxu0 0.0
        %4747 = vmatpush1.msra.mxu0 0.0
        %4748 = vmatprep.subr.mxu0 0.0
        %4749 = vmatpush1.msra.mxu0 0.0
        %4750 = vmatprep.subr.mxu0 0.0
        %4751 = vmatpush1.msra.mxu0 0.0
        %4752 = vmatprep.subr.mxu0 0.0
        %4753 = vmatpush1.msra.mxu0 0.0
        %4754 = vmatprep.subr.mxu0 0.0
        %4755 = vmatpush1.msra.mxu0 0.0
        %4756 = vmatprep.subr.mxu0 0.0
        %4757 = vmatpush1.msra.mxu0 0.0
        %4758 = vmatprep.subr.mxu0 0.0
        %4759 = vmatpush1.msra.mxu0 0.0
        %4760 = vmatprep.subr.mxu0 0.0
        %4761 = vmatpush1.msra.mxu0 0.0
        %4762 = vmatprep.subr.mxu0 0.0
        %4763 = vmatpush1.msra.mxu0 0.0
        %4764 = vmatprep.subr.mxu0 0.0
        %4765 = vmatpush1.msra.mxu0 0.0
        %4766 = vmatprep.subr.mxu0 0.0
        %4767 = vmatpush1.msra.mxu0 0.0
        %4768 = vmatprep.subr.mxu0 0.0
        %4769 = vmatpush1.msra.mxu0 0.0
        %4770 = vmatprep.subr.mxu0 0.0
        %4771 = vmatpush1.msra.mxu0 0.0
        %4772 = vmatprep.subr.mxu0 0.0
        %4773 = vmatpush1.msra.mxu0 0.0
        %4774 = vmatprep.subr.mxu0 0.0
        %4775 = vmatpush1.msra.mxu0 0.0
        %4776 = vmatprep.subr.mxu0 0.0
        %4777 = vmatpush1.msra.mxu0 0.0
        %4778 = vmatprep.subr.mxu0 0.0
        %4779 = vmatpush1.msra.mxu0 0.0
        %4780 = vmatprep.subr.mxu0 0.0
        %4781 = vmatpush1.msra.mxu0 0.0
        %4782 = vmatprep.subr.mxu0 0.0
        %4783 = vmatpush1.msra.mxu0 0.0
        %4784 = vmatprep.subr.mxu0 0.0
        %4785 = vmatpush1.msra.mxu0 0.0
        %4786 = vmatprep.subr.mxu0 0.0
        %4787 = vmatpush1.msra.mxu0 0.0
        %4788 = vmatprep.mubr.f32.mxu0 0.0
        %v4789 = vand.u32 %v675, 4294901760
        %4790 = vmatmul.mubr.f32.gmra.mrb[0].mxu0 %v4789
        %v4791 = vpop.f32.mrb[0].mxu0
        %v4792 = vadd.f32 %v4715, %v4791
        %v4793 = vpop.f32.mrb[0].mxu0
        %4794 = vdwg.mxu0
        %4795 = vmatprep.subr.mxu0 0.0
        %v4796 = vand.u32 %v4407, 4294901760
        %4797 = vmatpush1.msra.mxu0 %v4796
        %4798 = vmatprep.subr.mxu0 0.0
        %v4799 = vand.u32 %v4408, 4294901760
        %4800 = vmatpush1.msra.mxu0 %v4799
        %4801 = vmatprep.subr.mxu0 0.0
        %4802 = vmatpush1.msra.mxu0 0.0
        %4803 = vmatprep.subr.mxu0 0.0
        %4804 = vmatpush1.msra.mxu0 0.0
        %4805 = vmatprep.subr.mxu0 0.0
        %4806 = vmatpush1.msra.mxu0 0.0
        %4807 = vmatprep.subr.mxu0 0.0
        %4808 = vmatpush1.msra.mxu0 0.0
        %4809 = vmatprep.subr.mxu0 0.0
        %4810 = vmatpush1.msra.mxu0 0.0
        %4811 = vmatprep.subr.mxu0 0.0
        %4812 = vmatpush1.msra.mxu0 0.0
        %4813 = vmatprep.subr.mxu0 0.0
        %4814 = vmatpush1.msra.mxu0 0.0
        %4815 = vmatprep.subr.mxu0 0.0
        %4816 = vmatpush1.msra.mxu0 0.0
        %4817 = vmatprep.subr.mxu0 0.0
        %4818 = vmatpush1.msra.mxu0 0.0
        %4819 = vmatprep.subr.mxu0 0.0
        %4820 = vmatpush1.msra.mxu0 0.0
        %4821 = vmatprep.subr.mxu0 0.0
        %4822 = vmatpush1.msra.mxu0 0.0
        %4823 = vmatprep.subr.mxu0 0.0
        %4824 = vmatpush1.msra.mxu0 0.0
        %4825 = vmatprep.subr.mxu0 0.0
        %4826 = vmatpush1.msra.mxu0 0.0
        %4827 = vmatprep.subr.mxu0 0.0
        %4828 = vmatpush1.msra.mxu0 0.0
        %4829 = vmatprep.subr.mxu0 0.0
        %4830 = vmatpush1.msra.mxu0 0.0
        %4831 = vmatprep.subr.mxu0 0.0
        %4832 = vmatpush1.msra.mxu0 0.0
        %4833 = vmatprep.subr.mxu0 0.0
        %4834 = vmatpush1.msra.mxu0 0.0
        %4835 = vmatprep.subr.mxu0 0.0
        %4836 = vmatpush1.msra.mxu0 0.0
        %4837 = vmatprep.subr.mxu0 0.0
        %4838 = vmatpush1.msra.mxu0 0.0
        %4839 = vmatprep.subr.mxu0 0.0
        %4840 = vmatpush1.msra.mxu0 0.0
        %4841 = vmatprep.subr.mxu0 0.0
        %4842 = vmatpush1.msra.mxu0 0.0
        %4843 = vmatprep.subr.mxu0 0.0
        %4844 = vmatpush1.msra.mxu0 0.0
        %4845 = vmatprep.subr.mxu0 0.0
        %4846 = vmatpush1.msra.mxu0 0.0
        %4847 = vmatprep.subr.mxu0 0.0
        %4848 = vmatpush1.msra.mxu0 0.0
        %4849 = vmatprep.subr.mxu0 0.0
        %4850 = vmatpush1.msra.mxu0 0.0
        %4851 = vmatprep.subr.mxu0 0.0
        %4852 = vmatpush1.msra.mxu0 0.0
        %4853 = vmatprep.subr.mxu0 0.0
        %4854 = vmatpush1.msra.mxu0 0.0
        %4855 = vmatprep.subr.mxu0 0.0
        %4856 = vmatpush1.msra.mxu0 0.0
        %4857 = vmatprep.subr.mxu0 0.0
        %4858 = vmatpush1.msra.mxu0 0.0
        %4859 = vmatprep.subr.mxu0 0.0
        %4860 = vmatpush1.msra.mxu0 0.0
        %4861 = vmatprep.mubr.f32.mxu0 0.0
        %v4862 = vand.u32 %v675, 4294901760
        %4863 = vmatmul.mubr.f32.gmra.mrb[0].mxu0 %v4862
        %v4864 = vpop.f32.mrb[0].mxu0
        %v4865 = vadd.f32 %v4792, %v4864
        %v4866 = vpop.f32.mrb[0].mxu0
        %4867 = vdwg.mxu0
        %v4869 = vsel %vm673, %v4865, 0
        %4871 = vmatprep.subr.mxu0 0.0
        %v4872 = vand.u32 %v661, 4294901760
        %4873 = vmatpush1.msra.mxu0 %v4872
        %4874 = vmatprep.subr.mxu0 0.0
        %v4875 = vand.u32 %v662, 4294901760
        %4876 = vmatpush1.msra.mxu0 %v4875
        %4877 = vmatprep.subr.mxu0 0.0
        %4878 = vmatpush1.msra.mxu0 0.0
        %4879 = vmatprep.subr.mxu0 0.0
        %4880 = vmatpush1.msra.mxu0 0.0
        %4881 = vmatprep.subr.mxu0 0.0
        %4882 = vmatpush1.msra.mxu0 0.0
        %4883 = vmatprep.subr.mxu0 0.0
        %4884 = vmatpush1.msra.mxu0 0.0
        %4885 = vmatprep.subr.mxu0 0.0
        %4886 = vmatpush1.msra.mxu0 0.0
        %4887 = vmatprep.subr.mxu0 0.0
        %4888 = vmatpush1.msra.mxu0 0.0
        %4889 = vmatprep.subr.mxu0 0.0
        %4890 = vmatpush1.msra.mxu0 0.0
        %4891 = vmatprep.subr.mxu0 0.0
        %4892 = vmatpush1.msra.mxu0 0.0
        %4893 = vmatprep.subr.mxu0 0.0
        %4894 = vmatpush1.msra.mxu0 0.0
        %4895 = vmatprep.subr.mxu0 0.0
        %4896 = vmatpush1.msra.mxu0 0.0
        %4897 = vmatprep.subr.mxu0 0.0
        %4898 = vmatpush1.msra.mxu0 0.0
        %4899 = vmatprep.subr.mxu0 0.0
        %4900 = vmatpush1.msra.mxu0 0.0
        %4901 = vmatprep.subr.mxu0 0.0
        %4902 = vmatpush1.msra.mxu0 0.0
        %4903 = vmatprep.subr.mxu0 0.0
        %4904 = vmatpush1.msra.mxu0 0.0
        %4905 = vmatprep.subr.mxu0 0.0
        %4906 = vmatpush1.msra.mxu0 0.0
        %4907 = vmatprep.subr.mxu0 0.0
        %4908 = vmatpush1.msra.mxu0 0.0
        %4909 = vmatprep.subr.mxu0 0.0
        %4910 = vmatpush1.msra.mxu0 0.0
        %4911 = vmatprep.subr.mxu0 0.0
        %4912 = vmatpush1.msra.mxu0 0.0
        %4913 = vmatprep.subr.mxu0 0.0
        %4914 = vmatpush1.msra.mxu0 0.0
        %4915 = vmatprep.subr.mxu0 0.0
        %4916 = vmatpush1.msra.mxu0 0.0
        %4917 = vmatprep.subr.mxu0 0.0
        %4918 = vmatpush1.msra.mxu0 0.0
        %4919 = vmatprep.subr.mxu0 0.0
        %4920 = vmatpush1.msra.mxu0 0.0
        %4921 = vmatprep.subr.mxu0 0.0
        %4922 = vmatpush1.msra.mxu0 0.0
        %4923 = vmatprep.subr.mxu0 0.0
        %4924 = vmatpush1.msra.mxu0 0.0
        %4925 = vmatprep.subr.mxu0 0.0
        %4926 = vmatpush1.msra.mxu0 0.0
        %4927 = vmatprep.subr.mxu0 0.0
        %4928 = vmatpush1.msra.mxu0 0.0
        %4929 = vmatprep.subr.mxu0 0.0
        %4930 = vmatpush1.msra.mxu0 0.0
        %4931 = vmatprep.subr.mxu0 0.0
        %4932 = vmatpush1.msra.mxu0 0.0
        %4933 = vmatprep.subr.mxu0 0.0
        %4934 = vmatpush1.msra.mxu0 0.0
        %4935 = vmatprep.subr.mxu0 0.0
        %4936 = vmatpush1.msra.mxu0 0.0
        %4937 = vmatprep.mubr.f32.mxu0 0.0
        %v4938 = vand.u32 %v4869, 4294901760
        %v4939 = vsub.f32 %v4869, %v4938
        %v4940 = vand.u32 %v4939, 4294901760
        %v4941 = vsub.f32 %v4939, %v4940
        %v4942 = vand.u32 %v4941, 4294901760
        %4943 = vmatmul.mubr.f32.gmra.mrb[0].mxu0 %v4942
        %v4944 = vpop.f32.mrb[0].mxu0
        %v4945 = vadd.f32 0.0, %v4944
        %v4946 = vpop.f32.mrb[0].mxu0
        %4947 = vdwg.mxu0
        %4948 = vmatprep.subr.mxu0 0.0
        %v4949 = vand.u32 %v661, 4294901760
        %v4950 = vsub.f32 %v661, %v4949
        %v4951 = vand.u32 %v4950, 4294901760
        %v4952 = vsub.f32 %v4950, %v4951
        %v4953 = vand.u32 %v4952, 4294901760
        %4954 = vmatpush1.msra.mxu0 %v4953
        %4955 = vmatprep.subr.mxu0 0.0
        %v4956 = vand.u32 %v662, 4294901760
        %v4957 = vsub.f32 %v662, %v4956
        %v4958 = vand.u32 %v4957, 4294901760
        %v4959 = vsub.f32 %v4957, %v4958
        %v4960 = vand.u32 %v4959, 4294901760
        %4961 = vmatpush1.msra.mxu0 %v4960
        %4962 = vmatprep.subr.mxu0 0.0
        %4963 = vmatpush1.msra.mxu0 0.0
        %4964 = vmatprep.subr.mxu0 0.0
        %4965 = vmatpush1.msra.mxu0 0.0
        %4966 = vmatprep.subr.mxu0 0.0
        %4967 = vmatpush1.msra.mxu0 0.0
        %4968 = vmatprep.subr.mxu0 0.0
        %4969 = vmatpush1.msra.mxu0 0.0
        %4970 = vmatprep.subr.mxu0 0.0
        %4971 = vmatpush1.msra.mxu0 0.0
        %4972 = vmatprep.subr.mxu0 0.0
        %4973 = vmatpush1.msra.mxu0 0.0
        %4974 = vmatprep.subr.mxu0 0.0
        %4975 = vmatpush1.msra.mxu0 0.0
        %4976 = vmatprep.subr.mxu0 0.0
        %4977 = vmatpush1.msra.mxu0 0.0
        %4978 = vmatprep.subr.mxu0 0.0
        %4979 = vmatpush1.msra.mxu0 0.0
        %4980 = vmatprep.subr.mxu0 0.0
        %4981 = vmatpush1.msra.mxu0 0.0
        %4982 = vmatprep.subr.mxu0 0.0
        %4983 = vmatpush1.msra.mxu0 0.0
        %4984 = vmatprep.subr.mxu0 0.0
        %4985 = vmatpush1.msra.mxu0 0.0
        %4986 = vmatprep.subr.mxu0 0.0
        %4987 = vmatpush1.msra.mxu0 0.0
        %4988 = vmatprep.subr.mxu0 0.0
        %4989 = vmatpush1.msra.mxu0 0.0
        %4990 = vmatprep.subr.mxu0 0.0
        %4991 = vmatpush1.msra.mxu0 0.0
        %4992 = vmatprep.subr.mxu0 0.0
        %4993 = vmatpush1.msra.mxu0 0.0
        %4994 = vmatprep.subr.mxu0 0.0
        %4995 = vmatpush1.msra.mxu0 0.0
        %4996 = vmatprep.subr.mxu0 0.0
        %4997 = vmatpush1.msra.mxu0 0.0
        %4998 = vmatprep.subr.mxu0 0.0
        %4999 = vmatpush1.msra.mxu0 0.0
        %5000 = vmatprep.subr.mxu0 0.0
        %5001 = vmatpush1.msra.mxu0 0.0
        %5002 = vmatprep.subr.mxu0 0.0
        %5003 = vmatpush1.msra.mxu0 0.0
        %5004 = vmatprep.subr.mxu0 0.0
        %5005 = vmatpush1.msra.mxu0 0.0
        %5006 = vmatprep.subr.mxu0 0.0
        %5007 = vmatpush1.msra.mxu0 0.0
        %5008 = vmatprep.subr.mxu0 0.0
        %5009 = vmatpush1.msra.mxu0 0.0
        %5010 = vmatprep.subr.mxu0 0.0
        %5011 = vmatpush1.msra.mxu0 0.0
        %5012 = vmatprep.subr.mxu0 0.0
        %5013 = vmatpush1.msra.mxu0 0.0
        %5014 = vmatprep.subr.mxu0 0.0
        %5015 = vmatpush1.msra.mxu0 0.0
        %5016 = vmatprep.subr.mxu0 0.0
        %5017 = vmatpush1.msra.mxu0 0.0
        %5018 = vmatprep.subr.mxu0 0.0
        %5019 = vmatpush1.msra.mxu0 0.0
        %5020 = vmatprep.subr.mxu0 0.0
        %5021 = vmatpush1.msra.mxu0 0.0
        %5022 = vmatprep.mubr.f32.mxu0 0.0
        %v5023 = vand.u32 %v4869, 4294901760
        %5024 = vmatmul.mubr.f32.gmra.mrb[0].mxu0 %v5023
        %v5025 = vpop.f32.mrb[0].mxu0
        %v5026 = vadd.f32 %v4945, %v5025
        %v5027 = vpop.f32.mrb[0].mxu0
        %5028 = vdwg.mxu0
        %5029 = vmatprep.subr.mxu0 0.0
        %v5030 = vand.u32 %v661, 4294901760
        %v5031 = vsub.f32 %v661, %v5030
        %5032 = vmatpush1.msra.mxu0 %v5031
        %5033 = vmatprep.subr.mxu0 0.0
        %v5034 = vand.u32 %v662, 4294901760
        %v5035 = vsub.f32 %v662, %v5034
        %5036 = vmatpush1.msra.mxu0 %v5035
        %5037 = vmatprep.subr.mxu0 0.0
        %5038 = vmatpush1.msra.mxu0 0.0
        %5039 = vmatprep.subr.mxu0 0.0
        %5040 = vmatpush1.msra.mxu0 0.0
        %5041 = vmatprep.subr.mxu0 0.0
        %5042 = vmatpush1.msra.mxu0 0.0
        %5043 = vmatprep.subr.mxu0 0.0
        %5044 = vmatpush1.msra.mxu0 0.0
        %5045 = vmatprep.subr.mxu0 0.0
        %5046 = vmatpush1.msra.mxu0 0.0
        %5047 = vmatprep.subr.mxu0 0.0
        %5048 = vmatpush1.msra.mxu0 0.0
        %5049 = vmatprep.subr.mxu0 0.0
        %5050 = vmatpush1.msra.mxu0 0.0
        %5051 = vmatprep.subr.mxu0 0.0
        %5052 = vmatpush1.msra.mxu0 0.0
        %5053 = vmatprep.subr.mxu0 0.0
        %5054 = vmatpush1.msra.mxu0 0.0
        %5055 = vmatprep.subr.mxu0 0.0
        %5056 = vmatpush1.msra.mxu0 0.0
        %5057 = vmatprep.subr.mxu0 0.0
        %5058 = vmatpush1.msra.mxu0 0.0
        %5059 = vmatprep.subr.mxu0 0.0
        %5060 = vmatpush1.msra.mxu0 0.0
        %5061 = vmatprep.subr.mxu0 0.0
        %5062 = vmatpush1.msra.mxu0 0.0
        %5063 = vmatprep.subr.mxu0 0.0
        %5064 = vmatpush1.msra.mxu0 0.0
        %5065 = vmatprep.subr.mxu0 0.0
        %5066 = vmatpush1.msra.mxu0 0.0
        %5067 = vmatprep.subr.mxu0 0.0
        %5068 = vmatpush1.msra.mxu0 0.0
        %5069 = vmatprep.subr.mxu0 0.0
        %5070 = vmatpush1.msra.mxu0 0.0
        %5071 = vmatprep.subr.mxu0 0.0
        %5072 = vmatpush1.msra.mxu0 0.0
        %5073 = vmatprep.subr.mxu0 0.0
        %5074 = vmatpush1.msra.mxu0 0.0
        %5075 = vmatprep.subr.mxu0 0.0
        %5076 = vmatpush1.msra.mxu0 0.0
        %5077 = vmatprep.subr.mxu0 0.0
        %5078 = vmatpush1.msra.mxu0 0.0
        %5079 = vmatprep.subr.mxu0 0.0
        %5080 = vmatpush1.msra.mxu0 0.0
        %5081 = vmatprep.subr.mxu0 0.0
        %5082 = vmatpush1.msra.mxu0 0.0
        %5083 = vmatprep.subr.mxu0 0.0
        %5084 = vmatpush1.msra.mxu0 0.0
        %5085 = vmatprep.subr.mxu0 0.0
        %5086 = vmatpush1.msra.mxu0 0.0
        %5087 = vmatprep.subr.mxu0 0.0
        %5088 = vmatpush1.msra.mxu0 0.0
        %5089 = vmatprep.subr.mxu0 0.0
        %5090 = vmatpush1.msra.mxu0 0.0
        %5091 = vmatprep.subr.mxu0 0.0
        %5092 = vmatpush1.msra.mxu0 0.0
        %5093 = vmatprep.subr.mxu0 0.0
        %5094 = vmatpush1.msra.mxu0 0.0
        %5095 = vmatprep.subr.mxu0 0.0
        %5096 = vmatpush1.msra.mxu0 0.0
        %5097 = vmatprep.mubr.f32.mxu0 0.0
        %v5098 = vand.u32 %v4869, 4294901760
        %v5099 = vsub.f32 %v4869, %v5098
        %5100 = vmatmul.mubr.f32.gmra.mrb[0].mxu0 %v5099
        %v5101 = vpop.f32.mrb[0].mxu0
        %v5102 = vadd.f32 %v5026, %v5101
        %v5103 = vpop.f32.mrb[0].mxu0
        %5104 = vdwg.mxu0
        %5105 = vmatprep.subr.mxu0 0.0
        %v5106 = vand.u32 %v661, 4294901760
        %5107 = vmatpush1.msra.mxu0 %v5106
        %5108 = vmatprep.subr.mxu0 0.0
        %v5109 = vand.u32 %v662, 4294901760
        %5110 = vmatpush1.msra.mxu0 %v5109
        %5111 = vmatprep.subr.mxu0 0.0
        %5112 = vmatpush1.msra.mxu0 0.0
        %5113 = vmatprep.subr.mxu0 0.0
        %5114 = vmatpush1.msra.mxu0 0.0
        %5115 = vmatprep.subr.mxu0 0.0
        %5116 = vmatpush1.msra.mxu0 0.0
        %5117 = vmatprep.subr.mxu0 0.0
        %5118 = vmatpush1.msra.mxu0 0.0
        %5119 = vmatprep.subr.mxu0 0.0
        %5120 = vmatpush1.msra.mxu0 0.0
        %5121 = vmatprep.subr.mxu0 0.0
        %5122 = vmatpush1.msra.mxu0 0.0
        %5123 = vmatprep.subr.mxu0 0.0
        %5124 = vmatpush1.msra.mxu0 0.0
        %5125 = vmatprep.subr.mxu0 0.0
        %5126 = vmatpush1.msra.mxu0 0.0
        %5127 = vmatprep.subr.mxu0 0.0
        %5128 = vmatpush1.msra.mxu0 0.0
        %5129 = vmatprep.subr.mxu0 0.0
        %5130 = vmatpush1.msra.mxu0 0.0
        %5131 = vmatprep.subr.mxu0 0.0
        %5132 = vmatpush1.msra.mxu0 0.0
        %5133 = vmatprep.subr.mxu0 0.0
        %5134 = vmatpush1.msra.mxu0 0.0
        %5135 = vmatprep.subr.mxu0 0.0
        %5136 = vmatpush1.msra.mxu0 0.0
        %5137 = vmatprep.subr.mxu0 0.0
        %5138 = vmatpush1.msra.mxu0 0.0
        %5139 = vmatprep.subr.mxu0 0.0
        %5140 = vmatpush1.msra.mxu0 0.0
        %5141 = vmatprep.subr.mxu0 0.0
        %5142 = vmatpush1.msra.mxu0 0.0
        %5143 = vmatprep.subr.mxu0 0.0
        %5144 = vmatpush1.msra.mxu0 0.0
        %5145 = vmatprep.subr.mxu0 0.0
        %5146 = vmatpush1.msra.mxu0 0.0
        %5147 = vmatprep.subr.mxu0 0.0
        %5148 = vmatpush1.msra.mxu0 0.0
        %5149 = vmatprep.subr.mxu0 0.0
        %5150 = vmatpush1.msra.mxu0 0.0
        %5151 = vmatprep.subr.mxu0 0.0
        %5152 = vmatpush1.msra.mxu0 0.0
        %5153 = vmatprep.subr.mxu0 0.0
        %5154 = vmatpush1.msra.mxu0 0.0
        %5155 = vmatprep.subr.mxu0 0.0
        %5156 = vmatpush1.msra.mxu0 0.0
        %5157 = vmatprep.subr.mxu0 0.0
        %5158 = vmatpush1.msra.mxu0 0.0
        %5159 = vmatprep.subr.mxu0 0.0
        %5160 = vmatpush1.msra.mxu0 0.0
        %5161 = vmatprep.subr.mxu0 0.0
        %5162 = vmatpush1.msra.mxu0 0.0
        %5163 = vmatprep.subr.mxu0 0.0
        %5164 = vmatpush1.msra.mxu0 0.0
        %5165 = vmatprep.subr.mxu0 0.0
        %5166 = vmatpush1.msra.mxu0 0.0
        %5167 = vmatprep.subr.mxu0 0.0
        %5168 = vmatpush1.msra.mxu0 0.0
        %5169 = vmatprep.subr.mxu0 0.0
        %5170 = vmatpush1.msra.mxu0 0.0
        %5171 = vmatprep.mubr.f32.mxu0 0.0
        %v5172 = vand.u32 %v4869, 4294901760
        %v5173 = vsub.f32 %v4869, %v5172
        %v5174 = vand.u32 %v5173, 4294901760
        %5175 = vmatmul.mubr.f32.gmra.mrb[0].mxu0 %v5174
        %v5176 = vpop.f32.mrb[0].mxu0
        %v5177 = vadd.f32 %v5102, %v5176
        %v5178 = vpop.f32.mrb[0].mxu0
        %5179 = vdwg.mxu0
        %5180 = vmatprep.subr.mxu0 0.0
        %v5181 = vand.u32 %v661, 4294901760
        %v5182 = vsub.f32 %v661, %v5181
        %v5183 = vand.u32 %v5182, 4294901760
        %5184 = vmatpush1.msra.mxu0 %v5183
        %5185 = vmatprep.subr.mxu0 0.0
        %v5186 = vand.u32 %v662, 4294901760
        %v5187 = vsub.f32 %v662, %v5186
        %v5188 = vand.u32 %v5187, 4294901760
        %5189 = vmatpush1.msra.mxu0 %v5188
        %5190 = vmatprep.subr.mxu0 0.0
        %5191 = vmatpush1.msra.mxu0 0.0
        %5192 = vmatprep.subr.mxu0 0.0
        %5193 = vmatpush1.msra.mxu0 0.0
        %5194 = vmatprep.subr.mxu0 0.0
        %5195 = vmatpush1.msra.mxu0 0.0
        %5196 = vmatprep.subr.mxu0 0.0
        %5197 = vmatpush1.msra.mxu0 0.0
        %5198 = vmatprep.subr.mxu0 0.0
        %5199 = vmatpush1.msra.mxu0 0.0
        %5200 = vmatprep.subr.mxu0 0.0
        %5201 = vmatpush1.msra.mxu0 0.0
        %5202 = vmatprep.subr.mxu0 0.0
        %5203 = vmatpush1.msra.mxu0 0.0
        %5204 = vmatprep.subr.mxu0 0.0
        %5205 = vmatpush1.msra.mxu0 0.0
        %5206 = vmatprep.subr.mxu0 0.0
        %5207 = vmatpush1.msra.mxu0 0.0
        %5208 = vmatprep.subr.mxu0 0.0
        %5209 = vmatpush1.msra.mxu0 0.0
        %5210 = vmatprep.subr.mxu0 0.0
        %5211 = vmatpush1.msra.mxu0 0.0
        %5212 = vmatprep.subr.mxu0 0.0
        %5213 = vmatpush1.msra.mxu0 0.0
        %5214 = vmatprep.subr.mxu0 0.0
        %5215 = vmatpush1.msra.mxu0 0.0
        %5216 = vmatprep.subr.mxu0 0.0
        %5217 = vmatpush1.msra.mxu0 0.0
        %5218 = vmatprep.subr.mxu0 0.0
        %5219 = vmatpush1.msra.mxu0 0.0
        %5220 = vmatprep.subr.mxu0 0.0
        %5221 = vmatpush1.msra.mxu0 0.0
        %5222 = vmatprep.subr.mxu0 0.0
        %5223 = vmatpush1.msra.mxu0 0.0
        %5224 = vmatprep.subr.mxu0 0.0
        %5225 = vmatpush1.msra.mxu0 0.0
        %5226 = vmatprep.subr.mxu0 0.0
        %5227 = vmatpush1.msra.mxu0 0.0
        %5228 = vmatprep.subr.mxu0 0.0
        %5229 = vmatpush1.msra.mxu0 0.0
        %5230 = vmatprep.subr.mxu0 0.0
        %5231 = vmatpush1.msra.mxu0 0.0
        %5232 = vmatprep.subr.mxu0 0.0
        %5233 = vmatpush1.msra.mxu0 0.0
        %5234 = vmatprep.subr.mxu0 0.0
        %5235 = vmatpush1.msra.mxu0 0.0
        %5236 = vmatprep.subr.mxu0 0.0
        %5237 = vmatpush1.msra.mxu0 0.0
        %5238 = vmatprep.subr.mxu0 0.0
        %5239 = vmatpush1.msra.mxu0 0.0
        %5240 = vmatprep.subr.mxu0 0.0
        %5241 = vmatpush1.msra.mxu0 0.0
        %5242 = vmatprep.subr.mxu0 0.0
        %5243 = vmatpush1.msra.mxu0 0.0
        %5244 = vmatprep.subr.mxu0 0.0
        %5245 = vmatpush1.msra.mxu0 0.0
        %5246 = vmatprep.subr.mxu0 0.0
        %5247 = vmatpush1.msra.mxu0 0.0
        %5248 = vmatprep.subr.mxu0 0.0
        %5249 = vmatpush1.msra.mxu0 0.0
        %5250 = vmatprep.mubr.f32.mxu0 0.0
        %v5251 = vand.u32 %v4869, 4294901760
        %5252 = vmatmul.mubr.f32.gmra.mrb[0].mxu0 %v5251
        %v5253 = vpop.f32.mrb[0].mxu0
        %v5254 = vadd.f32 %v5177, %v5253
        %v5255 = vpop.f32.mrb[0].mxu0
        %5256 = vdwg.mxu0
        %5257 = vmatprep.subr.mxu0 0.0
        %v5258 = vand.u32 %v661, 4294901760
        %5259 = vmatpush1.msra.mxu0 %v5258
        %5260 = vmatprep.subr.mxu0 0.0
        %v5261 = vand.u32 %v662, 4294901760
        %5262 = vmatpush1.msra.mxu0 %v5261
        %5263 = vmatprep.subr.mxu0 0.0
        %5264 = vmatpush1.msra.mxu0 0.0
        %5265 = vmatprep.subr.mxu0 0.0
        %5266 = vmatpush1.msra.mxu0 0.0
        %5267 = vmatprep.subr.mxu0 0.0
        %5268 = vmatpush1.msra.mxu0 0.0
        %5269 = vmatprep.subr.mxu0 0.0
        %5270 = vmatpush1.msra.mxu0 0.0
        %5271 = vmatprep.subr.mxu0 0.0
        %5272 = vmatpush1.msra.mxu0 0.0
        %5273 = vmatprep.subr.mxu0 0.0
        %5274 = vmatpush1.msra.mxu0 0.0
        %5275 = vmatprep.subr.mxu0 0.0
        %5276 = vmatpush1.msra.mxu0 0.0
        %5277 = vmatprep.subr.mxu0 0.0
        %5278 = vmatpush1.msra.mxu0 0.0
        %5279 = vmatprep.subr.mxu0 0.0
        %5280 = vmatpush1.msra.mxu0 0.0
        %5281 = vmatprep.subr.mxu0 0.0
        %5282 = vmatpush1.msra.mxu0 0.0
        %5283 = vmatprep.subr.mxu0 0.0
        %5284 = vmatpush1.msra.mxu0 0.0
        %5285 = vmatprep.subr.mxu0 0.0
        %5286 = vmatpush1.msra.mxu0 0.0
        %5287 = vmatprep.subr.mxu0 0.0
        %5288 = vmatpush1.msra.mxu0 0.0
        %5289 = vmatprep.subr.mxu0 0.0
        %5290 = vmatpush1.msra.mxu0 0.0
        %5291 = vmatprep.subr.mxu0 0.0
        %5292 = vmatpush1.msra.mxu0 0.0
        %5293 = vmatprep.subr.mxu0 0.0
        %5294 = vmatpush1.msra.mxu0 0.0
        %5295 = vmatprep.subr.mxu0 0.0
        %5296 = vmatpush1.msra.mxu0 0.0
        %5297 = vmatprep.subr.mxu0 0.0
        %5298 = vmatpush1.msra.mxu0 0.0
        %5299 = vmatprep.subr.mxu0 0.0
        %5300 = vmatpush1.msra.mxu0 0.0
        %5301 = vmatprep.subr.mxu0 0.0
        %5302 = vmatpush1.msra.mxu0 0.0
        %5303 = vmatprep.subr.mxu0 0.0
        %5304 = vmatpush1.msra.mxu0 0.0
        %5305 = vmatprep.subr.mxu0 0.0
        %5306 = vmatpush1.msra.mxu0 0.0
        %5307 = vmatprep.subr.mxu0 0.0
        %5308 = vmatpush1.msra.mxu0 0.0
        %5309 = vmatprep.subr.mxu0 0.0
        %5310 = vmatpush1.msra.mxu0 0.0
        %5311 = vmatprep.subr.mxu0 0.0
        %5312 = vmatpush1.msra.mxu0 0.0
        %5313 = vmatprep.subr.mxu0 0.0
        %5314 = vmatpush1.msra.mxu0 0.0
        %5315 = vmatprep.subr.mxu0 0.0
        %5316 = vmatpush1.msra.mxu0 0.0
        %5317 = vmatprep.subr.mxu0 0.0
        %5318 = vmatpush1.msra.mxu0 0.0
        %5319 = vmatprep.subr.mxu0 0.0
        %5320 = vmatpush1.msra.mxu0 0.0
        %5321 = vmatprep.subr.mxu0 0.0
        %5322 = vmatpush1.msra.mxu0 0.0
        %5323 = vmatprep.mubr.f32.mxu0 0.0
        %v5324 = vand.u32 %v4869, 4294901760
        %5325 = vmatmul.mubr.f32.gmra.mrb[0].mxu0 %v5324
        %v5326 = vpop.f32.mrb[0].mxu0
        %v5327 = vadd.f32 %v5254, %v5326
        %v5328 = vpop.f32.mrb[0].mxu0
        %5329 = vdwg.mxu0
        %s5330 = scalar_lea.vmem %s384, 8
        %5331 = vst.msk [vmem:[%s5330] sm:$0x3] %vm1598, %v5327
        %vm5332 = vcmp.eq.f32.partialorder %v646, 5.0
        %vm5333 = vcmp.eq.f32.partialorder %v647, 5.0
        %v5334 = vsel %vm5332, %v532, 0.0
        %v5335 = vsel %vm5333, %v533, 0.0
        %vm5336 = vcmp.eq.f32.partialorder %v658, 5.0
        %vm5337 = vcmp.eq.f32.partialorder %v659, 5.0
        %v5338 = vsel %vm5336, %v534, 0.0
        %v5339 = vsel %vm5337, %v535, 0.0
        %v5340 = vadd.f32 %v5334, %v5338
        %v5341 = vadd.f32 %v5335, %v5339
        %5342 = vmatprep.subr.mxu0 0.0
        %v5343 = vand.u32 %v5340, 4294901760
        %5344 = vmatpush1.msra.mxu0 %v5343
        %5345 = vmatprep.subr.mxu0 0.0
        %v5346 = vand.u32 %v5341, 4294901760
        %5347 = vmatpush1.msra.mxu0 %v5346
        %5348 = vmatprep.subr.mxu0 0.0
        %5349 = vmatpush1.msra.mxu0 0.0
        %5350 = vmatprep.subr.mxu0 0.0
        %5351 = vmatpush1.msra.mxu0 0.0
        %5352 = vmatprep.subr.mxu0 0.0
        %5353 = vmatpush1.msra.mxu0 0.0
        %5354 = vmatprep.subr.mxu0 0.0
        %5355 = vmatpush1.msra.mxu0 0.0
        %5356 = vmatprep.subr.mxu0 0.0
        %5357 = vmatpush1.msra.mxu0 0.0
        %5358 = vmatprep.subr.mxu0 0.0
        %5359 = vmatpush1.msra.mxu0 0.0
        %5360 = vmatprep.subr.mxu0 0.0
        %5361 = vmatpush1.msra.mxu0 0.0
        %5362 = vmatprep.subr.mxu0 0.0
        %5363 = vmatpush1.msra.mxu0 0.0
        %5364 = vmatprep.subr.mxu0 0.0
        %5365 = vmatpush1.msra.mxu0 0.0
        %5366 = vmatprep.subr.mxu0 0.0
        %5367 = vmatpush1.msra.mxu0 0.0
        %5368 = vmatprep.subr.mxu0 0.0
        %5369 = vmatpush1.msra.mxu0 0.0
        %5370 = vmatprep.subr.mxu0 0.0
        %5371 = vmatpush1.msra.mxu0 0.0
        %5372 = vmatprep.subr.mxu0 0.0
        %5373 = vmatpush1.msra.mxu0 0.0
        %5374 = vmatprep.subr.mxu0 0.0
        %5375 = vmatpush1.msra.mxu0 0.0
        %5376 = vmatprep.subr.mxu0 0.0
        %5377 = vmatpush1.msra.mxu0 0.0
        %5378 = vmatprep.subr.mxu0 0.0
        %5379 = vmatpush1.msra.mxu0 0.0
        %5380 = vmatprep.subr.mxu0 0.0
        %5381 = vmatpush1.msra.mxu0 0.0
        %5382 = vmatprep.subr.mxu0 0.0
        %5383 = vmatpush1.msra.mxu0 0.0
        %5384 = vmatprep.subr.mxu0 0.0
        %5385 = vmatpush1.msra.mxu0 0.0
        %5386 = vmatprep.subr.mxu0 0.0
        %5387 = vmatpush1.msra.mxu0 0.0
        %5388 = vmatprep.subr.mxu0 0.0
        %5389 = vmatpush1.msra.mxu0 0.0
        %5390 = vmatprep.subr.mxu0 0.0
        %5391 = vmatpush1.msra.mxu0 0.0
        %5392 = vmatprep.subr.mxu0 0.0
        %5393 = vmatpush1.msra.mxu0 0.0
        %5394 = vmatprep.subr.mxu0 0.0
        %5395 = vmatpush1.msra.mxu0 0.0
        %5396 = vmatprep.subr.mxu0 0.0
        %5397 = vmatpush1.msra.mxu0 0.0
        %5398 = vmatprep.subr.mxu0 0.0
        %5399 = vmatpush1.msra.mxu0 0.0
        %5400 = vmatprep.subr.mxu0 0.0
        %5401 = vmatpush1.msra.mxu0 0.0
        %5402 = vmatprep.subr.mxu0 0.0
        %5403 = vmatpush1.msra.mxu0 0.0
        %5404 = vmatprep.subr.mxu0 0.0
        %5405 = vmatpush1.msra.mxu0 0.0
        %5406 = vmatprep.subr.mxu0 0.0
        %5407 = vmatpush1.msra.mxu0 0.0
        %5408 = vmatprep.mubr.f32.mxu0 0.0
        %v5409 = vand.u32 %v675, 4294901760
        %v5410 = vsub.f32 %v675, %v5409
        %v5411 = vand.u32 %v5410, 4294901760
        %v5412 = vsub.f32 %v5410, %v5411
        %v5413 = vand.u32 %v5412, 4294901760
        %5414 = vmatmul.mubr.f32.gmra.mrb[0].mxu0 %v5413
        %v5415 = vpop.f32.mrb[0].mxu0
        %v5416 = vadd.f32 0.0, %v5415
        %v5417 = vpop.f32.mrb[0].mxu0
        %5418 = vdwg.mxu0
        %5419 = vmatprep.subr.mxu0 0.0
        %v5420 = vand.u32 %v5340, 4294901760
        %v5421 = vsub.f32 %v5340, %v5420
        %v5422 = vand.u32 %v5421, 4294901760
        %v5423 = vsub.f32 %v5421, %v5422
        %v5424 = vand.u32 %v5423, 4294901760
        %5425 = vmatpush1.msra.mxu0 %v5424
        %5426 = vmatprep.subr.mxu0 0.0
        %v5427 = vand.u32 %v5341, 4294901760
        %v5428 = vsub.f32 %v5341, %v5427
        %v5429 = vand.u32 %v5428, 4294901760
        %v5430 = vsub.f32 %v5428, %v5429
        %v5431 = vand.u32 %v5430, 4294901760
        %5432 = vmatpush1.msra.mxu0 %v5431
        %5433 = vmatprep.subr.mxu0 0.0
        %5434 = vmatpush1.msra.mxu0 0.0
        %5435 = vmatprep.subr.mxu0 0.0
        %5436 = vmatpush1.msra.mxu0 0.0
        %5437 = vmatprep.subr.mxu0 0.0
        %5438 = vmatpush1.msra.mxu0 0.0
        %5439 = vmatprep.subr.mxu0 0.0
        %5440 = vmatpush1.msra.mxu0 0.0
        %5441 = vmatprep.subr.mxu0 0.0
        %5442 = vmatpush1.msra.mxu0 0.0
        %5443 = vmatprep.subr.mxu0 0.0
        %5444 = vmatpush1.msra.mxu0 0.0
        %5445 = vmatprep.subr.mxu0 0.0
        %5446 = vmatpush1.msra.mxu0 0.0
        %5447 = vmatprep.subr.mxu0 0.0
        %5448 = vmatpush1.msra.mxu0 0.0
        %5449 = vmatprep.subr.mxu0 0.0
        %5450 = vmatpush1.msra.mxu0 0.0
        %5451 = vmatprep.subr.mxu0 0.0
        %5452 = vmatpush1.msra.mxu0 0.0
        %5453 = vmatprep.subr.mxu0 0.0
        %5454 = vmatpush1.msra.mxu0 0.0
        %5455 = vmatprep.subr.mxu0 0.0
        %5456 = vmatpush1.msra.mxu0 0.0
        %5457 = vmatprep.subr.mxu0 0.0
        %5458 = vmatpush1.msra.mxu0 0.0
        %5459 = vmatprep.subr.mxu0 0.0
        %5460 = vmatpush1.msra.mxu0 0.0
        %5461 = vmatprep.subr.mxu0 0.0
        %5462 = vmatpush1.msra.mxu0 0.0
        %5463 = vmatprep.subr.mxu0 0.0
        %5464 = vmatpush1.msra.mxu0 0.0
        %5465 = vmatprep.subr.mxu0 0.0
        %5466 = vmatpush1.msra.mxu0 0.0
        %5467 = vmatprep.subr.mxu0 0.0
        %5468 = vmatpush1.msra.mxu0 0.0
        %5469 = vmatprep.subr.mxu0 0.0
        %5470 = vmatpush1.msra.mxu0 0.0
        %5471 = vmatprep.subr.mxu0 0.0
        %5472 = vmatpush1.msra.mxu0 0.0
        %5473 = vmatprep.subr.mxu0 0.0
        %5474 = vmatpush1.msra.mxu0 0.0
        %5475 = vmatprep.subr.mxu0 0.0
        %5476 = vmatpush1.msra.mxu0 0.0
        %5477 = vmatprep.subr.mxu0 0.0
        %5478 = vmatpush1.msra.mxu0 0.0
        %5479 = vmatprep.subr.mxu0 0.0
        %5480 = vmatpush1.msra.mxu0 0.0
        %5481 = vmatprep.subr.mxu0 0.0
        %5482 = vmatpush1.msra.mxu0 0.0
        %5483 = vmatprep.subr.mxu0 0.0
        %5484 = vmatpush1.msra.mxu0 0.0
        %5485 = vmatprep.subr.mxu0 0.0
        %5486 = vmatpush1.msra.mxu0 0.0
        %5487 = vmatprep.subr.mxu0 0.0
        %5488 = vmatpush1.msra.mxu0 0.0
        %5489 = vmatprep.subr.mxu0 0.0
        %5490 = vmatpush1.msra.mxu0 0.0
        %5491 = vmatprep.subr.mxu0 0.0
        %5492 = vmatpush1.msra.mxu0 0.0
        %5493 = vmatprep.mubr.f32.mxu0 0.0
        %v5494 = vand.u32 %v675, 4294901760
        %5495 = vmatmul.mubr.f32.gmra.mrb[0].mxu0 %v5494
        %v5496 = vpop.f32.mrb[0].mxu0
        %v5497 = vadd.f32 %v5416, %v5496
        %v5498 = vpop.f32.mrb[0].mxu0
        %5499 = vdwg.mxu0
        %5500 = vmatprep.subr.mxu0 0.0
        %v5501 = vand.u32 %v5340, 4294901760
        %v5502 = vsub.f32 %v5340, %v5501
        %5503 = vmatpush1.msra.mxu0 %v5502
        %5504 = vmatprep.subr.mxu0 0.0
        %v5505 = vand.u32 %v5341, 4294901760
        %v5506 = vsub.f32 %v5341, %v5505
        %5507 = vmatpush1.msra.mxu0 %v5506
        %5508 = vmatprep.subr.mxu0 0.0
        %5509 = vmatpush1.msra.mxu0 0.0
        %5510 = vmatprep.subr.mxu0 0.0
        %5511 = vmatpush1.msra.mxu0 0.0
        %5512 = vmatprep.subr.mxu0 0.0
        %5513 = vmatpush1.msra.mxu0 0.0
        %5514 = vmatprep.subr.mxu0 0.0
        %5515 = vmatpush1.msra.mxu0 0.0
        %5516 = vmatprep.subr.mxu0 0.0
        %5517 = vmatpush1.msra.mxu0 0.0
        %5518 = vmatprep.subr.mxu0 0.0
        %5519 = vmatpush1.msra.mxu0 0.0
        %5520 = vmatprep.subr.mxu0 0.0
        %5521 = vmatpush1.msra.mxu0 0.0
        %5522 = vmatprep.subr.mxu0 0.0
        %5523 = vmatpush1.msra.mxu0 0.0
        %5524 = vmatprep.subr.mxu0 0.0
        %5525 = vmatpush1.msra.mxu0 0.0
        %5526 = vmatprep.subr.mxu0 0.0
        %5527 = vmatpush1.msra.mxu0 0.0
        %5528 = vmatprep.subr.mxu0 0.0
        %5529 = vmatpush1.msra.mxu0 0.0
        %5530 = vmatprep.subr.mxu0 0.0
        %5531 = vmatpush1.msra.mxu0 0.0
        %5532 = vmatprep.subr.mxu0 0.0
        %5533 = vmatpush1.msra.mxu0 0.0
        %5534 = vmatprep.subr.mxu0 0.0
        %5535 = vmatpush1.msra.mxu0 0.0
        %5536 = vmatprep.subr.mxu0 0.0
        %5537 = vmatpush1.msra.mxu0 0.0
        %5538 = vmatprep.subr.mxu0 0.0
        %5539 = vmatpush1.msra.mxu0 0.0
        %5540 = vmatprep.subr.mxu0 0.0
        %5541 = vmatpush1.msra.mxu0 0.0
        %5542 = vmatprep.subr.mxu0 0.0
        %5543 = vmatpush1.msra.mxu0 0.0
        %5544 = vmatprep.subr.mxu0 0.0
        %5545 = vmatpush1.msra.mxu0 0.0
        %5546 = vmatprep.subr.mxu0 0.0
        %5547 = vmatpush1.msra.mxu0 0.0
        %5548 = vmatprep.subr.mxu0 0.0
        %5549 = vmatpush1.msra.mxu0 0.0
        %5550 = vmatprep.subr.mxu0 0.0
        %5551 = vmatpush1.msra.mxu0 0.0
        %5552 = vmatprep.subr.mxu0 0.0
        %5553 = vmatpush1.msra.mxu0 0.0
        %5554 = vmatprep.subr.mxu0 0.0
        %5555 = vmatpush1.msra.mxu0 0.0
        %5556 = vmatprep.subr.mxu0 0.0
        %5557 = vmatpush1.msra.mxu0 0.0
        %5558 = vmatprep.subr.mxu0 0.0
        %5559 = vmatpush1.msra.mxu0 0.0
        %5560 = vmatprep.subr.mxu0 0.0
        %5561 = vmatpush1.msra.mxu0 0.0
        %5562 = vmatprep.subr.mxu0 0.0
        %5563 = vmatpush1.msra.mxu0 0.0
        %5564 = vmatprep.subr.mxu0 0.0
        %5565 = vmatpush1.msra.mxu0 0.0
        %5566 = vmatprep.subr.mxu0 0.0
        %5567 = vmatpush1.msra.mxu0 0.0
        %5568 = vmatprep.mubr.f32.mxu0 0.0
        %v5569 = vand.u32 %v675, 4294901760
        %v5570 = vsub.f32 %v675, %v5569
        %5571 = vmatmul.mubr.f32.gmra.mrb[0].mxu0 %v5570
        %v5572 = vpop.f32.mrb[0].mxu0
        %v5573 = vadd.f32 %v5497, %v5572
        %v5574 = vpop.f32.mrb[0].mxu0
        %5575 = vdwg.mxu0
        %5576 = vmatprep.subr.mxu0 0.0
        %v5577 = vand.u32 %v5340, 4294901760
        %5578 = vmatpush1.msra.mxu0 %v5577
        %5579 = vmatprep.subr.mxu0 0.0
        %v5580 = vand.u32 %v5341, 4294901760
        %5581 = vmatpush1.msra.mxu0 %v5580
        %5582 = vmatprep.subr.mxu0 0.0
        %5583 = vmatpush1.msra.mxu0 0.0
        %5584 = vmatprep.subr.mxu0 0.0
        %5585 = vmatpush1.msra.mxu0 0.0
        %5586 = vmatprep.subr.mxu0 0.0
        %5587 = vmatpush1.msra.mxu0 0.0
        %5588 = vmatprep.subr.mxu0 0.0
        %5589 = vmatpush1.msra.mxu0 0.0
        %5590 = vmatprep.subr.mxu0 0.0
        %5591 = vmatpush1.msra.mxu0 0.0
        %5592 = vmatprep.subr.mxu0 0.0
        %5593 = vmatpush1.msra.mxu0 0.0
        %5594 = vmatprep.subr.mxu0 0.0
        %5595 = vmatpush1.msra.mxu0 0.0
        %5596 = vmatprep.subr.mxu0 0.0
        %5597 = vmatpush1.msra.mxu0 0.0
        %5598 = vmatprep.subr.mxu0 0.0
        %5599 = vmatpush1.msra.mxu0 0.0
        %5600 = vmatprep.subr.mxu0 0.0
        %5601 = vmatpush1.msra.mxu0 0.0
        %5602 = vmatprep.subr.mxu0 0.0
        %5603 = vmatpush1.msra.mxu0 0.0
        %5604 = vmatprep.subr.mxu0 0.0
        %5605 = vmatpush1.msra.mxu0 0.0
        %5606 = vmatprep.subr.mxu0 0.0
        %5607 = vmatpush1.msra.mxu0 0.0
        %5608 = vmatprep.subr.mxu0 0.0
        %5609 = vmatpush1.msra.mxu0 0.0
        %5610 = vmatprep.subr.mxu0 0.0
        %5611 = vmatpush1.msra.mxu0 0.0
        %5612 = vmatprep.subr.mxu0 0.0
        %5613 = vmatpush1.msra.mxu0 0.0
        %5614 = vmatprep.subr.mxu0 0.0
        %5615 = vmatpush1.msra.mxu0 0.0
        %5616 = vmatprep.subr.mxu0 0.0
        %5617 = vmatpush1.msra.mxu0 0.0
        %5618 = vmatprep.subr.mxu0 0.0
        %5619 = vmatpush1.msra.mxu0 0.0
        %5620 = vmatprep.subr.mxu0 0.0
        %5621 = vmatpush1.msra.mxu0 0.0
        %5622 = vmatprep.subr.mxu0 0.0
        %5623 = vmatpush1.msra.mxu0 0.0
        %5624 = vmatprep.subr.mxu0 0.0
        %5625 = vmatpush1.msra.mxu0 0.0
        %5626 = vmatprep.subr.mxu0 0.0
        %5627 = vmatpush1.msra.mxu0 0.0
        %5628 = vmatprep.subr.mxu0 0.0
        %5629 = vmatpush1.msra.mxu0 0.0
        %5630 = vmatprep.subr.mxu0 0.0
        %5631 = vmatpush1.msra.mxu0 0.0
        %5632 = vmatprep.subr.mxu0 0.0
        %5633 = vmatpush1.msra.mxu0 0.0
        %5634 = vmatprep.subr.mxu0 0.0
        %5635 = vmatpush1.msra.mxu0 0.0
        %5636 = vmatprep.subr.mxu0 0.0
        %5637 = vmatpush1.msra.mxu0 0.0
        %5638 = vmatprep.subr.mxu0 0.0
        %5639 = vmatpush1.msra.mxu0 0.0
        %5640 = vmatprep.subr.mxu0 0.0
        %5641 = vmatpush1.msra.mxu0 0.0
        %5642 = vmatprep.mubr.f32.mxu0 0.0
        %v5643 = vand.u32 %v675, 4294901760
        %v5644 = vsub.f32 %v675, %v5643
        %v5645 = vand.u32 %v5644, 4294901760
        %5646 = vmatmul.mubr.f32.gmra.mrb[0].mxu0 %v5645
        %v5647 = vpop.f32.mrb[0].mxu0
        %v5648 = vadd.f32 %v5573, %v5647
        %v5649 = vpop.f32.mrb[0].mxu0
        %5650 = vdwg.mxu0
        %5651 = vmatprep.subr.mxu0 0.0
        %v5652 = vand.u32 %v5340, 4294901760
        %v5653 = vsub.f32 %v5340, %v5652
        %v5654 = vand.u32 %v5653, 4294901760
        %5655 = vmatpush1.msra.mxu0 %v5654
        %5656 = vmatprep.subr.mxu0 0.0
        %v5657 = vand.u32 %v5341, 4294901760
        %v5658 = vsub.f32 %v5341, %v5657
        %v5659 = vand.u32 %v5658, 4294901760
        %5660 = vmatpush1.msra.mxu0 %v5659
        %5661 = vmatprep.subr.mxu0 0.0
        %5662 = vmatpush1.msra.mxu0 0.0
        %5663 = vmatprep.subr.mxu0 0.0
        %5664 = vmatpush1.msra.mxu0 0.0
        %5665 = vmatprep.subr.mxu0 0.0
        %5666 = vmatpush1.msra.mxu0 0.0
        %5667 = vmatprep.subr.mxu0 0.0
        %5668 = vmatpush1.msra.mxu0 0.0
        %5669 = vmatprep.subr.mxu0 0.0
        %5670 = vmatpush1.msra.mxu0 0.0
        %5671 = vmatprep.subr.mxu0 0.0
        %5672 = vmatpush1.msra.mxu0 0.0
        %5673 = vmatprep.subr.mxu0 0.0
        %5674 = vmatpush1.msra.mxu0 0.0
        %5675 = vmatprep.subr.mxu0 0.0
        %5676 = vmatpush1.msra.mxu0 0.0
        %5677 = vmatprep.subr.mxu0 0.0
        %5678 = vmatpush1.msra.mxu0 0.0
        %5679 = vmatprep.subr.mxu0 0.0
        %5680 = vmatpush1.msra.mxu0 0.0
        %5681 = vmatprep.subr.mxu0 0.0
        %5682 = vmatpush1.msra.mxu0 0.0
        %5683 = vmatprep.subr.mxu0 0.0
        %5684 = vmatpush1.msra.mxu0 0.0
        %5685 = vmatprep.subr.mxu0 0.0
        %5686 = vmatpush1.msra.mxu0 0.0
        %5687 = vmatprep.subr.mxu0 0.0
        %5688 = vmatpush1.msra.mxu0 0.0
        %5689 = vmatprep.subr.mxu0 0.0
        %5690 = vmatpush1.msra.mxu0 0.0
        %5691 = vmatprep.subr.mxu0 0.0
        %5692 = vmatpush1.msra.mxu0 0.0
        %5693 = vmatprep.subr.mxu0 0.0
        %5694 = vmatpush1.msra.mxu0 0.0
        %5695 = vmatprep.subr.mxu0 0.0
        %5696 = vmatpush1.msra.mxu0 0.0
        %5697 = vmatprep.subr.mxu0 0.0
        %5698 = vmatpush1.msra.mxu0 0.0
        %5699 = vmatprep.subr.mxu0 0.0
        %5700 = vmatpush1.msra.mxu0 0.0
        %5701 = vmatprep.subr.mxu0 0.0
        %5702 = vmatpush1.msra.mxu0 0.0
        %5703 = vmatprep.subr.mxu0 0.0
        %5704 = vmatpush1.msra.mxu0 0.0
        %5705 = vmatprep.subr.mxu0 0.0
        %5706 = vmatpush1.msra.mxu0 0.0
        %5707 = vmatprep.subr.mxu0 0.0
        %5708 = vmatpush1.msra.mxu0 0.0
        %5709 = vmatprep.subr.mxu0 0.0
        %5710 = vmatpush1.msra.mxu0 0.0
        %5711 = vmatprep.subr.mxu0 0.0
        %5712 = vmatpush1.msra.mxu0 0.0
        %5713 = vmatprep.subr.mxu0 0.0
        %5714 = vmatpush1.msra.mxu0 0.0
        %5715 = vmatprep.subr.mxu0 0.0
        %5716 = vmatpush1.msra.mxu0 0.0
        %5717 = vmatprep.subr.mxu0 0.0
        %5718 = vmatpush1.msra.mxu0 0.0
        %5719 = vmatprep.subr.mxu0 0.0
        %5720 = vmatpush1.msra.mxu0 0.0
        %5721 = vmatprep.mubr.f32.mxu0 0.0
        %v5722 = vand.u32 %v675, 4294901760
        %5723 = vmatmul.mubr.f32.gmra.mrb[0].mxu0 %v5722
        %v5724 = vpop.f32.mrb[0].mxu0
        %v5725 = vadd.f32 %v5648, %v5724
        %v5726 = vpop.f32.mrb[0].mxu0
        %5727 = vdwg.mxu0
        %5728 = vmatprep.subr.mxu0 0.0
        %v5729 = vand.u32 %v5340, 4294901760
        %5730 = vmatpush1.msra.mxu0 %v5729
        %5731 = vmatprep.subr.mxu0 0.0
        %v5732 = vand.u32 %v5341, 4294901760
        %5733 = vmatpush1.msra.mxu0 %v5732
        %5734 = vmatprep.subr.mxu0 0.0
        %5735 = vmatpush1.msra.mxu0 0.0
        %5736 = vmatprep.subr.mxu0 0.0
        %5737 = vmatpush1.msra.mxu0 0.0
        %5738 = vmatprep.subr.mxu0 0.0
        %5739 = vmatpush1.msra.mxu0 0.0
        %5740 = vmatprep.subr.mxu0 0.0
        %5741 = vmatpush1.msra.mxu0 0.0
        %5742 = vmatprep.subr.mxu0 0.0
        %5743 = vmatpush1.msra.mxu0 0.0
        %5744 = vmatprep.subr.mxu0 0.0
        %5745 = vmatpush1.msra.mxu0 0.0
        %5746 = vmatprep.subr.mxu0 0.0
        %5747 = vmatpush1.msra.mxu0 0.0
        %5748 = vmatprep.subr.mxu0 0.0
        %5749 = vmatpush1.msra.mxu0 0.0
        %5750 = vmatprep.subr.mxu0 0.0
        %5751 = vmatpush1.msra.mxu0 0.0
        %5752 = vmatprep.subr.mxu0 0.0
        %5753 = vmatpush1.msra.mxu0 0.0
        %5754 = vmatprep.subr.mxu0 0.0
        %5755 = vmatpush1.msra.mxu0 0.0
        %5756 = vmatprep.subr.mxu0 0.0
        %5757 = vmatpush1.msra.mxu0 0.0
        %5758 = vmatprep.subr.mxu0 0.0
        %5759 = vmatpush1.msra.mxu0 0.0
        %5760 = vmatprep.subr.mxu0 0.0
        %5761 = vmatpush1.msra.mxu0 0.0
        %5762 = vmatprep.subr.mxu0 0.0
        %5763 = vmatpush1.msra.mxu0 0.0
        %5764 = vmatprep.subr.mxu0 0.0
        %5765 = vmatpush1.msra.mxu0 0.0
        %5766 = vmatprep.subr.mxu0 0.0
        %5767 = vmatpush1.msra.mxu0 0.0
        %5768 = vmatprep.subr.mxu0 0.0
        %5769 = vmatpush1.msra.mxu0 0.0
        %5770 = vmatprep.subr.mxu0 0.0
        %5771 = vmatpush1.msra.mxu0 0.0
        %5772 = vmatprep.subr.mxu0 0.0
        %5773 = vmatpush1.msra.mxu0 0.0
        %5774 = vmatprep.subr.mxu0 0.0
        %5775 = vmatpush1.msra.mxu0 0.0
        %5776 = vmatprep.subr.mxu0 0.0
        %5777 = vmatpush1.msra.mxu0 0.0
        %5778 = vmatprep.subr.mxu0 0.0
        %5779 = vmatpush1.msra.mxu0 0.0
        %5780 = vmatprep.subr.mxu0 0.0
        %5781 = vmatpush1.msra.mxu0 0.0
        %5782 = vmatprep.subr.mxu0 0.0
        %5783 = vmatpush1.msra.mxu0 0.0
        %5784 = vmatprep.subr.mxu0 0.0
        %5785 = vmatpush1.msra.mxu0 0.0
        %5786 = vmatprep.subr.mxu0 0.0
        %5787 = vmatpush1.msra.mxu0 0.0
        %5788 = vmatprep.subr.mxu0 0.0
        %5789 = vmatpush1.msra.mxu0 0.0
        %5790 = vmatprep.subr.mxu0 0.0
        %5791 = vmatpush1.msra.mxu0 0.0
        %5792 = vmatprep.subr.mxu0 0.0
        %5793 = vmatpush1.msra.mxu0 0.0
        %5794 = vmatprep.mubr.f32.mxu0 0.0
        %v5795 = vand.u32 %v675, 4294901760
        %5796 = vmatmul.mubr.f32.gmra.mrb[0].mxu0 %v5795
        %v5797 = vpop.f32.mrb[0].mxu0
        %v5798 = vadd.f32 %v5725, %v5797
        %v5799 = vpop.f32.mrb[0].mxu0
        %5800 = vdwg.mxu0
        %v5802 = vsel %vm673, %v5798, 0
        %5804 = vmatprep.subr.mxu0 0.0
        %v5805 = vand.u32 %v661, 4294901760
        %5806 = vmatpush1.msra.mxu0 %v5805
        %5807 = vmatprep.subr.mxu0 0.0
        %v5808 = vand.u32 %v662, 4294901760
        %5809 = vmatpush1.msra.mxu0 %v5808
        %5810 = vmatprep.subr.mxu0 0.0
        %5811 = vmatpush1.msra.mxu0 0.0
        %5812 = vmatprep.subr.mxu0 0.0
        %5813 = vmatpush1.msra.mxu0 0.0
        %5814 = vmatprep.subr.mxu0 0.0
        %5815 = vmatpush1.msra.mxu0 0.0
        %5816 = vmatprep.subr.mxu0 0.0
        %5817 = vmatpush1.msra.mxu0 0.0
        %5818 = vmatprep.subr.mxu0 0.0
        %5819 = vmatpush1.msra.mxu0 0.0
        %5820 = vmatprep.subr.mxu0 0.0
        %5821 = vmatpush1.msra.mxu0 0.0
        %5822 = vmatprep.subr.mxu0 0.0
        %5823 = vmatpush1.msra.mxu0 0.0
        %5824 = vmatprep.subr.mxu0 0.0
        %5825 = vmatpush1.msra.mxu0 0.0
        %5826 = vmatprep.subr.mxu0 0.0
        %5827 = vmatpush1.msra.mxu0 0.0
        %5828 = vmatprep.subr.mxu0 0.0
        %5829 = vmatpush1.msra.mxu0 0.0
        %5830 = vmatprep.subr.mxu0 0.0
        %5831 = vmatpush1.msra.mxu0 0.0
        %5832 = vmatprep.subr.mxu0 0.0
        %5833 = vmatpush1.msra.mxu0 0.0
        %5834 = vmatprep.subr.mxu0 0.0
        %5835 = vmatpush1.msra.mxu0 0.0
        %5836 = vmatprep.subr.mxu0 0.0
        %5837 = vmatpush1.msra.mxu0 0.0
        %5838 = vmatprep.subr.mxu0 0.0
        %5839 = vmatpush1.msra.mxu0 0.0
        %5840 = vmatprep.subr.mxu0 0.0
        %5841 = vmatpush1.msra.mxu0 0.0
        %5842 = vmatprep.subr.mxu0 0.0
        %5843 = vmatpush1.msra.mxu0 0.0
        %5844 = vmatprep.subr.mxu0 0.0
        %5845 = vmatpush1.msra.mxu0 0.0
        %5846 = vmatprep.subr.mxu0 0.0
        %5847 = vmatpush1.msra.mxu0 0.0
        %5848 = vmatprep.subr.mxu0 0.0
        %5849 = vmatpush1.msra.mxu0 0.0
        %5850 = vmatprep.subr.mxu0 0.0
        %5851 = vmatpush1.msra.mxu0 0.0
        %5852 = vmatprep.subr.mxu0 0.0
        %5853 = vmatpush1.msra.mxu0 0.0
        %5854 = vmatprep.subr.mxu0 0.0
        %5855 = vmatpush1.msra.mxu0 0.0
        %5856 = vmatprep.subr.mxu0 0.0
        %5857 = vmatpush1.msra.mxu0 0.0
        %5858 = vmatprep.subr.mxu0 0.0
        %5859 = vmatpush1.msra.mxu0 0.0
        %5860 = vmatprep.subr.mxu0 0.0
        %5861 = vmatpush1.msra.mxu0 0.0
        %5862 = vmatprep.subr.mxu0 0.0
        %5863 = vmatpush1.msra.mxu0 0.0
        %5864 = vmatprep.subr.mxu0 0.0
        %5865 = vmatpush1.msra.mxu0 0.0
        %5866 = vmatprep.subr.mxu0 0.0
        %5867 = vmatpush1.msra.mxu0 0.0
        %5868 = vmatprep.subr.mxu0 0.0
        %5869 = vmatpush1.msra.mxu0 0.0
        %5870 = vmatprep.mubr.f32.mxu0 0.0
        %v5871 = vand.u32 %v5802, 4294901760
        %v5872 = vsub.f32 %v5802, %v5871
        %v5873 = vand.u32 %v5872, 4294901760
        %v5874 = vsub.f32 %v5872, %v5873
        %v5875 = vand.u32 %v5874, 4294901760
        %5876 = vmatmul.mubr.f32.gmra.mrb[0].mxu0 %v5875
        %v5877 = vpop.f32.mrb[0].mxu0
        %v5878 = vadd.f32 0.0, %v5877
        %v5879 = vpop.f32.mrb[0].mxu0
        %5880 = vdwg.mxu0
        %5881 = vmatprep.subr.mxu0 0.0
        %v5882 = vand.u32 %v661, 4294901760
        %v5883 = vsub.f32 %v661, %v5882
        %v5884 = vand.u32 %v5883, 4294901760
        %v5885 = vsub.f32 %v5883, %v5884
        %v5886 = vand.u32 %v5885, 4294901760
        %5887 = vmatpush1.msra.mxu0 %v5886
        %5888 = vmatprep.subr.mxu0 0.0
        %v5889 = vand.u32 %v662, 4294901760
        %v5890 = vsub.f32 %v662, %v5889
        %v5891 = vand.u32 %v5890, 4294901760
        %v5892 = vsub.f32 %v5890, %v5891
        %v5893 = vand.u32 %v5892, 4294901760
        %5894 = vmatpush1.msra.mxu0 %v5893
        %5895 = vmatprep.subr.mxu0 0.0
        %5896 = vmatpush1.msra.mxu0 0.0
        %5897 = vmatprep.subr.mxu0 0.0
        %5898 = vmatpush1.msra.mxu0 0.0
        %5899 = vmatprep.subr.mxu0 0.0
        %5900 = vmatpush1.msra.mxu0 0.0
        %5901 = vmatprep.subr.mxu0 0.0
        %5902 = vmatpush1.msra.mxu0 0.0
        %5903 = vmatprep.subr.mxu0 0.0
        %5904 = vmatpush1.msra.mxu0 0.0
        %5905 = vmatprep.subr.mxu0 0.0
        %5906 = vmatpush1.msra.mxu0 0.0
        %5907 = vmatprep.subr.mxu0 0.0
        %5908 = vmatpush1.msra.mxu0 0.0
        %5909 = vmatprep.subr.mxu0 0.0
        %5910 = vmatpush1.msra.mxu0 0.0
        %5911 = vmatprep.subr.mxu0 0.0
        %5912 = vmatpush1.msra.mxu0 0.0
        %5913 = vmatprep.subr.mxu0 0.0
        %5914 = vmatpush1.msra.mxu0 0.0
        %5915 = vmatprep.subr.mxu0 0.0
        %5916 = vmatpush1.msra.mxu0 0.0
        %5917 = vmatprep.subr.mxu0 0.0
        %5918 = vmatpush1.msra.mxu0 0.0
        %5919 = vmatprep.subr.mxu0 0.0
        %5920 = vmatpush1.msra.mxu0 0.0
        %5921 = vmatprep.subr.mxu0 0.0
        %5922 = vmatpush1.msra.mxu0 0.0
        %5923 = vmatprep.subr.mxu0 0.0
        %5924 = vmatpush1.msra.mxu0 0.0
        %5925 = vmatprep.subr.mxu0 0.0
        %5926 = vmatpush1.msra.mxu0 0.0
        %5927 = vmatprep.subr.mxu0 0.0
        %5928 = vmatpush1.msra.mxu0 0.0
        %5929 = vmatprep.subr.mxu0 0.0
        %5930 = vmatpush1.msra.mxu0 0.0
        %5931 = vmatprep.subr.mxu0 0.0
        %5932 = vmatpush1.msra.mxu0 0.0
        %5933 = vmatprep.subr.mxu0 0.0
        %5934 = vmatpush1.msra.mxu0 0.0
        %5935 = vmatprep.subr.mxu0 0.0
        %5936 = vmatpush1.msra.mxu0 0.0
        %5937 = vmatprep.subr.mxu0 0.0
        %5938 = vmatpush1.msra.mxu0 0.0
        %5939 = vmatprep.subr.mxu0 0.0
        %5940 = vmatpush1.msra.mxu0 0.0
        %5941 = vmatprep.subr.mxu0 0.0
        %5942 = vmatpush1.msra.mxu0 0.0
        %5943 = vmatprep.subr.mxu0 0.0
        %5944 = vmatpush1.msra.mxu0 0.0
        %5945 = vmatprep.subr.mxu0 0.0
        %5946 = vmatpush1.msra.mxu0 0.0
        %5947 = vmatprep.subr.mxu0 0.0
        %5948 = vmatpush1.msra.mxu0 0.0
        %5949 = vmatprep.subr.mxu0 0.0
        %5950 = vmatpush1.msra.mxu0 0.0
        %5951 = vmatprep.subr.mxu0 0.0
        %5952 = vmatpush1.msra.mxu0 0.0
        %5953 = vmatprep.subr.mxu0 0.0
        %5954 = vmatpush1.msra.mxu0 0.0
        %5955 = vmatprep.mubr.f32.mxu0 0.0
        %v5956 = vand.u32 %v5802, 4294901760
        %5957 = vmatmul.mubr.f32.gmra.mrb[0].mxu0 %v5956
        %v5958 = vpop.f32.mrb[0].mxu0
        %v5959 = vadd.f32 %v5878, %v5958
        %v5960 = vpop.f32.mrb[0].mxu0
        %5961 = vdwg.mxu0
        %5962 = vmatprep.subr.mxu0 0.0
        %v5963 = vand.u32 %v661, 4294901760
        %v5964 = vsub.f32 %v661, %v5963
        %5965 = vmatpush1.msra.mxu0 %v5964
        %5966 = vmatprep.subr.mxu0 0.0
        %v5967 = vand.u32 %v662, 4294901760
        %v5968 = vsub.f32 %v662, %v5967
        %5969 = vmatpush1.msra.mxu0 %v5968
        %5970 = vmatprep.subr.mxu0 0.0
        %5971 = vmatpush1.msra.mxu0 0.0
        %5972 = vmatprep.subr.mxu0 0.0
        %5973 = vmatpush1.msra.mxu0 0.0
        %5974 = vmatprep.subr.mxu0 0.0
        %5975 = vmatpush1.msra.mxu0 0.0
        %5976 = vmatprep.subr.mxu0 0.0
        %5977 = vmatpush1.msra.mxu0 0.0
        %5978 = vmatprep.subr.mxu0 0.0
        %5979 = vmatpush1.msra.mxu0 0.0
        %5980 = vmatprep.subr.mxu0 0.0
        %5981 = vmatpush1.msra.mxu0 0.0
        %5982 = vmatprep.subr.mxu0 0.0
        %5983 = vmatpush1.msra.mxu0 0.0
        %5984 = vmatprep.subr.mxu0 0.0
        %5985 = vmatpush1.msra.mxu0 0.0
        %5986 = vmatprep.subr.mxu0 0.0
        %5987 = vmatpush1.msra.mxu0 0.0
        %5988 = vmatprep.subr.mxu0 0.0
        %5989 = vmatpush1.msra.mxu0 0.0
        %5990 = vmatprep.subr.mxu0 0.0
        %5991 = vmatpush1.msra.mxu0 0.0
        %5992 = vmatprep.subr.mxu0 0.0
        %5993 = vmatpush1.msra.mxu0 0.0
        %5994 = vmatprep.subr.mxu0 0.0
        %5995 = vmatpush1.msra.mxu0 0.0
        %5996 = vmatprep.subr.mxu0 0.0
        %5997 = vmatpush1.msra.mxu0 0.0
        %5998 = vmatprep.subr.mxu0 0.0
        %5999 = vmatpush1.msra.mxu0 0.0
        %6000 = vmatprep.subr.mxu0 0.0
        %6001 = vmatpush1.msra.mxu0 0.0
        %6002 = vmatprep.subr.mxu0 0.0
        %6003 = vmatpush1.msra.mxu0 0.0
        %6004 = vmatprep.subr.mxu0 0.0
        %6005 = vmatpush1.msra.mxu0 0.0
        %6006 = vmatprep.subr.mxu0 0.0
        %6007 = vmatpush1.msra.mxu0 0.0
        %6008 = vmatprep.subr.mxu0 0.0
        %6009 = vmatpush1.msra.mxu0 0.0
        %6010 = vmatprep.subr.mxu0 0.0
        %6011 = vmatpush1.msra.mxu0 0.0
        %6012 = vmatprep.subr.mxu0 0.0
        %6013 = vmatpush1.msra.mxu0 0.0
        %6014 = vmatprep.subr.mxu0 0.0
        %6015 = vmatpush1.msra.mxu0 0.0
        %6016 = vmatprep.subr.mxu0 0.0
        %6017 = vmatpush1.msra.mxu0 0.0
        %6018 = vmatprep.subr.mxu0 0.0
        %6019 = vmatpush1.msra.mxu0 0.0
        %6020 = vmatprep.subr.mxu0 0.0
        %6021 = vmatpush1.msra.mxu0 0.0
        %6022 = vmatprep.subr.mxu0 0.0
        %6023 = vmatpush1.msra.mxu0 0.0
        %6024 = vmatprep.subr.mxu0 0.0
        %6025 = vmatpush1.msra.mxu0 0.0
        %6026 = vmatprep.subr.mxu0 0.0
        %6027 = vmatpush1.msra.mxu0 0.0
        %6028 = vmatprep.subr.mxu0 0.0
        %6029 = vmatpush1.msra.mxu0 0.0
        %6030 = vmatprep.mubr.f32.mxu0 0.0
        %v6031 = vand.u32 %v5802, 4294901760
        %v6032 = vsub.f32 %v5802, %v6031
        %6033 = vmatmul.mubr.f32.gmra.mrb[0].mxu0 %v6032
        %v6034 = vpop.f32.mrb[0].mxu0
        %v6035 = vadd.f32 %v5959, %v6034
        %v6036 = vpop.f32.mrb[0].mxu0
        %6037 = vdwg.mxu0
        %6038 = vmatprep.subr.mxu0 0.0
        %v6039 = vand.u32 %v661, 4294901760
        %6040 = vmatpush1.msra.mxu0 %v6039
        %6041 = vmatprep.subr.mxu0 0.0
        %v6042 = vand.u32 %v662, 4294901760
        %6043 = vmatpush1.msra.mxu0 %v6042
        %6044 = vmatprep.subr.mxu0 0.0
        %6045 = vmatpush1.msra.mxu0 0.0
        %6046 = vmatprep.subr.mxu0 0.0
        %6047 = vmatpush1.msra.mxu0 0.0
        %6048 = vmatprep.subr.mxu0 0.0
        %6049 = vmatpush1.msra.mxu0 0.0
        %6050 = vmatprep.subr.mxu0 0.0
        %6051 = vmatpush1.msra.mxu0 0.0
        %6052 = vmatprep.subr.mxu0 0.0
        %6053 = vmatpush1.msra.mxu0 0.0
        %6054 = vmatprep.subr.mxu0 0.0
        %6055 = vmatpush1.msra.mxu0 0.0
        %6056 = vmatprep.subr.mxu0 0.0
        %6057 = vmatpush1.msra.mxu0 0.0
        %6058 = vmatprep.subr.mxu0 0.0
        %6059 = vmatpush1.msra.mxu0 0.0
        %6060 = vmatprep.subr.mxu0 0.0
        %6061 = vmatpush1.msra.mxu0 0.0
        %6062 = vmatprep.subr.mxu0 0.0
        %6063 = vmatpush1.msra.mxu0 0.0
        %6064 = vmatprep.subr.mxu0 0.0
        %6065 = vmatpush1.msra.mxu0 0.0
        %6066 = vmatprep.subr.mxu0 0.0
        %6067 = vmatpush1.msra.mxu0 0.0
        %6068 = vmatprep.subr.mxu0 0.0
        %6069 = vmatpush1.msra.mxu0 0.0
        %6070 = vmatprep.subr.mxu0 0.0
        %6071 = vmatpush1.msra.mxu0 0.0
        %6072 = vmatprep.subr.mxu0 0.0
        %6073 = vmatpush1.msra.mxu0 0.0
        %6074 = vmatprep.subr.mxu0 0.0
        %6075 = vmatpush1.msra.mxu0 0.0
        %6076 = vmatprep.subr.mxu0 0.0
        %6077 = vmatpush1.msra.mxu0 0.0
        %6078 = vmatprep.subr.mxu0 0.0
        %6079 = vmatpush1.msra.mxu0 0.0
        %6080 = vmatprep.subr.mxu0 0.0
        %6081 = vmatpush1.msra.mxu0 0.0
        %6082 = vmatprep.subr.mxu0 0.0
        %6083 = vmatpush1.msra.mxu0 0.0
        %6084 = vmatprep.subr.mxu0 0.0
        %6085 = vmatpush1.msra.mxu0 0.0
        %6086 = vmatprep.subr.mxu0 0.0
        %6087 = vmatpush1.msra.mxu0 0.0
        %6088 = vmatprep.subr.mxu0 0.0
        %6089 = vmatpush1.msra.mxu0 0.0
        %6090 = vmatprep.subr.mxu0 0.0
        %6091 = vmatpush1.msra.mxu0 0.0
        %6092 = vmatprep.subr.mxu0 0.0
        %6093 = vmatpush1.msra.mxu0 0.0
        %6094 = vmatprep.subr.mxu0 0.0
        %6095 = vmatpush1.msra.mxu0 0.0
        %6096 = vmatprep.subr.mxu0 0.0
        %6097 = vmatpush1.msra.mxu0 0.0
        %6098 = vmatprep.subr.mxu0 0.0
        %6099 = vmatpush1.msra.mxu0 0.0
        %6100 = vmatprep.subr.mxu0 0.0
        %6101 = vmatpush1.msra.mxu0 0.0
        %6102 = vmatprep.subr.mxu0 0.0
        %6103 = vmatpush1.msra.mxu0 0.0
        %6104 = vmatprep.mubr.f32.mxu0 0.0
        %v6105 = vand.u32 %v5802, 4294901760
        %v6106 = vsub.f32 %v5802, %v6105
        %v6107 = vand.u32 %v6106, 4294901760
        %6108 = vmatmul.mubr.f32.gmra.mrb[0].mxu0 %v6107
        %v6109 = vpop.f32.mrb[0].mxu0
        %v6110 = vadd.f32 %v6035, %v6109
        %v6111 = vpop.f32.mrb[0].mxu0
        %6112 = vdwg.mxu0
        %6113 = vmatprep.subr.mxu0 0.0
        %v6114 = vand.u32 %v661, 4294901760
        %v6115 = vsub.f32 %v661, %v6114
        %v6116 = vand.u32 %v6115, 4294901760
        %6117 = vmatpush1.msra.mxu0 %v6116
        %6118 = vmatprep.subr.mxu0 0.0
        %v6119 = vand.u32 %v662, 4294901760
        %v6120 = vsub.f32 %v662, %v6119
        %v6121 = vand.u32 %v6120, 4294901760
        %6122 = vmatpush1.msra.mxu0 %v6121
        %6123 = vmatprep.subr.mxu0 0.0
        %6124 = vmatpush1.msra.mxu0 0.0
        %6125 = vmatprep.subr.mxu0 0.0
        %6126 = vmatpush1.msra.mxu0 0.0
        %6127 = vmatprep.subr.mxu0 0.0
        %6128 = vmatpush1.msra.mxu0 0.0
        %6129 = vmatprep.subr.mxu0 0.0
        %6130 = vmatpush1.msra.mxu0 0.0
        %6131 = vmatprep.subr.mxu0 0.0
        %6132 = vmatpush1.msra.mxu0 0.0
        %6133 = vmatprep.subr.mxu0 0.0
        %6134 = vmatpush1.msra.mxu0 0.0
        %6135 = vmatprep.subr.mxu0 0.0
        %6136 = vmatpush1.msra.mxu0 0.0
        %6137 = vmatprep.subr.mxu0 0.0
        %6138 = vmatpush1.msra.mxu0 0.0
        %6139 = vmatprep.subr.mxu0 0.0
        %6140 = vmatpush1.msra.mxu0 0.0
        %6141 = vmatprep.subr.mxu0 0.0
        %6142 = vmatpush1.msra.mxu0 0.0
        %6143 = vmatprep.subr.mxu0 0.0
        %6144 = vmatpush1.msra.mxu0 0.0
        %6145 = vmatprep.subr.mxu0 0.0
        %6146 = vmatpush1.msra.mxu0 0.0
        %6147 = vmatprep.subr.mxu0 0.0
        %6148 = vmatpush1.msra.mxu0 0.0
        %6149 = vmatprep.subr.mxu0 0.0
        %6150 = vmatpush1.msra.mxu0 0.0
        %6151 = vmatprep.subr.mxu0 0.0
        %6152 = vmatpush1.msra.mxu0 0.0
        %6153 = vmatprep.subr.mxu0 0.0
        %6154 = vmatpush1.msra.mxu0 0.0
        %6155 = vmatprep.subr.mxu0 0.0
        %6156 = vmatpush1.msra.mxu0 0.0
        %6157 = vmatprep.subr.mxu0 0.0
        %6158 = vmatpush1.msra.mxu0 0.0
        %6159 = vmatprep.subr.mxu0 0.0
        %6160 = vmatpush1.msra.mxu0 0.0
        %6161 = vmatprep.subr.mxu0 0.0
        %6162 = vmatpush1.msra.mxu0 0.0
        %6163 = vmatprep.subr.mxu0 0.0
        %6164 = vmatpush1.msra.mxu0 0.0
        %6165 = vmatprep.subr.mxu0 0.0
        %6166 = vmatpush1.msra.mxu0 0.0
        %6167 = vmatprep.subr.mxu0 0.0
        %6168 = vmatpush1.msra.mxu0 0.0
        %6169 = vmatprep.subr.mxu0 0.0
        %6170 = vmatpush1.msra.mxu0 0.0
        %6171 = vmatprep.subr.mxu0 0.0
        %6172 = vmatpush1.msra.mxu0 0.0
        %6173 = vmatprep.subr.mxu0 0.0
        %6174 = vmatpush1.msra.mxu0 0.0
        %6175 = vmatprep.subr.mxu0 0.0
        %6176 = vmatpush1.msra.mxu0 0.0
        %6177 = vmatprep.subr.mxu0 0.0
        %6178 = vmatpush1.msra.mxu0 0.0
        %6179 = vmatprep.subr.mxu0 0.0
        %6180 = vmatpush1.msra.mxu0 0.0
        %6181 = vmatprep.subr.mxu0 0.0
        %6182 = vmatpush1.msra.mxu0 0.0
        %6183 = vmatprep.mubr.f32.mxu0 0.0
        %v6184 = vand.u32 %v5802, 4294901760
        %6185 = vmatmul.mubr.f32.gmra.mrb[0].mxu0 %v6184
        %v6186 = vpop.f32.mrb[0].mxu0
        %v6187 = vadd.f32 %v6110, %v6186
        %v6188 = vpop.f32.mrb[0].mxu0
        %6189 = vdwg.mxu0
        %6190 = vmatprep.subr.mxu0 0.0
        %v6191 = vand.u32 %v661, 4294901760
        %6192 = vmatpush1.msra.mxu0 %v6191
        %6193 = vmatprep.subr.mxu0 0.0
        %v6194 = vand.u32 %v662, 4294901760
        %6195 = vmatpush1.msra.mxu0 %v6194
        %6196 = vmatprep.subr.mxu0 0.0
        %6197 = vmatpush1.msra.mxu0 0.0
        %6198 = vmatprep.subr.mxu0 0.0
        %6199 = vmatpush1.msra.mxu0 0.0
        %6200 = vmatprep.subr.mxu0 0.0
        %6201 = vmatpush1.msra.mxu0 0.0
        %6202 = vmatprep.subr.mxu0 0.0
        %6203 = vmatpush1.msra.mxu0 0.0
        %6204 = vmatprep.subr.mxu0 0.0
        %6205 = vmatpush1.msra.mxu0 0.0
        %6206 = vmatprep.subr.mxu0 0.0
        %6207 = vmatpush1.msra.mxu0 0.0
        %6208 = vmatprep.subr.mxu0 0.0
        %6209 = vmatpush1.msra.mxu0 0.0
        %6210 = vmatprep.subr.mxu0 0.0
        %6211 = vmatpush1.msra.mxu0 0.0
        %6212 = vmatprep.subr.mxu0 0.0
        %6213 = vmatpush1.msra.mxu0 0.0
        %6214 = vmatprep.subr.mxu0 0.0
        %6215 = vmatpush1.msra.mxu0 0.0
        %6216 = vmatprep.subr.mxu0 0.0
        %6217 = vmatpush1.msra.mxu0 0.0
        %6218 = vmatprep.subr.mxu0 0.0
        %6219 = vmatpush1.msra.mxu0 0.0
        %6220 = vmatprep.subr.mxu0 0.0
        %6221 = vmatpush1.msra.mxu0 0.0
        %6222 = vmatprep.subr.mxu0 0.0
        %6223 = vmatpush1.msra.mxu0 0.0
        %6224 = vmatprep.subr.mxu0 0.0
        %6225 = vmatpush1.msra.mxu0 0.0
        %6226 = vmatprep.subr.mxu0 0.0
        %6227 = vmatpush1.msra.mxu0 0.0
        %6228 = vmatprep.subr.mxu0 0.0
        %6229 = vmatpush1.msra.mxu0 0.0
        %6230 = vmatprep.subr.mxu0 0.0
        %6231 = vmatpush1.msra.mxu0 0.0
        %6232 = vmatprep.subr.mxu0 0.0
        %6233 = vmatpush1.msra.mxu0 0.0
        %6234 = vmatprep.subr.mxu0 0.0
        %6235 = vmatpush1.msra.mxu0 0.0
        %6236 = vmatprep.subr.mxu0 0.0
        %6237 = vmatpush1.msra.mxu0 0.0
        %6238 = vmatprep.subr.mxu0 0.0
        %6239 = vmatpush1.msra.mxu0 0.0
        %6240 = vmatprep.subr.mxu0 0.0
        %6241 = vmatpush1.msra.mxu0 0.0
        %6242 = vmatprep.subr.mxu0 0.0
        %6243 = vmatpush1.msra.mxu0 0.0
        %6244 = vmatprep.subr.mxu0 0.0
        %6245 = vmatpush1.msra.mxu0 0.0
        %6246 = vmatprep.subr.mxu0 0.0
        %6247 = vmatpush1.msra.mxu0 0.0
        %6248 = vmatprep.subr.mxu0 0.0
        %6249 = vmatpush1.msra.mxu0 0.0
        %6250 = vmatprep.subr.mxu0 0.0
        %6251 = vmatpush1.msra.mxu0 0.0
        %6252 = vmatprep.subr.mxu0 0.0
        %6253 = vmatpush1.msra.mxu0 0.0
        %6254 = vmatprep.subr.mxu0 0.0
        %6255 = vmatpush1.msra.mxu0 0.0
        %6256 = vmatprep.mubr.f32.mxu0 0.0
        %v6257 = vand.u32 %v5802, 4294901760
        %6258 = vmatmul.mubr.f32.gmra.mrb[0].mxu0 %v6257
        %v6259 = vpop.f32.mrb[0].mxu0
        %v6260 = vadd.f32 %v6187, %v6259
        %v6261 = vpop.f32.mrb[0].mxu0
        %6262 = vdwg.mxu0
        %s6263 = scalar_lea.vmem %s384, 10
        %6264 = vst.msk [vmem:[%s6263] sm:$0x3] %vm1598, %v6260
        %vm6265 = vcmp.eq.f32.partialorder %v646, 6.0
        %vm6266 = vcmp.eq.f32.partialorder %v647, 6.0
        %v6267 = vsel %vm6265, %v532, 0.0
        %v6268 = vsel %vm6266, %v533, 0.0
        %vm6269 = vcmp.eq.f32.partialorder %v658, 6.0
        %vm6270 = vcmp.eq.f32.partialorder %v659, 6.0
        %v6271 = vsel %vm6269, %v534, 0.0
        %v6272 = vsel %vm6270, %v535, 0.0
        %v6273 = vadd.f32 %v6267, %v6271
        %v6274 = vadd.f32 %v6268, %v6272
        %6275 = vmatprep.subr.mxu0 0.0
        %v6276 = vand.u32 %v6273, 4294901760
        %6277 = vmatpush1.msra.mxu0 %v6276
        %6278 = vmatprep.subr.mxu0 0.0
        %v6279 = vand.u32 %v6274, 4294901760
        %6280 = vmatpush1.msra.mxu0 %v6279
        %6281 = vmatprep.subr.mxu0 0.0
        %6282 = vmatpush1.msra.mxu0 0.0
        %6283 = vmatprep.subr.mxu0 0.0
        %6284 = vmatpush1.msra.mxu0 0.0
        %6285 = vmatprep.subr.mxu0 0.0
        %6286 = vmatpush1.msra.mxu0 0.0
        %6287 = vmatprep.subr.mxu0 0.0
        %6288 = vmatpush1.msra.mxu0 0.0
        %6289 = vmatprep.subr.mxu0 0.0
        %6290 = vmatpush1.msra.mxu0 0.0
        %6291 = vmatprep.subr.mxu0 0.0
        %6292 = vmatpush1.msra.mxu0 0.0
        %6293 = vmatprep.subr.mxu0 0.0
        %6294 = vmatpush1.msra.mxu0 0.0
        %6295 = vmatprep.subr.mxu0 0.0
        %6296 = vmatpush1.msra.mxu0 0.0
        %6297 = vmatprep.subr.mxu0 0.0
        %6298 = vmatpush1.msra.mxu0 0.0
        %6299 = vmatprep.subr.mxu0 0.0
        %6300 = vmatpush1.msra.mxu0 0.0
        %6301 = vmatprep.subr.mxu0 0.0
        %6302 = vmatpush1.msra.mxu0 0.0
        %6303 = vmatprep.subr.mxu0 0.0
        %6304 = vmatpush1.msra.mxu0 0.0
        %6305 = vmatprep.subr.mxu0 0.0
        %6306 = vmatpush1.msra.mxu0 0.0
        %6307 = vmatprep.subr.mxu0 0.0
        %6308 = vmatpush1.msra.mxu0 0.0
        %6309 = vmatprep.subr.mxu0 0.0
        %6310 = vmatpush1.msra.mxu0 0.0
        %6311 = vmatprep.subr.mxu0 0.0
        %6312 = vmatpush1.msra.mxu0 0.0
        %6313 = vmatprep.subr.mxu0 0.0
        %6314 = vmatpush1.msra.mxu0 0.0
        %6315 = vmatprep.subr.mxu0 0.0
        %6316 = vmatpush1.msra.mxu0 0.0
        %6317 = vmatprep.subr.mxu0 0.0
        %6318 = vmatpush1.msra.mxu0 0.0
        %6319 = vmatprep.subr.mxu0 0.0
        %6320 = vmatpush1.msra.mxu0 0.0
        %6321 = vmatprep.subr.mxu0 0.0
        %6322 = vmatpush1.msra.mxu0 0.0
        %6323 = vmatprep.subr.mxu0 0.0
        %6324 = vmatpush1.msra.mxu0 0.0
        %6325 = vmatprep.subr.mxu0 0.0
        %6326 = vmatpush1.msra.mxu0 0.0
        %6327 = vmatprep.subr.mxu0 0.0
        %6328 = vmatpush1.msra.mxu0 0.0
        %6329 = vmatprep.subr.mxu0 0.0
        %6330 = vmatpush1.msra.mxu0 0.0
        %6331 = vmatprep.subr.mxu0 0.0
        %6332 = vmatpush1.msra.mxu0 0.0
        %6333 = vmatprep.subr.mxu0 0.0
        %6334 = vmatpush1.msra.mxu0 0.0
        %6335 = vmatprep.subr.mxu0 0.0
        %6336 = vmatpush1.msra.mxu0 0.0
        %6337 = vmatprep.subr.mxu0 0.0
        %6338 = vmatpush1.msra.mxu0 0.0
        %6339 = vmatprep.subr.mxu0 0.0
        %6340 = vmatpush1.msra.mxu0 0.0
        %6341 = vmatprep.mubr.f32.mxu0 0.0
        %v6342 = vand.u32 %v675, 4294901760
        %v6343 = vsub.f32 %v675, %v6342
        %v6344 = vand.u32 %v6343, 4294901760
        %v6345 = vsub.f32 %v6343, %v6344
        %v6346 = vand.u32 %v6345, 4294901760
        %6347 = vmatmul.mubr.f32.gmra.mrb[0].mxu0 %v6346
        %v6348 = vpop.f32.mrb[0].mxu0
        %v6349 = vadd.f32 0.0, %v6348
        %v6350 = vpop.f32.mrb[0].mxu0
        %6351 = vdwg.mxu0
        %6352 = vmatprep.subr.mxu0 0.0
        %v6353 = vand.u32 %v6273, 4294901760
        %v6354 = vsub.f32 %v6273, %v6353
        %v6355 = vand.u32 %v6354, 4294901760
        %v6356 = vsub.f32 %v6354, %v6355
        %v6357 = vand.u32 %v6356, 4294901760
        %6358 = vmatpush1.msra.mxu0 %v6357
        %6359 = vmatprep.subr.mxu0 0.0
        %v6360 = vand.u32 %v6274, 4294901760
        %v6361 = vsub.f32 %v6274, %v6360
        %v6362 = vand.u32 %v6361, 4294901760
        %v6363 = vsub.f32 %v6361, %v6362
        %v6364 = vand.u32 %v6363, 4294901760
        %6365 = vmatpush1.msra.mxu0 %v6364
        %6366 = vmatprep.subr.mxu0 0.0
        %6367 = vmatpush1.msra.mxu0 0.0
        %6368 = vmatprep.subr.mxu0 0.0
        %6369 = vmatpush1.msra.mxu0 0.0
        %6370 = vmatprep.subr.mxu0 0.0
        %6371 = vmatpush1.msra.mxu0 0.0
        %6372 = vmatprep.subr.mxu0 0.0
        %6373 = vmatpush1.msra.mxu0 0.0
        %6374 = vmatprep.subr.mxu0 0.0
        %6375 = vmatpush1.msra.mxu0 0.0
        %6376 = vmatprep.subr.mxu0 0.0
        %6377 = vmatpush1.msra.mxu0 0.0
        %6378 = vmatprep.subr.mxu0 0.0
        %6379 = vmatpush1.msra.mxu0 0.0
        %6380 = vmatprep.subr.mxu0 0.0
        %6381 = vmatpush1.msra.mxu0 0.0
        %6382 = vmatprep.subr.mxu0 0.0
        %6383 = vmatpush1.msra.mxu0 0.0
        %6384 = vmatprep.subr.mxu0 0.0
        %6385 = vmatpush1.msra.mxu0 0.0
        %6386 = vmatprep.subr.mxu0 0.0
        %6387 = vmatpush1.msra.mxu0 0.0
        %6388 = vmatprep.subr.mxu0 0.0
        %6389 = vmatpush1.msra.mxu0 0.0
        %6390 = vmatprep.subr.mxu0 0.0
        %6391 = vmatpush1.msra.mxu0 0.0
        %6392 = vmatprep.subr.mxu0 0.0
        %6393 = vmatpush1.msra.mxu0 0.0
        %6394 = vmatprep.subr.mxu0 0.0
        %6395 = vmatpush1.msra.mxu0 0.0
        %6396 = vmatprep.subr.mxu0 0.0
        %6397 = vmatpush1.msra.mxu0 0.0
        %6398 = vmatprep.subr.mxu0 0.0
        %6399 = vmatpush1.msra.mxu0 0.0
        %6400 = vmatprep.subr.mxu0 0.0
        %6401 = vmatpush1.msra.mxu0 0.0
        %6402 = vmatprep.subr.mxu0 0.0
        %6403 = vmatpush1.msra.mxu0 0.0
        %6404 = vmatprep.subr.mxu0 0.0
        %6405 = vmatpush1.msra.mxu0 0.0
        %6406 = vmatprep.subr.mxu0 0.0
        %6407 = vmatpush1.msra.mxu0 0.0
        %6408 = vmatprep.subr.mxu0 0.0
        %6409 = vmatpush1.msra.mxu0 0.0
        %6410 = vmatprep.subr.mxu0 0.0
        %6411 = vmatpush1.msra.mxu0 0.0
        %6412 = vmatprep.subr.mxu0 0.0
        %6413 = vmatpush1.msra.mxu0 0.0
        %6414 = vmatprep.subr.mxu0 0.0
        %6415 = vmatpush1.msra.mxu0 0.0
        %6416 = vmatprep.subr.mxu0 0.0
        %6417 = vmatpush1.msra.mxu0 0.0
        %6418 = vmatprep.subr.mxu0 0.0
        %6419 = vmatpush1.msra.mxu0 0.0
        %6420 = vmatprep.subr.mxu0 0.0
        %6421 = vmatpush1.msra.mxu0 0.0
        %6422 = vmatprep.subr.mxu0 0.0
        %6423 = vmatpush1.msra.mxu0 0.0
        %6424 = vmatprep.subr.mxu0 0.0
        %6425 = vmatpush1.msra.mxu0 0.0
        %6426 = vmatprep.mubr.f32.mxu0 0.0
        %v6427 = vand.u32 %v675, 4294901760
        %6428 = vmatmul.mubr.f32.gmra.mrb[0].mxu0 %v6427
        %v6429 = vpop.f32.mrb[0].mxu0
        %v6430 = vadd.f32 %v6349, %v6429
        %v6431 = vpop.f32.mrb[0].mxu0
        %6432 = vdwg.mxu0
        %6433 = vmatprep.subr.mxu0 0.0
        %v6434 = vand.u32 %v6273, 4294901760
        %v6435 = vsub.f32 %v6273, %v6434
        %6436 = vmatpush1.msra.mxu0 %v6435
        %6437 = vmatprep.subr.mxu0 0.0
        %v6438 = vand.u32 %v6274, 4294901760
        %v6439 = vsub.f32 %v6274, %v6438
        %6440 = vmatpush1.msra.mxu0 %v6439
        %6441 = vmatprep.subr.mxu0 0.0
        %6442 = vmatpush1.msra.mxu0 0.0
        %6443 = vmatprep.subr.mxu0 0.0
        %6444 = vmatpush1.msra.mxu0 0.0
        %6445 = vmatprep.subr.mxu0 0.0
        %6446 = vmatpush1.msra.mxu0 0.0
        %6447 = vmatprep.subr.mxu0 0.0
        %6448 = vmatpush1.msra.mxu0 0.0
        %6449 = vmatprep.subr.mxu0 0.0
        %6450 = vmatpush1.msra.mxu0 0.0
        %6451 = vmatprep.subr.mxu0 0.0
        %6452 = vmatpush1.msra.mxu0 0.0
        %6453 = vmatprep.subr.mxu0 0.0
        %6454 = vmatpush1.msra.mxu0 0.0
        %6455 = vmatprep.subr.mxu0 0.0
        %6456 = vmatpush1.msra.mxu0 0.0
        %6457 = vmatprep.subr.mxu0 0.0
        %6458 = vmatpush1.msra.mxu0 0.0
        %6459 = vmatprep.subr.mxu0 0.0
        %6460 = vmatpush1.msra.mxu0 0.0
        %6461 = vmatprep.subr.mxu0 0.0
        %6462 = vmatpush1.msra.mxu0 0.0
        %6463 = vmatprep.subr.mxu0 0.0
        %6464 = vmatpush1.msra.mxu0 0.0
        %6465 = vmatprep.subr.mxu0 0.0
        %6466 = vmatpush1.msra.mxu0 0.0
        %6467 = vmatprep.subr.mxu0 0.0
        %6468 = vmatpush1.msra.mxu0 0.0
        %6469 = vmatprep.subr.mxu0 0.0
        %6470 = vmatpush1.msra.mxu0 0.0
        %6471 = vmatprep.subr.mxu0 0.0
        %6472 = vmatpush1.msra.mxu0 0.0
        %6473 = vmatprep.subr.mxu0 0.0
        %6474 = vmatpush1.msra.mxu0 0.0
        %6475 = vmatprep.subr.mxu0 0.0
        %6476 = vmatpush1.msra.mxu0 0.0
        %6477 = vmatprep.subr.mxu0 0.0
        %6478 = vmatpush1.msra.mxu0 0.0
        %6479 = vmatprep.subr.mxu0 0.0
        %6480 = vmatpush1.msra.mxu0 0.0
        %6481 = vmatprep.subr.mxu0 0.0
        %6482 = vmatpush1.msra.mxu0 0.0
        %6483 = vmatprep.subr.mxu0 0.0
        %6484 = vmatpush1.msra.mxu0 0.0
        %6485 = vmatprep.subr.mxu0 0.0
        %6486 = vmatpush1.msra.mxu0 0.0
        %6487 = vmatprep.subr.mxu0 0.0
        %6488 = vmatpush1.msra.mxu0 0.0
        %6489 = vmatprep.subr.mxu0 0.0
        %6490 = vmatpush1.msra.mxu0 0.0
        %6491 = vmatprep.subr.mxu0 0.0
        %6492 = vmatpush1.msra.mxu0 0.0
        %6493 = vmatprep.subr.mxu0 0.0
        %6494 = vmatpush1.msra.mxu0 0.0
        %6495 = vmatprep.subr.mxu0 0.0
        %6496 = vmatpush1.msra.mxu0 0.0
        %6497 = vmatprep.subr.mxu0 0.0
        %6498 = vmatpush1.msra.mxu0 0.0
        %6499 = vmatprep.subr.mxu0 0.0
        %6500 = vmatpush1.msra.mxu0 0.0
        %6501 = vmatprep.mubr.f32.mxu0 0.0
        %v6502 = vand.u32 %v675, 4294901760
        %v6503 = vsub.f32 %v675, %v6502
        %6504 = vmatmul.mubr.f32.gmra.mrb[0].mxu0 %v6503
        %v6505 = vpop.f32.mrb[0].mxu0
        %v6506 = vadd.f32 %v6430, %v6505
        %v6507 = vpop.f32.mrb[0].mxu0
        %6508 = vdwg.mxu0
        %6509 = vmatprep.subr.mxu0 0.0
        %v6510 = vand.u32 %v6273, 4294901760
        %6511 = vmatpush1.msra.mxu0 %v6510
        %6512 = vmatprep.subr.mxu0 0.0
        %v6513 = vand.u32 %v6274, 4294901760
        %6514 = vmatpush1.msra.mxu0 %v6513
        %6515 = vmatprep.subr.mxu0 0.0
        %6516 = vmatpush1.msra.mxu0 0.0
        %6517 = vmatprep.subr.mxu0 0.0
        %6518 = vmatpush1.msra.mxu0 0.0
        %6519 = vmatprep.subr.mxu0 0.0
        %6520 = vmatpush1.msra.mxu0 0.0
        %6521 = vmatprep.subr.mxu0 0.0
        %6522 = vmatpush1.msra.mxu0 0.0
        %6523 = vmatprep.subr.mxu0 0.0
        %6524 = vmatpush1.msra.mxu0 0.0
        %6525 = vmatprep.subr.mxu0 0.0
        %6526 = vmatpush1.msra.mxu0 0.0
        %6527 = vmatprep.subr.mxu0 0.0
        %6528 = vmatpush1.msra.mxu0 0.0
        %6529 = vmatprep.subr.mxu0 0.0
        %6530 = vmatpush1.msra.mxu0 0.0
        %6531 = vmatprep.subr.mxu0 0.0
        %6532 = vmatpush1.msra.mxu0 0.0
        %6533 = vmatprep.subr.mxu0 0.0
        %6534 = vmatpush1.msra.mxu0 0.0
        %6535 = vmatprep.subr.mxu0 0.0
        %6536 = vmatpush1.msra.mxu0 0.0
        %6537 = vmatprep.subr.mxu0 0.0
        %6538 = vmatpush1.msra.mxu0 0.0
        %6539 = vmatprep.subr.mxu0 0.0
        %6540 = vmatpush1.msra.mxu0 0.0
        %6541 = vmatprep.subr.mxu0 0.0
        %6542 = vmatpush1.msra.mxu0 0.0
        %6543 = vmatprep.subr.mxu0 0.0
        %6544 = vmatpush1.msra.mxu0 0.0
        %6545 = vmatprep.subr.mxu0 0.0
        %6546 = vmatpush1.msra.mxu0 0.0
        %6547 = vmatprep.subr.mxu0 0.0
        %6548 = vmatpush1.msra.mxu0 0.0
        %6549 = vmatprep.subr.mxu0 0.0
        %6550 = vmatpush1.msra.mxu0 0.0
        %6551 = vmatprep.subr.mxu0 0.0
        %6552 = vmatpush1.msra.mxu0 0.0
        %6553 = vmatprep.subr.mxu0 0.0
        %6554 = vmatpush1.msra.mxu0 0.0
        %6555 = vmatprep.subr.mxu0 0.0
        %6556 = vmatpush1.msra.mxu0 0.0
        %6557 = vmatprep.subr.mxu0 0.0
        %6558 = vmatpush1.msra.mxu0 0.0
        %6559 = vmatprep.subr.mxu0 0.0
        %6560 = vmatpush1.msra.mxu0 0.0
        %6561 = vmatprep.subr.mxu0 0.0
        %6562 = vmatpush1.msra.mxu0 0.0
        %6563 = vmatprep.subr.mxu0 0.0
        %6564 = vmatpush1.msra.mxu0 0.0
        %6565 = vmatprep.subr.mxu0 0.0
        %6566 = vmatpush1.msra.mxu0 0.0
        %6567 = vmatprep.subr.mxu0 0.0
        %6568 = vmatpush1.msra.mxu0 0.0
        %6569 = vmatprep.subr.mxu0 0.0
        %6570 = vmatpush1.msra.mxu0 0.0
        %6571 = vmatprep.subr.mxu0 0.0
        %6572 = vmatpush1.msra.mxu0 0.0
        %6573 = vmatprep.subr.mxu0 0.0
        %6574 = vmatpush1.msra.mxu0 0.0
        %6575 = vmatprep.mubr.f32.mxu0 0.0
        %v6576 = vand.u32 %v675, 4294901760
        %v6577 = vsub.f32 %v675, %v6576
        %v6578 = vand.u32 %v6577, 4294901760
        %6579 = vmatmul.mubr.f32.gmra.mrb[0].mxu0 %v6578
        %v6580 = vpop.f32.mrb[0].mxu0
        %v6581 = vadd.f32 %v6506, %v6580
        %v6582 = vpop.f32.mrb[0].mxu0
        %6583 = vdwg.mxu0
        %6584 = vmatprep.subr.mxu0 0.0
        %v6585 = vand.u32 %v6273, 4294901760
        %v6586 = vsub.f32 %v6273, %v6585
        %v6587 = vand.u32 %v6586, 4294901760
        %6588 = vmatpush1.msra.mxu0 %v6587
        %6589 = vmatprep.subr.mxu0 0.0
        %v6590 = vand.u32 %v6274, 4294901760
        %v6591 = vsub.f32 %v6274, %v6590
        %v6592 = vand.u32 %v6591, 4294901760
        %6593 = vmatpush1.msra.mxu0 %v6592
        %6594 = vmatprep.subr.mxu0 0.0
        %6595 = vmatpush1.msra.mxu0 0.0
        %6596 = vmatprep.subr.mxu0 0.0
        %6597 = vmatpush1.msra.mxu0 0.0
        %6598 = vmatprep.subr.mxu0 0.0
        %6599 = vmatpush1.msra.mxu0 0.0
        %6600 = vmatprep.subr.mxu0 0.0
        %6601 = vmatpush1.msra.mxu0 0.0
        %6602 = vmatprep.subr.mxu0 0.0
        %6603 = vmatpush1.msra.mxu0 0.0
        %6604 = vmatprep.subr.mxu0 0.0
        %6605 = vmatpush1.msra.mxu0 0.0
        %6606 = vmatprep.subr.mxu0 0.0
        %6607 = vmatpush1.msra.mxu0 0.0
        %6608 = vmatprep.subr.mxu0 0.0
        %6609 = vmatpush1.msra.mxu0 0.0
        %6610 = vmatprep.subr.mxu0 0.0
        %6611 = vmatpush1.msra.mxu0 0.0
        %6612 = vmatprep.subr.mxu0 0.0
        %6613 = vmatpush1.msra.mxu0 0.0
        %6614 = vmatprep.subr.mxu0 0.0
        %6615 = vmatpush1.msra.mxu0 0.0
        %6616 = vmatprep.subr.mxu0 0.0
        %6617 = vmatpush1.msra.mxu0 0.0
        %6618 = vmatprep.subr.mxu0 0.0
        %6619 = vmatpush1.msra.mxu0 0.0
        %6620 = vmatprep.subr.mxu0 0.0
        %6621 = vmatpush1.msra.mxu0 0.0
        %6622 = vmatprep.subr.mxu0 0.0
        %6623 = vmatpush1.msra.mxu0 0.0
        %6624 = vmatprep.subr.mxu0 0.0
        %6625 = vmatpush1.msra.mxu0 0.0
        %6626 = vmatprep.subr.mxu0 0.0
        %6627 = vmatpush1.msra.mxu0 0.0
        %6628 = vmatprep.subr.mxu0 0.0
        %6629 = vmatpush1.msra.mxu0 0.0
        %6630 = vmatprep.subr.mxu0 0.0
        %6631 = vmatpush1.msra.mxu0 0.0
        %6632 = vmatprep.subr.mxu0 0.0
        %6633 = vmatpush1.msra.mxu0 0.0
        %6634 = vmatprep.subr.mxu0 0.0
        %6635 = vmatpush1.msra.mxu0 0.0
        %6636 = vmatprep.subr.mxu0 0.0
        %6637 = vmatpush1.msra.mxu0 0.0
        %6638 = vmatprep.subr.mxu0 0.0
        %6639 = vmatpush1.msra.mxu0 0.0
        %6640 = vmatprep.subr.mxu0 0.0
        %6641 = vmatpush1.msra.mxu0 0.0
        %6642 = vmatprep.subr.mxu0 0.0
        %6643 = vmatpush1.msra.mxu0 0.0
        %6644 = vmatprep.subr.mxu0 0.0
        %6645 = vmatpush1.msra.mxu0 0.0
        %6646 = vmatprep.subr.mxu0 0.0
        %6647 = vmatpush1.msra.mxu0 0.0
        %6648 = vmatprep.subr.mxu0 0.0
        %6649 = vmatpush1.msra.mxu0 0.0
        %6650 = vmatprep.subr.mxu0 0.0
        %6651 = vmatpush1.msra.mxu0 0.0
        %6652 = vmatprep.subr.mxu0 0.0
        %6653 = vmatpush1.msra.mxu0 0.0
        %6654 = vmatprep.mubr.f32.mxu0 0.0
        %v6655 = vand.u32 %v675, 4294901760
        %6656 = vmatmul.mubr.f32.gmra.mrb[0].mxu0 %v6655
        %v6657 = vpop.f32.mrb[0].mxu0
        %v6658 = vadd.f32 %v6581, %v6657
        %v6659 = vpop.f32.mrb[0].mxu0
        %6660 = vdwg.mxu0
        %6661 = vmatprep.subr.mxu0 0.0
        %v6662 = vand.u32 %v6273, 4294901760
        %6663 = vmatpush1.msra.mxu0 %v6662
        %6664 = vmatprep.subr.mxu0 0.0
        %v6665 = vand.u32 %v6274, 4294901760
        %6666 = vmatpush1.msra.mxu0 %v6665
        %6667 = vmatprep.subr.mxu0 0.0
        %6668 = vmatpush1.msra.mxu0 0.0
        %6669 = vmatprep.subr.mxu0 0.0
        %6670 = vmatpush1.msra.mxu0 0.0
        %6671 = vmatprep.subr.mxu0 0.0
        %6672 = vmatpush1.msra.mxu0 0.0
        %6673 = vmatprep.subr.mxu0 0.0
        %6674 = vmatpush1.msra.mxu0 0.0
        %6675 = vmatprep.subr.mxu0 0.0
        %6676 = vmatpush1.msra.mxu0 0.0
        %6677 = vmatprep.subr.mxu0 0.0
        %6678 = vmatpush1.msra.mxu0 0.0
        %6679 = vmatprep.subr.mxu0 0.0
        %6680 = vmatpush1.msra.mxu0 0.0
        %6681 = vmatprep.subr.mxu0 0.0
        %6682 = vmatpush1.msra.mxu0 0.0
        %6683 = vmatprep.subr.mxu0 0.0
        %6684 = vmatpush1.msra.mxu0 0.0
        %6685 = vmatprep.subr.mxu0 0.0
        %6686 = vmatpush1.msra.mxu0 0.0
        %6687 = vmatprep.subr.mxu0 0.0
        %6688 = vmatpush1.msra.mxu0 0.0
        %6689 = vmatprep.subr.mxu0 0.0
        %6690 = vmatpush1.msra.mxu0 0.0
        %6691 = vmatprep.subr.mxu0 0.0
        %6692 = vmatpush1.msra.mxu0 0.0
        %6693 = vmatprep.subr.mxu0 0.0
        %6694 = vmatpush1.msra.mxu0 0.0
        %6695 = vmatprep.subr.mxu0 0.0
        %6696 = vmatpush1.msra.mxu0 0.0
        %6697 = vmatprep.subr.mxu0 0.0
        %6698 = vmatpush1.msra.mxu0 0.0
        %6699 = vmatprep.subr.mxu0 0.0
        %6700 = vmatpush1.msra.mxu0 0.0
        %6701 = vmatprep.subr.mxu0 0.0
        %6702 = vmatpush1.msra.mxu0 0.0
        %6703 = vmatprep.subr.mxu0 0.0
        %6704 = vmatpush1.msra.mxu0 0.0
        %6705 = vmatprep.subr.mxu0 0.0
        %6706 = vmatpush1.msra.mxu0 0.0
        %6707 = vmatprep.subr.mxu0 0.0
        %6708 = vmatpush1.msra.mxu0 0.0
        %6709 = vmatprep.subr.mxu0 0.0
        %6710 = vmatpush1.msra.mxu0 0.0
        %6711 = vmatprep.subr.mxu0 0.0
        %6712 = vmatpush1.msra.mxu0 0.0
        %6713 = vmatprep.subr.mxu0 0.0
        %6714 = vmatpush1.msra.mxu0 0.0
        %6715 = vmatprep.subr.mxu0 0.0
        %6716 = vmatpush1.msra.mxu0 0.0
        %6717 = vmatprep.subr.mxu0 0.0
        %6718 = vmatpush1.msra.mxu0 0.0
        %6719 = vmatprep.subr.mxu0 0.0
        %6720 = vmatpush1.msra.mxu0 0.0
        %6721 = vmatprep.subr.mxu0 0.0
        %6722 = vmatpush1.msra.mxu0 0.0
        %6723 = vmatprep.subr.mxu0 0.0
        %6724 = vmatpush1.msra.mxu0 0.0
        %6725 = vmatprep.subr.mxu0 0.0
        %6726 = vmatpush1.msra.mxu0 0.0
        %6727 = vmatprep.mubr.f32.mxu0 0.0
        %v6728 = vand.u32 %v675, 4294901760
        %6729 = vmatmul.mubr.f32.gmra.mrb[0].mxu0 %v6728
        %v6730 = vpop.f32.mrb[0].mxu0
        %v6731 = vadd.f32 %v6658, %v6730
        %v6732 = vpop.f32.mrb[0].mxu0
        %6733 = vdwg.mxu0
        %v6735 = vsel %vm673, %v6731, 0
        %6737 = vmatprep.subr.mxu0 0.0
        %v6738 = vand.u32 %v661, 4294901760
        %6739 = vmatpush1.msra.mxu0 %v6738
        %6740 = vmatprep.subr.mxu0 0.0
        %v6741 = vand.u32 %v662, 4294901760
        %6742 = vmatpush1.msra.mxu0 %v6741
        %6743 = vmatprep.subr.mxu0 0.0
        %6744 = vmatpush1.msra.mxu0 0.0
        %6745 = vmatprep.subr.mxu0 0.0
        %6746 = vmatpush1.msra.mxu0 0.0
        %6747 = vmatprep.subr.mxu0 0.0
        %6748 = vmatpush1.msra.mxu0 0.0
        %6749 = vmatprep.subr.mxu0 0.0
        %6750 = vmatpush1.msra.mxu0 0.0
        %6751 = vmatprep.subr.mxu0 0.0
        %6752 = vmatpush1.msra.mxu0 0.0
        %6753 = vmatprep.subr.mxu0 0.0
        %6754 = vmatpush1.msra.mxu0 0.0
        %6755 = vmatprep.subr.mxu0 0.0
        %6756 = vmatpush1.msra.mxu0 0.0
        %6757 = vmatprep.subr.mxu0 0.0
        %6758 = vmatpush1.msra.mxu0 0.0
        %6759 = vmatprep.subr.mxu0 0.0
        %6760 = vmatpush1.msra.mxu0 0.0
        %6761 = vmatprep.subr.mxu0 0.0
        %6762 = vmatpush1.msra.mxu0 0.0
        %6763 = vmatprep.subr.mxu0 0.0
        %6764 = vmatpush1.msra.mxu0 0.0
        %6765 = vmatprep.subr.mxu0 0.0
        %6766 = vmatpush1.msra.mxu0 0.0
        %6767 = vmatprep.subr.mxu0 0.0
        %6768 = vmatpush1.msra.mxu0 0.0
        %6769 = vmatprep.subr.mxu0 0.0
        %6770 = vmatpush1.msra.mxu0 0.0
        %6771 = vmatprep.subr.mxu0 0.0
        %6772 = vmatpush1.msra.mxu0 0.0
        %6773 = vmatprep.subr.mxu0 0.0
        %6774 = vmatpush1.msra.mxu0 0.0
        %6775 = vmatprep.subr.mxu0 0.0
        %6776 = vmatpush1.msra.mxu0 0.0
        %6777 = vmatprep.subr.mxu0 0.0
        %6778 = vmatpush1.msra.mxu0 0.0
        %6779 = vmatprep.subr.mxu0 0.0
        %6780 = vmatpush1.msra.mxu0 0.0
        %6781 = vmatprep.subr.mxu0 0.0
        %6782 = vmatpush1.msra.mxu0 0.0
        %6783 = vmatprep.subr.mxu0 0.0
        %6784 = vmatpush1.msra.mxu0 0.0
        %6785 = vmatprep.subr.mxu0 0.0
        %6786 = vmatpush1.msra.mxu0 0.0
        %6787 = vmatprep.subr.mxu0 0.0
        %6788 = vmatpush1.msra.mxu0 0.0
        %6789 = vmatprep.subr.mxu0 0.0
        %6790 = vmatpush1.msra.mxu0 0.0
        %6791 = vmatprep.subr.mxu0 0.0
        %6792 = vmatpush1.msra.mxu0 0.0
        %6793 = vmatprep.subr.mxu0 0.0
        %6794 = vmatpush1.msra.mxu0 0.0
        %6795 = vmatprep.subr.mxu0 0.0
        %6796 = vmatpush1.msra.mxu0 0.0
        %6797 = vmatprep.subr.mxu0 0.0
        %6798 = vmatpush1.msra.mxu0 0.0
        %6799 = vmatprep.subr.mxu0 0.0
        %6800 = vmatpush1.msra.mxu0 0.0
        %6801 = vmatprep.subr.mxu0 0.0
        %6802 = vmatpush1.msra.mxu0 0.0
        %6803 = vmatprep.mubr.f32.mxu0 0.0
        %v6804 = vand.u32 %v6735, 4294901760
        %v6805 = vsub.f32 %v6735, %v6804
        %v6806 = vand.u32 %v6805, 4294901760
        %v6807 = vsub.f32 %v6805, %v6806
        %v6808 = vand.u32 %v6807, 4294901760
        %6809 = vmatmul.mubr.f32.gmra.mrb[0].mxu0 %v6808
        %v6810 = vpop.f32.mrb[0].mxu0
        %v6811 = vadd.f32 0.0, %v6810
        %v6812 = vpop.f32.mrb[0].mxu0
        %6813 = vdwg.mxu0
        %6814 = vmatprep.subr.mxu0 0.0
        %v6815 = vand.u32 %v661, 4294901760
        %v6816 = vsub.f32 %v661, %v6815
        %v6817 = vand.u32 %v6816, 4294901760
        %v6818 = vsub.f32 %v6816, %v6817
        %v6819 = vand.u32 %v6818, 4294901760
        %6820 = vmatpush1.msra.mxu0 %v6819
        %6821 = vmatprep.subr.mxu0 0.0
        %v6822 = vand.u32 %v662, 4294901760
        %v6823 = vsub.f32 %v662, %v6822
        %v6824 = vand.u32 %v6823, 4294901760
        %v6825 = vsub.f32 %v6823, %v6824
        %v6826 = vand.u32 %v6825, 4294901760
        %6827 = vmatpush1.msra.mxu0 %v6826
        %6828 = vmatprep.subr.mxu0 0.0
        %6829 = vmatpush1.msra.mxu0 0.0
        %6830 = vmatprep.subr.mxu0 0.0
        %6831 = vmatpush1.msra.mxu0 0.0
        %6832 = vmatprep.subr.mxu0 0.0
        %6833 = vmatpush1.msra.mxu0 0.0
        %6834 = vmatprep.subr.mxu0 0.0
        %6835 = vmatpush1.msra.mxu0 0.0
        %6836 = vmatprep.subr.mxu0 0.0
        %6837 = vmatpush1.msra.mxu0 0.0
        %6838 = vmatprep.subr.mxu0 0.0
        %6839 = vmatpush1.msra.mxu0 0.0
        %6840 = vmatprep.subr.mxu0 0.0
        %6841 = vmatpush1.msra.mxu0 0.0
        %6842 = vmatprep.subr.mxu0 0.0
        %6843 = vmatpush1.msra.mxu0 0.0
        %6844 = vmatprep.subr.mxu0 0.0
        %6845 = vmatpush1.msra.mxu0 0.0
        %6846 = vmatprep.subr.mxu0 0.0
        %6847 = vmatpush1.msra.mxu0 0.0
        %6848 = vmatprep.subr.mxu0 0.0
        %6849 = vmatpush1.msra.mxu0 0.0
        %6850 = vmatprep.subr.mxu0 0.0
        %6851 = vmatpush1.msra.mxu0 0.0
        %6852 = vmatprep.subr.mxu0 0.0
        %6853 = vmatpush1.msra.mxu0 0.0
        %6854 = vmatprep.subr.mxu0 0.0
        %6855 = vmatpush1.msra.mxu0 0.0
        %6856 = vmatprep.subr.mxu0 0.0
        %6857 = vmatpush1.msra.mxu0 0.0
        %6858 = vmatprep.subr.mxu0 0.0
        %6859 = vmatpush1.msra.mxu0 0.0
        %6860 = vmatprep.subr.mxu0 0.0
        %6861 = vmatpush1.msra.mxu0 0.0
        %6862 = vmatprep.subr.mxu0 0.0
        %6863 = vmatpush1.msra.mxu0 0.0
        %6864 = vmatprep.subr.mxu0 0.0
        %6865 = vmatpush1.msra.mxu0 0.0
        %6866 = vmatprep.subr.mxu0 0.0
        %6867 = vmatpush1.msra.mxu0 0.0
        %6868 = vmatprep.subr.mxu0 0.0
        %6869 = vmatpush1.msra.mxu0 0.0
        %6870 = vmatprep.subr.mxu0 0.0
        %6871 = vmatpush1.msra.mxu0 0.0
        %6872 = vmatprep.subr.mxu0 0.0
        %6873 = vmatpush1.msra.mxu0 0.0
        %6874 = vmatprep.subr.mxu0 0.0
        %6875 = vmatpush1.msra.mxu0 0.0
        %6876 = vmatprep.subr.mxu0 0.0
        %6877 = vmatpush1.msra.mxu0 0.0
        %6878 = vmatprep.subr.mxu0 0.0
        %6879 = vmatpush1.msra.mxu0 0.0
        %6880 = vmatprep.subr.mxu0 0.0
        %6881 = vmatpush1.msra.mxu0 0.0
        %6882 = vmatprep.subr.mxu0 0.0
        %6883 = vmatpush1.msra.mxu0 0.0
        %6884 = vmatprep.subr.mxu0 0.0
        %6885 = vmatpush1.msra.mxu0 0.0
        %6886 = vmatprep.subr.mxu0 0.0
        %6887 = vmatpush1.msra.mxu0 0.0
        %6888 = vmatprep.mubr.f32.mxu0 0.0
        %v6889 = vand.u32 %v6735, 4294901760
        %6890 = vmatmul.mubr.f32.gmra.mrb[0].mxu0 %v6889
        %v6891 = vpop.f32.mrb[0].mxu0
        %v6892 = vadd.f32 %v6811, %v6891
        %v6893 = vpop.f32.mrb[0].mxu0
        %6894 = vdwg.mxu0
        %6895 = vmatprep.subr.mxu0 0.0
        %v6896 = vand.u32 %v661, 4294901760
        %v6897 = vsub.f32 %v661, %v6896
        %6898 = vmatpush1.msra.mxu0 %v6897
        %6899 = vmatprep.subr.mxu0 0.0
        %v6900 = vand.u32 %v662, 4294901760
        %v6901 = vsub.f32 %v662, %v6900
        %6902 = vmatpush1.msra.mxu0 %v6901
        %6903 = vmatprep.subr.mxu0 0.0
        %6904 = vmatpush1.msra.mxu0 0.0
        %6905 = vmatprep.subr.mxu0 0.0
        %6906 = vmatpush1.msra.mxu0 0.0
        %6907 = vmatprep.subr.mxu0 0.0
        %6908 = vmatpush1.msra.mxu0 0.0
        %6909 = vmatprep.subr.mxu0 0.0
        %6910 = vmatpush1.msra.mxu0 0.0
        %6911 = vmatprep.subr.mxu0 0.0
        %6912 = vmatpush1.msra.mxu0 0.0
        %6913 = vmatprep.subr.mxu0 0.0
        %6914 = vmatpush1.msra.mxu0 0.0
        %6915 = vmatprep.subr.mxu0 0.0
        %6916 = vmatpush1.msra.mxu0 0.0
        %6917 = vmatprep.subr.mxu0 0.0
        %6918 = vmatpush1.msra.mxu0 0.0
        %6919 = vmatprep.subr.mxu0 0.0
        %6920 = vmatpush1.msra.mxu0 0.0
        %6921 = vmatprep.subr.mxu0 0.0
        %6922 = vmatpush1.msra.mxu0 0.0
        %6923 = vmatprep.subr.mxu0 0.0
        %6924 = vmatpush1.msra.mxu0 0.0
        %6925 = vmatprep.subr.mxu0 0.0
        %6926 = vmatpush1.msra.mxu0 0.0
        %6927 = vmatprep.subr.mxu0 0.0
        %6928 = vmatpush1.msra.mxu0 0.0
        %6929 = vmatprep.subr.mxu0 0.0
        %6930 = vmatpush1.msra.mxu0 0.0
        %6931 = vmatprep.subr.mxu0 0.0
        %6932 = vmatpush1.msra.mxu0 0.0
        %6933 = vmatprep.subr.mxu0 0.0
        %6934 = vmatpush1.msra.mxu0 0.0
        %6935 = vmatprep.subr.mxu0 0.0
        %6936 = vmatpush1.msra.mxu0 0.0
        %6937 = vmatprep.subr.mxu0 0.0
        %6938 = vmatpush1.msra.mxu0 0.0
        %6939 = vmatprep.subr.mxu0 0.0
        %6940 = vmatpush1.msra.mxu0 0.0
        %6941 = vmatprep.subr.mxu0 0.0
        %6942 = vmatpush1.msra.mxu0 0.0
        %6943 = vmatprep.subr.mxu0 0.0
        %6944 = vmatpush1.msra.mxu0 0.0
        %6945 = vmatprep.subr.mxu0 0.0
        %6946 = vmatpush1.msra.mxu0 0.0
        %6947 = vmatprep.subr.mxu0 0.0
        %6948 = vmatpush1.msra.mxu0 0.0
        %6949 = vmatprep.subr.mxu0 0.0
        %6950 = vmatpush1.msra.mxu0 0.0
        %6951 = vmatprep.subr.mxu0 0.0
        %6952 = vmatpush1.msra.mxu0 0.0
        %6953 = vmatprep.subr.mxu0 0.0
        %6954 = vmatpush1.msra.mxu0 0.0
        %6955 = vmatprep.subr.mxu0 0.0
        %6956 = vmatpush1.msra.mxu0 0.0
        %6957 = vmatprep.subr.mxu0 0.0
        %6958 = vmatpush1.msra.mxu0 0.0
        %6959 = vmatprep.subr.mxu0 0.0
        %6960 = vmatpush1.msra.mxu0 0.0
        %6961 = vmatprep.subr.mxu0 0.0
        %6962 = vmatpush1.msra.mxu0 0.0
        %6963 = vmatprep.mubr.f32.mxu0 0.0
        %v6964 = vand.u32 %v6735, 4294901760
        %v6965 = vsub.f32 %v6735, %v6964
        %6966 = vmatmul.mubr.f32.gmra.mrb[0].mxu0 %v6965
        %v6967 = vpop.f32.mrb[0].mxu0
        %v6968 = vadd.f32 %v6892, %v6967
        %v6969 = vpop.f32.mrb[0].mxu0
        %6970 = vdwg.mxu0
        %6971 = vmatprep.subr.mxu0 0.0
        %v6972 = vand.u32 %v661, 4294901760
        %6973 = vmatpush1.msra.mxu0 %v6972
        %6974 = vmatprep.subr.mxu0 0.0
        %v6975 = vand.u32 %v662, 4294901760
        %6976 = vmatpush1.msra.mxu0 %v6975
        %6977 = vmatprep.subr.mxu0 0.0
        %6978 = vmatpush1.msra.mxu0 0.0
        %6979 = vmatprep.subr.mxu0 0.0
        %6980 = vmatpush1.msra.mxu0 0.0
        %6981 = vmatprep.subr.mxu0 0.0
        %6982 = vmatpush1.msra.mxu0 0.0
        %6983 = vmatprep.subr.mxu0 0.0
        %6984 = vmatpush1.msra.mxu0 0.0
        %6985 = vmatprep.subr.mxu0 0.0
        %6986 = vmatpush1.msra.mxu0 0.0
        %6987 = vmatprep.subr.mxu0 0.0
        %6988 = vmatpush1.msra.mxu0 0.0
        %6989 = vmatprep.subr.mxu0 0.0
        %6990 = vmatpush1.msra.mxu0 0.0
        %6991 = vmatprep.subr.mxu0 0.0
        %6992 = vmatpush1.msra.mxu0 0.0
        %6993 = vmatprep.subr.mxu0 0.0
        %6994 = vmatpush1.msra.mxu0 0.0
        %6995 = vmatprep.subr.mxu0 0.0
        %6996 = vmatpush1.msra.mxu0 0.0
        %6997 = vmatprep.subr.mxu0 0.0
        %6998 = vmatpush1.msra.mxu0 0.0
        %6999 = vmatprep.subr.mxu0 0.0
        %7000 = vmatpush1.msra.mxu0 0.0
        %7001 = vmatprep.subr.mxu0 0.0
        %7002 = vmatpush1.msra.mxu0 0.0
        %7003 = vmatprep.subr.mxu0 0.0
        %7004 = vmatpush1.msra.mxu0 0.0
        %7005 = vmatprep.subr.mxu0 0.0
        %7006 = vmatpush1.msra.mxu0 0.0
        %7007 = vmatprep.subr.mxu0 0.0
        %7008 = vmatpush1.msra.mxu0 0.0
        %7009 = vmatprep.subr.mxu0 0.0
        %7010 = vmatpush1.msra.mxu0 0.0
        %7011 = vmatprep.subr.mxu0 0.0
        %7012 = vmatpush1.msra.mxu0 0.0
        %7013 = vmatprep.subr.mxu0 0.0
        %7014 = vmatpush1.msra.mxu0 0.0
        %7015 = vmatprep.subr.mxu0 0.0
        %7016 = vmatpush1.msra.mxu0 0.0
        %7017 = vmatprep.subr.mxu0 0.0
        %7018 = vmatpush1.msra.mxu0 0.0
        %7019 = vmatprep.subr.mxu0 0.0
        %7020 = vmatpush1.msra.mxu0 0.0
        %7021 = vmatprep.subr.mxu0 0.0
        %7022 = vmatpush1.msra.mxu0 0.0
        %7023 = vmatprep.subr.mxu0 0.0
        %7024 = vmatpush1.msra.mxu0 0.0
        %7025 = vmatprep.subr.mxu0 0.0
        %7026 = vmatpush1.msra.mxu0 0.0
        %7027 = vmatprep.subr.mxu0 0.0
        %7028 = vmatpush1.msra.mxu0 0.0
        %7029 = vmatprep.subr.mxu0 0.0
        %7030 = vmatpush1.msra.mxu0 0.0
        %7031 = vmatprep.subr.mxu0 0.0
        %7032 = vmatpush1.msra.mxu0 0.0
        %7033 = vmatprep.subr.mxu0 0.0
        %7034 = vmatpush1.msra.mxu0 0.0
        %7035 = vmatprep.subr.mxu0 0.0
        %7036 = vmatpush1.msra.mxu0 0.0
        %7037 = vmatprep.mubr.f32.mxu0 0.0
        %v7038 = vand.u32 %v6735, 4294901760
        %v7039 = vsub.f32 %v6735, %v7038
        %v7040 = vand.u32 %v7039, 4294901760
        %7041 = vmatmul.mubr.f32.gmra.mrb[0].mxu0 %v7040
        %v7042 = vpop.f32.mrb[0].mxu0
        %v7043 = vadd.f32 %v6968, %v7042
        %v7044 = vpop.f32.mrb[0].mxu0
        %7045 = vdwg.mxu0
        %7046 = vmatprep.subr.mxu0 0.0
        %v7047 = vand.u32 %v661, 4294901760
        %v7048 = vsub.f32 %v661, %v7047
        %v7049 = vand.u32 %v7048, 4294901760
        %7050 = vmatpush1.msra.mxu0 %v7049
        %7051 = vmatprep.subr.mxu0 0.0
        %v7052 = vand.u32 %v662, 4294901760
        %v7053 = vsub.f32 %v662, %v7052
        %v7054 = vand.u32 %v7053, 4294901760
        %7055 = vmatpush1.msra.mxu0 %v7054
        %7056 = vmatprep.subr.mxu0 0.0
        %7057 = vmatpush1.msra.mxu0 0.0
        %7058 = vmatprep.subr.mxu0 0.0
        %7059 = vmatpush1.msra.mxu0 0.0
        %7060 = vmatprep.subr.mxu0 0.0
        %7061 = vmatpush1.msra.mxu0 0.0
        %7062 = vmatprep.subr.mxu0 0.0
        %7063 = vmatpush1.msra.mxu0 0.0
        %7064 = vmatprep.subr.mxu0 0.0
        %7065 = vmatpush1.msra.mxu0 0.0
        %7066 = vmatprep.subr.mxu0 0.0
        %7067 = vmatpush1.msra.mxu0 0.0
        %7068 = vmatprep.subr.mxu0 0.0
        %7069 = vmatpush1.msra.mxu0 0.0
        %7070 = vmatprep.subr.mxu0 0.0
        %7071 = vmatpush1.msra.mxu0 0.0
        %7072 = vmatprep.subr.mxu0 0.0
        %7073 = vmatpush1.msra.mxu0 0.0
        %7074 = vmatprep.subr.mxu0 0.0
        %7075 = vmatpush1.msra.mxu0 0.0
        %7076 = vmatprep.subr.mxu0 0.0
        %7077 = vmatpush1.msra.mxu0 0.0
        %7078 = vmatprep.subr.mxu0 0.0
        %7079 = vmatpush1.msra.mxu0 0.0
        %7080 = vmatprep.subr.mxu0 0.0
        %7081 = vmatpush1.msra.mxu0 0.0
        %7082 = vmatprep.subr.mxu0 0.0
        %7083 = vmatpush1.msra.mxu0 0.0
        %7084 = vmatprep.subr.mxu0 0.0
        %7085 = vmatpush1.msra.mxu0 0.0
        %7086 = vmatprep.subr.mxu0 0.0
        %7087 = vmatpush1.msra.mxu0 0.0
        %7088 = vmatprep.subr.mxu0 0.0
        %7089 = vmatpush1.msra.mxu0 0.0
        %7090 = vmatprep.subr.mxu0 0.0
        %7091 = vmatpush1.msra.mxu0 0.0
        %7092 = vmatprep.subr.mxu0 0.0
        %7093 = vmatpush1.msra.mxu0 0.0
        %7094 = vmatprep.subr.mxu0 0.0
        %7095 = vmatpush1.msra.mxu0 0.0
        %7096 = vmatprep.subr.mxu0 0.0
        %7097 = vmatpush1.msra.mxu0 0.0
        %7098 = vmatprep.subr.mxu0 0.0
        %7099 = vmatpush1.msra.mxu0 0.0
        %7100 = vmatprep.subr.mxu0 0.0
        %7101 = vmatpush1.msra.mxu0 0.0
        %7102 = vmatprep.subr.mxu0 0.0
        %7103 = vmatpush1.msra.mxu0 0.0
        %7104 = vmatprep.subr.mxu0 0.0
        %7105 = vmatpush1.msra.mxu0 0.0
        %7106 = vmatprep.subr.mxu0 0.0
        %7107 = vmatpush1.msra.mxu0 0.0
        %7108 = vmatprep.subr.mxu0 0.0
        %7109 = vmatpush1.msra.mxu0 0.0
        %7110 = vmatprep.subr.mxu0 0.0
        %7111 = vmatpush1.msra.mxu0 0.0
        %7112 = vmatprep.subr.mxu0 0.0
        %7113 = vmatpush1.msra.mxu0 0.0
        %7114 = vmatprep.subr.mxu0 0.0
        %7115 = vmatpush1.msra.mxu0 0.0
        %7116 = vmatprep.mubr.f32.mxu0 0.0
        %v7117 = vand.u32 %v6735, 4294901760
        %7118 = vmatmul.mubr.f32.gmra.mrb[0].mxu0 %v7117
        %v7119 = vpop.f32.mrb[0].mxu0
        %v7120 = vadd.f32 %v7043, %v7119
        %v7121 = vpop.f32.mrb[0].mxu0
        %7122 = vdwg.mxu0
        %7123 = vmatprep.subr.mxu0 0.0
        %v7124 = vand.u32 %v661, 4294901760
        %7125 = vmatpush1.msra.mxu0 %v7124
        %7126 = vmatprep.subr.mxu0 0.0
        %v7127 = vand.u32 %v662, 4294901760
        %7128 = vmatpush1.msra.mxu0 %v7127
        %7129 = vmatprep.subr.mxu0 0.0
        %7130 = vmatpush1.msra.mxu0 0.0
        %7131 = vmatprep.subr.mxu0 0.0
        %7132 = vmatpush1.msra.mxu0 0.0
        %7133 = vmatprep.subr.mxu0 0.0
        %7134 = vmatpush1.msra.mxu0 0.0
        %7135 = vmatprep.subr.mxu0 0.0
        %7136 = vmatpush1.msra.mxu0 0.0
        %7137 = vmatprep.subr.mxu0 0.0
        %7138 = vmatpush1.msra.mxu0 0.0
        %7139 = vmatprep.subr.mxu0 0.0
        %7140 = vmatpush1.msra.mxu0 0.0
        %7141 = vmatprep.subr.mxu0 0.0
        %7142 = vmatpush1.msra.mxu0 0.0
        %7143 = vmatprep.subr.mxu0 0.0
        %7144 = vmatpush1.msra.mxu0 0.0
        %7145 = vmatprep.subr.mxu0 0.0
        %7146 = vmatpush1.msra.mxu0 0.0
        %7147 = vmatprep.subr.mxu0 0.0
        %7148 = vmatpush1.msra.mxu0 0.0
        %7149 = vmatprep.subr.mxu0 0.0
        %7150 = vmatpush1.msra.mxu0 0.0
        %7151 = vmatprep.subr.mxu0 0.0
        %7152 = vmatpush1.msra.mxu0 0.0
        %7153 = vmatprep.subr.mxu0 0.0
        %7154 = vmatpush1.msra.mxu0 0.0
        %7155 = vmatprep.subr.mxu0 0.0
        %7156 = vmatpush1.msra.mxu0 0.0
        %7157 = vmatprep.subr.mxu0 0.0
        %7158 = vmatpush1.msra.mxu0 0.0
        %7159 = vmatprep.subr.mxu0 0.0
        %7160 = vmatpush1.msra.mxu0 0.0
        %7161 = vmatprep.subr.mxu0 0.0
        %7162 = vmatpush1.msra.mxu0 0.0
        %7163 = vmatprep.subr.mxu0 0.0
        %7164 = vmatpush1.msra.mxu0 0.0
        %7165 = vmatprep.subr.mxu0 0.0
        %7166 = vmatpush1.msra.mxu0 0.0
        %7167 = vmatprep.subr.mxu0 0.0
        %7168 = vmatpush1.msra.mxu0 0.0
        %7169 = vmatprep.subr.mxu0 0.0
        %7170 = vmatpush1.msra.mxu0 0.0
        %7171 = vmatprep.subr.mxu0 0.0
        %7172 = vmatpush1.msra.mxu0 0.0
        %7173 = vmatprep.subr.mxu0 0.0
        %7174 = vmatpush1.msra.mxu0 0.0
        %7175 = vmatprep.subr.mxu0 0.0
        %7176 = vmatpush1.msra.mxu0 0.0
        %7177 = vmatprep.subr.mxu0 0.0
        %7178 = vmatpush1.msra.mxu0 0.0
        %7179 = vmatprep.subr.mxu0 0.0
        %7180 = vmatpush1.msra.mxu0 0.0
        %7181 = vmatprep.subr.mxu0 0.0
        %7182 = vmatpush1.msra.mxu0 0.0
        %7183 = vmatprep.subr.mxu0 0.0
        %7184 = vmatpush1.msra.mxu0 0.0
        %7185 = vmatprep.subr.mxu0 0.0
        %7186 = vmatpush1.msra.mxu0 0.0
        %7187 = vmatprep.subr.mxu0 0.0
        %7188 = vmatpush1.msra.mxu0 0.0
        %7189 = vmatprep.mubr.f32.mxu0 0.0
        %v7190 = vand.u32 %v6735, 4294901760
        %7191 = vmatmul.mubr.f32.gmra.mrb[0].mxu0 %v7190
        %v7192 = vpop.f32.mrb[0].mxu0
        %v7193 = vadd.f32 %v7120, %v7192
        %v7194 = vpop.f32.mrb[0].mxu0
        %7195 = vdwg.mxu0
        %s7196 = scalar_lea.vmem %s384, 12
        %7197 = vst.msk [vmem:[%s7196] sm:$0x3] %vm1598, %v7193
        %vm7198 = vcmp.eq.f32.partialorder %v646, 7.0
        %vm7199 = vcmp.eq.f32.partialorder %v647, 7.0
        %v7200 = vsel %vm7198, %v532, 0.0
        %v7201 = vsel %vm7199, %v533, 0.0
        %vm7202 = vcmp.eq.f32.partialorder %v658, 7.0
        %vm7203 = vcmp.eq.f32.partialorder %v659, 7.0
        %v7204 = vsel %vm7202, %v534, 0.0
        %v7205 = vsel %vm7203, %v535, 0.0
        %v7206 = vadd.f32 %v7200, %v7204
        %v7207 = vadd.f32 %v7201, %v7205
        %7208 = vmatprep.subr.mxu0 0.0
        %v7209 = vand.u32 %v7206, 4294901760
        %7210 = vmatpush1.msra.mxu0 %v7209
        %7211 = vmatprep.subr.mxu0 0.0
        %v7212 = vand.u32 %v7207, 4294901760
        %7213 = vmatpush1.msra.mxu0 %v7212
        %7214 = vmatprep.subr.mxu0 0.0
        %7215 = vmatpush1.msra.mxu0 0.0
        %7216 = vmatprep.subr.mxu0 0.0
        %7217 = vmatpush1.msra.mxu0 0.0
        %7218 = vmatprep.subr.mxu0 0.0
        %7219 = vmatpush1.msra.mxu0 0.0
        %7220 = vmatprep.subr.mxu0 0.0
        %7221 = vmatpush1.msra.mxu0 0.0
        %7222 = vmatprep.subr.mxu0 0.0
        %7223 = vmatpush1.msra.mxu0 0.0
        %7224 = vmatprep.subr.mxu0 0.0
        %7225 = vmatpush1.msra.mxu0 0.0
        %7226 = vmatprep.subr.mxu0 0.0
        %7227 = vmatpush1.msra.mxu0 0.0
        %7228 = vmatprep.subr.mxu0 0.0
        %7229 = vmatpush1.msra.mxu0 0.0
        %7230 = vmatprep.subr.mxu0 0.0
        %7231 = vmatpush1.msra.mxu0 0.0
        %7232 = vmatprep.subr.mxu0 0.0
        %7233 = vmatpush1.msra.mxu0 0.0
        %7234 = vmatprep.subr.mxu0 0.0
        %7235 = vmatpush1.msra.mxu0 0.0
        %7236 = vmatprep.subr.mxu0 0.0
        %7237 = vmatpush1.msra.mxu0 0.0
        %7238 = vmatprep.subr.mxu0 0.0
        %7239 = vmatpush1.msra.mxu0 0.0
        %7240 = vmatprep.subr.mxu0 0.0
        %7241 = vmatpush1.msra.mxu0 0.0
        %7242 = vmatprep.subr.mxu0 0.0
        %7243 = vmatpush1.msra.mxu0 0.0
        %7244 = vmatprep.subr.mxu0 0.0
        %7245 = vmatpush1.msra.mxu0 0.0
        %7246 = vmatprep.subr.mxu0 0.0
        %7247 = vmatpush1.msra.mxu0 0.0
        %7248 = vmatprep.subr.mxu0 0.0
        %7249 = vmatpush1.msra.mxu0 0.0
        %7250 = vmatprep.subr.mxu0 0.0
        %7251 = vmatpush1.msra.mxu0 0.0
        %7252 = vmatprep.subr.mxu0 0.0
        %7253 = vmatpush1.msra.mxu0 0.0
        %7254 = vmatprep.subr.mxu0 0.0
        %7255 = vmatpush1.msra.mxu0 0.0
        %7256 = vmatprep.subr.mxu0 0.0
        %7257 = vmatpush1.msra.mxu0 0.0
        %7258 = vmatprep.subr.mxu0 0.0
        %7259 = vmatpush1.msra.mxu0 0.0
        %7260 = vmatprep.subr.mxu0 0.0
        %7261 = vmatpush1.msra.mxu0 0.0
        %7262 = vmatprep.subr.mxu0 0.0
        %7263 = vmatpush1.msra.mxu0 0.0
        %7264 = vmatprep.subr.mxu0 0.0
        %7265 = vmatpush1.msra.mxu0 0.0
        %7266 = vmatprep.subr.mxu0 0.0
        %7267 = vmatpush1.msra.mxu0 0.0
        %7268 = vmatprep.subr.mxu0 0.0
        %7269 = vmatpush1.msra.mxu0 0.0
        %7270 = vmatprep.subr.mxu0 0.0
        %7271 = vmatpush1.msra.mxu0 0.0
        %7272 = vmatprep.subr.mxu0 0.0
        %7273 = vmatpush1.msra.mxu0 0.0
        %7274 = vmatprep.mubr.f32.mxu0 0.0
        %v7275 = vand.u32 %v675, 4294901760
        %v7276 = vsub.f32 %v675, %v7275
        %v7277 = vand.u32 %v7276, 4294901760
        %v7278 = vsub.f32 %v7276, %v7277
        %v7279 = vand.u32 %v7278, 4294901760
        %7280 = vmatmul.mubr.f32.gmra.mrb[0].mxu0 %v7279
        %v7281 = vpop.f32.mrb[0].mxu0
        %v7282 = vadd.f32 0.0, %v7281
        %v7283 = vpop.f32.mrb[0].mxu0
        %7284 = vdwg.mxu0
        %7285 = vmatprep.subr.mxu0 0.0
        %v7286 = vand.u32 %v7206, 4294901760
        %v7287 = vsub.f32 %v7206, %v7286
        %v7288 = vand.u32 %v7287, 4294901760
        %v7289 = vsub.f32 %v7287, %v7288
        %v7290 = vand.u32 %v7289, 4294901760
        %7291 = vmatpush1.msra.mxu0 %v7290
        %7292 = vmatprep.subr.mxu0 0.0
        %v7293 = vand.u32 %v7207, 4294901760
        %v7294 = vsub.f32 %v7207, %v7293
        %v7295 = vand.u32 %v7294, 4294901760
        %v7296 = vsub.f32 %v7294, %v7295
        %v7297 = vand.u32 %v7296, 4294901760
        %7298 = vmatpush1.msra.mxu0 %v7297
        %7299 = vmatprep.subr.mxu0 0.0
        %7300 = vmatpush1.msra.mxu0 0.0
        %7301 = vmatprep.subr.mxu0 0.0
        %7302 = vmatpush1.msra.mxu0 0.0
        %7303 = vmatprep.subr.mxu0 0.0
        %7304 = vmatpush1.msra.mxu0 0.0
        %7305 = vmatprep.subr.mxu0 0.0
        %7306 = vmatpush1.msra.mxu0 0.0
        %7307 = vmatprep.subr.mxu0 0.0
        %7308 = vmatpush1.msra.mxu0 0.0
        %7309 = vmatprep.subr.mxu0 0.0
        %7310 = vmatpush1.msra.mxu0 0.0
        %7311 = vmatprep.subr.mxu0 0.0
        %7312 = vmatpush1.msra.mxu0 0.0
        %7313 = vmatprep.subr.mxu0 0.0
        %7314 = vmatpush1.msra.mxu0 0.0
        %7315 = vmatprep.subr.mxu0 0.0
        %7316 = vmatpush1.msra.mxu0 0.0
        %7317 = vmatprep.subr.mxu0 0.0
        %7318 = vmatpush1.msra.mxu0 0.0
        %7319 = vmatprep.subr.mxu0 0.0
        %7320 = vmatpush1.msra.mxu0 0.0
        %7321 = vmatprep.subr.mxu0 0.0
        %7322 = vmatpush1.msra.mxu0 0.0
        %7323 = vmatprep.subr.mxu0 0.0
        %7324 = vmatpush1.msra.mxu0 0.0
        %7325 = vmatprep.subr.mxu0 0.0
        %7326 = vmatpush1.msra.mxu0 0.0
        %7327 = vmatprep.subr.mxu0 0.0
        %7328 = vmatpush1.msra.mxu0 0.0
        %7329 = vmatprep.subr.mxu0 0.0
        %7330 = vmatpush1.msra.mxu0 0.0
        %7331 = vmatprep.subr.mxu0 0.0
        %7332 = vmatpush1.msra.mxu0 0.0
        %7333 = vmatprep.subr.mxu0 0.0
        %7334 = vmatpush1.msra.mxu0 0.0
        %7335 = vmatprep.subr.mxu0 0.0
        %7336 = vmatpush1.msra.mxu0 0.0
        %7337 = vmatprep.subr.mxu0 0.0
        %7338 = vmatpush1.msra.mxu0 0.0
        %7339 = vmatprep.subr.mxu0 0.0
        %7340 = vmatpush1.msra.mxu0 0.0
        %7341 = vmatprep.subr.mxu0 0.0
        %7342 = vmatpush1.msra.mxu0 0.0
        %7343 = vmatprep.subr.mxu0 0.0
        %7344 = vmatpush1.msra.mxu0 0.0
        %7345 = vmatprep.subr.mxu0 0.0
        %7346 = vmatpush1.msra.mxu0 0.0
        %7347 = vmatprep.subr.mxu0 0.0
        %7348 = vmatpush1.msra.mxu0 0.0
        %7349 = vmatprep.subr.mxu0 0.0
        %7350 = vmatpush1.msra.mxu0 0.0
        %7351 = vmatprep.subr.mxu0 0.0
        %7352 = vmatpush1.msra.mxu0 0.0
        %7353 = vmatprep.subr.mxu0 0.0
        %7354 = vmatpush1.msra.mxu0 0.0
        %7355 = vmatprep.subr.mxu0 0.0
        %7356 = vmatpush1.msra.mxu0 0.0
        %7357 = vmatprep.subr.mxu0 0.0
        %7358 = vmatpush1.msra.mxu0 0.0
        %7359 = vmatprep.mubr.f32.mxu0 0.0
        %v7360 = vand.u32 %v675, 4294901760
        %7361 = vmatmul.mubr.f32.gmra.mrb[0].mxu0 %v7360
        %v7362 = vpop.f32.mrb[0].mxu0
        %v7363 = vadd.f32 %v7282, %v7362
        %v7364 = vpop.f32.mrb[0].mxu0
        %7365 = vdwg.mxu0
        %7366 = vmatprep.subr.mxu0 0.0
        %v7367 = vand.u32 %v7206, 4294901760
        %v7368 = vsub.f32 %v7206, %v7367
        %7369 = vmatpush1.msra.mxu0 %v7368
        %7370 = vmatprep.subr.mxu0 0.0
        %v7371 = vand.u32 %v7207, 4294901760
        %v7372 = vsub.f32 %v7207, %v7371
        %7373 = vmatpush1.msra.mxu0 %v7372
        %7374 = vmatprep.subr.mxu0 0.0
        %7375 = vmatpush1.msra.mxu0 0.0
        %7376 = vmatprep.subr.mxu0 0.0
        %7377 = vmatpush1.msra.mxu0 0.0
        %7378 = vmatprep.subr.mxu0 0.0
        %7379 = vmatpush1.msra.mxu0 0.0
        %7380 = vmatprep.subr.mxu0 0.0
        %7381 = vmatpush1.msra.mxu0 0.0
        %7382 = vmatprep.subr.mxu0 0.0
        %7383 = vmatpush1.msra.mxu0 0.0
        %7384 = vmatprep.subr.mxu0 0.0
        %7385 = vmatpush1.msra.mxu0 0.0
        %7386 = vmatprep.subr.mxu0 0.0
        %7387 = vmatpush1.msra.mxu0 0.0
        %7388 = vmatprep.subr.mxu0 0.0
        %7389 = vmatpush1.msra.mxu0 0.0
        %7390 = vmatprep.subr.mxu0 0.0
        %7391 = vmatpush1.msra.mxu0 0.0
        %7392 = vmatprep.subr.mxu0 0.0
        %7393 = vmatpush1.msra.mxu0 0.0
        %7394 = vmatprep.subr.mxu0 0.0
        %7395 = vmatpush1.msra.mxu0 0.0
        %7396 = vmatprep.subr.mxu0 0.0
        %7397 = vmatpush1.msra.mxu0 0.0
        %7398 = vmatprep.subr.mxu0 0.0
        %7399 = vmatpush1.msra.mxu0 0.0
        %7400 = vmatprep.subr.mxu0 0.0
        %7401 = vmatpush1.msra.mxu0 0.0
        %7402 = vmatprep.subr.mxu0 0.0
        %7403 = vmatpush1.msra.mxu0 0.0
        %7404 = vmatprep.subr.mxu0 0.0
        %7405 = vmatpush1.msra.mxu0 0.0
        %7406 = vmatprep.subr.mxu0 0.0
        %7407 = vmatpush1.msra.mxu0 0.0
        %7408 = vmatprep.subr.mxu0 0.0
        %7409 = vmatpush1.msra.mxu0 0.0
        %7410 = vmatprep.subr.mxu0 0.0
        %7411 = vmatpush1.msra.mxu0 0.0
        %7412 = vmatprep.subr.mxu0 0.0
        %7413 = vmatpush1.msra.mxu0 0.0
        %7414 = vmatprep.subr.mxu0 0.0
        %7415 = vmatpush1.msra.mxu0 0.0
        %7416 = vmatprep.subr.mxu0 0.0
        %7417 = vmatpush1.msra.mxu0 0.0
        %7418 = vmatprep.subr.mxu0 0.0
        %7419 = vmatpush1.msra.mxu0 0.0
        %7420 = vmatprep.subr.mxu0 0.0
        %7421 = vmatpush1.msra.mxu0 0.0
        %7422 = vmatprep.subr.mxu0 0.0
        %7423 = vmatpush1.msra.mxu0 0.0
        %7424 = vmatprep.subr.mxu0 0.0
        %7425 = vmatpush1.msra.mxu0 0.0
        %7426 = vmatprep.subr.mxu0 0.0
        %7427 = vmatpush1.msra.mxu0 0.0
        %7428 = vmatprep.subr.mxu0 0.0
        %7429 = vmatpush1.msra.mxu0 0.0
        %7430 = vmatprep.subr.mxu0 0.0
        %7431 = vmatpush1.msra.mxu0 0.0
        %7432 = vmatprep.subr.mxu0 0.0
        %7433 = vmatpush1.msra.mxu0 0.0
        %7434 = vmatprep.mubr.f32.mxu0 0.0
        %v7435 = vand.u32 %v675, 4294901760
        %v7436 = vsub.f32 %v675, %v7435
        %7437 = vmatmul.mubr.f32.gmra.mrb[0].mxu0 %v7436
        %v7438 = vpop.f32.mrb[0].mxu0
        %v7439 = vadd.f32 %v7363, %v7438
        %v7440 = vpop.f32.mrb[0].mxu0
        %7441 = vdwg.mxu0
        %7442 = vmatprep.subr.mxu0 0.0
        %v7443 = vand.u32 %v7206, 4294901760
        %7444 = vmatpush1.msra.mxu0 %v7443
        %7445 = vmatprep.subr.mxu0 0.0
        %v7446 = vand.u32 %v7207, 4294901760
        %7447 = vmatpush1.msra.mxu0 %v7446
        %7448 = vmatprep.subr.mxu0 0.0
        %7449 = vmatpush1.msra.mxu0 0.0
        %7450 = vmatprep.subr.mxu0 0.0
        %7451 = vmatpush1.msra.mxu0 0.0
        %7452 = vmatprep.subr.mxu0 0.0
        %7453 = vmatpush1.msra.mxu0 0.0
        %7454 = vmatprep.subr.mxu0 0.0
        %7455 = vmatpush1.msra.mxu0 0.0
        %7456 = vmatprep.subr.mxu0 0.0
        %7457 = vmatpush1.msra.mxu0 0.0
        %7458 = vmatprep.subr.mxu0 0.0
        %7459 = vmatpush1.msra.mxu0 0.0
        %7460 = vmatprep.subr.mxu0 0.0
        %7461 = vmatpush1.msra.mxu0 0.0
        %7462 = vmatprep.subr.mxu0 0.0
        %7463 = vmatpush1.msra.mxu0 0.0
        %7464 = vmatprep.subr.mxu0 0.0
        %7465 = vmatpush1.msra.mxu0 0.0
        %7466 = vmatprep.subr.mxu0 0.0
        %7467 = vmatpush1.msra.mxu0 0.0
        %7468 = vmatprep.subr.mxu0 0.0
        %7469 = vmatpush1.msra.mxu0 0.0
        %7470 = vmatprep.subr.mxu0 0.0
        %7471 = vmatpush1.msra.mxu0 0.0
        %7472 = vmatprep.subr.mxu0 0.0
        %7473 = vmatpush1.msra.mxu0 0.0
        %7474 = vmatprep.subr.mxu0 0.0
        %7475 = vmatpush1.msra.mxu0 0.0
        %7476 = vmatprep.subr.mxu0 0.0
        %7477 = vmatpush1.msra.mxu0 0.0
        %7478 = vmatprep.subr.mxu0 0.0
        %7479 = vmatpush1.msra.mxu0 0.0
        %7480 = vmatprep.subr.mxu0 0.0
        %7481 = vmatpush1.msra.mxu0 0.0
        %7482 = vmatprep.subr.mxu0 0.0
        %7483 = vmatpush1.msra.mxu0 0.0
        %7484 = vmatprep.subr.mxu0 0.0
        %7485 = vmatpush1.msra.mxu0 0.0
        %7486 = vmatprep.subr.mxu0 0.0
        %7487 = vmatpush1.msra.mxu0 0.0
        %7488 = vmatprep.subr.mxu0 0.0
        %7489 = vmatpush1.msra.mxu0 0.0
        %7490 = vmatprep.subr.mxu0 0.0
        %7491 = vmatpush1.msra.mxu0 0.0
        %7492 = vmatprep.subr.mxu0 0.0
        %7493 = vmatpush1.msra.mxu0 0.0
        %7494 = vmatprep.subr.mxu0 0.0
        %7495 = vmatpush1.msra.mxu0 0.0
        %7496 = vmatprep.subr.mxu0 0.0
        %7497 = vmatpush1.msra.mxu0 0.0
        %7498 = vmatprep.subr.mxu0 0.0
        %7499 = vmatpush1.msra.mxu0 0.0
        %7500 = vmatprep.subr.mxu0 0.0
        %7501 = vmatpush1.msra.mxu0 0.0
        %7502 = vmatprep.subr.mxu0 0.0
        %7503 = vmatpush1.msra.mxu0 0.0
        %7504 = vmatprep.subr.mxu0 0.0
        %7505 = vmatpush1.msra.mxu0 0.0
        %7506 = vmatprep.subr.mxu0 0.0
        %7507 = vmatpush1.msra.mxu0 0.0
        %7508 = vmatprep.mubr.f32.mxu0 0.0
        %v7509 = vand.u32 %v675, 4294901760
        %v7510 = vsub.f32 %v675, %v7509
        %v7511 = vand.u32 %v7510, 4294901760
        %7512 = vmatmul.mubr.f32.gmra.mrb[0].mxu0 %v7511
        %v7513 = vpop.f32.mrb[0].mxu0
        %v7514 = vadd.f32 %v7439, %v7513
        %v7515 = vpop.f32.mrb[0].mxu0
        %7516 = vdwg.mxu0
        %7517 = vmatprep.subr.mxu0 0.0
        %v7518 = vand.u32 %v7206, 4294901760
        %v7519 = vsub.f32 %v7206, %v7518
        %v7520 = vand.u32 %v7519, 4294901760
        %7521 = vmatpush1.msra.mxu0 %v7520
        %7522 = vmatprep.subr.mxu0 0.0
        %v7523 = vand.u32 %v7207, 4294901760
        %v7524 = vsub.f32 %v7207, %v7523
        %v7525 = vand.u32 %v7524, 4294901760
        %7526 = vmatpush1.msra.mxu0 %v7525
        %7527 = vmatprep.subr.mxu0 0.0
        %7528 = vmatpush1.msra.mxu0 0.0
        %7529 = vmatprep.subr.mxu0 0.0
        %7530 = vmatpush1.msra.mxu0 0.0
        %7531 = vmatprep.subr.mxu0 0.0
        %7532 = vmatpush1.msra.mxu0 0.0
        %7533 = vmatprep.subr.mxu0 0.0
        %7534 = vmatpush1.msra.mxu0 0.0
        %7535 = vmatprep.subr.mxu0 0.0
        %7536 = vmatpush1.msra.mxu0 0.0
        %7537 = vmatprep.subr.mxu0 0.0
        %7538 = vmatpush1.msra.mxu0 0.0
        %7539 = vmatprep.subr.mxu0 0.0
        %7540 = vmatpush1.msra.mxu0 0.0
        %7541 = vmatprep.subr.mxu0 0.0
        %7542 = vmatpush1.msra.mxu0 0.0
        %7543 = vmatprep.subr.mxu0 0.0
        %7544 = vmatpush1.msra.mxu0 0.0
        %7545 = vmatprep.subr.mxu0 0.0
        %7546 = vmatpush1.msra.mxu0 0.0
        %7547 = vmatprep.subr.mxu0 0.0
        %7548 = vmatpush1.msra.mxu0 0.0
        %7549 = vmatprep.subr.mxu0 0.0
        %7550 = vmatpush1.msra.mxu0 0.0
        %7551 = vmatprep.subr.mxu0 0.0
        %7552 = vmatpush1.msra.mxu0 0.0
        %7553 = vmatprep.subr.mxu0 0.0
        %7554 = vmatpush1.msra.mxu0 0.0
        %7555 = vmatprep.subr.mxu0 0.0
        %7556 = vmatpush1.msra.mxu0 0.0
        %7557 = vmatprep.subr.mxu0 0.0
        %7558 = vmatpush1.msra.mxu0 0.0
        %7559 = vmatprep.subr.mxu0 0.0
        %7560 = vmatpush1.msra.mxu0 0.0
        %7561 = vmatprep.subr.mxu0 0.0
        %7562 = vmatpush1.msra.mxu0 0.0
        %7563 = vmatprep.subr.mxu0 0.0
        %7564 = vmatpush1.msra.mxu0 0.0
        %7565 = vmatprep.subr.mxu0 0.0
        %7566 = vmatpush1.msra.mxu0 0.0
        %7567 = vmatprep.subr.mxu0 0.0
        %7568 = vmatpush1.msra.mxu0 0.0
        %7569 = vmatprep.subr.mxu0 0.0
        %7570 = vmatpush1.msra.mxu0 0.0
        %7571 = vmatprep.subr.mxu0 0.0
        %7572 = vmatpush1.msra.mxu0 0.0
        %7573 = vmatprep.subr.mxu0 0.0
        %7574 = vmatpush1.msra.mxu0 0.0
        %7575 = vmatprep.subr.mxu0 0.0
        %7576 = vmatpush1.msra.mxu0 0.0
        %7577 = vmatprep.subr.mxu0 0.0
        %7578 = vmatpush1.msra.mxu0 0.0
        %7579 = vmatprep.subr.mxu0 0.0
        %7580 = vmatpush1.msra.mxu0 0.0
        %7581 = vmatprep.subr.mxu0 0.0
        %7582 = vmatpush1.msra.mxu0 0.0
        %7583 = vmatprep.subr.mxu0 0.0
        %7584 = vmatpush1.msra.mxu0 0.0
        %7585 = vmatprep.subr.mxu0 0.0
        %7586 = vmatpush1.msra.mxu0 0.0
        %7587 = vmatprep.mubr.f32.mxu0 0.0
        %v7588 = vand.u32 %v675, 4294901760
        %7589 = vmatmul.mubr.f32.gmra.mrb[0].mxu0 %v7588
        %v7590 = vpop.f32.mrb[0].mxu0
        %v7591 = vadd.f32 %v7514, %v7590
        %v7592 = vpop.f32.mrb[0].mxu0
        %7593 = vdwg.mxu0
        %7594 = vmatprep.subr.mxu0 0.0
        %v7595 = vand.u32 %v7206, 4294901760
        %7596 = vmatpush1.msra.mxu0 %v7595
        %7597 = vmatprep.subr.mxu0 0.0
        %v7598 = vand.u32 %v7207, 4294901760
        %7599 = vmatpush1.msra.mxu0 %v7598
        %7600 = vmatprep.subr.mxu0 0.0
        %7601 = vmatpush1.msra.mxu0 0.0
        %7602 = vmatprep.subr.mxu0 0.0
        %7603 = vmatpush1.msra.mxu0 0.0
        %7604 = vmatprep.subr.mxu0 0.0
        %7605 = vmatpush1.msra.mxu0 0.0
        %7606 = vmatprep.subr.mxu0 0.0
        %7607 = vmatpush1.msra.mxu0 0.0
        %7608 = vmatprep.subr.mxu0 0.0
        %7609 = vmatpush1.msra.mxu0 0.0
        %7610 = vmatprep.subr.mxu0 0.0
        %7611 = vmatpush1.msra.mxu0 0.0
        %7612 = vmatprep.subr.mxu0 0.0
        %7613 = vmatpush1.msra.mxu0 0.0
        %7614 = vmatprep.subr.mxu0 0.0
        %7615 = vmatpush1.msra.mxu0 0.0
        %7616 = vmatprep.subr.mxu0 0.0
        %7617 = vmatpush1.msra.mxu0 0.0
        %7618 = vmatprep.subr.mxu0 0.0
        %7619 = vmatpush1.msra.mxu0 0.0
        %7620 = vmatprep.subr.mxu0 0.0
        %7621 = vmatpush1.msra.mxu0 0.0
        %7622 = vmatprep.subr.mxu0 0.0
        %7623 = vmatpush1.msra.mxu0 0.0
        %7624 = vmatprep.subr.mxu0 0.0
        %7625 = vmatpush1.msra.mxu0 0.0
        %7626 = vmatprep.subr.mxu0 0.0
        %7627 = vmatpush1.msra.mxu0 0.0
        %7628 = vmatprep.subr.mxu0 0.0
        %7629 = vmatpush1.msra.mxu0 0.0
        %7630 = vmatprep.subr.mxu0 0.0
        %7631 = vmatpush1.msra.mxu0 0.0
        %7632 = vmatprep.subr.mxu0 0.0
        %7633 = vmatpush1.msra.mxu0 0.0
        %7634 = vmatprep.subr.mxu0 0.0
        %7635 = vmatpush1.msra.mxu0 0.0
        %7636 = vmatprep.subr.mxu0 0.0
        %7637 = vmatpush1.msra.mxu0 0.0
        %7638 = vmatprep.subr.mxu0 0.0
        %7639 = vmatpush1.msra.mxu0 0.0
        %7640 = vmatprep.subr.mxu0 0.0
        %7641 = vmatpush1.msra.mxu0 0.0
        %7642 = vmatprep.subr.mxu0 0.0
        %7643 = vmatpush1.msra.mxu0 0.0
        %7644 = vmatprep.subr.mxu0 0.0
        %7645 = vmatpush1.msra.mxu0 0.0
        %7646 = vmatprep.subr.mxu0 0.0
        %7647 = vmatpush1.msra.mxu0 0.0
        %7648 = vmatprep.subr.mxu0 0.0
        %7649 = vmatpush1.msra.mxu0 0.0
        %7650 = vmatprep.subr.mxu0 0.0
        %7651 = vmatpush1.msra.mxu0 0.0
        %7652 = vmatprep.subr.mxu0 0.0
        %7653 = vmatpush1.msra.mxu0 0.0
        %7654 = vmatprep.subr.mxu0 0.0
        %7655 = vmatpush1.msra.mxu0 0.0
        %7656 = vmatprep.subr.mxu0 0.0
        %7657 = vmatpush1.msra.mxu0 0.0
        %7658 = vmatprep.subr.mxu0 0.0
        %7659 = vmatpush1.msra.mxu0 0.0
        %7660 = vmatprep.mubr.f32.mxu0 0.0
        %v7661 = vand.u32 %v675, 4294901760
        %7662 = vmatmul.mubr.f32.gmra.mrb[0].mxu0 %v7661
        %v7663 = vpop.f32.mrb[0].mxu0
        %v7664 = vadd.f32 %v7591, %v7663
        %v7665 = vpop.f32.mrb[0].mxu0
        %7666 = vdwg.mxu0
        %v7668 = vsel %vm673, %v7664, 0
        %7670 = vmatprep.subr.mxu0 0.0
        %v7671 = vand.u32 %v661, 4294901760
        %7672 = vmatpush1.msra.mxu0 %v7671
        %7673 = vmatprep.subr.mxu0 0.0
        %v7674 = vand.u32 %v662, 4294901760
        %7675 = vmatpush1.msra.mxu0 %v7674
        %7676 = vmatprep.subr.mxu0 0.0
        %7677 = vmatpush1.msra.mxu0 0.0
        %7678 = vmatprep.subr.mxu0 0.0
        %7679 = vmatpush1.msra.mxu0 0.0
        %7680 = vmatprep.subr.mxu0 0.0
        %7681 = vmatpush1.msra.mxu0 0.0
        %7682 = vmatprep.subr.mxu0 0.0
        %7683 = vmatpush1.msra.mxu0 0.0
        %7684 = vmatprep.subr.mxu0 0.0
        %7685 = vmatpush1.msra.mxu0 0.0
        %7686 = vmatprep.subr.mxu0 0.0
        %7687 = vmatpush1.msra.mxu0 0.0
        %7688 = vmatprep.subr.mxu0 0.0
        %7689 = vmatpush1.msra.mxu0 0.0
        %7690 = vmatprep.subr.mxu0 0.0
        %7691 = vmatpush1.msra.mxu0 0.0
        %7692 = vmatprep.subr.mxu0 0.0
        %7693 = vmatpush1.msra.mxu0 0.0
        %7694 = vmatprep.subr.mxu0 0.0
        %7695 = vmatpush1.msra.mxu0 0.0
        %7696 = vmatprep.subr.mxu0 0.0
        %7697 = vmatpush1.msra.mxu0 0.0
        %7698 = vmatprep.subr.mxu0 0.0
        %7699 = vmatpush1.msra.mxu0 0.0
        %7700 = vmatprep.subr.mxu0 0.0
        %7701 = vmatpush1.msra.mxu0 0.0
        %7702 = vmatprep.subr.mxu0 0.0
        %7703 = vmatpush1.msra.mxu0 0.0
        %7704 = vmatprep.subr.mxu0 0.0
        %7705 = vmatpush1.msra.mxu0 0.0
        %7706 = vmatprep.subr.mxu0 0.0
        %7707 = vmatpush1.msra.mxu0 0.0
        %7708 = vmatprep.subr.mxu0 0.0
        %7709 = vmatpush1.msra.mxu0 0.0
        %7710 = vmatprep.subr.mxu0 0.0
        %7711 = vmatpush1.msra.mxu0 0.0
        %7712 = vmatprep.subr.mxu0 0.0
        %7713 = vmatpush1.msra.mxu0 0.0
        %7714 = vmatprep.subr.mxu0 0.0
        %7715 = vmatpush1.msra.mxu0 0.0
        %7716 = vmatprep.subr.mxu0 0.0
        %7717 = vmatpush1.msra.mxu0 0.0
        %7718 = vmatprep.subr.mxu0 0.0
        %7719 = vmatpush1.msra.mxu0 0.0
        %7720 = vmatprep.subr.mxu0 0.0
        %7721 = vmatpush1.msra.mxu0 0.0
        %7722 = vmatprep.subr.mxu0 0.0
        %7723 = vmatpush1.msra.mxu0 0.0
        %7724 = vmatprep.subr.mxu0 0.0
        %7725 = vmatpush1.msra.mxu0 0.0
        %7726 = vmatprep.subr.mxu0 0.0
        %7727 = vmatpush1.msra.mxu0 0.0
        %7728 = vmatprep.subr.mxu0 0.0
        %7729 = vmatpush1.msra.mxu0 0.0
        %7730 = vmatprep.subr.mxu0 0.0
        %7731 = vmatpush1.msra.mxu0 0.0
        %7732 = vmatprep.subr.mxu0 0.0
        %7733 = vmatpush1.msra.mxu0 0.0
        %7734 = vmatprep.subr.mxu0 0.0
        %7735 = vmatpush1.msra.mxu0 0.0
        %7736 = vmatprep.mubr.f32.mxu0 0.0
        %v7737 = vand.u32 %v7668, 4294901760
        %v7738 = vsub.f32 %v7668, %v7737
        %v7739 = vand.u32 %v7738, 4294901760
        %v7740 = vsub.f32 %v7738, %v7739
        %v7741 = vand.u32 %v7740, 4294901760
        %7742 = vmatmul.mubr.f32.gmra.mrb[0].mxu0 %v7741
        %v7743 = vpop.f32.mrb[0].mxu0
        %v7744 = vadd.f32 0.0, %v7743
        %v7745 = vpop.f32.mrb[0].mxu0
        %7746 = vdwg.mxu0
        %7747 = vmatprep.subr.mxu0 0.0
        %v7748 = vand.u32 %v661, 4294901760
        %v7749 = vsub.f32 %v661, %v7748
        %v7750 = vand.u32 %v7749, 4294901760
        %v7751 = vsub.f32 %v7749, %v7750
        %v7752 = vand.u32 %v7751, 4294901760
        %7753 = vmatpush1.msra.mxu0 %v7752
        %7754 = vmatprep.subr.mxu0 0.0
        %v7755 = vand.u32 %v662, 4294901760
        %v7756 = vsub.f32 %v662, %v7755
        %v7757 = vand.u32 %v7756, 4294901760
        %v7758 = vsub.f32 %v7756, %v7757
        %v7759 = vand.u32 %v7758, 4294901760
        %7760 = vmatpush1.msra.mxu0 %v7759
        %7761 = vmatprep.subr.mxu0 0.0
        %7762 = vmatpush1.msra.mxu0 0.0
        %7763 = vmatprep.subr.mxu0 0.0
        %7764 = vmatpush1.msra.mxu0 0.0
        %7765 = vmatprep.subr.mxu0 0.0
        %7766 = vmatpush1.msra.mxu0 0.0
        %7767 = vmatprep.subr.mxu0 0.0
        %7768 = vmatpush1.msra.mxu0 0.0
        %7769 = vmatprep.subr.mxu0 0.0
        %7770 = vmatpush1.msra.mxu0 0.0
        %7771 = vmatprep.subr.mxu0 0.0
        %7772 = vmatpush1.msra.mxu0 0.0
        %7773 = vmatprep.subr.mxu0 0.0
        %7774 = vmatpush1.msra.mxu0 0.0
        %7775 = vmatprep.subr.mxu0 0.0
        %7776 = vmatpush1.msra.mxu0 0.0
        %7777 = vmatprep.subr.mxu0 0.0
        %7778 = vmatpush1.msra.mxu0 0.0
        %7779 = vmatprep.subr.mxu0 0.0
        %7780 = vmatpush1.msra.mxu0 0.0
        %7781 = vmatprep.subr.mxu0 0.0
        %7782 = vmatpush1.msra.mxu0 0.0
        %7783 = vmatprep.subr.mxu0 0.0
        %7784 = vmatpush1.msra.mxu0 0.0
        %7785 = vmatprep.subr.mxu0 0.0
        %7786 = vmatpush1.msra.mxu0 0.0
        %7787 = vmatprep.subr.mxu0 0.0
        %7788 = vmatpush1.msra.mxu0 0.0
        %7789 = vmatprep.subr.mxu0 0.0
        %7790 = vmatpush1.msra.mxu0 0.0
        %7791 = vmatprep.subr.mxu0 0.0
        %7792 = vmatpush1.msra.mxu0 0.0
        %7793 = vmatprep.subr.mxu0 0.0
        %7794 = vmatpush1.msra.mxu0 0.0
        %7795 = vmatprep.subr.mxu0 0.0
        %7796 = vmatpush1.msra.mxu0 0.0
        %7797 = vmatprep.subr.mxu0 0.0
        %7798 = vmatpush1.msra.mxu0 0.0
        %7799 = vmatprep.subr.mxu0 0.0
        %7800 = vmatpush1.msra.mxu0 0.0
        %7801 = vmatprep.subr.mxu0 0.0
        %7802 = vmatpush1.msra.mxu0 0.0
        %7803 = vmatprep.subr.mxu0 0.0
        %7804 = vmatpush1.msra.mxu0 0.0
        %7805 = vmatprep.subr.mxu0 0.0
        %7806 = vmatpush1.msra.mxu0 0.0
        %7807 = vmatprep.subr.mxu0 0.0
        %7808 = vmatpush1.msra.mxu0 0.0
        %7809 = vmatprep.subr.mxu0 0.0
        %7810 = vmatpush1.msra.mxu0 0.0
        %7811 = vmatprep.subr.mxu0 0.0
        %7812 = vmatpush1.msra.mxu0 0.0
        %7813 = vmatprep.subr.mxu0 0.0
        %7814 = vmatpush1.msra.mxu0 0.0
        %7815 = vmatprep.subr.mxu0 0.0
        %7816 = vmatpush1.msra.mxu0 0.0
        %7817 = vmatprep.subr.mxu0 0.0
        %7818 = vmatpush1.msra.mxu0 0.0
        %7819 = vmatprep.subr.mxu0 0.0
        %7820 = vmatpush1.msra.mxu0 0.0
        %7821 = vmatprep.mubr.f32.mxu0 0.0
        %v7822 = vand.u32 %v7668, 4294901760
        %7823 = vmatmul.mubr.f32.gmra.mrb[0].mxu0 %v7822
        %v7824 = vpop.f32.mrb[0].mxu0
        %v7825 = vadd.f32 %v7744, %v7824
        %v7826 = vpop.f32.mrb[0].mxu0
        %7827 = vdwg.mxu0
        %7828 = vmatprep.subr.mxu0 0.0
        %v7829 = vand.u32 %v661, 4294901760
        %v7830 = vsub.f32 %v661, %v7829
        %7831 = vmatpush1.msra.mxu0 %v7830
        %7832 = vmatprep.subr.mxu0 0.0
        %v7833 = vand.u32 %v662, 4294901760
        %v7834 = vsub.f32 %v662, %v7833
        %7835 = vmatpush1.msra.mxu0 %v7834
        %7836 = vmatprep.subr.mxu0 0.0
        %7837 = vmatpush1.msra.mxu0 0.0
        %7838 = vmatprep.subr.mxu0 0.0
        %7839 = vmatpush1.msra.mxu0 0.0
        %7840 = vmatprep.subr.mxu0 0.0
        %7841 = vmatpush1.msra.mxu0 0.0
        %7842 = vmatprep.subr.mxu0 0.0
        %7843 = vmatpush1.msra.mxu0 0.0
        %7844 = vmatprep.subr.mxu0 0.0
        %7845 = vmatpush1.msra.mxu0 0.0
        %7846 = vmatprep.subr.mxu0 0.0
        %7847 = vmatpush1.msra.mxu0 0.0
        %7848 = vmatprep.subr.mxu0 0.0
        %7849 = vmatpush1.msra.mxu0 0.0
        %7850 = vmatprep.subr.mxu0 0.0
        %7851 = vmatpush1.msra.mxu0 0.0
        %7852 = vmatprep.subr.mxu0 0.0
        %7853 = vmatpush1.msra.mxu0 0.0
        %7854 = vmatprep.subr.mxu0 0.0
        %7855 = vmatpush1.msra.mxu0 0.0
        %7856 = vmatprep.subr.mxu0 0.0
        %7857 = vmatpush1.msra.mxu0 0.0
        %7858 = vmatprep.subr.mxu0 0.0
        %7859 = vmatpush1.msra.mxu0 0.0
        %7860 = vmatprep.subr.mxu0 0.0
        %7861 = vmatpush1.msra.mxu0 0.0
        %7862 = vmatprep.subr.mxu0 0.0
        %7863 = vmatpush1.msra.mxu0 0.0
        %7864 = vmatprep.subr.mxu0 0.0
        %7865 = vmatpush1.msra.mxu0 0.0
        %7866 = vmatprep.subr.mxu0 0.0
        %7867 = vmatpush1.msra.mxu0 0.0
        %7868 = vmatprep.subr.mxu0 0.0
        %7869 = vmatpush1.msra.mxu0 0.0
        %7870 = vmatprep.subr.mxu0 0.0
        %7871 = vmatpush1.msra.mxu0 0.0
        %7872 = vmatprep.subr.mxu0 0.0
        %7873 = vmatpush1.msra.mxu0 0.0
        %7874 = vmatprep.subr.mxu0 0.0
        %7875 = vmatpush1.msra.mxu0 0.0
        %7876 = vmatprep.subr.mxu0 0.0
        %7877 = vmatpush1.msra.mxu0 0.0
        %7878 = vmatprep.subr.mxu0 0.0
        %7879 = vmatpush1.msra.mxu0 0.0
        %7880 = vmatprep.subr.mxu0 0.0
        %7881 = vmatpush1.msra.mxu0 0.0
        %7882 = vmatprep.subr.mxu0 0.0
        %7883 = vmatpush1.msra.mxu0 0.0
        %7884 = vmatprep.subr.mxu0 0.0
        %7885 = vmatpush1.msra.mxu0 0.0
        %7886 = vmatprep.subr.mxu0 0.0
        %7887 = vmatpush1.msra.mxu0 0.0
        %7888 = vmatprep.subr.mxu0 0.0
        %7889 = vmatpush1.msra.mxu0 0.0
        %7890 = vmatprep.subr.mxu0 0.0
        %7891 = vmatpush1.msra.mxu0 0.0
        %7892 = vmatprep.subr.mxu0 0.0
        %7893 = vmatpush1.msra.mxu0 0.0
        %7894 = vmatprep.subr.mxu0 0.0
        %7895 = vmatpush1.msra.mxu0 0.0
        %7896 = vmatprep.mubr.f32.mxu0 0.0
        %v7897 = vand.u32 %v7668, 4294901760
        %v7898 = vsub.f32 %v7668, %v7897
        %7899 = vmatmul.mubr.f32.gmra.mrb[0].mxu0 %v7898
        %v7900 = vpop.f32.mrb[0].mxu0
        %v7901 = vadd.f32 %v7825, %v7900
        %v7902 = vpop.f32.mrb[0].mxu0
        %7903 = vdwg.mxu0
        %7904 = vmatprep.subr.mxu0 0.0
        %v7905 = vand.u32 %v661, 4294901760
        %7906 = vmatpush1.msra.mxu0 %v7905
        %7907 = vmatprep.subr.mxu0 0.0
        %v7908 = vand.u32 %v662, 4294901760
        %7909 = vmatpush1.msra.mxu0 %v7908
        %7910 = vmatprep.subr.mxu0 0.0
        %7911 = vmatpush1.msra.mxu0 0.0
        %7912 = vmatprep.subr.mxu0 0.0
        %7913 = vmatpush1.msra.mxu0 0.0
        %7914 = vmatprep.subr.mxu0 0.0
        %7915 = vmatpush1.msra.mxu0 0.0
        %7916 = vmatprep.subr.mxu0 0.0
        %7917 = vmatpush1.msra.mxu0 0.0
        %7918 = vmatprep.subr.mxu0 0.0
        %7919 = vmatpush1.msra.mxu0 0.0
        %7920 = vmatprep.subr.mxu0 0.0
        %7921 = vmatpush1.msra.mxu0 0.0
        %7922 = vmatprep.subr.mxu0 0.0
        %7923 = vmatpush1.msra.mxu0 0.0
        %7924 = vmatprep.subr.mxu0 0.0
        %7925 = vmatpush1.msra.mxu0 0.0
        %7926 = vmatprep.subr.mxu0 0.0
        %7927 = vmatpush1.msra.mxu0 0.0
        %7928 = vmatprep.subr.mxu0 0.0
        %7929 = vmatpush1.msra.mxu0 0.0
        %7930 = vmatprep.subr.mxu0 0.0
        %7931 = vmatpush1.msra.mxu0 0.0
        %7932 = vmatprep.subr.mxu0 0.0
        %7933 = vmatpush1.msra.mxu0 0.0
        %7934 = vmatprep.subr.mxu0 0.0
        %7935 = vmatpush1.msra.mxu0 0.0
        %7936 = vmatprep.subr.mxu0 0.0
        %7937 = vmatpush1.msra.mxu0 0.0
        %7938 = vmatprep.subr.mxu0 0.0
        %7939 = vmatpush1.msra.mxu0 0.0
        %7940 = vmatprep.subr.mxu0 0.0
        %7941 = vmatpush1.msra.mxu0 0.0
        %7942 = vmatprep.subr.mxu0 0.0
        %7943 = vmatpush1.msra.mxu0 0.0
        %7944 = vmatprep.subr.mxu0 0.0
        %7945 = vmatpush1.msra.mxu0 0.0
        %7946 = vmatprep.subr.mxu0 0.0
        %7947 = vmatpush1.msra.mxu0 0.0
        %7948 = vmatprep.subr.mxu0 0.0
        %7949 = vmatpush1.msra.mxu0 0.0
        %7950 = vmatprep.subr.mxu0 0.0
        %7951 = vmatpush1.msra.mxu0 0.0
        %7952 = vmatprep.subr.mxu0 0.0
        %7953 = vmatpush1.msra.mxu0 0.0
        %7954 = vmatprep.subr.mxu0 0.0
        %7955 = vmatpush1.msra.mxu0 0.0
        %7956 = vmatprep.subr.mxu0 0.0
        %7957 = vmatpush1.msra.mxu0 0.0
        %7958 = vmatprep.subr.mxu0 0.0
        %7959 = vmatpush1.msra.mxu0 0.0
        %7960 = vmatprep.subr.mxu0 0.0
        %7961 = vmatpush1.msra.mxu0 0.0
        %7962 = vmatprep.subr.mxu0 0.0
        %7963 = vmatpush1.msra.mxu0 0.0
        %7964 = vmatprep.subr.mxu0 0.0
        %7965 = vmatpush1.msra.mxu0 0.0
        %7966 = vmatprep.subr.mxu0 0.0
        %7967 = vmatpush1.msra.mxu0 0.0
        %7968 = vmatprep.subr.mxu0 0.0
        %7969 = vmatpush1.msra.mxu0 0.0
        %7970 = vmatprep.mubr.f32.mxu0 0.0
        %v7971 = vand.u32 %v7668, 4294901760
        %v7972 = vsub.f32 %v7668, %v7971
        %v7973 = vand.u32 %v7972, 4294901760
        %7974 = vmatmul.mubr.f32.gmra.mrb[0].mxu0 %v7973
        %v7975 = vpop.f32.mrb[0].mxu0
        %v7976 = vadd.f32 %v7901, %v7975
        %v7977 = vpop.f32.mrb[0].mxu0
        %7978 = vdwg.mxu0
        %7979 = vmatprep.subr.mxu0 0.0
        %v7980 = vand.u32 %v661, 4294901760
        %v7981 = vsub.f32 %v661, %v7980
        %v7982 = vand.u32 %v7981, 4294901760
        %7983 = vmatpush1.msra.mxu0 %v7982
        %7984 = vmatprep.subr.mxu0 0.0
        %v7985 = vand.u32 %v662, 4294901760
        %v7986 = vsub.f32 %v662, %v7985
        %v7987 = vand.u32 %v7986, 4294901760
        %7988 = vmatpush1.msra.mxu0 %v7987
        %7989 = vmatprep.subr.mxu0 0.0
        %7990 = vmatpush1.msra.mxu0 0.0
        %7991 = vmatprep.subr.mxu0 0.0
        %7992 = vmatpush1.msra.mxu0 0.0
        %7993 = vmatprep.subr.mxu0 0.0
        %7994 = vmatpush1.msra.mxu0 0.0
        %7995 = vmatprep.subr.mxu0 0.0
        %7996 = vmatpush1.msra.mxu0 0.0
        %7997 = vmatprep.subr.mxu0 0.0
        %7998 = vmatpush1.msra.mxu0 0.0
        %7999 = vmatprep.subr.mxu0 0.0
        %8000 = vmatpush1.msra.mxu0 0.0
        %8001 = vmatprep.subr.mxu0 0.0
        %8002 = vmatpush1.msra.mxu0 0.0
        %8003 = vmatprep.subr.mxu0 0.0
        %8004 = vmatpush1.msra.mxu0 0.0
        %8005 = vmatprep.subr.mxu0 0.0
        %8006 = vmatpush1.msra.mxu0 0.0
        %8007 = vmatprep.subr.mxu0 0.0
        %8008 = vmatpush1.msra.mxu0 0.0
        %8009 = vmatprep.subr.mxu0 0.0
        %8010 = vmatpush1.msra.mxu0 0.0
        %8011 = vmatprep.subr.mxu0 0.0
        %8012 = vmatpush1.msra.mxu0 0.0
        %8013 = vmatprep.subr.mxu0 0.0
        %8014 = vmatpush1.msra.mxu0 0.0
        %8015 = vmatprep.subr.mxu0 0.0
        %8016 = vmatpush1.msra.mxu0 0.0
        %8017 = vmatprep.subr.mxu0 0.0
        %8018 = vmatpush1.msra.mxu0 0.0
        %8019 = vmatprep.subr.mxu0 0.0
        %8020 = vmatpush1.msra.mxu0 0.0
        %8021 = vmatprep.subr.mxu0 0.0
        %8022 = vmatpush1.msra.mxu0 0.0
        %8023 = vmatprep.subr.mxu0 0.0
        %8024 = vmatpush1.msra.mxu0 0.0
        %8025 = vmatprep.subr.mxu0 0.0
        %8026 = vmatpush1.msra.mxu0 0.0
        %8027 = vmatprep.subr.mxu0 0.0
        %8028 = vmatpush1.msra.mxu0 0.0
        %8029 = vmatprep.subr.mxu0 0.0
        %8030 = vmatpush1.msra.mxu0 0.0
        %8031 = vmatprep.subr.mxu0 0.0
        %8032 = vmatpush1.msra.mxu0 0.0
        %8033 = vmatprep.subr.mxu0 0.0
        %8034 = vmatpush1.msra.mxu0 0.0
        %8035 = vmatprep.subr.mxu0 0.0
        %8036 = vmatpush1.msra.mxu0 0.0
        %8037 = vmatprep.subr.mxu0 0.0
        %8038 = vmatpush1.msra.mxu0 0.0
        %8039 = vmatprep.subr.mxu0 0.0
        %8040 = vmatpush1.msra.mxu0 0.0
        %8041 = vmatprep.subr.mxu0 0.0
        %8042 = vmatpush1.msra.mxu0 0.0
        %8043 = vmatprep.subr.mxu0 0.0
        %8044 = vmatpush1.msra.mxu0 0.0
        %8045 = vmatprep.subr.mxu0 0.0
        %8046 = vmatpush1.msra.mxu0 0.0
        %8047 = vmatprep.subr.mxu0 0.0
        %8048 = vmatpush1.msra.mxu0 0.0
        %8049 = vmatprep.mubr.f32.mxu0 0.0
        %v8050 = vand.u32 %v7668, 4294901760
        %8051 = vmatmul.mubr.f32.gmra.mrb[0].mxu0 %v8050
        %v8052 = vpop.f32.mrb[0].mxu0
        %v8053 = vadd.f32 %v7976, %v8052
        %v8054 = vpop.f32.mrb[0].mxu0
        %8055 = vdwg.mxu0
        %8056 = vmatprep.subr.mxu0 0.0
        %v8057 = vand.u32 %v661, 4294901760
        %8058 = vmatpush1.msra.mxu0 %v8057
        %8059 = vmatprep.subr.mxu0 0.0
        %v8060 = vand.u32 %v662, 4294901760
        %8061 = vmatpush1.msra.mxu0 %v8060
        %8062 = vmatprep.subr.mxu0 0.0
        %8063 = vmatpush1.msra.mxu0 0.0
        %8064 = vmatprep.subr.mxu0 0.0
        %8065 = vmatpush1.msra.mxu0 0.0
        %8066 = vmatprep.subr.mxu0 0.0
        %8067 = vmatpush1.msra.mxu0 0.0
        %8068 = vmatprep.subr.mxu0 0.0
        %8069 = vmatpush1.msra.mxu0 0.0
        %8070 = vmatprep.subr.mxu0 0.0
        %8071 = vmatpush1.msra.mxu0 0.0
        %8072 = vmatprep.subr.mxu0 0.0
        %8073 = vmatpush1.msra.mxu0 0.0
        %8074 = vmatprep.subr.mxu0 0.0
        %8075 = vmatpush1.msra.mxu0 0.0
        %8076 = vmatprep.subr.mxu0 0.0
        %8077 = vmatpush1.msra.mxu0 0.0
        %8078 = vmatprep.subr.mxu0 0.0
        %8079 = vmatpush1.msra.mxu0 0.0
        %8080 = vmatprep.subr.mxu0 0.0
        %8081 = vmatpush1.msra.mxu0 0.0
        %8082 = vmatprep.subr.mxu0 0.0
        %8083 = vmatpush1.msra.mxu0 0.0
        %8084 = vmatprep.subr.mxu0 0.0
        %8085 = vmatpush1.msra.mxu0 0.0
        %8086 = vmatprep.subr.mxu0 0.0
        %8087 = vmatpush1.msra.mxu0 0.0
        %8088 = vmatprep.subr.mxu0 0.0
        %8089 = vmatpush1.msra.mxu0 0.0
        %8090 = vmatprep.subr.mxu0 0.0
        %8091 = vmatpush1.msra.mxu0 0.0
        %8092 = vmatprep.subr.mxu0 0.0
        %8093 = vmatpush1.msra.mxu0 0.0
        %8094 = vmatprep.subr.mxu0 0.0
        %8095 = vmatpush1.msra.mxu0 0.0
        %8096 = vmatprep.subr.mxu0 0.0
        %8097 = vmatpush1.msra.mxu0 0.0
        %8098 = vmatprep.subr.mxu0 0.0
        %8099 = vmatpush1.msra.mxu0 0.0
        %8100 = vmatprep.subr.mxu0 0.0
        %8101 = vmatpush1.msra.mxu0 0.0
        %8102 = vmatprep.subr.mxu0 0.0
        %8103 = vmatpush1.msra.mxu0 0.0
        %8104 = vmatprep.subr.mxu0 0.0
        %8105 = vmatpush1.msra.mxu0 0.0
        %8106 = vmatprep.subr.mxu0 0.0
        %8107 = vmatpush1.msra.mxu0 0.0
        %8108 = vmatprep.subr.mxu0 0.0
        %8109 = vmatpush1.msra.mxu0 0.0
        %8110 = vmatprep.subr.mxu0 0.0
        %8111 = vmatpush1.msra.mxu0 0.0
        %8112 = vmatprep.subr.mxu0 0.0
        %8113 = vmatpush1.msra.mxu0 0.0
        %8114 = vmatprep.subr.mxu0 0.0
        %8115 = vmatpush1.msra.mxu0 0.0
        %8116 = vmatprep.subr.mxu0 0.0
        %8117 = vmatpush1.msra.mxu0 0.0
        %8118 = vmatprep.subr.mxu0 0.0
        %8119 = vmatpush1.msra.mxu0 0.0
        %8120 = vmatprep.subr.mxu0 0.0
        %8121 = vmatpush1.msra.mxu0 0.0
        %8122 = vmatprep.mubr.f32.mxu0 0.0
        %v8123 = vand.u32 %v7668, 4294901760
        %8124 = vmatmul.mubr.f32.gmra.mrb[0].mxu0 %v8123
        %v8125 = vpop.f32.mrb[0].mxu0
        %v8126 = vadd.f32 %v8053, %v8125
        %v8127 = vpop.f32.mrb[0].mxu0
        %8128 = vdwg.mxu0
        %s8129 = scalar_lea.vmem %s384, 14
        %8130 = vst.msk [vmem:[%s8129] sm:$0x3] %vm1598, %v8126
        %vm8131 = vcmp.eq.f32.partialorder %v646, 8.0
        %vm8132 = vcmp.eq.f32.partialorder %v647, 8.0
        %v8133 = vsel %vm8131, %v532, 0.0
        %v8134 = vsel %vm8132, %v533, 0.0
        %vm8135 = vcmp.eq.f32.partialorder %v658, 8.0
        %vm8136 = vcmp.eq.f32.partialorder %v659, 8.0
        %v8137 = vsel %vm8135, %v534, 0.0
        %v8138 = vsel %vm8136, %v535, 0.0
        %v8139 = vadd.f32 %v8133, %v8137
        %v8140 = vadd.f32 %v8134, %v8138
        %8141 = vmatprep.subr.mxu0 0.0
        %v8142 = vand.u32 %v8139, 4294901760
        %8143 = vmatpush1.msra.mxu0 %v8142
        %8144 = vmatprep.subr.mxu0 0.0
        %v8145 = vand.u32 %v8140, 4294901760
        %8146 = vmatpush1.msra.mxu0 %v8145
        %8147 = vmatprep.subr.mxu0 0.0
        %8148 = vmatpush1.msra.mxu0 0.0
        %8149 = vmatprep.subr.mxu0 0.0
        %8150 = vmatpush1.msra.mxu0 0.0
        %8151 = vmatprep.subr.mxu0 0.0
        %8152 = vmatpush1.msra.mxu0 0.0
        %8153 = vmatprep.subr.mxu0 0.0
        %8154 = vmatpush1.msra.mxu0 0.0
        %8155 = vmatprep.subr.mxu0 0.0
        %8156 = vmatpush1.msra.mxu0 0.0
        %8157 = vmatprep.subr.mxu0 0.0
        %8158 = vmatpush1.msra.mxu0 0.0
        %8159 = vmatprep.subr.mxu0 0.0
        %8160 = vmatpush1.msra.mxu0 0.0
        %8161 = vmatprep.subr.mxu0 0.0
        %8162 = vmatpush1.msra.mxu0 0.0
        %8163 = vmatprep.subr.mxu0 0.0
        %8164 = vmatpush1.msra.mxu0 0.0
        %8165 = vmatprep.subr.mxu0 0.0
        %8166 = vmatpush1.msra.mxu0 0.0
        %8167 = vmatprep.subr.mxu0 0.0
        %8168 = vmatpush1.msra.mxu0 0.0
        %8169 = vmatprep.subr.mxu0 0.0
        %8170 = vmatpush1.msra.mxu0 0.0
        %8171 = vmatprep.subr.mxu0 0.0
        %8172 = vmatpush1.msra.mxu0 0.0
        %8173 = vmatprep.subr.mxu0 0.0
        %8174 = vmatpush1.msra.mxu0 0.0
        %8175 = vmatprep.subr.mxu0 0.0
        %8176 = vmatpush1.msra.mxu0 0.0
        %8177 = vmatprep.subr.mxu0 0.0
        %8178 = vmatpush1.msra.mxu0 0.0
        %8179 = vmatprep.subr.mxu0 0.0
        %8180 = vmatpush1.msra.mxu0 0.0
        %8181 = vmatprep.subr.mxu0 0.0
        %8182 = vmatpush1.msra.mxu0 0.0
        %8183 = vmatprep.subr.mxu0 0.0
        %8184 = vmatpush1.msra.mxu0 0.0
        %8185 = vmatprep.subr.mxu0 0.0
        %8186 = vmatpush1.msra.mxu0 0.0
        %8187 = vmatprep.subr.mxu0 0.0
        %8188 = vmatpush1.msra.mxu0 0.0
        %8189 = vmatprep.subr.mxu0 0.0
        %8190 = vmatpush1.msra.mxu0 0.0
        %8191 = vmatprep.subr.mxu0 0.0
        %8192 = vmatpush1.msra.mxu0 0.0
        %8193 = vmatprep.subr.mxu0 0.0
        %8194 = vmatpush1.msra.mxu0 0.0
        %8195 = vmatprep.subr.mxu0 0.0
        %8196 = vmatpush1.msra.mxu0 0.0
        %8197 = vmatprep.subr.mxu0 0.0
        %8198 = vmatpush1.msra.mxu0 0.0
        %8199 = vmatprep.subr.mxu0 0.0
        %8200 = vmatpush1.msra.mxu0 0.0
        %8201 = vmatprep.subr.mxu0 0.0
        %8202 = vmatpush1.msra.mxu0 0.0
        %8203 = vmatprep.subr.mxu0 0.0
        %8204 = vmatpush1.msra.mxu0 0.0
        %8205 = vmatprep.subr.mxu0 0.0
        %8206 = vmatpush1.msra.mxu0 0.0
        %8207 = vmatprep.mubr.f32.mxu0 0.0
        %v8208 = vand.u32 %v675, 4294901760
        %v8209 = vsub.f32 %v675, %v8208
        %v8210 = vand.u32 %v8209, 4294901760
        %v8211 = vsub.f32 %v8209, %v8210
        %v8212 = vand.u32 %v8211, 4294901760
        %8213 = vmatmul.mubr.f32.gmra.mrb[0].mxu0 %v8212
        %v8214 = vpop.f32.mrb[0].mxu0
        %v8215 = vadd.f32 0.0, %v8214
        %v8216 = vpop.f32.mrb[0].mxu0
        %8217 = vdwg.mxu0
        %8218 = vmatprep.subr.mxu0 0.0
        %v8219 = vand.u32 %v8139, 4294901760
        %v8220 = vsub.f32 %v8139, %v8219
        %v8221 = vand.u32 %v8220, 4294901760
        %v8222 = vsub.f32 %v8220, %v8221
        %v8223 = vand.u32 %v8222, 4294901760
        %8224 = vmatpush1.msra.mxu0 %v8223
        %8225 = vmatprep.subr.mxu0 0.0
        %v8226 = vand.u32 %v8140, 4294901760
        %v8227 = vsub.f32 %v8140, %v8226
        %v8228 = vand.u32 %v8227, 4294901760
        %v8229 = vsub.f32 %v8227, %v8228
        %v8230 = vand.u32 %v8229, 4294901760
        %8231 = vmatpush1.msra.mxu0 %v8230
        %8232 = vmatprep.subr.mxu0 0.0
        %8233 = vmatpush1.msra.mxu0 0.0
        %8234 = vmatprep.subr.mxu0 0.0
        %8235 = vmatpush1.msra.mxu0 0.0
        %8236 = vmatprep.subr.mxu0 0.0
        %8237 = vmatpush1.msra.mxu0 0.0
        %8238 = vmatprep.subr.mxu0 0.0
        %8239 = vmatpush1.msra.mxu0 0.0
        %8240 = vmatprep.subr.mxu0 0.0
        %8241 = vmatpush1.msra.mxu0 0.0
        %8242 = vmatprep.subr.mxu0 0.0
        %8243 = vmatpush1.msra.mxu0 0.0
        %8244 = vmatprep.subr.mxu0 0.0
        %8245 = vmatpush1.msra.mxu0 0.0
        %8246 = vmatprep.subr.mxu0 0.0
        %8247 = vmatpush1.msra.mxu0 0.0
        %8248 = vmatprep.subr.mxu0 0.0
        %8249 = vmatpush1.msra.mxu0 0.0
        %8250 = vmatprep.subr.mxu0 0.0
        %8251 = vmatpush1.msra.mxu0 0.0
        %8252 = vmatprep.subr.mxu0 0.0
        %8253 = vmatpush1.msra.mxu0 0.0
        %8254 = vmatprep.subr.mxu0 0.0
        %8255 = vmatpush1.msra.mxu0 0.0
        %8256 = vmatprep.subr.mxu0 0.0
        %8257 = vmatpush1.msra.mxu0 0.0
        %8258 = vmatprep.subr.mxu0 0.0
        %8259 = vmatpush1.msra.mxu0 0.0
        %8260 = vmatprep.subr.mxu0 0.0
        %8261 = vmatpush1.msra.mxu0 0.0
        %8262 = vmatprep.subr.mxu0 0.0
        %8263 = vmatpush1.msra.mxu0 0.0
        %8264 = vmatprep.subr.mxu0 0.0
        %8265 = vmatpush1.msra.mxu0 0.0
        %8266 = vmatprep.subr.mxu0 0.0
        %8267 = vmatpush1.msra.mxu0 0.0
        %8268 = vmatprep.subr.mxu0 0.0
        %8269 = vmatpush1.msra.mxu0 0.0
        %8270 = vmatprep.subr.mxu0 0.0
        %8271 = vmatpush1.msra.mxu0 0.0
        %8272 = vmatprep.subr.mxu0 0.0
        %8273 = vmatpush1.msra.mxu0 0.0
        %8274 = vmatprep.subr.mxu0 0.0
        %8275 = vmatpush1.msra.mxu0 0.0
        %8276 = vmatprep.subr.mxu0 0.0
        %8277 = vmatpush1.msra.mxu0 0.0
        %8278 = vmatprep.subr.mxu0 0.0
        %8279 = vmatpush1.msra.mxu0 0.0
        %8280 = vmatprep.subr.mxu0 0.0
        %8281 = vmatpush1.msra.mxu0 0.0
        %8282 = vmatprep.subr.mxu0 0.0
        %8283 = vmatpush1.msra.mxu0 0.0
        %8284 = vmatprep.subr.mxu0 0.0
        %8285 = vmatpush1.msra.mxu0 0.0
        %8286 = vmatprep.subr.mxu0 0.0
        %8287 = vmatpush1.msra.mxu0 0.0
        %8288 = vmatprep.subr.mxu0 0.0
        %8289 = vmatpush1.msra.mxu0 0.0
        %8290 = vmatprep.subr.mxu0 0.0
        %8291 = vmatpush1.msra.mxu0 0.0
        %8292 = vmatprep.mubr.f32.mxu0 0.0
        %v8293 = vand.u32 %v675, 4294901760
        %8294 = vmatmul.mubr.f32.gmra.mrb[0].mxu0 %v8293
        %v8295 = vpop.f32.mrb[0].mxu0
        %v8296 = vadd.f32 %v8215, %v8295
        %v8297 = vpop.f32.mrb[0].mxu0
        %8298 = vdwg.mxu0
        %8299 = vmatprep.subr.mxu0 0.0
        %v8300 = vand.u32 %v8139, 4294901760
        %v8301 = vsub.f32 %v8139, %v8300
        %8302 = vmatpush1.msra.mxu0 %v8301
        %8303 = vmatprep.subr.mxu0 0.0
        %v8304 = vand.u32 %v8140, 4294901760
        %v8305 = vsub.f32 %v8140, %v8304
        %8306 = vmatpush1.msra.mxu0 %v8305
        %8307 = vmatprep.subr.mxu0 0.0
        %8308 = vmatpush1.msra.mxu0 0.0
        %8309 = vmatprep.subr.mxu0 0.0
        %8310 = vmatpush1.msra.mxu0 0.0
        %8311 = vmatprep.subr.mxu0 0.0
        %8312 = vmatpush1.msra.mxu0 0.0
        %8313 = vmatprep.subr.mxu0 0.0
        %8314 = vmatpush1.msra.mxu0 0.0
        %8315 = vmatprep.subr.mxu0 0.0
        %8316 = vmatpush1.msra.mxu0 0.0
        %8317 = vmatprep.subr.mxu0 0.0
        %8318 = vmatpush1.msra.mxu0 0.0
        %8319 = vmatprep.subr.mxu0 0.0
        %8320 = vmatpush1.msra.mxu0 0.0
        %8321 = vmatprep.subr.mxu0 0.0
        %8322 = vmatpush1.msra.mxu0 0.0
        %8323 = vmatprep.subr.mxu0 0.0
        %8324 = vmatpush1.msra.mxu0 0.0
        %8325 = vmatprep.subr.mxu0 0.0
        %8326 = vmatpush1.msra.mxu0 0.0
        %8327 = vmatprep.subr.mxu0 0.0
        %8328 = vmatpush1.msra.mxu0 0.0
        %8329 = vmatprep.subr.mxu0 0.0
        %8330 = vmatpush1.msra.mxu0 0.0
        %8331 = vmatprep.subr.mxu0 0.0
        %8332 = vmatpush1.msra.mxu0 0.0
        %8333 = vmatprep.subr.mxu0 0.0
        %8334 = vmatpush1.msra.mxu0 0.0
        %8335 = vmatprep.subr.mxu0 0.0
        %8336 = vmatpush1.msra.mxu0 0.0
        %8337 = vmatprep.subr.mxu0 0.0
        %8338 = vmatpush1.msra.mxu0 0.0
        %8339 = vmatprep.subr.mxu0 0.0
        %8340 = vmatpush1.msra.mxu0 0.0
        %8341 = vmatprep.subr.mxu0 0.0
        %8342 = vmatpush1.msra.mxu0 0.0
        %8343 = vmatprep.subr.mxu0 0.0
        %8344 = vmatpush1.msra.mxu0 0.0
        %8345 = vmatprep.subr.mxu0 0.0
        %8346 = vmatpush1.msra.mxu0 0.0
        %8347 = vmatprep.subr.mxu0 0.0
        %8348 = vmatpush1.msra.mxu0 0.0
        %8349 = vmatprep.subr.mxu0 0.0
        %8350 = vmatpush1.msra.mxu0 0.0
        %8351 = vmatprep.subr.mxu0 0.0
        %8352 = vmatpush1.msra.mxu0 0.0
        %8353 = vmatprep.subr.mxu0 0.0
        %8354 = vmatpush1.msra.mxu0 0.0
        %8355 = vmatprep.subr.mxu0 0.0
        %8356 = vmatpush1.msra.mxu0 0.0
        %8357 = vmatprep.subr.mxu0 0.0
        %8358 = vmatpush1.msra.mxu0 0.0
        %8359 = vmatprep.subr.mxu0 0.0
        %8360 = vmatpush1.msra.mxu0 0.0
        %8361 = vmatprep.subr.mxu0 0.0
        %8362 = vmatpush1.msra.mxu0 0.0
        %8363 = vmatprep.subr.mxu0 0.0
        %8364 = vmatpush1.msra.mxu0 0.0
        %8365 = vmatprep.subr.mxu0 0.0
        %8366 = vmatpush1.msra.mxu0 0.0
        %8367 = vmatprep.mubr.f32.mxu0 0.0
        %v8368 = vand.u32 %v675, 4294901760
        %v8369 = vsub.f32 %v675, %v8368
        %8370 = vmatmul.mubr.f32.gmra.mrb[0].mxu0 %v8369
        %v8371 = vpop.f32.mrb[0].mxu0
        %v8372 = vadd.f32 %v8296, %v8371
        %v8373 = vpop.f32.mrb[0].mxu0
        %8374 = vdwg.mxu0
        %8375 = vmatprep.subr.mxu0 0.0
        %v8376 = vand.u32 %v8139, 4294901760
        %8377 = vmatpush1.msra.mxu0 %v8376
        %8378 = vmatprep.subr.mxu0 0.0
        %v8379 = vand.u32 %v8140, 4294901760
        %8380 = vmatpush1.msra.mxu0 %v8379
        %8381 = vmatprep.subr.mxu0 0.0
        %8382 = vmatpush1.msra.mxu0 0.0
        %8383 = vmatprep.subr.mxu0 0.0
        %8384 = vmatpush1.msra.mxu0 0.0
        %8385 = vmatprep.subr.mxu0 0.0
        %8386 = vmatpush1.msra.mxu0 0.0
        %8387 = vmatprep.subr.mxu0 0.0
        %8388 = vmatpush1.msra.mxu0 0.0
        %8389 = vmatprep.subr.mxu0 0.0
        %8390 = vmatpush1.msra.mxu0 0.0
        %8391 = vmatprep.subr.mxu0 0.0
        %8392 = vmatpush1.msra.mxu0 0.0
        %8393 = vmatprep.subr.mxu0 0.0
        %8394 = vmatpush1.msra.mxu0 0.0
        %8395 = vmatprep.subr.mxu0 0.0
        %8396 = vmatpush1.msra.mxu0 0.0
        %8397 = vmatprep.subr.mxu0 0.0
        %8398 = vmatpush1.msra.mxu0 0.0
        %8399 = vmatprep.subr.mxu0 0.0
        %8400 = vmatpush1.msra.mxu0 0.0
        %8401 = vmatprep.subr.mxu0 0.0
        %8402 = vmatpush1.msra.mxu0 0.0
        %8403 = vmatprep.subr.mxu0 0.0
        %8404 = vmatpush1.msra.mxu0 0.0
        %8405 = vmatprep.subr.mxu0 0.0
        %8406 = vmatpush1.msra.mxu0 0.0
        %8407 = vmatprep.subr.mxu0 0.0
        %8408 = vmatpush1.msra.mxu0 0.0
        %8409 = vmatprep.subr.mxu0 0.0
        %8410 = vmatpush1.msra.mxu0 0.0
        %8411 = vmatprep.subr.mxu0 0.0
        %8412 = vmatpush1.msra.mxu0 0.0
        %8413 = vmatprep.subr.mxu0 0.0
        %8414 = vmatpush1.msra.mxu0 0.0
        %8415 = vmatprep.subr.mxu0 0.0
        %8416 = vmatpush1.msra.mxu0 0.0
        %8417 = vmatprep.subr.mxu0 0.0
        %8418 = vmatpush1.msra.mxu0 0.0
        %8419 = vmatprep.subr.mxu0 0.0
        %8420 = vmatpush1.msra.mxu0 0.0
        %8421 = vmatprep.subr.mxu0 0.0
        %8422 = vmatpush1.msra.mxu0 0.0
        %8423 = vmatprep.subr.mxu0 0.0
        %8424 = vmatpush1.msra.mxu0 0.0
        %8425 = vmatprep.subr.mxu0 0.0
        %8426 = vmatpush1.msra.mxu0 0.0
        %8427 = vmatprep.subr.mxu0 0.0
        %8428 = vmatpush1.msra.mxu0 0.0
        %8429 = vmatprep.subr.mxu0 0.0
        %8430 = vmatpush1.msra.mxu0 0.0
        %8431 = vmatprep.subr.mxu0 0.0
        %8432 = vmatpush1.msra.mxu0 0.0
        %8433 = vmatprep.subr.mxu0 0.0
        %8434 = vmatpush1.msra.mxu0 0.0
        %8435 = vmatprep.subr.mxu0 0.0
        %8436 = vmatpush1.msra.mxu0 0.0
        %8437 = vmatprep.subr.mxu0 0.0
        %8438 = vmatpush1.msra.mxu0 0.0
        %8439 = vmatprep.subr.mxu0 0.0
        %8440 = vmatpush1.msra.mxu0 0.0
        %8441 = vmatprep.mubr.f32.mxu0 0.0
        %v8442 = vand.u32 %v675, 4294901760
        %v8443 = vsub.f32 %v675, %v8442
        %v8444 = vand.u32 %v8443, 4294901760
        %8445 = vmatmul.mubr.f32.gmra.mrb[0].mxu0 %v8444
        %v8446 = vpop.f32.mrb[0].mxu0
        %v8447 = vadd.f32 %v8372, %v8446
        %v8448 = vpop.f32.mrb[0].mxu0
        %8449 = vdwg.mxu0
        %8450 = vmatprep.subr.mxu0 0.0
        %v8451 = vand.u32 %v8139, 4294901760
        %v8452 = vsub.f32 %v8139, %v8451
        %v8453 = vand.u32 %v8452, 4294901760
        %8454 = vmatpush1.msra.mxu0 %v8453
        %8455 = vmatprep.subr.mxu0 0.0
        %v8456 = vand.u32 %v8140, 4294901760
        %v8457 = vsub.f32 %v8140, %v8456
        %v8458 = vand.u32 %v8457, 4294901760
        %8459 = vmatpush1.msra.mxu0 %v8458
        %8460 = vmatprep.subr.mxu0 0.0
        %8461 = vmatpush1.msra.mxu0 0.0
        %8462 = vmatprep.subr.mxu0 0.0
        %8463 = vmatpush1.msra.mxu0 0.0
        %8464 = vmatprep.subr.mxu0 0.0
        %8465 = vmatpush1.msra.mxu0 0.0
        %8466 = vmatprep.subr.mxu0 0.0
        %8467 = vmatpush1.msra.mxu0 0.0
        %8468 = vmatprep.subr.mxu0 0.0
        %8469 = vmatpush1.msra.mxu0 0.0
        %8470 = vmatprep.subr.mxu0 0.0
        %8471 = vmatpush1.msra.mxu0 0.0
        %8472 = vmatprep.subr.mxu0 0.0
        %8473 = vmatpush1.msra.mxu0 0.0
        %8474 = vmatprep.subr.mxu0 0.0
        %8475 = vmatpush1.msra.mxu0 0.0
        %8476 = vmatprep.subr.mxu0 0.0
        %8477 = vmatpush1.msra.mxu0 0.0
        %8478 = vmatprep.subr.mxu0 0.0
        %8479 = vmatpush1.msra.mxu0 0.0
        %8480 = vmatprep.subr.mxu0 0.0
        %8481 = vmatpush1.msra.mxu0 0.0
        %8482 = vmatprep.subr.mxu0 0.0
        %8483 = vmatpush1.msra.mxu0 0.0
        %8484 = vmatprep.subr.mxu0 0.0
        %8485 = vmatpush1.msra.mxu0 0.0
        %8486 = vmatprep.subr.mxu0 0.0
        %8487 = vmatpush1.msra.mxu0 0.0
        %8488 = vmatprep.subr.mxu0 0.0
        %8489 = vmatpush1.msra.mxu0 0.0
        %8490 = vmatprep.subr.mxu0 0.0
        %8491 = vmatpush1.msra.mxu0 0.0
        %8492 = vmatprep.subr.mxu0 0.0
        %8493 = vmatpush1.msra.mxu0 0.0
        %8494 = vmatprep.subr.mxu0 0.0
        %8495 = vmatpush1.msra.mxu0 0.0
        %8496 = vmatprep.subr.mxu0 0.0
        %8497 = vmatpush1.msra.mxu0 0.0
        %8498 = vmatprep.subr.mxu0 0.0
        %8499 = vmatpush1.msra.mxu0 0.0
        %8500 = vmatprep.subr.mxu0 0.0
        %8501 = vmatpush1.msra.mxu0 0.0
        %8502 = vmatprep.subr.mxu0 0.0
        %8503 = vmatpush1.msra.mxu0 0.0
        %8504 = vmatprep.subr.mxu0 0.0
        %8505 = vmatpush1.msra.mxu0 0.0
        %8506 = vmatprep.subr.mxu0 0.0
        %8507 = vmatpush1.msra.mxu0 0.0
        %8508 = vmatprep.subr.mxu0 0.0
        %8509 = vmatpush1.msra.mxu0 0.0
        %8510 = vmatprep.subr.mxu0 0.0
        %8511 = vmatpush1.msra.mxu0 0.0
        %8512 = vmatprep.subr.mxu0 0.0
        %8513 = vmatpush1.msra.mxu0 0.0
        %8514 = vmatprep.subr.mxu0 0.0
        %8515 = vmatpush1.msra.mxu0 0.0
        %8516 = vmatprep.subr.mxu0 0.0
        %8517 = vmatpush1.msra.mxu0 0.0
        %8518 = vmatprep.subr.mxu0 0.0
        %8519 = vmatpush1.msra.mxu0 0.0
        %8520 = vmatprep.mubr.f32.mxu0 0.0
        %v8521 = vand.u32 %v675, 4294901760
        %8522 = vmatmul.mubr.f32.gmra.mrb[0].mxu0 %v8521
        %v8523 = vpop.f32.mrb[0].mxu0
        %v8524 = vadd.f32 %v8447, %v8523
        %v8525 = vpop.f32.mrb[0].mxu0
        %8526 = vdwg.mxu0
        %8527 = vmatprep.subr.mxu0 0.0
        %v8528 = vand.u32 %v8139, 4294901760
        %8529 = vmatpush1.msra.mxu0 %v8528
        %8530 = vmatprep.subr.mxu0 0.0
        %v8531 = vand.u32 %v8140, 4294901760
        %8532 = vmatpush1.msra.mxu0 %v8531
        %8533 = vmatprep.subr.mxu0 0.0
        %8534 = vmatpush1.msra.mxu0 0.0
        %8535 = vmatprep.subr.mxu0 0.0
        %8536 = vmatpush1.msra.mxu0 0.0
        %8537 = vmatprep.subr.mxu0 0.0
        %8538 = vmatpush1.msra.mxu0 0.0
        %8539 = vmatprep.subr.mxu0 0.0
        %8540 = vmatpush1.msra.mxu0 0.0
        %8541 = vmatprep.subr.mxu0 0.0
        %8542 = vmatpush1.msra.mxu0 0.0
        %8543 = vmatprep.subr.mxu0 0.0
        %8544 = vmatpush1.msra.mxu0 0.0
        %8545 = vmatprep.subr.mxu0 0.0
        %8546 = vmatpush1.msra.mxu0 0.0
        %8547 = vmatprep.subr.mxu0 0.0
        %8548 = vmatpush1.msra.mxu0 0.0
        %8549 = vmatprep.subr.mxu0 0.0
        %8550 = vmatpush1.msra.mxu0 0.0
        %8551 = vmatprep.subr.mxu0 0.0
        %8552 = vmatpush1.msra.mxu0 0.0
        %8553 = vmatprep.subr.mxu0 0.0
        %8554 = vmatpush1.msra.mxu0 0.0
        %8555 = vmatprep.subr.mxu0 0.0
        %8556 = vmatpush1.msra.mxu0 0.0
        %8557 = vmatprep.subr.mxu0 0.0
        %8558 = vmatpush1.msra.mxu0 0.0
        %8559 = vmatprep.subr.mxu0 0.0
        %8560 = vmatpush1.msra.mxu0 0.0
        %8561 = vmatprep.subr.mxu0 0.0
        %8562 = vmatpush1.msra.mxu0 0.0
        %8563 = vmatprep.subr.mxu0 0.0
        %8564 = vmatpush1.msra.mxu0 0.0
        %8565 = vmatprep.subr.mxu0 0.0
        %8566 = vmatpush1.msra.mxu0 0.0
        %8567 = vmatprep.subr.mxu0 0.0
        %8568 = vmatpush1.msra.mxu0 0.0
        %8569 = vmatprep.subr.mxu0 0.0
        %8570 = vmatpush1.msra.mxu0 0.0
        %8571 = vmatprep.subr.mxu0 0.0
        %8572 = vmatpush1.msra.mxu0 0.0
        %8573 = vmatprep.subr.mxu0 0.0
        %8574 = vmatpush1.msra.mxu0 0.0
        %8575 = vmatprep.subr.mxu0 0.0
        %8576 = vmatpush1.msra.mxu0 0.0
        %8577 = vmatprep.subr.mxu0 0.0
        %8578 = vmatpush1.msra.mxu0 0.0
        %8579 = vmatprep.subr.mxu0 0.0
        %8580 = vmatpush1.msra.mxu0 0.0
        %8581 = vmatprep.subr.mxu0 0.0
        %8582 = vmatpush1.msra.mxu0 0.0
        %8583 = vmatprep.subr.mxu0 0.0
        %8584 = vmatpush1.msra.mxu0 0.0
        %8585 = vmatprep.subr.mxu0 0.0
        %8586 = vmatpush1.msra.mxu0 0.0
        %8587 = vmatprep.subr.mxu0 0.0
        %8588 = vmatpush1.msra.mxu0 0.0
        %8589 = vmatprep.subr.mxu0 0.0
        %8590 = vmatpush1.msra.mxu0 0.0
        %8591 = vmatprep.subr.mxu0 0.0
        %8592 = vmatpush1.msra.mxu0 0.0
        %8593 = vmatprep.mubr.f32.mxu0 0.0
        %v8594 = vand.u32 %v675, 4294901760
        %8595 = vmatmul.mubr.f32.gmra.mrb[0].mxu0 %v8594
        %v8596 = vpop.f32.mrb[0].mxu0
        %v8597 = vadd.f32 %v8524, %v8596
        %v8598 = vpop.f32.mrb[0].mxu0
        %8599 = vdwg.mxu0
        %v8601 = vsel %vm673, %v8597, 0
        %8603 = vmatprep.subr.mxu0 0.0
        %v8604 = vand.u32 %v661, 4294901760
        %8605 = vmatpush1.msra.mxu0 %v8604
        %8606 = vmatprep.subr.mxu0 0.0
        %v8607 = vand.u32 %v662, 4294901760
        %8608 = vmatpush1.msra.mxu0 %v8607
        %8609 = vmatprep.subr.mxu0 0.0
        %8610 = vmatpush1.msra.mxu0 0.0
        %8611 = vmatprep.subr.mxu0 0.0
        %8612 = vmatpush1.msra.mxu0 0.0
        %8613 = vmatprep.subr.mxu0 0.0
        %8614 = vmatpush1.msra.mxu0 0.0
        %8615 = vmatprep.subr.mxu0 0.0
        %8616 = vmatpush1.msra.mxu0 0.0
        %8617 = vmatprep.subr.mxu0 0.0
        %8618 = vmatpush1.msra.mxu0 0.0
        %8619 = vmatprep.subr.mxu0 0.0
        %8620 = vmatpush1.msra.mxu0 0.0
        %8621 = vmatprep.subr.mxu0 0.0
        %8622 = vmatpush1.msra.mxu0 0.0
        %8623 = vmatprep.subr.mxu0 0.0
        %8624 = vmatpush1.msra.mxu0 0.0
        %8625 = vmatprep.subr.mxu0 0.0
        %8626 = vmatpush1.msra.mxu0 0.0
        %8627 = vmatprep.subr.mxu0 0.0
        %8628 = vmatpush1.msra.mxu0 0.0
        %8629 = vmatprep.subr.mxu0 0.0
        %8630 = vmatpush1.msra.mxu0 0.0
        %8631 = vmatprep.subr.mxu0 0.0
        %8632 = vmatpush1.msra.mxu0 0.0
        %8633 = vmatprep.subr.mxu0 0.0
        %8634 = vmatpush1.msra.mxu0 0.0
        %8635 = vmatprep.subr.mxu0 0.0
        %8636 = vmatpush1.msra.mxu0 0.0
        %8637 = vmatprep.subr.mxu0 0.0
        %8638 = vmatpush1.msra.mxu0 0.0
        %8639 = vmatprep.subr.mxu0 0.0
        %8640 = vmatpush1.msra.mxu0 0.0
        %8641 = vmatprep.subr.mxu0 0.0
        %8642 = vmatpush1.msra.mxu0 0.0
        %8643 = vmatprep.subr.mxu0 0.0
        %8644 = vmatpush1.msra.mxu0 0.0
        %8645 = vmatprep.subr.mxu0 0.0
        %8646 = vmatpush1.msra.mxu0 0.0
        %8647 = vmatprep.subr.mxu0 0.0
        %8648 = vmatpush1.msra.mxu0 0.0
        %8649 = vmatprep.subr.mxu0 0.0
        %8650 = vmatpush1.msra.mxu0 0.0
        %8651 = vmatprep.subr.mxu0 0.0
        %8652 = vmatpush1.msra.mxu0 0.0
        %8653 = vmatprep.subr.mxu0 0.0
        %8654 = vmatpush1.msra.mxu0 0.0
        %8655 = vmatprep.subr.mxu0 0.0
        %8656 = vmatpush1.msra.mxu0 0.0
        %8657 = vmatprep.subr.mxu0 0.0
        %8658 = vmatpush1.msra.mxu0 0.0
        %8659 = vmatprep.subr.mxu0 0.0
        %8660 = vmatpush1.msra.mxu0 0.0
        %8661 = vmatprep.subr.mxu0 0.0
        %8662 = vmatpush1.msra.mxu0 0.0
        %8663 = vmatprep.subr.mxu0 0.0
        %8664 = vmatpush1.msra.mxu0 0.0
        %8665 = vmatprep.subr.mxu0 0.0
        %8666 = vmatpush1.msra.mxu0 0.0
        %8667 = vmatprep.subr.mxu0 0.0
        %8668 = vmatpush1.msra.mxu0 0.0
        %8669 = vmatprep.mubr.f32.mxu0 0.0
        %v8670 = vand.u32 %v8601, 4294901760
        %v8671 = vsub.f32 %v8601, %v8670
        %v8672 = vand.u32 %v8671, 4294901760
        %v8673 = vsub.f32 %v8671, %v8672
        %v8674 = vand.u32 %v8673, 4294901760
        %8675 = vmatmul.mubr.f32.gmra.mrb[0].mxu0 %v8674
        %v8676 = vpop.f32.mrb[0].mxu0
        %v8677 = vadd.f32 0.0, %v8676
        %v8678 = vpop.f32.mrb[0].mxu0
        %8679 = vdwg.mxu0
        %8680 = vmatprep.subr.mxu0 0.0
        %v8681 = vand.u32 %v661, 4294901760
        %v8682 = vsub.f32 %v661, %v8681
        %v8683 = vand.u32 %v8682, 4294901760
        %v8684 = vsub.f32 %v8682, %v8683
        %v8685 = vand.u32 %v8684, 4294901760
        %8686 = vmatpush1.msra.mxu0 %v8685
        %8687 = vmatprep.subr.mxu0 0.0
        %v8688 = vand.u32 %v662, 4294901760
        %v8689 = vsub.f32 %v662, %v8688
        %v8690 = vand.u32 %v8689, 4294901760
        %v8691 = vsub.f32 %v8689, %v8690
        %v8692 = vand.u32 %v8691, 4294901760
        %8693 = vmatpush1.msra.mxu0 %v8692
        %8694 = vmatprep.subr.mxu0 0.0
        %8695 = vmatpush1.msra.mxu0 0.0
        %8696 = vmatprep.subr.mxu0 0.0
        %8697 = vmatpush1.msra.mxu0 0.0
        %8698 = vmatprep.subr.mxu0 0.0
        %8699 = vmatpush1.msra.mxu0 0.0
        %8700 = vmatprep.subr.mxu0 0.0
        %8701 = vmatpush1.msra.mxu0 0.0
        %8702 = vmatprep.subr.mxu0 0.0
        %8703 = vmatpush1.msra.mxu0 0.0
        %8704 = vmatprep.subr.mxu0 0.0
        %8705 = vmatpush1.msra.mxu0 0.0
        %8706 = vmatprep.subr.mxu0 0.0
        %8707 = vmatpush1.msra.mxu0 0.0
        %8708 = vmatprep.subr.mxu0 0.0
        %8709 = vmatpush1.msra.mxu0 0.0
        %8710 = vmatprep.subr.mxu0 0.0
        %8711 = vmatpush1.msra.mxu0 0.0
        %8712 = vmatprep.subr.mxu0 0.0
        %8713 = vmatpush1.msra.mxu0 0.0
        %8714 = vmatprep.subr.mxu0 0.0
        %8715 = vmatpush1.msra.mxu0 0.0
        %8716 = vmatprep.subr.mxu0 0.0
        %8717 = vmatpush1.msra.mxu0 0.0
        %8718 = vmatprep.subr.mxu0 0.0
        %8719 = vmatpush1.msra.mxu0 0.0
        %8720 = vmatprep.subr.mxu0 0.0
        %8721 = vmatpush1.msra.mxu0 0.0
        %8722 = vmatprep.subr.mxu0 0.0
        %8723 = vmatpush1.msra.mxu0 0.0
        %8724 = vmatprep.subr.mxu0 0.0
        %8725 = vmatpush1.msra.mxu0 0.0
        %8726 = vmatprep.subr.mxu0 0.0
        %8727 = vmatpush1.msra.mxu0 0.0
        %8728 = vmatprep.subr.mxu0 0.0
        %8729 = vmatpush1.msra.mxu0 0.0
        %8730 = vmatprep.subr.mxu0 0.0
        %8731 = vmatpush1.msra.mxu0 0.0
        %8732 = vmatprep.subr.mxu0 0.0
        %8733 = vmatpush1.msra.mxu0 0.0
        %8734 = vmatprep.subr.mxu0 0.0
        %8735 = vmatpush1.msra.mxu0 0.0
        %8736 = vmatprep.subr.mxu0 0.0
        %8737 = vmatpush1.msra.mxu0 0.0
        %8738 = vmatprep.subr.mxu0 0.0
        %8739 = vmatpush1.msra.mxu0 0.0
        %8740 = vmatprep.subr.mxu0 0.0
        %8741 = vmatpush1.msra.mxu0 0.0
        %8742 = vmatprep.subr.mxu0 0.0
        %8743 = vmatpush1.msra.mxu0 0.0
        %8744 = vmatprep.subr.mxu0 0.0
        %8745 = vmatpush1.msra.mxu0 0.0
        %8746 = vmatprep.subr.mxu0 0.0
        %8747 = vmatpush1.msra.mxu0 0.0
        %8748 = vmatprep.subr.mxu0 0.0
        %8749 = vmatpush1.msra.mxu0 0.0
        %8750 = vmatprep.subr.mxu0 0.0
        %8751 = vmatpush1.msra.mxu0 0.0
        %8752 = vmatprep.subr.mxu0 0.0
        %8753 = vmatpush1.msra.mxu0 0.0
        %8754 = vmatprep.mubr.f32.mxu0 0.0
        %v8755 = vand.u32 %v8601, 4294901760
        %8756 = vmatmul.mubr.f32.gmra.mrb[0].mxu0 %v8755
        %v8757 = vpop.f32.mrb[0].mxu0
        %v8758 = vadd.f32 %v8677, %v8757
        %v8759 = vpop.f32.mrb[0].mxu0
        %8760 = vdwg.mxu0
        %8761 = vmatprep.subr.mxu0 0.0
        %v8762 = vand.u32 %v661, 4294901760
        %v8763 = vsub.f32 %v661, %v8762
        %8764 = vmatpush1.msra.mxu0 %v8763
        %8765 = vmatprep.subr.mxu0 0.0
        %v8766 = vand.u32 %v662, 4294901760
        %v8767 = vsub.f32 %v662, %v8766
        %8768 = vmatpush1.msra.mxu0 %v8767
        %8769 = vmatprep.subr.mxu0 0.0
        %8770 = vmatpush1.msra.mxu0 0.0
        %8771 = vmatprep.subr.mxu0 0.0
        %8772 = vmatpush1.msra.mxu0 0.0
        %8773 = vmatprep.subr.mxu0 0.0
        %8774 = vmatpush1.msra.mxu0 0.0
        %8775 = vmatprep.subr.mxu0 0.0
        %8776 = vmatpush1.msra.mxu0 0.0
        %8777 = vmatprep.subr.mxu0 0.0
        %8778 = vmatpush1.msra.mxu0 0.0
        %8779 = vmatprep.subr.mxu0 0.0
        %8780 = vmatpush1.msra.mxu0 0.0
        %8781 = vmatprep.subr.mxu0 0.0
        %8782 = vmatpush1.msra.mxu0 0.0
        %8783 = vmatprep.subr.mxu0 0.0
        %8784 = vmatpush1.msra.mxu0 0.0
        %8785 = vmatprep.subr.mxu0 0.0
        %8786 = vmatpush1.msra.mxu0 0.0
        %8787 = vmatprep.subr.mxu0 0.0
        %8788 = vmatpush1.msra.mxu0 0.0
        %8789 = vmatprep.subr.mxu0 0.0
        %8790 = vmatpush1.msra.mxu0 0.0
        %8791 = vmatprep.subr.mxu0 0.0
        %8792 = vmatpush1.msra.mxu0 0.0
        %8793 = vmatprep.subr.mxu0 0.0
        %8794 = vmatpush1.msra.mxu0 0.0
        %8795 = vmatprep.subr.mxu0 0.0
        %8796 = vmatpush1.msra.mxu0 0.0
        %8797 = vmatprep.subr.mxu0 0.0
        %8798 = vmatpush1.msra.mxu0 0.0
        %8799 = vmatprep.subr.mxu0 0.0
        %8800 = vmatpush1.msra.mxu0 0.0
        %8801 = vmatprep.subr.mxu0 0.0
        %8802 = vmatpush1.msra.mxu0 0.0
        %8803 = vmatprep.subr.mxu0 0.0
        %8804 = vmatpush1.msra.mxu0 0.0
        %8805 = vmatprep.subr.mxu0 0.0
        %8806 = vmatpush1.msra.mxu0 0.0
        %8807 = vmatprep.subr.mxu0 0.0
        %8808 = vmatpush1.msra.mxu0 0.0
        %8809 = vmatprep.subr.mxu0 0.0
        %8810 = vmatpush1.msra.mxu0 0.0
        %8811 = vmatprep.subr.mxu0 0.0
        %8812 = vmatpush1.msra.mxu0 0.0
        %8813 = vmatprep.subr.mxu0 0.0
        %8814 = vmatpush1.msra.mxu0 0.0
        %8815 = vmatprep.subr.mxu0 0.0
        %8816 = vmatpush1.msra.mxu0 0.0
        %8817 = vmatprep.subr.mxu0 0.0
        %8818 = vmatpush1.msra.mxu0 0.0
        %8819 = vmatprep.subr.mxu0 0.0
        %8820 = vmatpush1.msra.mxu0 0.0
        %8821 = vmatprep.subr.mxu0 0.0
        %8822 = vmatpush1.msra.mxu0 0.0
        %8823 = vmatprep.subr.mxu0 0.0
        %8824 = vmatpush1.msra.mxu0 0.0
        %8825 = vmatprep.subr.mxu0 0.0
        %8826 = vmatpush1.msra.mxu0 0.0
        %8827 = vmatprep.subr.mxu0 0.0
        %8828 = vmatpush1.msra.mxu0 0.0
        %8829 = vmatprep.mubr.f32.mxu0 0.0
        %v8830 = vand.u32 %v8601, 4294901760
        %v8831 = vsub.f32 %v8601, %v8830
        %8832 = vmatmul.mubr.f32.gmra.mrb[0].mxu0 %v8831
        %v8833 = vpop.f32.mrb[0].mxu0
        %v8834 = vadd.f32 %v8758, %v8833
        %v8835 = vpop.f32.mrb[0].mxu0
        %8836 = vdwg.mxu0
        %8837 = vmatprep.subr.mxu0 0.0
        %v8838 = vand.u32 %v661, 4294901760
        %8839 = vmatpush1.msra.mxu0 %v8838
        %8840 = vmatprep.subr.mxu0 0.0
        %v8841 = vand.u32 %v662, 4294901760
        %8842 = vmatpush1.msra.mxu0 %v8841
        %8843 = vmatprep.subr.mxu0 0.0
        %8844 = vmatpush1.msra.mxu0 0.0
        %8845 = vmatprep.subr.mxu0 0.0
        %8846 = vmatpush1.msra.mxu0 0.0
        %8847 = vmatprep.subr.mxu0 0.0
        %8848 = vmatpush1.msra.mxu0 0.0
        %8849 = vmatprep.subr.mxu0 0.0
        %8850 = vmatpush1.msra.mxu0 0.0
        %8851 = vmatprep.subr.mxu0 0.0
        %8852 = vmatpush1.msra.mxu0 0.0
        %8853 = vmatprep.subr.mxu0 0.0
        %8854 = vmatpush1.msra.mxu0 0.0
        %8855 = vmatprep.subr.mxu0 0.0
        %8856 = vmatpush1.msra.mxu0 0.0
        %8857 = vmatprep.subr.mxu0 0.0
        %8858 = vmatpush1.msra.mxu0 0.0
        %8859 = vmatprep.subr.mxu0 0.0
        %8860 = vmatpush1.msra.mxu0 0.0
        %8861 = vmatprep.subr.mxu0 0.0
        %8862 = vmatpush1.msra.mxu0 0.0
        %8863 = vmatprep.subr.mxu0 0.0
        %8864 = vmatpush1.msra.mxu0 0.0
        %8865 = vmatprep.subr.mxu0 0.0
        %8866 = vmatpush1.msra.mxu0 0.0
        %8867 = vmatprep.subr.mxu0 0.0
        %8868 = vmatpush1.msra.mxu0 0.0
        %8869 = vmatprep.subr.mxu0 0.0
        %8870 = vmatpush1.msra.mxu0 0.0
        %8871 = vmatprep.subr.mxu0 0.0
        %8872 = vmatpush1.msra.mxu0 0.0
        %8873 = vmatprep.subr.mxu0 0.0
        %8874 = vmatpush1.msra.mxu0 0.0
        %8875 = vmatprep.subr.mxu0 0.0
        %8876 = vmatpush1.msra.mxu0 0.0
        %8877 = vmatprep.subr.mxu0 0.0
        %8878 = vmatpush1.msra.mxu0 0.0
        %8879 = vmatprep.subr.mxu0 0.0
        %8880 = vmatpush1.msra.mxu0 0.0
        %8881 = vmatprep.subr.mxu0 0.0
        %8882 = vmatpush1.msra.mxu0 0.0
        %8883 = vmatprep.subr.mxu0 0.0
        %8884 = vmatpush1.msra.mxu0 0.0
        %8885 = vmatprep.subr.mxu0 0.0
        %8886 = vmatpush1.msra.mxu0 0.0
        %8887 = vmatprep.subr.mxu0 0.0
        %8888 = vmatpush1.msra.mxu0 0.0
        %8889 = vmatprep.subr.mxu0 0.0
        %8890 = vmatpush1.msra.mxu0 0.0
        %8891 = vmatprep.subr.mxu0 0.0
        %8892 = vmatpush1.msra.mxu0 0.0
        %8893 = vmatprep.subr.mxu0 0.0
        %8894 = vmatpush1.msra.mxu0 0.0
        %8895 = vmatprep.subr.mxu0 0.0
        %8896 = vmatpush1.msra.mxu0 0.0
        %8897 = vmatprep.subr.mxu0 0.0
        %8898 = vmatpush1.msra.mxu0 0.0
        %8899 = vmatprep.subr.mxu0 0.0
        %8900 = vmatpush1.msra.mxu0 0.0
        %8901 = vmatprep.subr.mxu0 0.0
        %8902 = vmatpush1.msra.mxu0 0.0
        %8903 = vmatprep.mubr.f32.mxu0 0.0
        %v8904 = vand.u32 %v8601, 4294901760
        %v8905 = vsub.f32 %v8601, %v8904
        %v8906 = vand.u32 %v8905, 4294901760
        %8907 = vmatmul.mubr.f32.gmra.mrb[0].mxu0 %v8906
        %v8908 = vpop.f32.mrb[0].mxu0
        %v8909 = vadd.f32 %v8834, %v8908
        %v8910 = vpop.f32.mrb[0].mxu0
        %8911 = vdwg.mxu0
        %8912 = vmatprep.subr.mxu0 0.0
        %v8913 = vand.u32 %v661, 4294901760
        %v8914 = vsub.f32 %v661, %v8913
        %v8915 = vand.u32 %v8914, 4294901760
        %8916 = vmatpush1.msra.mxu0 %v8915
        %8917 = vmatprep.subr.mxu0 0.0
        %v8918 = vand.u32 %v662, 4294901760
        %v8919 = vsub.f32 %v662, %v8918
        %v8920 = vand.u32 %v8919, 4294901760
        %8921 = vmatpush1.msra.mxu0 %v8920
        %8922 = vmatprep.subr.mxu0 0.0
        %8923 = vmatpush1.msra.mxu0 0.0
        %8924 = vmatprep.subr.mxu0 0.0
        %8925 = vmatpush1.msra.mxu0 0.0
        %8926 = vmatprep.subr.mxu0 0.0
        %8927 = vmatpush1.msra.mxu0 0.0
        %8928 = vmatprep.subr.mxu0 0.0
        %8929 = vmatpush1.msra.mxu0 0.0
        %8930 = vmatprep.subr.mxu0 0.0
        %8931 = vmatpush1.msra.mxu0 0.0
        %8932 = vmatprep.subr.mxu0 0.0
        %8933 = vmatpush1.msra.mxu0 0.0
        %8934 = vmatprep.subr.mxu0 0.0
        %8935 = vmatpush1.msra.mxu0 0.0
        %8936 = vmatprep.subr.mxu0 0.0
        %8937 = vmatpush1.msra.mxu0 0.0
        %8938 = vmatprep.subr.mxu0 0.0
        %8939 = vmatpush1.msra.mxu0 0.0
        %8940 = vmatprep.subr.mxu0 0.0
        %8941 = vmatpush1.msra.mxu0 0.0
        %8942 = vmatprep.subr.mxu0 0.0
        %8943 = vmatpush1.msra.mxu0 0.0
        %8944 = vmatprep.subr.mxu0 0.0
        %8945 = vmatpush1.msra.mxu0 0.0
        %8946 = vmatprep.subr.mxu0 0.0
        %8947 = vmatpush1.msra.mxu0 0.0
        %8948 = vmatprep.subr.mxu0 0.0
        %8949 = vmatpush1.msra.mxu0 0.0
        %8950 = vmatprep.subr.mxu0 0.0
        %8951 = vmatpush1.msra.mxu0 0.0
        %8952 = vmatprep.subr.mxu0 0.0
        %8953 = vmatpush1.msra.mxu0 0.0
        %8954 = vmatprep.subr.mxu0 0.0
        %8955 = vmatpush1.msra.mxu0 0.0
        %8956 = vmatprep.subr.mxu0 0.0
        %8957 = vmatpush1.msra.mxu0 0.0
        %8958 = vmatprep.subr.mxu0 0.0
        %8959 = vmatpush1.msra.mxu0 0.0
        %8960 = vmatprep.subr.mxu0 0.0
        %8961 = vmatpush1.msra.mxu0 0.0
        %8962 = vmatprep.subr.mxu0 0.0
        %8963 = vmatpush1.msra.mxu0 0.0
        %8964 = vmatprep.subr.mxu0 0.0
        %8965 = vmatpush1.msra.mxu0 0.0
        %8966 = vmatprep.subr.mxu0 0.0
        %8967 = vmatpush1.msra.mxu0 0.0
        %8968 = vmatprep.subr.mxu0 0.0
        %8969 = vmatpush1.msra.mxu0 0.0
        %8970 = vmatprep.subr.mxu0 0.0
        %8971 = vmatpush1.msra.mxu0 0.0
        %8972 = vmatprep.subr.mxu0 0.0
        %8973 = vmatpush1.msra.mxu0 0.0
        %8974 = vmatprep.subr.mxu0 0.0
        %8975 = vmatpush1.msra.mxu0 0.0
        %8976 = vmatprep.subr.mxu0 0.0
        %8977 = vmatpush1.msra.mxu0 0.0
        %8978 = vmatprep.subr.mxu0 0.0
        %8979 = vmatpush1.msra.mxu0 0.0
        %8980 = vmatprep.subr.mxu0 0.0
        %8981 = vmatpush1.msra.mxu0 0.0
        %8982 = vmatprep.mubr.f32.mxu0 0.0
        %v8983 = vand.u32 %v8601, 4294901760
        %8984 = vmatmul.mubr.f32.gmra.mrb[0].mxu0 %v8983
        %v8985 = vpop.f32.mrb[0].mxu0
        %v8986 = vadd.f32 %v8909, %v8985
        %v8987 = vpop.f32.mrb[0].mxu0
        %8988 = vdwg.mxu0
        %8989 = vmatprep.subr.mxu0 0.0
        %v8990 = vand.u32 %v661, 4294901760
        %8991 = vmatpush1.msra.mxu0 %v8990
        %8992 = vmatprep.subr.mxu0 0.0
        %v8993 = vand.u32 %v662, 4294901760
        %8994 = vmatpush1.msra.mxu0 %v8993
        %8995 = vmatprep.subr.mxu0 0.0
        %8996 = vmatpush1.msra.mxu0 0.0
        %8997 = vmatprep.subr.mxu0 0.0
        %8998 = vmatpush1.msra.mxu0 0.0
        %8999 = vmatprep.subr.mxu0 0.0
        %9000 = vmatpush1.msra.mxu0 0.0
        %9001 = vmatprep.subr.mxu0 0.0
        %9002 = vmatpush1.msra.mxu0 0.0
        %9003 = vmatprep.subr.mxu0 0.0
        %9004 = vmatpush1.msra.mxu0 0.0
        %9005 = vmatprep.subr.mxu0 0.0
        %9006 = vmatpush1.msra.mxu0 0.0
        %9007 = vmatprep.subr.mxu0 0.0
        %9008 = vmatpush1.msra.mxu0 0.0
        %9009 = vmatprep.subr.mxu0 0.0
        %9010 = vmatpush1.msra.mxu0 0.0
        %9011 = vmatprep.subr.mxu0 0.0
        %9012 = vmatpush1.msra.mxu0 0.0
        %9013 = vmatprep.subr.mxu0 0.0
        %9014 = vmatpush1.msra.mxu0 0.0
        %9015 = vmatprep.subr.mxu0 0.0
        %9016 = vmatpush1.msra.mxu0 0.0
        %9017 = vmatprep.subr.mxu0 0.0
        %9018 = vmatpush1.msra.mxu0 0.0
        %9019 = vmatprep.subr.mxu0 0.0
        %9020 = vmatpush1.msra.mxu0 0.0
        %9021 = vmatprep.subr.mxu0 0.0
        %9022 = vmatpush1.msra.mxu0 0.0
        %9023 = vmatprep.subr.mxu0 0.0
        %9024 = vmatpush1.msra.mxu0 0.0
        %9025 = vmatprep.subr.mxu0 0.0
        %9026 = vmatpush1.msra.mxu0 0.0
        %9027 = vmatprep.subr.mxu0 0.0
        %9028 = vmatpush1.msra.mxu0 0.0
        %9029 = vmatprep.subr.mxu0 0.0
        %9030 = vmatpush1.msra.mxu0 0.0
        %9031 = vmatprep.subr.mxu0 0.0
        %9032 = vmatpush1.msra.mxu0 0.0
        %9033 = vmatprep.subr.mxu0 0.0
        %9034 = vmatpush1.msra.mxu0 0.0
        %9035 = vmatprep.subr.mxu0 0.0
        %9036 = vmatpush1.msra.mxu0 0.0
        %9037 = vmatprep.subr.mxu0 0.0
        %9038 = vmatpush1.msra.mxu0 0.0
        %9039 = vmatprep.subr.mxu0 0.0
        %9040 = vmatpush1.msra.mxu0 0.0
        %9041 = vmatprep.subr.mxu0 0.0
        %9042 = vmatpush1.msra.mxu0 0.0
        %9043 = vmatprep.subr.mxu0 0.0
        %9044 = vmatpush1.msra.mxu0 0.0
        %9045 = vmatprep.subr.mxu0 0.0
        %9046 = vmatpush1.msra.mxu0 0.0
        %9047 = vmatprep.subr.mxu0 0.0
        %9048 = vmatpush1.msra.mxu0 0.0
        %9049 = vmatprep.subr.mxu0 0.0
        %9050 = vmatpush1.msra.mxu0 0.0
        %9051 = vmatprep.subr.mxu0 0.0
        %9052 = vmatpush1.msra.mxu0 0.0
        %9053 = vmatprep.subr.mxu0 0.0
        %9054 = vmatpush1.msra.mxu0 0.0
        %9055 = vmatprep.mubr.f32.mxu0 0.0
        %v9056 = vand.u32 %v8601, 4294901760
        %9057 = vmatmul.mubr.f32.gmra.mrb[0].mxu0 %v9056
        %v9058 = vpop.f32.mrb[0].mxu0
        %v9059 = vadd.f32 %v8986, %v9058
        %v9060 = vpop.f32.mrb[0].mxu0
        %9061 = vdwg.mxu0
        %s9062 = scalar_lea.vmem %s384, 16
        %9063 = vst.msk [vmem:[%s9062] sm:$0x3] %vm1598, %v9059
        %p9064 = scmp.lt.s32.totalorder %s26, 1
        %s9065 = scalar_select %p9064, %s26, 1
        %p9066 = scmp.lt.s32.totalorder %s27, 0
        %s9067 = scalar_select %p9066, %s27, 0
        %s9068 = smul.addr %s9065, 9
        %s9069 = sadd.s32 %s9067, %s9068
        %s9070 = smul.addr %s9069, 2
        %s9071 = scalar_lea.vmem %s5, %s9070
        // Predicated region
        $region53: #{tpu_custom_call.1} parent=39 // pred_check
          %p9072 = pneg %p196
        $region54: #{tpu_custom_call.1} parent=39 // pred_check_branch
          %9074 = sbr.rel (%p9072) target = $region56
        $region55: #{tpu_custom_call.1} parent=39 // pred_region
          _
        $region56: #{tpu_custom_call.1} parent=39 // pred_fallthru
          _
      $region40: #{tpu_custom_call.1} parent=5 // pred_fallthru
        _
      %p9075 = scmp.le.s32.totalorder 2, %s17
      // Predicated region
      $region57: #{tpu_custom_call.1} parent=5 // pred_check
        %p9076 = pneg %p9075
      $region58: #{tpu_custom_call.1} parent=5 // pred_check_branch
        %9078 = sbr.rel (%p9076) target = $region60
      $region59: #{tpu_custom_call.1} parent=5 // pred_region
        %s9079 = ssub.s32 %s17, 2
        // Predicated region
        $region61: #{tpu_custom_call.1} parent=59 // pred_check
          %p9080 = pneg %p202
        $region62: #{tpu_custom_call.1} parent=59 // pred_check_branch
          %9082 = sbr.rel (%p9080) target = $region64
        $region63: #{tpu_custom_call.1} parent=59 // pred_region
          %p9083 = scmp.lt.s32.totalorder %s28, 1
          %s9084 = scalar_select %p9083, %s28, 1
          %p9085 = scmp.lt.s32.totalorder %s29, 0
          %s9086 = scalar_select %p9085, %s29, 0
          %s9087 = smul.addr %s9084, 9
          %s9088 = sadd.s32 %s9086, %s9087
          %s9089 = smul.addr %s9088, 2
          %s9090 = scalar_lea.vmem %s5, %s9089
        $region64: #{tpu_custom_call.1} parent=59 // pred_fallthru
          _
      $region60: #{tpu_custom_call.1} parent=5 // pred_fallthru
        _
    $region6: #{tpu_custom_call.1} parent=1 // loop_footer
      %s21 = sadd.s32 1, %s17
    $region7: #{tpu_custom_call.1} parent=1 // loop_footer_branch
      %16 = sbr.rel target = $region3
    $region8: #{tpu_custom_call.1} parent=1 // loop_exit
      _
    %9091 = vsyncpa [#allocation3], 1
    %s9092 = scalar_lea.sflag [#allocation3], 1
    %9093 = vsyncpa %s9092, 1
    %9094 = vsyncpa [#allocation5], 1
    %s9095 = scalar_lea.sflag [#allocation5], 1
    %9096 = vsyncpa %s9095, 1

</llo_original>
